<compile_context>
chip_gen: v6e
topology: v6e:2x2x1
jax: 0.10.0
libtpu: 0.0.40
codegen_flags: <defaults>
</compile_context>

<pallas_src>
import functools

import jax
import jax.numpy as jnp
from jax import lax
from jax.experimental import pallas as pl
from jax.experimental.pallas import tpu as pltpu

BN_EPS = 1e-5
LANE = 128
CONV_DTYPE = jnp.bfloat16          # MXU operand / HBM intermediate dtype
VMEM_LIMIT = 32 * 1024 * 1024      # explicit scoped-VMEM cap (v7x-safe)


def _round_up(x, m):
    return (x + m - 1) // m * m


def _pad_last(a, c):
    p = c - a.shape[-1]
    if p == 0:
        return a
    return jnp.pad(a, [(0, 0)] * (a.ndim - 1) + [(0, p)])


def _pad_vec(v, c):
    # Zero padding (gamma MUST be padded with zeros so padded lanes get
    # BN scale 0 and stay exactly zero through both layers).
    p = c - v.shape[0]
    return jnp.pad(v, (0, p)) if p else v


def _prep_weight(w, cpi, cpo):
    # (3, 3, Cin, Cout) -> zero-pad channels -> bf16 (3, 3, cpi, cpo).
    _, _, ci, co = w.shape
    w = jnp.pad(w, ((0, 0), (0, 0), (0, cpi - ci), (0, cpo - co)))
    return w.astype(CONV_DTYPE)


# --------------------------------------------------------------------------
# Kernel 1: optional fused (previous layer's BN+ReLU) on the input tile,
# then 3x3 same-conv (stride 1) as nine per-tap MXU dots (bf16 x bf16 -> f32
# accumulate), plus per-step partial channel sums / sums-of-squares for the
# BatchNorm batch statistics.
# --------------------------------------------------------------------------
def _conv3x3_kernel(x_ref, w_ref, s_ref, t_ref,
                    y_ref, sum_ref, sq_ref, xp_ref,
                    *, bt, H, W, apply_prelu):
    Cin = x_ref.shape[-1]
    Cout = w_ref.shape[-1]
    rows = bt * H * W
    cdt = xp_ref.dtype

    x = x_ref[...]                                     # (bt, H, W, Cin)
    if apply_prelu:                                    # fused BN+ReLU of the
        s = s_ref[...].reshape(1, 1, 1, Cin)           # previous layer (f32)
        t = t_ref[...].reshape(1, 1, 1, Cin)
        x = jnp.maximum(x.astype(jnp.float32) * s + t, 0.0)
    x = x.astype(cdt)

    # Zero-padded halo tile in VMEM scratch.  Only the 1-px border ring is
    # zeroed (the interior is fully overwritten right after); it is re-zeroed
    # every step so the kernel stays correct when the batch axis is sharded
    # across TensorCores.
    xp_ref[:, 0:1, :, :] = jnp.zeros((bt, 1, W + 2, Cin), cdt)
    xp_ref[:, H + 1:H + 2, :, :] = jnp.zeros((bt, 1, W + 2, Cin), cdt)
    xp_ref[:, 1:H + 1, 0:1, :] = jnp.zeros((bt, H, 1, Cin), cdt)
    xp_ref[:, 1:H + 1, W + 1:W + 2, :] = jnp.zeros((bt, H, 1, Cin), cdt)
    xp_ref[:, 1:H + 1, 1:W + 1, :] = x

    # 3x3 'same' conv: nine per-tap MXU contractions, f32 accumulation.
    # (No im2col slab, no concatenate: minimal VMEM working set.)
    acc = None
    for kh in range(3):
        for kw in range(3):
            win = xp_ref[:, kh:kh + H, kw:kw + W, :].reshape(rows, Cin)
            d = jnp.dot(win, w_ref[kh, kw, :, :],
                        preferred_element_type=jnp.float32)
            acc = d if acc is None else acc + d

    y_ref[...] = acc.reshape(bt, H, W, Cout).astype(y_ref.dtype)

    # Per-step partial BN statistics from the f32 accumulator (the conv bias
    # is never added: it cancels exactly under train-mode BatchNorm).
    grp = acc.reshape(rows // 8, 8, Cout)
    sum_ref[...] = jnp.sum(grp, axis=0)                # (8, Cout)
    sq_ref[...] = jnp.sum(grp * grp, axis=0)           # (8, Cout)


def conv3x3_bn_stats(x, w, pre_scale, pre_shift, *, apply_prelu, bt=1):
    """3x3 'same' conv of a channel-padded NHWC tensor (bf16 in/out).

    Optionally applies relu(x*pre_scale + pre_shift) to the input tile first
    (fused BatchNorm+ReLU of the previous layer).  Returns the bias-free conv
    output plus per-channel sum / sum-of-squares over (N, H, W).
    """
    N, H, W, Cin = x.shape
    Cout = w.shape[-1]
    assert w.shape == (3, 3, Cin, Cout)
    assert N % bt == 0 and (bt * H * W) % 8 == 0
    steps = N // bt

    kernel = functools.partial(_conv3x3_kernel, bt=bt, H=H, W=W,
                               apply_prelu=apply_prelu)
    y, ps, pq = pl.pallas_call(
        kernel,
        out_shape=(
            jax.ShapeDtypeStruct((N, H, W, Cout), CONV_DTYPE),
            jax.ShapeDtypeStruct((steps * 8, Cout), jnp.float32),
            jax.ShapeDtypeStruct((steps * 8, Cout), jnp.float32),
        ),
        grid=(steps,),
        in_specs=[
            pl.BlockSpec((bt, H, W, Cin), lambda n: (n, 0, 0, 0)),
            pl.BlockSpec((3, 3, Cin, Cout), lambda n: (0, 0, 0, 0)),  # resident
            pl.BlockSpec((1, Cin), lambda n: (0, 0)),                 # resident
            pl.BlockSpec((1, Cin), lambda n: (0, 0)),                 # resident
        ],
        out_specs=(
            pl.BlockSpec((bt, H, W, Cout), lambda n: (n, 0, 0, 0)),
            pl.BlockSpec((8, Cout), lambda n: (n, 0)),
            pl.BlockSpec((8, Cout), lambda n: (n, 0)),
        ),
        scratch_shapes=[pltpu.VMEM((bt, H + 2, W + 2, Cin), CONV_DTYPE)],
        compiler_params=pltpu.CompilerParams(
            dimension_semantics=("parallel",),
            vmem_limit_bytes=VMEM_LIMIT),
    )(x, w, pre_scale, pre_shift)
    # Tiny final reduction of the per-step partials in plain XLA.
    return y, jnp.sum(ps, axis=0), jnp.sum(pq, axis=0)


# --------------------------------------------------------------------------
# Kernel 2: final BatchNorm affine (pre-folded scale/shift) + ReLU on a
# row-flattened (N*H*W, Cpad) slab; the channel un-padding slice is folded
# into the output spec.  Layer-1's BN+ReLU is fused into conv2's input path.
# --------------------------------------------------------------------------
def _bn_relu_slice_kernel(y_ref, s_ref, t_ref, o_ref, *, out_ch):
    y = y_ref[...].astype(jnp.float32)
    v = jnp.maximum(y * s_ref[...] + t_ref[...], 0.0)
    o_ref[...] = v[:, :out_ch]


def bn_relu_slice(y_flat, scale, shift, out_ch):
    rows, C = y_flat.shape
    rt = rows
    for cand in (1024, 512, 256, 128, 64, 32, 16, 8):
        if rows % cand == 0:
            rt = cand
            break
    kernel = functools.partial(_bn_relu_slice_kernel, out_ch=out_ch)
    return pl.pallas_call(
        kernel,
        out_shape=jax.ShapeDtypeStruct((rows, out_ch), jnp.float32),
        grid=(rows // rt,),
        in_specs=[
            pl.BlockSpec((rt, C), lambda r: (r, 0)),
            pl.BlockSpec((1, C), lambda r: (0, 0)),
            pl.BlockSpec((1, C), lambda r: (0, 0)),
        ],
        out_specs=pl.BlockSpec((rt, out_ch), lambda r: (r, 0)),
        compiler_params=pltpu.CompilerParams(
            dimension_semantics=("parallel",),
            vmem_limit_bytes=VMEM_LIMIT),
    )(y_flat, scale.reshape(1, C), shift.reshape(1, C))


# --------------------------------------------------------------------------
# Full conv_block forward: (conv -> BN(train, batch stats) -> ReLU) x 2
# --------------------------------------------------------------------------
def conv_block_forward(x_nchw, params):
    # NCHW -> NHWC.  (Droppable if the surrounding network carries NHWC.)
    x = jnp.transpose(x_nchw, (0, 2, 3, 1)).astype(jnp.float32)
    N, H, W, in_ch = x.shape
    out_ch = params["w1"].shape[-1]
    cpi = _round_up(in_ch, LANE)
    cpo = _round_up(out_ch, LANE)
    cnt = float(N * H * W)

    # Channel padding to a lane multiple; for real UNet-R50 widths (>=64)
    # this is free, for the thin test layer it is a tiny one-off pad.
    x = _pad_last(x, cpi).astype(CONV_DTYPE)

    # ---- layer 1: conv (no fused pre-activation) -------------------------
    # nn.Conv2d bias is NOT applied: under train-mode BatchNorm it cancels
    # exactly (same centered value, same variance), so it is folded away.
    w1 = _prep_weight(params["w1"], cpi, cpo)
    one = jnp.ones((1, cpi), jnp.float32)
    zero = jnp.zeros((1, cpi), jnp.float32)
    y1, s1, q1 = conv3x3_bn_stats(x, w1, one, zero, apply_prelu=False)
    mean1 = s1 / cnt
    var1 = q1 / cnt - mean1 * mean1          # biased var (PyTorch train BN)
    g1 = _pad_vec(params["gamma1"], cpo)     # zero-padded gamma -> scale 0 on pad lanes
    b1 = _pad_vec(params["beta1"], cpo)
    scale1 = g1 / jnp.sqrt(var1 + BN_EPS)
    shift1 = b1 - mean1 * scale1

    # ---- layer 2: fused (BN1+ReLU on the input path) + conv --------------
    w2 = _prep_weight(params["w2"], cpo, cpo)
    y2, s2, q2 = conv3x3_bn_stats(
        y1, w2, scale1.reshape(1, cpo), shift1.reshape(1, cpo),
        apply_prelu=True)
    mean2 = s2 / cnt
    var2 = q2 / cnt - mean2 * mean2
    g2 = _pad_vec(params["gamma2"], cpo)
    b2 = _pad_vec(params["beta2"], cpo)
    scale2 = g2 / jnp.sqrt(var2 + BN_EPS)
    shift2 = b2 - mean2 * scale2

    # ---- final BN+ReLU, channel un-padding folded into the output spec ---
    out = bn_relu_slice(y2.reshape(N * H * W, cpo), scale2, shift2, out_ch)
    out = out.reshape(N, H, W, out_ch)
    return jnp.transpose(out, (0, 3, 1, 2))  # NHWC -> NCHW


# --------------------------------------------------------------------------
# Pure-JAX f32 reference (honest: conv with bias, BN on the biased output).
# --------------------------------------------------------------------------
def conv_block_reference(x_nchw, params):
    x = jnp.transpose(x_nchw, (0, 2, 3, 1)).astype(jnp.float32)
    for i in (1, 2):
        w, b = params[f"w{i}"], params[f"b{i}"]
        gamma, beta = params[f"gamma{i}"], params[f"beta{i}"]
        y = lax.conv_general_dilated(
            x, w, window_strides=(1, 1), padding=((1, 1), (1, 1)),
            dimension_numbers=("NHWC", "HWIO", "NHWC")) + b
        mean = jnp.mean(y, axis=(0, 1, 2))
        var = jnp.mean(y * y, axis=(0, 1, 2)) - mean * mean
        x = jnp.maximum((y - mean) * gamma / jnp.sqrt(var + BN_EPS) + beta, 0.0)
    return jnp.transpose(x, (0, 3, 1, 2))


def make_params(key, in_ch, out_ch):
    ks = jax.random.split(key, 8)
    return {
        "w1": 0.1 * jax.random.normal(ks[0], (3, 3, in_ch, out_ch), jnp.float32),
        "b1": 0.05 * jax.random.normal(ks[1], (out_ch,), jnp.float32),
        "gamma1": 1.0 + 0.1 * jax.random.normal(ks[2], (out_ch,), jnp.float32),
        "beta1": 0.05 * jax.random.normal(ks[3], (out_ch,), jnp.float32),
        "w2": 0.1 * jax.random.normal(ks[4], (3, 3, out_ch, out_ch), jnp.float32),
        "b2": 0.05 * jax.random.normal(ks[5], (out_ch,), jnp.float32),
        "gamma2": 1.0 + 0.1 * jax.random.normal(ks[6], (out_ch,), jnp.float32),
        "beta2": 0.05 * jax.random.normal(ks[7], (out_ch,), jnp.float32),
    }


if __name__ == "__main__":
    N, in_ch, out_ch, H, W = 2, 4, 8, 16, 16
    key = jax.random.PRNGKey(0)
    kx, kp = jax.random.split(key)
    x = jax.random.normal(kx, (N, in_ch, H, W), jnp.float32)
    params = make_params(kp, in_ch, out_ch)

    fwd = jax.jit(conv_block_forward)
    out = jax.block_until_ready(fwd(x, params))

    ref = conv_block_reference(x, params)
    assert out.shape == (N, out_ch, H, W), out.shape
    max_diff = float(jnp.max(jnp.abs(out - ref)))
    # bf16 MXU operands + bf16 HBM intermediates (per perf review) give a
    # slightly looser numerical match vs. the pure-f32 reference.
    tol = 2e-3 if CONV_DTYPE == jnp.float32 else 3e-2
    assert max_diff < tol, max_diff
    print("KERNEL_OK")
</pallas_src>

<mosaic_0001>
module attributes {stable_mosaic.version = 11 : i64} {
  func.func @_conv3x3_kernel(%arg0: i32, %arg1: memref<1x16x16x128xbf16, #tpu.memory_space<vmem>>, %arg2: memref<3x3x128x128xbf16, #tpu.memory_space<vmem>>, %arg3: memref<1x128xf32, #tpu.memory_space<vmem>>, %arg4: memref<1x128xf32, #tpu.memory_space<vmem>>, %arg5: memref<1x16x16x128xbf16, #tpu.memory_space<vmem>>, %arg6: memref<8x128xf32, #tpu.memory_space<vmem>>, %arg7: memref<8x128xf32, #tpu.memory_space<vmem>>, %arg8: memref<1x18x18x128xbf16, #tpu.memory_space<vmem>>) attributes {dimension_semantics = [#tpu.dimension_semantics<parallel>], iteration_bounds = array<i64: 2>, scalar_prefetch = 0 : i64, scratch_operands = 1 : i64, tpu.core_type = #tpu.core_type<tc>, window_params = [{transform_indices = @transform_0, window_bounds = array<i64: 1, 16, 16, 128>}, {pipeline_mode = #tpu.pipeline_mode<synchronous>, transform_indices = @transform_1, window_bounds = array<i64: 3, 3, 128, 128>}, {pipeline_mode = #tpu.pipeline_mode<synchronous>, transform_indices = @transform_2, window_bounds = array<i64: 1, 128>}, {pipeline_mode = #tpu.pipeline_mode<synchronous>, transform_indices = @transform_3, window_bounds = array<i64: 1, 128>}, {transform_indices = @transform_4, window_bounds = array<i64: 1, 16, 16, 128>}, {transform_indices = @transform_5, window_bounds = array<i64: 8, 128>}, {transform_indices = @transform_6, window_bounds = array<i64: 8, 128>}]} {
    %c0 = arith.constant 0 : index
    %c0_0 = arith.constant 0 : index
    %c0_1 = arith.constant 0 : index
    %c0_2 = arith.constant 0 : index
    %0 = vector.load %arg1[%c0, %c0_0, %c0_1, %c0_2] : memref<1x16x16x128xbf16, #tpu.memory_space<vmem>>, vector<1x16x16x128xbf16>
    %cst = arith.constant 0.000000e+00 : bf16
    %1 = vector.broadcast %cst : bf16 to vector<1x1x18x128xbf16>
    %c0_3 = arith.constant 0 : index
    %c0_4 = arith.constant 0 : index
    %c0_5 = arith.constant 0 : index
    %c0_6 = arith.constant 0 : index
    %2 = vector.load %arg8[%c0_3, %c0_4, %c0_5, %c0_6] : memref<1x18x18x128xbf16, #tpu.memory_space<vmem>>, vector<1x1x18x128xbf16>
    tpu.vector_store %arg8[%c0_3, %c0_4, %c0_5, %c0_6], %1 {strides = array<i32>} : memref<1x18x18x128xbf16, #tpu.memory_space<vmem>>, vector<1x1x18x128xbf16>,
    %cst_7 = arith.constant 0.000000e+00 : bf16
    %3 = vector.broadcast %cst_7 : bf16 to vector<1x1x18x128xbf16>
    %c0_8 = arith.constant 0 : index
    %c17 = arith.constant 17 : index
    %c0_9 = arith.constant 0 : index
    %c0_10 = arith.constant 0 : index
    %4 = vector.load %arg8[%c0_8, %c17, %c0_9, %c0_10] : memref<1x18x18x128xbf16, #tpu.memory_space<vmem>>, vector<1x1x18x128xbf16>
    tpu.vector_store %arg8[%c0_8, %c17, %c0_9, %c0_10], %3 {strides = array<i32>} : memref<1x18x18x128xbf16, #tpu.memory_space<vmem>>, vector<1x1x18x128xbf16>,
    %cst_11 = arith.constant 0.000000e+00 : bf16
    %5 = vector.broadcast %cst_11 : bf16 to vector<1x16x1x128xbf16>
    %c0_12 = arith.constant 0 : index
    %c1 = arith.constant 1 : index
    %c0_13 = arith.constant 0 : index
    %c0_14 = arith.constant 0 : index
    %6 = vector.load %arg8[%c0_12, %c1, %c0_13, %c0_14] : memref<1x18x18x128xbf16, #tpu.memory_space<vmem>>, vector<1x16x1x128xbf16>
    tpu.vector_store %arg8[%c0_12, %c1, %c0_13, %c0_14], %5 {strides = array<i32>} : memref<1x18x18x128xbf16, #tpu.memory_space<vmem>>, vector<1x16x1x128xbf16>,
    %cst_15 = arith.constant 0.000000e+00 : bf16
    %7 = vector.broadcast %cst_15 : bf16 to vector<1x16x1x128xbf16>
    %c0_16 = arith.constant 0 : index
    %c1_17 = arith.constant 1 : index
    %c17_18 = arith.constant 17 : index
    %c0_19 = arith.constant 0 : index
    %8 = vector.load %arg8[%c0_16, %c1_17, %c17_18, %c0_19] : memref<1x18x18x128xbf16, #tpu.memory_space<vmem>>, vector<1x16x1x128xbf16>
    tpu.vector_store %arg8[%c0_16, %c1_17, %c17_18, %c0_19], %7 {strides = array<i32>} : memref<1x18x18x128xbf16, #tpu.memory_space<vmem>>, vector<1x16x1x128xbf16>,
    %c0_20 = arith.constant 0 : index
    %c1_21 = arith.constant 1 : index
    %c1_22 = arith.constant 1 : index
    %c0_23 = arith.constant 0 : index
    %9 = vector.load %arg8[%c0_20, %c1_21, %c1_22, %c0_23] : memref<1x18x18x128xbf16, #tpu.memory_space<vmem>>, vector<1x16x16x128xbf16>
    tpu.vector_store %arg8[%c0_20, %c1_21, %c1_22, %c0_23], %0 {strides = array<i32>} : memref<1x18x18x128xbf16, #tpu.memory_space<vmem>>, vector<1x16x16x128xbf16>,
    %c0_24 = arith.constant 0 : index
    %c0_25 = arith.constant 0 : index
    %c0_26 = arith.constant 0 : index
    %c0_27 = arith.constant 0 : index
    %10 = vector.load %arg8[%c0_24, %c0_25, %c0_26, %c0_27] : memref<1x18x18x128xbf16, #tpu.memory_space<vmem>>, vector<1x16x16x128xbf16>
    %11 = vector.shape_cast %10 : vector<1x16x16x128xbf16> to vector<256x128xbf16>
    %c0_28 = arith.constant 0 : index
    %c0_29 = arith.constant 0 : index
    %c0_30 = arith.constant 0 : index
    %c0_31 = arith.constant 0 : index
    %12 = vector.load %arg2[%c0_28, %c0_29, %c0_30, %c0_31] : memref<3x3x128x128xbf16, #tpu.memory_space<vmem>>, vector<1x1x128x128xbf16>
    %13 = vector.shape_cast %12 : vector<1x1x128x128xbf16> to vector<128x128xbf16>
    %cst_32 = arith.constant dense<0.000000e+00> : vector<256x128xf32>
    %14 = tpu.matmul %11, %13, %cst_32 {dimension_numbers = #tpu.dot_dimension_numbers<[1], [0], [0], [1], [0, 0, 1, 1], [], []>} : vector<256x128xbf16>, vector<128x128xbf16>, vector<256x128xf32> -> vector<256x128xf32>
    %c0_33 = arith.constant 0 : index
    %c0_34 = arith.constant 0 : index
    %c1_35 = arith.constant 1 : index
    %c0_36 = arith.constant 0 : index
    %15 = vector.load %arg8[%c0_33, %c0_34, %c1_35, %c0_36] : memref<1x18x18x128xbf16, #tpu.memory_space<vmem>>, vector<1x16x16x128xbf16>
    %16 = vector.shape_cast %15 : vector<1x16x16x128xbf16> to vector<256x128xbf16>
    %c0_37 = arith.constant 0 : index
    %c1_38 = arith.constant 1 : index
    %c0_39 = arith.constant 0 : index
    %c0_40 = arith.constant 0 : index
    %17 = vector.load %arg2[%c0_37, %c1_38, %c0_39, %c0_40] : memref<3x3x128x128xbf16, #tpu.memory_space<vmem>>, vector<1x1x128x128xbf16>
    %18 = vector.shape_cast %17 : vector<1x1x128x128xbf16> to vector<128x128xbf16>
    %cst_41 = arith.constant dense<0.000000e+00> : vector<256x128xf32>
    %19 = tpu.matmul %16, %18, %cst_41 {dimension_numbers = #tpu.dot_dimension_numbers<[1], [0], [0], [1], [0, 0, 1, 1], [], []>} : vector<256x128xbf16>, vector<128x128xbf16>, vector<256x128xf32> -> vector<256x128xf32>
    %20 = arith.addf %14, %19 : vector<256x128xf32>
    %c0_42 = arith.constant 0 : index
    %c0_43 = arith.constant 0 : index
    %c2 = arith.constant 2 : index
    %c0_44 = arith.constant 0 : index
    %21 = vector.load %arg8[%c0_42, %c0_43, %c2, %c0_44] : memref<1x18x18x128xbf16, #tpu.memory_space<vmem>>, vector<1x16x16x128xbf16>
    %22 = vector.shape_cast %21 : vector<1x16x16x128xbf16> to vector<256x128xbf16>
    %c0_45 = arith.constant 0 : index
    %c2_46 = arith.constant 2 : index
    %c0_47 = arith.constant 0 : index
    %c0_48 = arith.constant 0 : index
    %23 = vector.load %arg2[%c0_45, %c2_46, %c0_47, %c0_48] : memref<3x3x128x128xbf16, #tpu.memory_space<vmem>>, vector<1x1x128x128xbf16>
    %24 = vector.shape_cast %23 : vector<1x1x128x128xbf16> to vector<128x128xbf16>
    %cst_49 = arith.constant dense<0.000000e+00> : vector<256x128xf32>
    %25 = tpu.matmul %22, %24, %cst_49 {dimension_numbers = #tpu.dot_dimension_numbers<[1], [0], [0], [1], [0, 0, 1, 1], [], []>} : vector<256x128xbf16>, vector<128x128xbf16>, vector<256x128xf32> -> vector<256x128xf32>
    %26 = arith.addf %20, %25 : vector<256x128xf32>
    %c0_50 = arith.constant 0 : index
    %c1_51 = arith.constant 1 : index
    %c0_52 = arith.constant 0 : index
    %c0_53 = arith.constant 0 : index
    %27 = vector.load %arg8[%c0_50, %c1_51, %c0_52, %c0_53] : memref<1x18x18x128xbf16, #tpu.memory_space<vmem>>, vector<1x16x16x128xbf16>
    %28 = vector.shape_cast %27 : vector<1x16x16x128xbf16> to vector<256x128xbf16>
    %c1_54 = arith.constant 1 : index
    %c0_55 = arith.constant 0 : index
    %c0_56 = arith.constant 0 : index
    %c0_57 = arith.constant 0 : index
    %29 = vector.load %arg2[%c1_54, %c0_55, %c0_56, %c0_57] : memref<3x3x128x128xbf16, #tpu.memory_space<vmem>>, vector<1x1x128x128xbf16>
    %30 = vector.shape_cast %29 : vector<1x1x128x128xbf16> to vector<128x128xbf16>
    %cst_58 = arith.constant dense<0.000000e+00> : vector<256x128xf32>
    %31 = tpu.matmul %28, %30, %cst_58 {dimension_numbers = #tpu.dot_dimension_numbers<[1], [0], [0], [1], [0, 0, 1, 1], [], []>} : vector<256x128xbf16>, vector<128x128xbf16>, vector<256x128xf32> -> vector<256x128xf32>
    %32 = arith.addf %26, %31 : vector<256x128xf32>
    %c0_59 = arith.constant 0 : index
    %c1_60 = arith.constant 1 : index
    %c1_61 = arith.constant 1 : index
    %c0_62 = arith.constant 0 : index
    %33 = vector.load %arg8[%c0_59, %c1_60, %c1_61, %c0_62] : memref<1x18x18x128xbf16, #tpu.memory_space<vmem>>, vector<1x16x16x128xbf16>
    %34 = vector.shape_cast %33 : vector<1x16x16x128xbf16> to vector<256x128xbf16>
    %c1_63 = arith.constant 1 : index
    %c1_64 = arith.constant 1 : index
    %c0_65 = arith.constant 0 : index
    %c0_66 = arith.constant 0 : index
    %35 = vector.load %arg2[%c1_63, %c1_64, %c0_65, %c0_66] : memref<3x3x128x128xbf16, #tpu.memory_space<vmem>>, vector<1x1x128x128xbf16>
    %36 = vector.shape_cast %35 : vector<1x1x128x128xbf16> to vector<128x128xbf16>
    %cst_67 = arith.constant dense<0.000000e+00> : vector<256x128xf32>
    %37 = tpu.matmul %34, %36, %cst_67 {dimension_numbers = #tpu.dot_dimension_numbers<[1], [0], [0], [1], [0, 0, 1, 1], [], []>} : vector<256x128xbf16>, vector<128x128xbf16>, vector<256x128xf32> -> vector<256x128xf32>
    %38 = arith.addf %32, %37 : vector<256x128xf32>
    %c0_68 = arith.constant 0 : index
    %c1_69 = arith.constant 1 : index
    %c2_70 = arith.constant 2 : index
    %c0_71 = arith.constant 0 : index
    %39 = vector.load %arg8[%c0_68, %c1_69, %c2_70, %c0_71] : memref<1x18x18x128xbf16, #tpu.memory_space<vmem>>, vector<1x16x16x128xbf16>
    %40 = vector.shape_cast %39 : vector<1x16x16x128xbf16> to vector<256x128xbf16>
    %c1_72 = arith.constant 1 : index
    %c2_73 = arith.constant 2 : index
    %c0_74 = arith.constant 0 : index
    %c0_75 = arith.constant 0 : index
    %41 = vector.load %arg2[%c1_72, %c2_73, %c0_74, %c0_75] : memref<3x3x128x128xbf16, #tpu.memory_space<vmem>>, vector<1x1x128x128xbf16>
    %42 = vector.shape_cast %41 : vector<1x1x128x128xbf16> to vector<128x128xbf16>
    %cst_76 = arith.constant dense<0.000000e+00> : vector<256x128xf32>
    %43 = tpu.matmul %40, %42, %cst_76 {dimension_numbers = #tpu.dot_dimension_numbers<[1], [0], [0], [1], [0, 0, 1, 1], [], []>} : vector<256x128xbf16>, vector<128x128xbf16>, vector<256x128xf32> -> vector<256x128xf32>
    %44 = arith.addf %38, %43 : vector<256x128xf32>
    %c0_77 = arith.constant 0 : index
    %c2_78 = arith.constant 2 : index
    %c0_79 = arith.constant 0 : index
    %c0_80 = arith.constant 0 : index
    %45 = vector.load %arg8[%c0_77, %c2_78, %c0_79, %c0_80] : memref<1x18x18x128xbf16, #tpu.memory_space<vmem>>, vector<1x16x16x128xbf16>
    %46 = vector.shape_cast %45 : vector<1x16x16x128xbf16> to vector<256x128xbf16>
    %c2_81 = arith.constant 2 : index
    %c0_82 = arith.constant 0 : index
    %c0_83 = arith.constant 0 : index
    %c0_84 = arith.constant 0 : index
    %47 = vector.load %arg2[%c2_81, %c0_82, %c0_83, %c0_84] : memref<3x3x128x128xbf16, #tpu.memory_space<vmem>>, vector<1x1x128x128xbf16>
    %48 = vector.shape_cast %47 : vector<1x1x128x128xbf16> to vector<128x128xbf16>
    %cst_85 = arith.constant dense<0.000000e+00> : vector<256x128xf32>
    %49 = tpu.matmul %46, %48, %cst_85 {dimension_numbers = #tpu.dot_dimension_numbers<[1], [0], [0], [1], [0, 0, 1, 1], [], []>} : vector<256x128xbf16>, vector<128x128xbf16>, vector<256x128xf32> -> vector<256x128xf32>
    %50 = arith.addf %44, %49 : vector<256x128xf32>
    %c0_86 = arith.constant 0 : index
    %c2_87 = arith.constant 2 : index
    %c1_88 = arith.constant 1 : index
    %c0_89 = arith.constant 0 : index
    %51 = vector.load %arg8[%c0_86, %c2_87, %c1_88, %c0_89] : memref<1x18x18x128xbf16, #tpu.memory_space<vmem>>, vector<1x16x16x128xbf16>
    %52 = vector.shape_cast %51 : vector<1x16x16x128xbf16> to vector<256x128xbf16>
    %c2_90 = arith.constant 2 : index
    %c1_91 = arith.constant 1 : index
    %c0_92 = arith.constant 0 : index
    %c0_93 = arith.constant 0 : index
    %53 = vector.load %arg2[%c2_90, %c1_91, %c0_92, %c0_93] : memref<3x3x128x128xbf16, #tpu.memory_space<vmem>>, vector<1x1x128x128xbf16>
    %54 = vector.shape_cast %53 : vector<1x1x128x128xbf16> to vector<128x128xbf16>
    %cst_94 = arith.constant dense<0.000000e+00> : vector<256x128xf32>
    %55 = tpu.matmul %52, %54, %cst_94 {dimension_numbers = #tpu.dot_dimension_numbers<[1], [0], [0], [1], [0, 0, 1, 1], [], []>} : vector<256x128xbf16>, vector<128x128xbf16>, vector<256x128xf32> -> vector<256x128xf32>
    %56 = arith.addf %50, %55 : vector<256x128xf32>
    %c0_95 = arith.constant 0 : index
    %c2_96 = arith.constant 2 : index
    %c2_97 = arith.constant 2 : index
    %c0_98 = arith.constant 0 : index
    %57 = vector.load %arg8[%c0_95, %c2_96, %c2_97, %c0_98] : memref<1x18x18x128xbf16, #tpu.memory_space<vmem>>, vector<1x16x16x128xbf16>
    %58 = vector.shape_cast %57 : vector<1x16x16x128xbf16> to vector<256x128xbf16>
    %c2_99 = arith.constant 2 : index
    %c2_100 = arith.constant 2 : index
    %c0_101 = arith.constant 0 : index
    %c0_102 = arith.constant 0 : index
    %59 = vector.load %arg2[%c2_99, %c2_100, %c0_101, %c0_102] : memref<3x3x128x128xbf16, #tpu.memory_space<vmem>>, vector<1x1x128x128xbf16>
    %60 = vector.shape_cast %59 : vector<1x1x128x128xbf16> to vector<128x128xbf16>
    %cst_103 = arith.constant dense<0.000000e+00> : vector<256x128xf32>
    %61 = tpu.matmul %58, %60, %cst_103 {dimension_numbers = #tpu.dot_dimension_numbers<[1], [0], [0], [1], [0, 0, 1, 1], [], []>} : vector<256x128xbf16>, vector<128x128xbf16>, vector<256x128xf32> -> vector<256x128xf32>
    %62 = arith.addf %56, %61 : vector<256x128xf32>
    %63 = vector.shape_cast %62 : vector<256x128xf32> to vector<1x16x16x128xf32>
    %64 = arith.truncf %63 : vector<1x16x16x128xf32> to vector<1x16x16x128xbf16>
    %c0_104 = arith.constant 0 : index
    %c0_105 = arith.constant 0 : index
    %c0_106 = arith.constant 0 : index
    %c0_107 = arith.constant 0 : index
    %65 = vector.load %arg5[%c0_104, %c0_105, %c0_106, %c0_107] : memref<1x16x16x128xbf16, #tpu.memory_space<vmem>>, vector<1x16x16x128xbf16>
    tpu.vector_store %arg5[%c0_104, %c0_105, %c0_106, %c0_107], %64 {strides = array<i32>} : memref<1x16x16x128xbf16, #tpu.memory_space<vmem>>, vector<1x16x16x128xbf16>,
    %66 = vector.shape_cast %62 : vector<256x128xf32> to vector<32x8x128xf32>
    %cst_108 = arith.constant dense<0.000000e+00> : vector<8x128xf32>
    %67 = vector.multi_reduction <add>, %66, %cst_108 [0] : vector<32x8x128xf32> to vector<8x128xf32>
    %c0_109 = arith.constant 0 : index
    %c0_110 = arith.constant 0 : index
    %68 = vector.load %arg6[%c0_109, %c0_110] : memref<8x128xf32, #tpu.memory_space<vmem>>, vector<8x128xf32>
    tpu.vector_store %arg6[%c0_109, %c0_110], %67 {strides = array<i32>} : memref<8x128xf32, #tpu.memory_space<vmem>>, vector<8x128xf32>,
    %69 = arith.mulf %66, %66 : vector<32x8x128xf32>
    %cst_111 = arith.constant dense<0.000000e+00> : vector<8x128xf32>
    %70 = vector.multi_reduction <add>, %69, %cst_111 [0] : vector<32x8x128xf32> to vector<8x128xf32>
    %c0_112 = arith.constant 0 : index
    %c0_113 = arith.constant 0 : index
    %71 = vector.load %arg7[%c0_112, %c0_113] : memref<8x128xf32, #tpu.memory_space<vmem>>, vector<8x128xf32>
    tpu.vector_store %arg7[%c0_112, %c0_113], %70 {strides = array<i32>} : memref<8x128xf32, #tpu.memory_space<vmem>>, vector<8x128xf32>,
    return
  }
  func.func @transform_0(%arg0: i32) -> (i32, i32, i32, i32) {
    %c0_i32 = arith.constant 0 : i32
    %c0_i32_0 = arith.constant 0 : i32
    %c0_i32_1 = arith.constant 0 : i32
    %c0_i32_2 = arith.constant 0 : i32
    return %arg0, %c0_i32, %c0_i32_0, %c0_i32_1 : i32, i32, i32, i32
  }
  func.func @transform_1(%arg0: i32) -> (i32, i32, i32, i32) {
    %c0_i32 = arith.constant 0 : i32
    %c0_i32_0 = arith.constant 0 : i32
    %c0_i32_1 = arith.constant 0 : i32
    %c0_i32_2 = arith.constant 0 : i32
    %c0_i32_3 = arith.constant 0 : i32
    return %c0_i32, %c0_i32_0, %c0_i32_1, %c0_i32_2 : i32, i32, i32, i32
  }
  func.func @transform_2(%arg0: i32) -> (i32, i32) {
    %c0_i32 = arith.constant 0 : i32
    %c0_i32_0 = arith.constant 0 : i32
    %c0_i32_1 = arith.constant 0 : i32
    return %c0_i32, %c0_i32_0 : i32, i32
  }
  func.func @transform_3(%arg0: i32) -> (i32, i32) {
    %c0_i32 = arith.constant 0 : i32
    %c0_i32_0 = arith.constant 0 : i32
    %c0_i32_1 = arith.constant 0 : i32
    return %c0_i32, %c0_i32_0 : i32, i32
  }
  func.func @transform_4(%arg0: i32) -> (i32, i32, i32, i32) {
    %c0_i32 = arith.constant 0 : i32
    %c0_i32_0 = arith.constant 0 : i32
    %c0_i32_1 = arith.constant 0 : i32
    %c0_i32_2 = arith.constant 0 : i32
    return %arg0, %c0_i32, %c0_i32_0, %c0_i32_1 : i32, i32, i32, i32
  }
  func.func @transform_5(%arg0: i32) -> (i32, i32) {
    %c0_i32 = arith.constant 0 : i32
    %c0_i32_0 = arith.constant 0 : i32
    return %arg0, %c0_i32 : i32, i32
  }
  func.func @transform_6(%arg0: i32) -> (i32, i32) {
    %c0_i32 = arith.constant 0 : i32
    %c0_i32_0 = arith.constant 0 : i32
    return %arg0, %c0_i32 : i32, i32
  }
}

module attributes {stable_mosaic.version = 11 : i64} {
  func.func @_conv3x3_kernel(%arg0: i32, %arg1: memref<1x16x16x128xbf16, #tpu.memory_space<vmem>>, %arg2: memref<3x3x128x128xbf16, #tpu.memory_space<vmem>>, %arg3: memref<1x128xf32, #tpu.memory_space<vmem>>, %arg4: memref<1x128xf32, #tpu.memory_space<vmem>>, %arg5: memref<1x16x16x128xbf16, #tpu.memory_space<vmem>>, %arg6: memref<8x128xf32, #tpu.memory_space<vmem>>, %arg7: memref<8x128xf32, #tpu.memory_space<vmem>>, %arg8: memref<1x18x18x128xbf16, #tpu.memory_space<vmem>>) attributes {dimension_semantics = [#tpu.dimension_semantics<parallel>], iteration_bounds = array<i64: 2>, scalar_prefetch = 0 : i64, scratch_operands = 1 : i64, tpu.core_type = #tpu.core_type<tc>, window_params = [{transform_indices = @transform_0, window_bounds = array<i64: 1, 16, 16, 128>}, {pipeline_mode = #tpu.pipeline_mode<synchronous>, transform_indices = @transform_1, window_bounds = array<i64: 3, 3, 128, 128>}, {pipeline_mode = #tpu.pipeline_mode<synchronous>, transform_indices = @transform_2, window_bounds = array<i64: 1, 128>}, {pipeline_mode = #tpu.pipeline_mode<synchronous>, transform_indices = @transform_3, window_bounds = array<i64: 1, 128>}, {transform_indices = @transform_4, window_bounds = array<i64: 1, 16, 16, 128>}, {transform_indices = @transform_5, window_bounds = array<i64: 8, 128>}, {transform_indices = @transform_6, window_bounds = array<i64: 8, 128>}]} {
    %c0 = arith.constant 0 : index
    %c0_0 = arith.constant 0 : index
    %c0_1 = arith.constant 0 : index
    %c0_2 = arith.constant 0 : index
    %0 = vector.load %arg1[%c0, %c0_0, %c0_1, %c0_2] : memref<1x16x16x128xbf16, #tpu.memory_space<vmem>>, vector<1x16x16x128xbf16>
    %c0_3 = arith.constant 0 : index
    %c0_4 = arith.constant 0 : index
    %1 = vector.load %arg3[%c0_3, %c0_4] : memref<1x128xf32, #tpu.memory_space<vmem>>, vector<1x128xf32>
    %2 = vector.shape_cast %1 : vector<1x128xf32> to vector<1x1x1x128xf32>
    %c0_5 = arith.constant 0 : index
    %c0_6 = arith.constant 0 : index
    %3 = vector.load %arg4[%c0_5, %c0_6] : memref<1x128xf32, #tpu.memory_space<vmem>>, vector<1x128xf32>
    %4 = vector.shape_cast %3 : vector<1x128xf32> to vector<1x1x1x128xf32>
    %5 = arith.extf %0 : vector<1x16x16x128xbf16> to vector<1x16x16x128xf32>
    %6 = vector.broadcast %2 : vector<1x1x1x128xf32> to vector<1x16x16x128xf32>
    %7 = arith.mulf %5, %6 : vector<1x16x16x128xf32>
    %8 = vector.broadcast %4 : vector<1x1x1x128xf32> to vector<1x16x16x128xf32>
    %9 = arith.addf %7, %8 : vector<1x16x16x128xf32>
    %cst = arith.constant 0.000000e+00 : f32
    %10 = vector.broadcast %cst : f32 to vector<1x16x16x128xf32>
    %11 = arith.maximumf %9, %10 : vector<1x16x16x128xf32>
    %12 = arith.truncf %11 : vector<1x16x16x128xf32> to vector<1x16x16x128xbf16>
    %cst_7 = arith.constant 0.000000e+00 : bf16
    %13 = vector.broadcast %cst_7 : bf16 to vector<1x1x18x128xbf16>
    %c0_8 = arith.constant 0 : index
    %c0_9 = arith.constant 0 : index
    %c0_10 = arith.constant 0 : index
    %c0_11 = arith.constant 0 : index
    %14 = vector.load %arg8[%c0_8, %c0_9, %c0_10, %c0_11] : memref<1x18x18x128xbf16, #tpu.memory_space<vmem>>, vector<1x1x18x128xbf16>
    tpu.vector_store %arg8[%c0_8, %c0_9, %c0_10, %c0_11], %13 {strides = array<i32>} : memref<1x18x18x128xbf16, #tpu.memory_space<vmem>>, vector<1x1x18x128xbf16>,
    %cst_12 = arith.constant 0.000000e+00 : bf16
    %15 = vector.broadcast %cst_12 : bf16 to vector<1x1x18x128xbf16>
    %c0_13 = arith.constant 0 : index
    %c17 = arith.constant 17 : index
    %c0_14 = arith.constant 0 : index
    %c0_15 = arith.constant 0 : index
    %16 = vector.load %arg8[%c0_13, %c17, %c0_14, %c0_15] : memref<1x18x18x128xbf16, #tpu.memory_space<vmem>>, vector<1x1x18x128xbf16>
    tpu.vector_store %arg8[%c0_13, %c17, %c0_14, %c0_15], %15 {strides = array<i32>} : memref<1x18x18x128xbf16, #tpu.memory_space<vmem>>, vector<1x1x18x128xbf16>,
    %cst_16 = arith.constant 0.000000e+00 : bf16
    %17 = vector.broadcast %cst_16 : bf16 to vector<1x16x1x128xbf16>
    %c0_17 = arith.constant 0 : index
    %c1 = arith.constant 1 : index
    %c0_18 = arith.constant 0 : index
    %c0_19 = arith.constant 0 : index
    %18 = vector.load %arg8[%c0_17, %c1, %c0_18, %c0_19] : memref<1x18x18x128xbf16, #tpu.memory_space<vmem>>, vector<1x16x1x128xbf16>
    tpu.vector_store %arg8[%c0_17, %c1, %c0_18, %c0_19], %17 {strides = array<i32>} : memref<1x18x18x128xbf16, #tpu.memory_space<vmem>>, vector<1x16x1x128xbf16>,
    %cst_20 = arith.constant 0.000000e+00 : bf16
    %19 = vector.broadcast %cst_20 : bf16 to vector<1x16x1x128xbf16>
    %c0_21 = arith.constant 0 : index
    %c1_22 = arith.constant 1 : index
    %c17_23 = arith.constant 17 : index
    %c0_24 = arith.constant 0 : index
    %20 = vector.load %arg8[%c0_21, %c1_22, %c17_23, %c0_24] : memref<1x18x18x128xbf16, #tpu.memory_space<vmem>>, vector<1x16x1x128xbf16>
    tpu.vector_store %arg8[%c0_21, %c1_22, %c17_23, %c0_24], %19 {strides = array<i32>} : memref<1x18x18x128xbf16, #tpu.memory_space<vmem>>, vector<1x16x1x128xbf16>,
    %c0_25 = arith.constant 0 : index
    %c1_26 = arith.constant 1 : index
    %c1_27 = arith.constant 1 : index
    %c0_28 = arith.constant 0 : index
    %21 = vector.load %arg8[%c0_25, %c1_26, %c1_27, %c0_28] : memref<1x18x18x128xbf16, #tpu.memory_space<vmem>>, vector<1x16x16x128xbf16>
    tpu.vector_store %arg8[%c0_25, %c1_26, %c1_27, %c0_28], %12 {strides = array<i32>} : memref<1x18x18x128xbf16, #tpu.memory_space<vmem>>, vector<1x16x16x128xbf16>,
    %c0_29 = arith.constant 0 : index
    %c0_30 = arith.constant 0 : index
    %c0_31 = arith.constant 0 : index
    %c0_32 = arith.constant 0 : index
    %22 = vector.load %arg8[%c0_29, %c0_30, %c0_31, %c0_32] : memref<1x18x18x128xbf16, #tpu.memory_space<vmem>>, vector<1x16x16x128xbf16>
    %23 = vector.shape_cast %22 : vector<1x16x16x128xbf16> to vector<256x128xbf16>
    %c0_33 = arith.constant 0 : index
    %c0_34 = arith.constant 0 : index
    %c0_35 = arith.constant 0 : index
    %c0_36 = arith.constant 0 : index
    %24 = vector.load %arg2[%c0_33, %c0_34, %c0_35, %c0_36] : memref<3x3x128x128xbf16, #tpu.memory_space<vmem>>, vector<1x1x128x128xbf16>
    %25 = vector.shape_cast %24 : vector<1x1x128x128xbf16> to vector<128x128xbf16>
    %cst_37 = arith.constant dense<0.000000e+00> : vector<256x128xf32>
    %26 = tpu.matmul %23, %25, %cst_37 {dimension_numbers = #tpu.dot_dimension_numbers<[1], [0], [0], [1], [0, 0, 1, 1], [], []>} : vector<256x128xbf16>, vector<128x128xbf16>, vector<256x128xf32> -> vector<256x128xf32>
    %c0_38 = arith.constant 0 : index
    %c0_39 = arith.constant 0 : index
    %c1_40 = arith.constant 1 : index
    %c0_41 = arith.constant 0 : index
    %27 = vector.load %arg8[%c0_38, %c0_39, %c1_40, %c0_41] : memref<1x18x18x128xbf16, #tpu.memory_space<vmem>>, vector<1x16x16x128xbf16>
    %28 = vector.shape_cast %27 : vector<1x16x16x128xbf16> to vector<256x128xbf16>
    %c0_42 = arith.constant 0 : index
    %c1_43 = arith.constant 1 : index
    %c0_44 = arith.constant 0 : index
    %c0_45 = arith.constant 0 : index
    %29 = vector.load %arg2[%c0_42, %c1_43, %c0_44, %c0_45] : memref<3x3x128x128xbf16, #tpu.memory_space<vmem>>, vector<1x1x128x128xbf16>
    %30 = vector.shape_cast %29 : vector<1x1x128x128xbf16> to vector<128x128xbf16>
    %cst_46 = arith.constant dense<0.000000e+00> : vector<256x128xf32>
    %31 = tpu.matmul %28, %30, %cst_46 {dimension_numbers = #tpu.dot_dimension_numbers<[1], [0], [0], [1], [0, 0, 1, 1], [], []>} : vector<256x128xbf16>, vector<128x128xbf16>, vector<256x128xf32> -> vector<256x128xf32>
    %32 = arith.addf %26, %31 : vector<256x128xf32>
    %c0_47 = arith.constant 0 : index
    %c0_48 = arith.constant 0 : index
    %c2 = arith.constant 2 : index
    %c0_49 = arith.constant 0 : index
    %33 = vector.load %arg8[%c0_47, %c0_48, %c2, %c0_49] : memref<1x18x18x128xbf16, #tpu.memory_space<vmem>>, vector<1x16x16x128xbf16>
    %34 = vector.shape_cast %33 : vector<1x16x16x128xbf16> to vector<256x128xbf16>
    %c0_50 = arith.constant 0 : index
    %c2_51 = arith.constant 2 : index
    %c0_52 = arith.constant 0 : index
    %c0_53 = arith.constant 0 : index
    %35 = vector.load %arg2[%c0_50, %c2_51, %c0_52, %c0_53] : memref<3x3x128x128xbf16, #tpu.memory_space<vmem>>, vector<1x1x128x128xbf16>
    %36 = vector.shape_cast %35 : vector<1x1x128x128xbf16> to vector<128x128xbf16>
    %cst_54 = arith.constant dense<0.000000e+00> : vector<256x128xf32>
    %37 = tpu.matmul %34, %36, %cst_54 {dimension_numbers = #tpu.dot_dimension_numbers<[1], [0], [0], [1], [0, 0, 1, 1], [], []>} : vector<256x128xbf16>, vector<128x128xbf16>, vector<256x128xf32> -> vector<256x128xf32>
    %38 = arith.addf %32, %37 : vector<256x128xf32>
    %c0_55 = arith.constant 0 : index
    %c1_56 = arith.constant 1 : index
    %c0_57 = arith.constant 0 : index
    %c0_58 = arith.constant 0 : index
    %39 = vector.load %arg8[%c0_55, %c1_56, %c0_57, %c0_58] : memref<1x18x18x128xbf16, #tpu.memory_space<vmem>>, vector<1x16x16x128xbf16>
    %40 = vector.shape_cast %39 : vector<1x16x16x128xbf16> to vector<256x128xbf16>
    %c1_59 = arith.constant 1 : index
    %c0_60 = arith.constant 0 : index
    %c0_61 = arith.constant 0 : index
    %c0_62 = arith.constant 0 : index
    %41 = vector.load %arg2[%c1_59, %c0_60, %c0_61, %c0_62] : memref<3x3x128x128xbf16, #tpu.memory_space<vmem>>, vector<1x1x128x128xbf16>
    %42 = vector.shape_cast %41 : vector<1x1x128x128xbf16> to vector<128x128xbf16>
    %cst_63 = arith.constant dense<0.000000e+00> : vector<256x128xf32>
    %43 = tpu.matmul %40, %42, %cst_63 {dimension_numbers = #tpu.dot_dimension_numbers<[1], [0], [0], [1], [0, 0, 1, 1], [], []>} : vector<256x128xbf16>, vector<128x128xbf16>, vector<256x128xf32> -> vector<256x128xf32>
    %44 = arith.addf %38, %43 : vector<256x128xf32>
    %c0_64 = arith.constant 0 : index
    %c1_65 = arith.constant 1 : index
    %c1_66 = arith.constant 1 : index
    %c0_67 = arith.constant 0 : index
    %45 = vector.load %arg8[%c0_64, %c1_65, %c1_66, %c0_67] : memref<1x18x18x128xbf16, #tpu.memory_space<vmem>>, vector<1x16x16x128xbf16>
    %46 = vector.shape_cast %45 : vector<1x16x16x128xbf16> to vector<256x128xbf16>
    %c1_68 = arith.constant 1 : index
    %c1_69 = arith.constant 1 : index
    %c0_70 = arith.constant 0 : index
    %c0_71 = arith.constant 0 : index
    %47 = vector.load %arg2[%c1_68, %c1_69, %c0_70, %c0_71] : memref<3x3x128x128xbf16, #tpu.memory_space<vmem>>, vector<1x1x128x128xbf16>
    %48 = vector.shape_cast %47 : vector<1x1x128x128xbf16> to vector<128x128xbf16>
    %cst_72 = arith.constant dense<0.000000e+00> : vector<256x128xf32>
    %49 = tpu.matmul %46, %48, %cst_72 {dimension_numbers = #tpu.dot_dimension_numbers<[1], [0], [0], [1], [0, 0, 1, 1], [], []>} : vector<256x128xbf16>, vector<128x128xbf16>, vector<256x128xf32> -> vector<256x128xf32>
    %50 = arith.addf %44, %49 : vector<256x128xf32>
    %c0_73 = arith.constant 0 : index
    %c1_74 = arith.constant 1 : index
    %c2_75 = arith.constant 2 : index
    %c0_76 = arith.constant 0 : index
    %51 = vector.load %arg8[%c0_73, %c1_74, %c2_75, %c0_76] : memref<1x18x18x128xbf16, #tpu.memory_space<vmem>>, vector<1x16x16x128xbf16>
    %52 = vector.shape_cast %51 : vector<1x16x16x128xbf16> to vector<256x128xbf16>
    %c1_77 = arith.constant 1 : index
    %c2_78 = arith.constant 2 : index
    %c0_79 = arith.constant 0 : index
    %c0_80 = arith.constant 0 : index
    %53 = vector.load %arg2[%c1_77, %c2_78, %c0_79, %c0_80] : memref<3x3x128x128xbf16, #tpu.memory_space<vmem>>, vector<1x1x128x128xbf16>
    %54 = vector.shape_cast %53 : vector<1x1x128x128xbf16> to vector<128x128xbf16>
    %cst_81 = arith.constant dense<0.000000e+00> : vector<256x128xf32>
    %55 = tpu.matmul %52, %54, %cst_81 {dimension_numbers = #tpu.dot_dimension_numbers<[1], [0], [0], [1], [0, 0, 1, 1], [], []>} : vector<256x128xbf16>, vector<128x128xbf16>, vector<256x128xf32> -> vector<256x128xf32>
    %56 = arith.addf %50, %55 : vector<256x128xf32>
    %c0_82 = arith.constant 0 : index
    %c2_83 = arith.constant 2 : index
    %c0_84 = arith.constant 0 : index
    %c0_85 = arith.constant 0 : index
    %57 = vector.load %arg8[%c0_82, %c2_83, %c0_84, %c0_85] : memref<1x18x18x128xbf16, #tpu.memory_space<vmem>>, vector<1x16x16x128xbf16>
    %58 = vector.shape_cast %57 : vector<1x16x16x128xbf16> to vector<256x128xbf16>
    %c2_86 = arith.constant 2 : index
    %c0_87 = arith.constant 0 : index
    %c0_88 = arith.constant 0 : index
    %c0_89 = arith.constant 0 : index
    %59 = vector.load %arg2[%c2_86, %c0_87, %c0_88, %c0_89] : memref<3x3x128x128xbf16, #tpu.memory_space<vmem>>, vector<1x1x128x128xbf16>
    %60 = vector.shape_cast %59 : vector<1x1x128x128xbf16> to vector<128x128xbf16>
    %cst_90 = arith.constant dense<0.000000e+00> : vector<256x128xf32>
    %61 = tpu.matmul %58, %60, %cst_90 {dimension_numbers = #tpu.dot_dimension_numbers<[1], [0], [0], [1], [0, 0, 1, 1], [], []>} : vector<256x128xbf16>, vector<128x128xbf16>, vector<256x128xf32> -> vector<256x128xf32>
    %62 = arith.addf %56, %61 : vector<256x128xf32>
    %c0_91 = arith.constant 0 : index
    %c2_92 = arith.constant 2 : index
    %c1_93 = arith.constant 1 : index
    %c0_94 = arith.constant 0 : index
    %63 = vector.load %arg8[%c0_91, %c2_92, %c1_93, %c0_94] : memref<1x18x18x128xbf16, #tpu.memory_space<vmem>>, vector<1x16x16x128xbf16>
    %64 = vector.shape_cast %63 : vector<1x16x16x128xbf16> to vector<256x128xbf16>
    %c2_95 = arith.constant 2 : index
    %c1_96 = arith.constant 1 : index
    %c0_97 = arith.constant 0 : index
    %c0_98 = arith.constant 0 : index
    %65 = vector.load %arg2[%c2_95, %c1_96, %c0_97, %c0_98] : memref<3x3x128x128xbf16, #tpu.memory_space<vmem>>, vector<1x1x128x128xbf16>
    %66 = vector.shape_cast %65 : vector<1x1x128x128xbf16> to vector<128x128xbf16>
    %cst_99 = arith.constant dense<0.000000e+00> : vector<256x128xf32>
    %67 = tpu.matmul %64, %66, %cst_99 {dimension_numbers = #tpu.dot_dimension_numbers<[1], [0], [0], [1], [0, 0, 1, 1], [], []>} : vector<256x128xbf16>, vector<128x128xbf16>, vector<256x128xf32> -> vector<256x128xf32>
    %68 = arith.addf %62, %67 : vector<256x128xf32>
    %c0_100 = arith.constant 0 : index
    %c2_101 = arith.constant 2 : index
    %c2_102 = arith.constant 2 : index
    %c0_103 = arith.constant 0 : index
    %69 = vector.load %arg8[%c0_100, %c2_101, %c2_102, %c0_103] : memref<1x18x18x128xbf16, #tpu.memory_space<vmem>>, vector<1x16x16x128xbf16>
    %70 = vector.shape_cast %69 : vector<1x16x16x128xbf16> to vector<256x128xbf16>
    %c2_104 = arith.constant 2 : index
    %c2_105 = arith.constant 2 : index
    %c0_106 = arith.constant 0 : index
    %c0_107 = arith.constant 0 : index
    %71 = vector.load %arg2[%c2_104, %c2_105, %c0_106, %c0_107] : memref<3x3x128x128xbf16, #tpu.memory_space<vmem>>, vector<1x1x128x128xbf16>
    %72 = vector.shape_cast %71 : vector<1x1x128x128xbf16> to vector<128x128xbf16>
    %cst_108 = arith.constant dense<0.000000e+00> : vector<256x128xf32>
    %73 = tpu.matmul %70, %72, %cst_108 {dimension_numbers = #tpu.dot_dimension_numbers<[1], [0], [0], [1], [0, 0, 1, 1], [], []>} : vector<256x128xbf16>, vector<128x128xbf16>, vector<256x128xf32> -> vector<256x128xf32>
    %74 = arith.addf %68, %73 : vector<256x128xf32>
    %75 = vector.shape_cast %74 : vector<256x128xf32> to vector<1x16x16x128xf32>
    %76 = arith.truncf %75 : vector<1x16x16x128xf32> to vector<1x16x16x128xbf16>
    %c0_109 = arith.constant 0 : index
    %c0_110 = arith.constant 0 : index
    %c0_111 = arith.constant 0 : index
    %c0_112 = arith.constant 0 : index
    %77 = vector.load %arg5[%c0_109, %c0_110, %c0_111, %c0_112] : memref<1x16x16x128xbf16, #tpu.memory_space<vmem>>, vector<1x16x16x128xbf16>
    tpu.vector_store %arg5[%c0_109, %c0_110, %c0_111, %c0_112], %76 {strides = array<i32>} : memref<1x16x16x128xbf16, #tpu.memory_space<vmem>>, vector<1x16x16x128xbf16>,
    %78 = vector.shape_cast %74 : vector<256x128xf32> to vector<32x8x128xf32>
    %cst_113 = arith.constant dense<0.000000e+00> : vector<8x128xf32>
    %79 = vector.multi_reduction <add>, %78, %cst_113 [0] : vector<32x8x128xf32> to vector<8x128xf32>
    %c0_114 = arith.constant 0 : index
    %c0_115 = arith.constant 0 : index
    %80 = vector.load %arg6[%c0_114, %c0_115] : memref<8x128xf32, #tpu.memory_space<vmem>>, vector<8x128xf32>
    tpu.vector_store %arg6[%c0_114, %c0_115], %79 {strides = array<i32>} : memref<8x128xf32, #tpu.memory_space<vmem>>, vector<8x128xf32>,
    %81 = arith.mulf %78, %78 : vector<32x8x128xf32>
    %cst_116 = arith.constant dense<0.000000e+00> : vector<8x128xf32>
    %82 = vector.multi_reduction <add>, %81, %cst_116 [0] : vector<32x8x128xf32> to vector<8x128xf32>
    %c0_117 = arith.constant 0 : index
    %c0_118 = arith.constant 0 : index
    %83 = vector.load %arg7[%c0_117, %c0_118] : memref<8x128xf32, #tpu.memory_space<vmem>>, vector<8x128xf32>
    tpu.vector_store %arg7[%c0_117, %c0_118], %82 {strides = array<i32>} : memref<8x128xf32, #tpu.memory_space<vmem>>, vector<8x128xf32>,
    return
  }
  func.func @transform_0(%arg0: i32) -> (i32, i32, i32, i32) {
    %c0_i32 = arith.constant 0 : i32
    %c0_i32_0 = arith.constant 0 : i32
    %c0_i32_1 = arith.constant 0 : i32
    %c0_i32_2 = arith.constant 0 : i32
    return %arg0, %c0_i32, %c0_i32_0, %c0_i32_1 : i32, i32, i32, i32
  }
  func.func @transform_1(%arg0: i32) -> (i32, i32, i32, i32) {
    %c0_i32 = arith.constant 0 : i32
    %c0_i32_0 = arith.constant 0 : i32
    %c0_i32_1 = arith.constant 0 : i32
    %c0_i32_2 = arith.constant 0 : i32
    %c0_i32_3 = arith.constant 0 : i32
    return %c0_i32, %c0_i32_0, %c0_i32_1, %c0_i32_2 : i32, i32, i32, i32
  }
  func.func @transform_2(%arg0: i32) -> (i32, i32) {
    %c0_i32 = arith.constant 0 : i32
    %c0_i32_0 = arith.constant 0 : i32
    %c0_i32_1 = arith.constant 0 : i32
    return %c0_i32, %c0_i32_0 : i32, i32
  }
  func.func @transform_3(%arg0: i32) -> (i32, i32) {
    %c0_i32 = arith.constant 0 : i32
    %c0_i32_0 = arith.constant 0 : i32
    %c0_i32_1 = arith.constant 0 : i32
    return %c0_i32, %c0_i32_0 : i32, i32
  }
  func.func @transform_4(%arg0: i32) -> (i32, i32, i32, i32) {
    %c0_i32 = arith.constant 0 : i32
    %c0_i32_0 = arith.constant 0 : i32
    %c0_i32_1 = arith.constant 0 : i32
    %c0_i32_2 = arith.constant 0 : i32
    return %arg0, %c0_i32, %c0_i32_0, %c0_i32_1 : i32, i32, i32, i32
  }
  func.func @transform_5(%arg0: i32) -> (i32, i32) {
    %c0_i32 = arith.constant 0 : i32
    %c0_i32_0 = arith.constant 0 : i32
    return %arg0, %c0_i32 : i32, i32
  }
  func.func @transform_6(%arg0: i32) -> (i32, i32) {
    %c0_i32 = arith.constant 0 : i32
    %c0_i32_0 = arith.constant 0 : i32
    return %arg0, %c0_i32 : i32, i32
  }
}

module attributes {stable_mosaic.version = 11 : i64} {
  func.func @_bn_relu_slice_kernel(%arg0: i32, %arg1: memref<512x128xbf16, #tpu.memory_space<vmem>>, %arg2: memref<1x128xf32, #tpu.memory_space<vmem>>, %arg3: memref<1x128xf32, #tpu.memory_space<vmem>>, %arg4: memref<512x8xf32, #tpu.memory_space<vmem>>) attributes {dimension_semantics = [#tpu.dimension_semantics<parallel>], iteration_bounds = array<i64: 1>, scalar_prefetch = 0 : i64, scratch_operands = 0 : i64, tpu.core_type = #tpu.core_type<tc>, window_params = [{transform_indices = @transform_0, window_bounds = array<i64: 512, 128>}, {pipeline_mode = #tpu.pipeline_mode<synchronous>, transform_indices = @transform_1, window_bounds = array<i64: 1, 128>}, {pipeline_mode = #tpu.pipeline_mode<synchronous>, transform_indices = @transform_2, window_bounds = array<i64: 1, 128>}, {transform_indices = @transform_3, window_bounds = array<i64: 512, 8>}]} {
    %c0 = arith.constant 0 : index
    %c0_0 = arith.constant 0 : index
    %0 = vector.load %arg1[%c0, %c0_0] : memref<512x128xbf16, #tpu.memory_space<vmem>>, vector<512x128xbf16>
    %1 = arith.extf %0 : vector<512x128xbf16> to vector<512x128xf32>
    %c0_1 = arith.constant 0 : index
    %c0_2 = arith.constant 0 : index
    %2 = vector.load %arg2[%c0_1, %c0_2] : memref<1x128xf32, #tpu.memory_space<vmem>>, vector<1x128xf32>
    %3 = vector.broadcast %2 : vector<1x128xf32> to vector<512x128xf32>
    %4 = arith.mulf %1, %3 : vector<512x128xf32>
    %c0_3 = arith.constant 0 : index
    %c0_4 = arith.constant 0 : index
    %5 = vector.load %arg3[%c0_3, %c0_4] : memref<1x128xf32, #tpu.memory_space<vmem>>, vector<1x128xf32>
    %6 = vector.broadcast %5 : vector<1x128xf32> to vector<512x128xf32>
    %7 = arith.addf %4, %6 : vector<512x128xf32>
    %cst = arith.constant 0.000000e+00 : f32
    %8 = vector.broadcast %cst : f32 to vector<512x128xf32>
    %9 = arith.maximumf %7, %8 : vector<512x128xf32>
    %10 = vector.extract_strided_slice %9 {offsets = [0, 0], sizes = [512, 8], strides = [1, 1]} : vector<512x128xf32> to vector<512x8xf32>
    %c0_5 = arith.constant 0 : index
    %c0_6 = arith.constant 0 : index
    %11 = vector.load %arg4[%c0_5, %c0_6] : memref<512x8xf32, #tpu.memory_space<vmem>>, vector<512x8xf32>
    tpu.vector_store %arg4[%c0_5, %c0_6], %10 {strides = array<i32>} : memref<512x8xf32, #tpu.memory_space<vmem>>, vector<512x8xf32>,
    return
  }
  func.func @transform_0(%arg0: i32) -> (i32, i32) {
    %c0_i32 = arith.constant 0 : i32
    %c0_i32_0 = arith.constant 0 : i32
    return %arg0, %c0_i32 : i32, i32
  }
  func.func @transform_1(%arg0: i32) -> (i32, i32) {
    %c0_i32 = arith.constant 0 : i32
    %c0_i32_0 = arith.constant 0 : i32
    %c0_i32_1 = arith.constant 0 : i32
    return %c0_i32, %c0_i32_0 : i32, i32
  }
  func.func @transform_2(%arg0: i32) -> (i32, i32) {
    %c0_i32 = arith.constant 0 : i32
    %c0_i32_0 = arith.constant 0 : i32
    %c0_i32_1 = arith.constant 0 : i32
    return %c0_i32, %c0_i32_0 : i32, i32
  }
  func.func @transform_3(%arg0: i32) -> (i32, i32) {
    %c0_i32 = arith.constant 0 : i32
    %c0_i32_0 = arith.constant 0 : i32
    return %arg0, %c0_i32 : i32, i32
  }
}

</mosaic_0001>

<llo_original>
// kernel: conv_block_forward.5
$region0: #{conv_block_forward.5}
  #allocation0 [shape = 'u32[]', space=smem, size = 0x4, offset = 0x4, fixed_abs, tag = 'smem constant byte address 0x4 - core index']
  #allocation1 [shape = 'u32[144,128]{1,0:T(1,128)}', space=vmem, size = 0x12000, scoped, tag = 'internal scratch']
  %s0 = inlined_call_operand.vmem [shape: bf16[512,128], index: 0, kind: input, shape index: {}]
  %s1 = inlined_call_operand.vmem [shape: f32[1,128], index: 1, kind: input, shape index: {}]
  %s2 = inlined_call_operand.vmem [shape: f32[1,128], index: 2, kind: input, shape index: {}]
  %s3 = inlined_call_operand.vmem [shape: f32[512,8], index: 3, kind: output, shape index: {}]
  %s4 = sld [smem:[#allocation0]]
  $region22: #{conv_block_forward.5} parent=0
    _
  %s6 = ssub.s32 1, %s4
  %s7 = scalar_select 0, %s6, %s4
  // Predicated region
  $region2: #{conv_block_forward.5} parent=0 // pred_check
    _
  $region3: #{conv_block_forward.5} parent=0 // pred_check_branch
    %9 = sbr.rel (0) target = $region5
  $region4: #{conv_block_forward.5} parent=0 // pred_region
    _
  $region5: #{conv_block_forward.5} parent=0 // pred_fallthru
    _
  // Predicated region
  $region6: #{conv_block_forward.5} parent=0 // pred_check
    _
  $region7: #{conv_block_forward.5} parent=0 // pred_check_branch
    %11 = sbr.rel (0) target = $region9
  $region8: #{conv_block_forward.5} parent=0 // pred_region
    _
  $region9: #{conv_block_forward.5} parent=0 // pred_fallthru
    _
  // Predicated region
  $region10: #{conv_block_forward.5} parent=0 // pred_check
    _
  $region11: #{conv_block_forward.5} parent=0 // pred_check_branch
    %13 = sbr.rel (0) target = $region13
  $region12: #{conv_block_forward.5} parent=0 // pred_region
    _
  $region13: #{conv_block_forward.5} parent=0 // pred_fallthru
    _
  %v14 = vld [vmem:[%s0] sm:$0xf]
  %v15 = vld [vmem:[%s0 + $0x4] sm:$0xf]
  %v16 = vld [vmem:[%s0 + $0x8] sm:$0xf]
  %v17 = vld [vmem:[%s0 + $0xc] sm:$0xf]
  %v18 = vld [vmem:[%s0 + $0x10] sm:$0xf]
  %v19 = vld [vmem:[%s0 + $0x14] sm:$0xf]
  %v20 = vld [vmem:[%s0 + $0x18] sm:$0xf]
  %v21 = vld [vmem:[%s0 + $0x1c] sm:$0xf]
  %v22 = vld [vmem:[%s0 + $0x20] sm:$0xf]
  %v23 = vld [vmem:[%s0 + $0x24] sm:$0xf]
  %v24 = vld [vmem:[%s0 + $0x28] sm:$0xf]
  %v25 = vld [vmem:[%s0 + $0x2c] sm:$0xf]
  %v26 = vld [vmem:[%s0 + $0x30] sm:$0xf]
  %v27 = vld [vmem:[%s0 + $0x34] sm:$0xf]
  %v28 = vld [vmem:[%s0 + $0x38] sm:$0xf]
  %v29 = vld [vmem:[%s0 + $0x3c] sm:$0xf]
  %v30 = vld [vmem:[%s0 + $0x40] sm:$0xf]
  %v31 = vld [vmem:[%s0 + $0x44] sm:$0xf]
  %v32 = vld [vmem:[%s0 + $0x48] sm:$0xf]
  %v33 = vld [vmem:[%s0 + $0x4c] sm:$0xf]
  %v34 = vld [vmem:[%s0 + $0x50] sm:$0xf]
  %v35 = vld [vmem:[%s0 + $0x54] sm:$0xf]
  %v36 = vld [vmem:[%s0 + $0x58] sm:$0xf]
  %v37 = vld [vmem:[%s0 + $0x5c] sm:$0xf]
  %v38 = vld [vmem:[%s0 + $0x60] sm:$0xf]
  %v39 = vld [vmem:[%s0 + $0x64] sm:$0xf]
  %v40 = vld [vmem:[%s0 + $0x68] sm:$0xf]
  %v41 = vld [vmem:[%s0 + $0x6c] sm:$0xf]
  %v42 = vld [vmem:[%s0 + $0x70] sm:$0xf]
  %v43 = vld [vmem:[%s0 + $0x74] sm:$0xf]
  %v44 = vld [vmem:[%s0 + $0x78] sm:$0xf]
  %v45 = vld [vmem:[%s0 + $0x7c] sm:$0xf]
  %v46 = vld [vmem:[%s0 + $0x80] sm:$0xf]
  %v47 = vld [vmem:[%s0 + $0x84] sm:$0xf]
  %v48 = vld [vmem:[%s0 + $0x88] sm:$0xf]
  %v49 = vld [vmem:[%s0 + $0x8c] sm:$0xf]
  %v50 = vld [vmem:[%s0 + $0x90] sm:$0xf]
  %v51 = vld [vmem:[%s0 + $0x94] sm:$0xf]
  %v52 = vld [vmem:[%s0 + $0x98] sm:$0xf]
  %v53 = vld [vmem:[%s0 + $0x9c] sm:$0xf]
  %v54 = vld [vmem:[%s0 + $0xa0] sm:$0xf]
  %v55 = vld [vmem:[%s0 + $0xa4] sm:$0xf]
  %v56 = vld [vmem:[%s0 + $0xa8] sm:$0xf]
  %v57 = vld [vmem:[%s0 + $0xac] sm:$0xf]
  %v58 = vld [vmem:[%s0 + $0xb0] sm:$0xf]
  %v59 = vld [vmem:[%s0 + $0xb4] sm:$0xf]
  %v60 = vld [vmem:[%s0 + $0xb8] sm:$0xf]
  %v61 = vld [vmem:[%s0 + $0xbc] sm:$0xf]
  %v62 = vld [vmem:[%s0 + $0xc0] sm:$0xf]
  %v63 = vld [vmem:[%s0 + $0xc4] sm:$0xf]
  %v64 = vld [vmem:[%s0 + $0xc8] sm:$0xf]
  %v65 = vld [vmem:[%s0 + $0xcc] sm:$0xf]
  %v66 = vld [vmem:[%s0 + $0xd0] sm:$0xf]
  %v67 = vld [vmem:[%s0 + $0xd4] sm:$0xf]
  %v68 = vld [vmem:[%s0 + $0xd8] sm:$0xf]
  %v69 = vld [vmem:[%s0 + $0xdc] sm:$0xf]
  %v70 = vld [vmem:[%s0 + $0xe0] sm:$0xf]
  %v71 = vld [vmem:[%s0 + $0xe4] sm:$0xf]
  %v72 = vld [vmem:[%s0 + $0xe8] sm:$0xf]
  %v73 = vld [vmem:[%s0 + $0xec] sm:$0xf]
  %v74 = vld [vmem:[%s0 + $0xf0] sm:$0xf]
  %v75 = vld [vmem:[%s0 + $0xf4] sm:$0xf]
  %v76 = vld [vmem:[%s0 + $0xf8] sm:$0xf]
  %v77 = vld [vmem:[%s0 + $0xfc] sm:$0xf]
  %v78 = vunpack.c.l.bf16 %v14
  %v79 = vunpack.c.l.bf16 %v15
  %v80 = vunpack.c.l.bf16 %v16
  %v81 = vunpack.c.l.bf16 %v17
  %v82 = vunpack.c.l.bf16 %v18
  %v83 = vunpack.c.l.bf16 %v19
  %v84 = vunpack.c.l.bf16 %v20
  %v85 = vunpack.c.l.bf16 %v21
  %v86 = vunpack.c.l.bf16 %v22
  %v87 = vunpack.c.l.bf16 %v23
  %v88 = vunpack.c.l.bf16 %v24
  %v89 = vunpack.c.l.bf16 %v25
  %v90 = vunpack.c.l.bf16 %v26
  %v91 = vunpack.c.l.bf16 %v27
  %v92 = vunpack.c.l.bf16 %v28
  %v93 = vunpack.c.l.bf16 %v29
  %v94 = vunpack.c.l.bf16 %v30
  %v95 = vunpack.c.l.bf16 %v31
  %v96 = vunpack.c.l.bf16 %v32
  %v97 = vunpack.c.l.bf16 %v33
  %v98 = vunpack.c.l.bf16 %v34
  %v99 = vunpack.c.l.bf16 %v35
  %v100 = vunpack.c.l.bf16 %v36
  %v101 = vunpack.c.l.bf16 %v37
  %v102 = vunpack.c.l.bf16 %v38
  %v103 = vunpack.c.l.bf16 %v39
  %v104 = vunpack.c.l.bf16 %v40
  %v105 = vunpack.c.l.bf16 %v41
  %v106 = vunpack.c.l.bf16 %v42
  %v107 = vunpack.c.l.bf16 %v43
  %v108 = vunpack.c.l.bf16 %v44
  %v109 = vunpack.c.l.bf16 %v45
  %v110 = vunpack.c.l.bf16 %v46
  %v111 = vunpack.c.l.bf16 %v47
  %v112 = vunpack.c.l.bf16 %v48
  %v113 = vunpack.c.l.bf16 %v49
  %v114 = vunpack.c.l.bf16 %v50
  %v115 = vunpack.c.l.bf16 %v51
  %v116 = vunpack.c.l.bf16 %v52
  %v117 = vunpack.c.l.bf16 %v53
  %v118 = vunpack.c.l.bf16 %v54
  %v119 = vunpack.c.l.bf16 %v55
  %v120 = vunpack.c.l.bf16 %v56
  %v121 = vunpack.c.l.bf16 %v57
  %v122 = vunpack.c.l.bf16 %v58
  %v123 = vunpack.c.l.bf16 %v59
  %v124 = vunpack.c.l.bf16 %v60
  %v125 = vunpack.c.l.bf16 %v61
  %v126 = vunpack.c.l.bf16 %v62
  %v127 = vunpack.c.l.bf16 %v63
  %v128 = vunpack.c.l.bf16 %v64
  %v129 = vunpack.c.l.bf16 %v65
  %v130 = vunpack.c.l.bf16 %v66
  %v131 = vunpack.c.l.bf16 %v67
  %v132 = vunpack.c.l.bf16 %v68
  %v133 = vunpack.c.l.bf16 %v69
  %v134 = vunpack.c.l.bf16 %v70
  %v135 = vunpack.c.l.bf16 %v71
  %v136 = vunpack.c.l.bf16 %v72
  %v137 = vunpack.c.l.bf16 %v73
  %v138 = vunpack.c.l.bf16 %v74
  %v139 = vunpack.c.l.bf16 %v75
  %v140 = vunpack.c.l.bf16 %v76
  %v141 = vunpack.c.l.bf16 %v77
  %v142 = vld [vmem:[%s1] sm:$0x1]
  %v144 = vlaneseq
  %v145 = vshrl.u32 %v144, 7
  %v146 = vsub.s32 0, %v145
  %v147 = vrot.slane %v142, %v146
  %v149 = vmul.f32 %v78, %v147
  %v150 = vmul.f32 %v79, %v147
  %v151 = vmul.f32 %v80, %v147
  %v152 = vmul.f32 %v81, %v147
  %v153 = vmul.f32 %v82, %v147
  %v154 = vmul.f32 %v83, %v147
  %v155 = vmul.f32 %v84, %v147
  %v156 = vmul.f32 %v85, %v147
  %v157 = vmul.f32 %v86, %v147
  %v158 = vmul.f32 %v87, %v147
  %v159 = vmul.f32 %v88, %v147
  %v160 = vmul.f32 %v89, %v147
  %v161 = vmul.f32 %v90, %v147
  %v162 = vmul.f32 %v91, %v147
  %v163 = vmul.f32 %v92, %v147
  %v164 = vmul.f32 %v93, %v147
  %v165 = vmul.f32 %v94, %v147
  %v166 = vmul.f32 %v95, %v147
  %v167 = vmul.f32 %v96, %v147
  %v168 = vmul.f32 %v97, %v147
  %v169 = vmul.f32 %v98, %v147
  %v170 = vmul.f32 %v99, %v147
  %v171 = vmul.f32 %v100, %v147
  %v172 = vmul.f32 %v101, %v147
  %v173 = vmul.f32 %v102, %v147
  %v174 = vmul.f32 %v103, %v147
  %v175 = vmul.f32 %v104, %v147
  %v176 = vmul.f32 %v105, %v147
  %v177 = vmul.f32 %v106, %v147
  %v178 = vmul.f32 %v107, %v147
  %v179 = vmul.f32 %v108, %v147
  %v180 = vmul.f32 %v109, %v147
  %v181 = vmul.f32 %v110, %v147
  %v182 = vmul.f32 %v111, %v147
  %v183 = vmul.f32 %v112, %v147
  %v184 = vmul.f32 %v113, %v147
  %v185 = vmul.f32 %v114, %v147
  %v186 = vmul.f32 %v115, %v147
  %v187 = vmul.f32 %v116, %v147
  %v188 = vmul.f32 %v117, %v147
  %v189 = vmul.f32 %v118, %v147
  %v190 = vmul.f32 %v119, %v147
  %v191 = vmul.f32 %v120, %v147
  %v192 = vmul.f32 %v121, %v147
  %v193 = vmul.f32 %v122, %v147
  %v194 = vmul.f32 %v123, %v147
  %v195 = vmul.f32 %v124, %v147
  %v196 = vmul.f32 %v125, %v147
  %v197 = vmul.f32 %v126, %v147
  %v198 = vmul.f32 %v127, %v147
  %v199 = vmul.f32 %v128, %v147
  %v200 = vmul.f32 %v129, %v147
  %v201 = vmul.f32 %v130, %v147
  %v202 = vmul.f32 %v131, %v147
  %v203 = vmul.f32 %v132, %v147
  %v204 = vmul.f32 %v133, %v147
  %v205 = vmul.f32 %v134, %v147
  %v206 = vmul.f32 %v135, %v147
  %v207 = vmul.f32 %v136, %v147
  %v208 = vmul.f32 %v137, %v147
  %v209 = vmul.f32 %v138, %v147
  %v210 = vmul.f32 %v139, %v147
  %v211 = vmul.f32 %v140, %v147
  %v212 = vmul.f32 %v141, %v147
  %v213 = vld [vmem:[%s2] sm:$0x1]
  %v215 = vlaneseq
  %v216 = vshrl.u32 %v215, 7
  %v217 = vsub.s32 0, %v216
  %v218 = vrot.slane %v213, %v217
  %v220 = vadd.f32 %v149, %v218
  %v221 = vadd.f32 %v150, %v218
  %v222 = vadd.f32 %v151, %v218
  %v223 = vadd.f32 %v152, %v218
  %v224 = vadd.f32 %v153, %v218
  %v225 = vadd.f32 %v154, %v218
  %v226 = vadd.f32 %v155, %v218
  %v227 = vadd.f32 %v156, %v218
  %v228 = vadd.f32 %v157, %v218
  %v229 = vadd.f32 %v158, %v218
  %v230 = vadd.f32 %v159, %v218
  %v231 = vadd.f32 %v160, %v218
  %v232 = vadd.f32 %v161, %v218
  %v233 = vadd.f32 %v162, %v218
  %v234 = vadd.f32 %v163, %v218
  %v235 = vadd.f32 %v164, %v218
  %v236 = vadd.f32 %v165, %v218
  %v237 = vadd.f32 %v166, %v218
  %v238 = vadd.f32 %v167, %v218
  %v239 = vadd.f32 %v168, %v218
  %v240 = vadd.f32 %v169, %v218
  %v241 = vadd.f32 %v170, %v218
  %v242 = vadd.f32 %v171, %v218
  %v243 = vadd.f32 %v172, %v218
  %v244 = vadd.f32 %v173, %v218
  %v245 = vadd.f32 %v174, %v218
  %v246 = vadd.f32 %v175, %v218
  %v247 = vadd.f32 %v176, %v218
  %v248 = vadd.f32 %v177, %v218
  %v249 = vadd.f32 %v178, %v218
  %v250 = vadd.f32 %v179, %v218
  %v251 = vadd.f32 %v180, %v218
  %v252 = vadd.f32 %v181, %v218
  %v253 = vadd.f32 %v182, %v218
  %v254 = vadd.f32 %v183, %v218
  %v255 = vadd.f32 %v184, %v218
  %v256 = vadd.f32 %v185, %v218
  %v257 = vadd.f32 %v186, %v218
  %v258 = vadd.f32 %v187, %v218
  %v259 = vadd.f32 %v188, %v218
  %v260 = vadd.f32 %v189, %v218
  %v261 = vadd.f32 %v190, %v218
  %v262 = vadd.f32 %v191, %v218
  %v263 = vadd.f32 %v192, %v218
  %v264 = vadd.f32 %v193, %v218
  %v265 = vadd.f32 %v194, %v218
  %v266 = vadd.f32 %v195, %v218
  %v267 = vadd.f32 %v196, %v218
  %v268 = vadd.f32 %v197, %v218
  %v269 = vadd.f32 %v198, %v218
  %v270 = vadd.f32 %v199, %v218
  %v271 = vadd.f32 %v200, %v218
  %v272 = vadd.f32 %v201, %v218
  %v273 = vadd.f32 %v202, %v218
  %v274 = vadd.f32 %v203, %v218
  %v275 = vadd.f32 %v204, %v218
  %v276 = vadd.f32 %v205, %v218
  %v277 = vadd.f32 %v206, %v218
  %v278 = vadd.f32 %v207, %v218
  %v279 = vadd.f32 %v208, %v218
  %v280 = vadd.f32 %v209, %v218
  %v281 = vadd.f32 %v210, %v218
  %v282 = vadd.f32 %v211, %v218
  %v283 = vadd.f32 %v212, %v218
  %v284 = vmax.f32 %v220, 0.0
  %v285 = vmax.f32 %v221, 0.0
  %v286 = vmax.f32 %v222, 0.0
  %v287 = vmax.f32 %v223, 0.0
  %v288 = vmax.f32 %v224, 0.0
  %v289 = vmax.f32 %v225, 0.0
  %v290 = vmax.f32 %v226, 0.0
  %v291 = vmax.f32 %v227, 0.0
  %v292 = vmax.f32 %v228, 0.0
  %v293 = vmax.f32 %v229, 0.0
  %v294 = vmax.f32 %v230, 0.0
  %v295 = vmax.f32 %v231, 0.0
  %v296 = vmax.f32 %v232, 0.0
  %v297 = vmax.f32 %v233, 0.0
  %v298 = vmax.f32 %v234, 0.0
  %v299 = vmax.f32 %v235, 0.0
  %v300 = vmax.f32 %v236, 0.0
  %v301 = vmax.f32 %v237, 0.0
  %v302 = vmax.f32 %v238, 0.0
  %v303 = vmax.f32 %v239, 0.0
  %v304 = vmax.f32 %v240, 0.0
  %v305 = vmax.f32 %v241, 0.0
  %v306 = vmax.f32 %v242, 0.0
  %v307 = vmax.f32 %v243, 0.0
  %v308 = vmax.f32 %v244, 0.0
  %v309 = vmax.f32 %v245, 0.0
  %v310 = vmax.f32 %v246, 0.0
  %v311 = vmax.f32 %v247, 0.0
  %v312 = vmax.f32 %v248, 0.0
  %v313 = vmax.f32 %v249, 0.0
  %v314 = vmax.f32 %v250, 0.0
  %v315 = vmax.f32 %v251, 0.0
  %v316 = vmax.f32 %v252, 0.0
  %v317 = vmax.f32 %v253, 0.0
  %v318 = vmax.f32 %v254, 0.0
  %v319 = vmax.f32 %v255, 0.0
  %v320 = vmax.f32 %v256, 0.0
  %v321 = vmax.f32 %v257, 0.0
  %v322 = vmax.f32 %v258, 0.0
  %v323 = vmax.f32 %v259, 0.0
  %v324 = vmax.f32 %v260, 0.0
  %v325 = vmax.f32 %v261, 0.0
  %v326 = vmax.f32 %v262, 0.0
  %v327 = vmax.f32 %v263, 0.0
  %v328 = vmax.f32 %v264, 0.0
  %v329 = vmax.f32 %v265, 0.0
  %v330 = vmax.f32 %v266, 0.0
  %v331 = vmax.f32 %v267, 0.0
  %v332 = vmax.f32 %v268, 0.0
  %v333 = vmax.f32 %v269, 0.0
  %v334 = vmax.f32 %v270, 0.0
  %v335 = vmax.f32 %v271, 0.0
  %v336 = vmax.f32 %v272, 0.0
  %v337 = vmax.f32 %v273, 0.0
  %v338 = vmax.f32 %v274, 0.0
  %v339 = vmax.f32 %v275, 0.0
  %v340 = vmax.f32 %v276, 0.0
  %v341 = vmax.f32 %v277, 0.0
  %v342 = vmax.f32 %v278, 0.0
  %v343 = vmax.f32 %v279, 0.0
  %v344 = vmax.f32 %v280, 0.0
  %v345 = vmax.f32 %v281, 0.0
  %v346 = vmax.f32 %v282, 0.0
  %v347 = vmax.f32 %v283, 0.0
  %vm348 = vcmask 64512
  %349 = vst.msk [vmem:[%s3] sm:$0xff] %vm348, %v284
  %350 = vst.msk [vmem:[%s3 + $0x8] sm:$0xff] %vm348, %v285
  %351 = vst.msk [vmem:[%s3 + $0x10] sm:$0xff] %vm348, %v286
  %352 = vst.msk [vmem:[%s3 + $0x18] sm:$0xff] %vm348, %v287
  %353 = vst.msk [vmem:[%s3 + $0x20] sm:$0xff] %vm348, %v288
  %354 = vst.msk [vmem:[%s3 + $0x28] sm:$0xff] %vm348, %v289
  %355 = vst.msk [vmem:[%s3 + $0x30] sm:$0xff] %vm348, %v290
  %356 = vst.msk [vmem:[%s3 + $0x38] sm:$0xff] %vm348, %v291
  %357 = vst.msk [vmem:[%s3 + $0x40] sm:$0xff] %vm348, %v292
  %358 = vst.msk [vmem:[%s3 + $0x48] sm:$0xff] %vm348, %v293
  %359 = vst.msk [vmem:[%s3 + $0x50] sm:$0xff] %vm348, %v294
  %360 = vst.msk [vmem:[%s3 + $0x58] sm:$0xff] %vm348, %v295
  %361 = vst.msk [vmem:[%s3 + $0x60] sm:$0xff] %vm348, %v296
  %362 = vst.msk [vmem:[%s3 + $0x68] sm:$0xff] %vm348, %v297
  %363 = vst.msk [vmem:[%s3 + $0x70] sm:$0xff] %vm348, %v298
  %364 = vst.msk [vmem:[%s3 + $0x78] sm:$0xff] %vm348, %v299
  %365 = vst.msk [vmem:[%s3 + $0x80] sm:$0xff] %vm348, %v300
  %366 = vst.msk [vmem:[%s3 + $0x88] sm:$0xff] %vm348, %v301
  %367 = vst.msk [vmem:[%s3 + $0x90] sm:$0xff] %vm348, %v302
  %368 = vst.msk [vmem:[%s3 + $0x98] sm:$0xff] %vm348, %v303
  %369 = vst.msk [vmem:[%s3 + $0xa0] sm:$0xff] %vm348, %v304
  %370 = vst.msk [vmem:[%s3 + $0xa8] sm:$0xff] %vm348, %v305
  %371 = vst.msk [vmem:[%s3 + $0xb0] sm:$0xff] %vm348, %v306
  %372 = vst.msk [vmem:[%s3 + $0xb8] sm:$0xff] %vm348, %v307
  %373 = vst.msk [vmem:[%s3 + $0xc0] sm:$0xff] %vm348, %v308
  %374 = vst.msk [vmem:[%s3 + $0xc8] sm:$0xff] %vm348, %v309
  %375 = vst.msk [vmem:[%s3 + $0xd0] sm:$0xff] %vm348, %v310
  %376 = vst.msk [vmem:[%s3 + $0xd8] sm:$0xff] %vm348, %v311
  %377 = vst.msk [vmem:[%s3 + $0xe0] sm:$0xff] %vm348, %v312
  %378 = vst.msk [vmem:[%s3 + $0xe8] sm:$0xff] %vm348, %v313
  %379 = vst.msk [vmem:[%s3 + $0xf0] sm:$0xff] %vm348, %v314
  %380 = vst.msk [vmem:[%s3 + $0xf8] sm:$0xff] %vm348, %v315
  %381 = vst.msk [vmem:[%s3 + $0x100] sm:$0xff] %vm348, %v316
  %382 = vst.msk [vmem:[%s3 + $0x108] sm:$0xff] %vm348, %v317
  %383 = vst.msk [vmem:[%s3 + $0x110] sm:$0xff] %vm348, %v318
  %384 = vst.msk [vmem:[%s3 + $0x118] sm:$0xff] %vm348, %v319
  %385 = vst.msk [vmem:[%s3 + $0x120] sm:$0xff] %vm348, %v320
  %386 = vst.msk [vmem:[%s3 + $0x128] sm:$0xff] %vm348, %v321
  %387 = vst.msk [vmem:[%s3 + $0x130] sm:$0xff] %vm348, %v322
  %388 = vst.msk [vmem:[%s3 + $0x138] sm:$0xff] %vm348, %v323
  %389 = vst.msk [vmem:[%s3 + $0x140] sm:$0xff] %vm348, %v324
  %390 = vst.msk [vmem:[%s3 + $0x148] sm:$0xff] %vm348, %v325
  %391 = vst.msk [vmem:[%s3 + $0x150] sm:$0xff] %vm348, %v326
  %392 = vst.msk [vmem:[%s3 + $0x158] sm:$0xff] %vm348, %v327
  %393 = vst.msk [vmem:[%s3 + $0x160] sm:$0xff] %vm348, %v328
  %394 = vst.msk [vmem:[%s3 + $0x168] sm:$0xff] %vm348, %v329
  %395 = vst.msk [vmem:[%s3 + $0x170] sm:$0xff] %vm348, %v330
  %396 = vst.msk [vmem:[%s3 + $0x178] sm:$0xff] %vm348, %v331
  %397 = vst.msk [vmem:[%s3 + $0x180] sm:$0xff] %vm348, %v332
  %398 = vst.msk [vmem:[%s3 + $0x188] sm:$0xff] %vm348, %v333
  %399 = vst.msk [vmem:[%s3 + $0x190] sm:$0xff] %vm348, %v334
  %400 = vst.msk [vmem:[%s3 + $0x198] sm:$0xff] %vm348, %v335
  %401 = vst.msk [vmem:[%s3 + $0x1a0] sm:$0xff] %vm348, %v336
  %402 = vst.msk [vmem:[%s3 + $0x1a8] sm:$0xff] %vm348, %v337
  %403 = vst.msk [vmem:[%s3 + $0x1b0] sm:$0xff] %vm348, %v338
  %404 = vst.msk [vmem:[%s3 + $0x1b8] sm:$0xff] %vm348, %v339
  %405 = vst.msk [vmem:[%s3 + $0x1c0] sm:$0xff] %vm348, %v340
  %406 = vst.msk [vmem:[%s3 + $0x1c8] sm:$0xff] %vm348, %v341
  %407 = vst.msk [vmem:[%s3 + $0x1d0] sm:$0xff] %vm348, %v342
  %408 = vst.msk [vmem:[%s3 + $0x1d8] sm:$0xff] %vm348, %v343
  %409 = vst.msk [vmem:[%s3 + $0x1e0] sm:$0xff] %vm348, %v344
  %410 = vst.msk [vmem:[%s3 + $0x1e8] sm:$0xff] %vm348, %v345
  %411 = vst.msk [vmem:[%s3 + $0x1f0] sm:$0xff] %vm348, %v346
  %412 = vst.msk [vmem:[%s3 + $0x1f8] sm:$0xff] %vm348, %v347
  // Predicated region
  $region14: #{conv_block_forward.5} parent=0 // pred_check
    _
  $region15: #{conv_block_forward.5} parent=0 // pred_check_branch
    %414 = sbr.rel (0) target = $region17
  $region16: #{conv_block_forward.5} parent=0 // pred_region
    _
  $region17: #{conv_block_forward.5} parent=0 // pred_fallthru
    _
  // Predicated region
  $region18: #{conv_block_forward.5} parent=0 // pred_check
    _
  $region19: #{conv_block_forward.5} parent=0 // pred_check_branch
    %416 = sbr.rel (0) target = $region21
  $region20: #{conv_block_forward.5} parent=0 // pred_region
    _
  $region21: #{conv_block_forward.5} parent=0 // pred_fallthru
    _

// kernel: conv_block_forward.3
$region0: #{conv_block_forward.3}
  #allocation0 [shape = 'u32[]', space=smem, size = 0x4, offset = 0x4, fixed_abs, tag = 'smem constant byte address 0x4 - core index']
  #allocation1 [shape = 'u32[144,128]{1,0:T(1,128)}', space=vmem, size = 0x12000, scoped, tag = 'internal scratch']
  #allocation2 [shape = 'bf16[1,18,18,128]{3,2,1,0:T(8,128)(2,1)}', space=vmem, size = 0x1b000, scoped, tag = 'scratch operand']
  %s0 = inlined_call_operand.vmem [shape: bf16[2,16,16,128], index: 0, kind: input, shape index: {}]
  %s1 = inlined_call_operand.vmem [shape: bf16[3,3,128,128], index: 1, kind: input, shape index: {}]
  %s2 = inlined_call_operand.vmem [shape: f32[1,128], index: 2, kind: input, shape index: {}]
  %s3 = inlined_call_operand.vmem [shape: f32[1,128], index: 3, kind: input, shape index: {}]
  %s4 = inlined_call_operand.vmem [shape: bf16[2,16,16,128], index: 4, kind: output, shape index: {0}]
  %s5 = inlined_call_operand.vmem [shape: f32[16,128], index: 5, kind: output, shape index: {1}]
  %s6 = inlined_call_operand.vmem [shape: f32[16,128], index: 6, kind: output, shape index: {2}]
  %7 = xla_tuple %s4, %s5, %s6
  %s8 = sld [smem:[#allocation0]]
  $region65: #{conv_block_forward.3} parent=0
    _
  %s10 = ssub.s32 1, %s8
  %s11 = scalar_select 0, %s10, %s8
  loop: start=0, step=1, limit=4
  $region2: #{conv_block_forward.3} parent=0 // loop_pre_header
    _
  $region3: #{conv_block_forward.3} parent=0 // loop_header
    %s13 = sphi 0, %s17
    %p14 = scmp.ge.s32.totalorder %s13, 4
    %s23 = sphi 0, %s25
    %s26 = sphi 0, %s23
    %s27 = sphi 0, %s26
    %s43 = sphi 0, %s27
    %s47 = sphi 0, %s47
    %s49 = sphi 0, %s47
    %s50 = sphi 0, %s49
    %s64 = sphi 0, %s50
    %s68 = sphi 0, %s68
    %s70 = sphi 0, %s68
    %s71 = sphi 0, %s70
    %s85 = sphi 0, %s71
    %s89 = sphi 0, %s89
    %s91 = sphi 0, %s89
    %s92 = sphi 0, %s91
    %s106 = sphi 0, %s92
    %s112 = sphi 0, %s114
    %s115 = sphi 0, %s112
    %s116 = sphi 0, %s115
    %s132 = sphi 0, %s116
    %s138 = sphi 0, %s140
    %s141 = sphi 0, %s138
    %s142 = sphi 0, %s141
    %s158 = sphi 0, %s142
    %s164 = sphi 0, %s166
    %s167 = sphi 0, %s164
    %s168 = sphi 0, %s167
    %s184 = sphi 0, %s168
  $region4: #{conv_block_forward.3} parent=0 // loop_header_branch
    %16 = sbr.rel (%p14) target = $region8
  $region5: #{conv_block_forward.3} parent=0 // loop_body
    %s18 = ssub.s32 %s13, 1
    %s19 = ssub.s32 %s13, 2
    %s20 = sadd.s32 %s13, 1
    %s21 = ssub.s32 %s13, %s20
    %p22 = scmp.eq.s32.totalorder %s21, 0
    %s24 = sadd.s32 %s23, 1
    %s25 = scalar_select %p22, %s23, %s24
    %p28 = pneg %p22
    %p29 = scmp.eq.s32.totalorder %s13, 1
    %p30 = por %p28, %p29
    %p31 = scmp.ne.s32.totalorder %s23, %s26
    %p32 = scmp.eq.s32.totalorder %s13, 0
    %p33 = por %p31, %p32
    %p34 = scmp.ne.s32.totalorder %s23, %s26
    %p35 = scmp.eq.s32.totalorder %s18, 1
    %p36 = por %p34, %p35
    %p37 = scmp.ne.s32.totalorder %s26, %s27
    %p38 = scmp.eq.s32.totalorder %s18, 0
    %p39 = por %p37, %p38
    %p40 = scmp.ne.s32.totalorder %s26, %s27
    %p41 = scmp.eq.s32.totalorder %s19, 1
    %p42 = por %p40, %p41
    %p44 = scmp.ne.s32.totalorder %s27, %s43
    %p45 = scmp.eq.s32.totalorder %s19, 0
    %p46 = por %p44, %p45
    %s48 = sadd.s32 %s47, 1
    %p51 = scmp.eq.s32.totalorder %s13, 1
    %p52 = scmp.ne.s32.totalorder %s47, %s49
    %p53 = scmp.eq.s32.totalorder %s13, 0
    %p54 = por %p52, %p53
    %p55 = scmp.ne.s32.totalorder %s47, %s49
    %p56 = scmp.eq.s32.totalorder %s18, 1
    %p57 = por %p55, %p56
    %p58 = scmp.ne.s32.totalorder %s49, %s50
    %p59 = scmp.eq.s32.totalorder %s18, 0
    %p60 = por %p58, %p59
    %p61 = scmp.ne.s32.totalorder %s49, %s50
    %p62 = scmp.eq.s32.totalorder %s19, 1
    %p63 = por %p61, %p62
    %p65 = scmp.ne.s32.totalorder %s50, %s64
    %p66 = scmp.eq.s32.totalorder %s19, 0
    %p67 = por %p65, %p66
    %s69 = sadd.s32 %s68, 1
    %p72 = scmp.eq.s32.totalorder %s13, 1
    %p73 = scmp.ne.s32.totalorder %s68, %s70
    %p74 = scmp.eq.s32.totalorder %s13, 0
    %p75 = por %p73, %p74
    %p76 = scmp.ne.s32.totalorder %s68, %s70
    %p77 = scmp.eq.s32.totalorder %s18, 1
    %p78 = por %p76, %p77
    %p79 = scmp.ne.s32.totalorder %s70, %s71
    %p80 = scmp.eq.s32.totalorder %s18, 0
    %p81 = por %p79, %p80
    %p82 = scmp.ne.s32.totalorder %s70, %s71
    %p83 = scmp.eq.s32.totalorder %s19, 1
    %p84 = por %p82, %p83
    %p86 = scmp.ne.s32.totalorder %s71, %s85
    %p87 = scmp.eq.s32.totalorder %s19, 0
    %p88 = por %p86, %p87
    %s90 = sadd.s32 %s89, 1
    %p93 = scmp.eq.s32.totalorder %s13, 1
    %p94 = scmp.ne.s32.totalorder %s89, %s91
    %p95 = scmp.eq.s32.totalorder %s13, 0
    %p96 = por %p94, %p95
    %p97 = scmp.ne.s32.totalorder %s89, %s91
    %p98 = scmp.eq.s32.totalorder %s18, 1
    %p99 = por %p97, %p98
    %p100 = scmp.ne.s32.totalorder %s91, %s92
    %p101 = scmp.eq.s32.totalorder %s18, 0
    %p102 = por %p100, %p101
    %p103 = scmp.ne.s32.totalorder %s91, %s92
    %p104 = scmp.eq.s32.totalorder %s19, 1
    %p105 = por %p103, %p104
    %p107 = scmp.ne.s32.totalorder %s92, %s106
    %p108 = scmp.eq.s32.totalorder %s19, 0
    %p109 = por %p107, %p108
    %s110 = ssub.s32 %s13, %s20
    %p111 = scmp.eq.s32.totalorder %s110, 0
    %s113 = sadd.s32 %s112, 1
    %s114 = scalar_select %p111, %s112, %s113
    %p117 = pneg %p111
    %p118 = scmp.eq.s32.totalorder %s13, 1
    %p119 = por %p117, %p118
    %p120 = scmp.ne.s32.totalorder %s112, %s115
    %p121 = scmp.eq.s32.totalorder %s13, 0
    %p122 = por %p120, %p121
    %p123 = scmp.ne.s32.totalorder %s112, %s115
    %p124 = scmp.eq.s32.totalorder %s18, 1
    %p125 = por %p123, %p124
    %p126 = scmp.ne.s32.totalorder %s115, %s116
    %p127 = scmp.eq.s32.totalorder %s18, 0
    %p128 = por %p126, %p127
    %p129 = scmp.ne.s32.totalorder %s115, %s116
    %p130 = scmp.eq.s32.totalorder %s19, 1
    %p131 = por %p129, %p130
    %p133 = scmp.ne.s32.totalorder %s116, %s132
    %p134 = scmp.eq.s32.totalorder %s19, 0
    %p135 = por %p133, %p134
    %s136 = ssub.s32 %s13, %s20
    %p137 = scmp.eq.s32.totalorder %s136, 0
    %s139 = sadd.s32 %s138, 1
    %s140 = scalar_select %p137, %s138, %s139
    %p143 = pneg %p137
    %p144 = scmp.eq.s32.totalorder %s13, 1
    %p145 = por %p143, %p144
    %p146 = scmp.ne.s32.totalorder %s138, %s141
    %p147 = scmp.eq.s32.totalorder %s13, 0
    %p148 = por %p146, %p147
    %p149 = scmp.ne.s32.totalorder %s138, %s141
    %p150 = scmp.eq.s32.totalorder %s18, 1
    %p151 = por %p149, %p150
    %p152 = scmp.ne.s32.totalorder %s141, %s142
    %p153 = scmp.eq.s32.totalorder %s18, 0
    %p154 = por %p152, %p153
    %p155 = scmp.ne.s32.totalorder %s141, %s142
    %p156 = scmp.eq.s32.totalorder %s19, 1
    %p157 = por %p155, %p156
    %p159 = scmp.ne.s32.totalorder %s142, %s158
    %p160 = scmp.eq.s32.totalorder %s19, 0
    %p161 = por %p159, %p160
    %s162 = ssub.s32 %s13, %s20
    %p163 = scmp.eq.s32.totalorder %s162, 0
    %s165 = sadd.s32 %s164, 1
    %s166 = scalar_select %p163, %s164, %s165
    %p169 = pneg %p163
    %p170 = scmp.eq.s32.totalorder %s13, 1
    %p171 = por %p169, %p170
    %p172 = scmp.ne.s32.totalorder %s164, %s167
    %p173 = scmp.eq.s32.totalorder %s13, 0
    %p174 = por %p172, %p173
    %p175 = scmp.ne.s32.totalorder %s164, %s167
    %p176 = scmp.eq.s32.totalorder %s18, 1
    %p177 = por %p175, %p176
    %p178 = scmp.ne.s32.totalorder %s167, %s168
    %p179 = scmp.eq.s32.totalorder %s18, 0
    %p180 = por %p178, %p179
    %p181 = scmp.ne.s32.totalorder %s167, %s168
    %p182 = scmp.eq.s32.totalorder %s19, 1
    %p183 = por %p181, %p182
    %p185 = scmp.ne.s32.totalorder %s168, %s184
    %p186 = scmp.eq.s32.totalorder %s19, 0
    %p187 = por %p185, %p186
    %p188 = scmp.le.s32.totalorder 1, %s13
    %p189 = scmp.lt.s32.totalorder %s13, 3
    %p190 = pnand %p188, %p189
    %p191 = pneg %p190
    // Predicated region
    $region9: #{conv_block_forward.3} parent=5 // pred_check
      _
    $region10: #{conv_block_forward.3} parent=5 // pred_check_branch
      %193 = sbr.rel (%p190) target = $region12
    $region11: #{conv_block_forward.3} parent=5 // pred_region
      %s194 = ssub.s32 %s13, 1
      // Predicated region
      $region13: #{conv_block_forward.3} parent=11 // pred_check
        %p195 = pneg %p60
      $region14: #{conv_block_forward.3} parent=11 // pred_check_branch
        %197 = sbr.rel (%p195) target = $region16
      $region15: #{conv_block_forward.3} parent=11 // pred_region
        _
      $region16: #{conv_block_forward.3} parent=11 // pred_fallthru
        _
      // Predicated region
      $region17: #{conv_block_forward.3} parent=11 // pred_check
        %p198 = pneg %p81
      $region18: #{conv_block_forward.3} parent=11 // pred_check_branch
        %200 = sbr.rel (%p198) target = $region20
      $region19: #{conv_block_forward.3} parent=11 // pred_region
        _
      $region20: #{conv_block_forward.3} parent=11 // pred_fallthru
        _
      // Predicated region
      $region21: #{conv_block_forward.3} parent=11 // pred_check
        %p201 = pneg %p102
      $region22: #{conv_block_forward.3} parent=11 // pred_check_branch
        %203 = sbr.rel (%p201) target = $region24
      $region23: #{conv_block_forward.3} parent=11 // pred_region
        _
      $region24: #{conv_block_forward.3} parent=11 // pred_fallthru
        _
    $region12: #{conv_block_forward.3} parent=5 // pred_fallthru
      _
    %p204 = scmp.lt.s32.totalorder %s13, 2
    // Predicated region
    $region25: #{conv_block_forward.3} parent=5 // pred_check
      %p205 = pneg %p204
    $region26: #{conv_block_forward.3} parent=5 // pred_check_branch
      %207 = sbr.rel (%p205) target = $region28
    $region27: #{conv_block_forward.3} parent=5 // pred_region
      // Predicated region
      $region29: #{conv_block_forward.3} parent=27 // pred_check
        %p208 = pneg %p33
      $region30: #{conv_block_forward.3} parent=27 // pred_check_branch
        %210 = sbr.rel (%p208) target = $region32
      $region31: #{conv_block_forward.3} parent=27 // pred_region
        %p211 = scmp.lt.s32.totalorder %s13, 1
        %s212 = scalar_select %p211, %s13, 1
        %s213 = smul.addr %s212, 32
        %s214 = smul.addr %s213, 4
        %s215 = scalar_lea.vmem %s0, %s214
      $region32: #{conv_block_forward.3} parent=27 // pred_fallthru
        _
    $region28: #{conv_block_forward.3} parent=5 // pred_fallthru
      _
    %p216 = scmp.le.s32.totalorder 1, %s13
    %p217 = scmp.lt.s32.totalorder %s13, 3
    %p218 = pnand %p216, %p217
    %p219 = pneg %p218
    // Predicated region
    $region33: #{conv_block_forward.3} parent=5 // pred_check
      _
    $region34: #{conv_block_forward.3} parent=5 // pred_check_branch
      %221 = sbr.rel (%p218) target = $region36
    $region35: #{conv_block_forward.3} parent=5 // pred_region
      %s222 = ssub.s32 %s13, 1
      %p223 = scmp.lt.s32.totalorder %s18, 1
      %s224 = scalar_select %p223, %s18, 1
      %s225 = smul.addr %s224, 32
      %s226 = smul.addr %s225, 4
      %s227 = scalar_lea.vmem %s0, %s226
      %p228 = pneg %p39
      %p229 = pneg %p36
      %p230 = pneg %p60
      %p231 = pneg %p57
      %p232 = pneg %p81
      %p233 = pneg %p78
      %p234 = pneg %p102
      %p235 = pneg %p99
      %p236 = pneg %p128
      %p237 = pneg %p125
      %p238 = scmp.lt.s32.totalorder %s18, 1
      %s239 = scalar_select %p238, %s18, 1
      %s240 = smul.addr %s239, 32
      %s241 = smul.addr %s240, 4
      %s242 = scalar_lea.vmem %s4, %s241
      %p243 = pneg %p154
      %p244 = pneg %p151
      %p245 = scmp.lt.s32.totalorder %s18, 1
      %s246 = scalar_select %p245, %s18, 1
      %s247 = smul.addr %s246, 8
      %s248 = scalar_lea.vmem %s5, %s247
      %p249 = pneg %p180
      %p250 = pneg %p177
      %p251 = scmp.lt.s32.totalorder %s18, 1
      %s252 = scalar_select %p251, %s18, 1
      %s253 = smul.addr %s252, 8
      %s254 = scalar_lea.vmem %s6, %s253
      %p255 = scmp.lt.s32.totalorder %s18, 1
      %s256 = scalar_select %p255, %s18, 1
      %s257 = smul.addr %s256, 32
      %s258 = smul.addr %s257, 4
      %s259 = scalar_lea.vmem %s0, %s258
      %p260 = scmp.lt.s32.totalorder %s18, 1
      %s261 = scalar_select %p260, %s18, 1
      %s262 = smul.addr %s261, 32
      %s263 = smul.addr %s262, 4
      %s264 = scalar_lea.vmem %s4, %s263
      %p265 = scmp.lt.s32.totalorder %s18, 1
      %s266 = scalar_select %p265, %s18, 1
      %s267 = smul.addr %s266, 8
      %s268 = scalar_lea.vmem %s5, %s267
      %p269 = scmp.lt.s32.totalorder %s18, 1
      %s270 = scalar_select %p269, %s18, 1
      %s271 = smul.addr %s270, 8
      %s272 = scalar_lea.vmem %s6, %s271
      %v274 = vld [vmem:[%s259] sm:$0xf]
      %v275 = vld [vmem:[%s259 + $0x4] sm:$0xf]
      %v276 = vld [vmem:[%s259 + $0x8] sm:$0xf]
      %v277 = vld [vmem:[%s259 + $0xc] sm:$0xf]
      %v278 = vld [vmem:[%s259 + $0x10] sm:$0xf]
      %v279 = vld [vmem:[%s259 + $0x14] sm:$0xf]
      %v280 = vld [vmem:[%s259 + $0x18] sm:$0xf]
      %v281 = vld [vmem:[%s259 + $0x1c] sm:$0xf]
      %v282 = vld [vmem:[%s259 + $0x20] sm:$0xf]
      %v283 = vld [vmem:[%s259 + $0x24] sm:$0xf]
      %v284 = vld [vmem:[%s259 + $0x28] sm:$0xf]
      %v285 = vld [vmem:[%s259 + $0x2c] sm:$0xf]
      %v286 = vld [vmem:[%s259 + $0x30] sm:$0xf]
      %v287 = vld [vmem:[%s259 + $0x34] sm:$0xf]
      %v288 = vld [vmem:[%s259 + $0x38] sm:$0xf]
      %v289 = vld [vmem:[%s259 + $0x3c] sm:$0xf]
      %v290 = vld [vmem:[%s259 + $0x40] sm:$0xf]
      %v291 = vld [vmem:[%s259 + $0x44] sm:$0xf]
      %v292 = vld [vmem:[%s259 + $0x48] sm:$0xf]
      %v293 = vld [vmem:[%s259 + $0x4c] sm:$0xf]
      %v294 = vld [vmem:[%s259 + $0x50] sm:$0xf]
      %v295 = vld [vmem:[%s259 + $0x54] sm:$0xf]
      %v296 = vld [vmem:[%s259 + $0x58] sm:$0xf]
      %v297 = vld [vmem:[%s259 + $0x5c] sm:$0xf]
      %v298 = vld [vmem:[%s259 + $0x60] sm:$0xf]
      %v299 = vld [vmem:[%s259 + $0x64] sm:$0xf]
      %v300 = vld [vmem:[%s259 + $0x68] sm:$0xf]
      %v301 = vld [vmem:[%s259 + $0x6c] sm:$0xf]
      %v302 = vld [vmem:[%s259 + $0x70] sm:$0xf]
      %v303 = vld [vmem:[%s259 + $0x74] sm:$0xf]
      %v304 = vld [vmem:[%s259 + $0x78] sm:$0xf]
      %v305 = vld [vmem:[%s259 + $0x7c] sm:$0xf]
      %306 = vst [vmem:[#allocation2] sm:$0xf] 0
      %307 = vst [vmem:[#allocation2 + $0x4] sm:$0xf] 0
      %308 = vst [vmem:[#allocation2 + $0x8] sm:$0x1] 0
      %s309 = scalar_lea.vmem [#allocation2], 204
      %310 = vst [vmem:[%s309] sm:$0xf] 0
      %311 = vst [vmem:[%s309 + $0x4] sm:$0xf] 0
      %312 = vst [vmem:[%s309 + $0x8] sm:$0x1] 0
      %s313 = scalar_lea.vmem [#allocation2], 12
      %vm314 = vcmask 1040384
      %vm315 = vsmask.f32 256
      %vm316 = vmand %vm314, %vm315
      %v317 = vld [vmem:[%s313] sm:$0x1]
      %v318 = vsel %vm316, 0, %v317
      %319 = vst [vmem:[%s313] sm:$0x1] %v318
      %v320 = vld [vmem:[%s313 + $0xc] sm:$0x1]
      %v321 = vsel %vm316, 0, %v320
      %322 = vst [vmem:[%s313 + $0xc] sm:$0x1] %v321
      %v323 = vld [vmem:[%s313 + $0x18] sm:$0x1]
      %v324 = vsel %vm316, 0, %v323
      %325 = vst [vmem:[%s313 + $0x18] sm:$0x1] %v324
      %v326 = vld [vmem:[%s313 + $0x24] sm:$0x1]
      %v327 = vsel %vm316, 0, %v326
      %328 = vst [vmem:[%s313 + $0x24] sm:$0x1] %v327
      %v329 = vld [vmem:[%s313 + $0x30] sm:$0x1]
      %v330 = vsel %vm316, 0, %v329
      %331 = vst [vmem:[%s313 + $0x30] sm:$0x1] %v330
      %v332 = vld [vmem:[%s313 + $0x3c] sm:$0x1]
      %v333 = vsel %vm316, 0, %v332
      %334 = vst [vmem:[%s313 + $0x3c] sm:$0x1] %v333
      %v335 = vld [vmem:[%s313 + $0x48] sm:$0x1]
      %v336 = vsel %vm316, 0, %v335
      %337 = vst [vmem:[%s313 + $0x48] sm:$0x1] %v336
      %v338 = vld [vmem:[%s313 + $0x54] sm:$0x1]
      %v339 = vsel %vm316, 0, %v338
      %340 = vst [vmem:[%s313 + $0x54] sm:$0x1] %v339
      %v341 = vld [vmem:[%s313 + $0x60] sm:$0x1]
      %v342 = vsel %vm316, 0, %v341
      %343 = vst [vmem:[%s313 + $0x60] sm:$0x1] %v342
      %v344 = vld [vmem:[%s313 + $0x6c] sm:$0x1]
      %v345 = vsel %vm316, 0, %v344
      %346 = vst [vmem:[%s313 + $0x6c] sm:$0x1] %v345
      %v347 = vld [vmem:[%s313 + $0x78] sm:$0x1]
      %v348 = vsel %vm316, 0, %v347
      %349 = vst [vmem:[%s313 + $0x78] sm:$0x1] %v348
      %v350 = vld [vmem:[%s313 + $0x84] sm:$0x1]
      %v351 = vsel %vm316, 0, %v350
      %352 = vst [vmem:[%s313 + $0x84] sm:$0x1] %v351
      %v353 = vld [vmem:[%s313 + $0x90] sm:$0x1]
      %v354 = vsel %vm316, 0, %v353
      %355 = vst [vmem:[%s313 + $0x90] sm:$0x1] %v354
      %v356 = vld [vmem:[%s313 + $0x9c] sm:$0x1]
      %v357 = vsel %vm316, 0, %v356
      %358 = vst [vmem:[%s313 + $0x9c] sm:$0x1] %v357
      %v359 = vld [vmem:[%s313 + $0xa8] sm:$0x1]
      %v360 = vsel %vm316, 0, %v359
      %361 = vst [vmem:[%s313 + $0xa8] sm:$0x1] %v360
      %v362 = vld [vmem:[%s313 + $0xb4] sm:$0x1]
      %v363 = vsel %vm316, 0, %v362
      %364 = vst [vmem:[%s313 + $0xb4] sm:$0x1] %v363
      %vm365 = vsmask.f32 7938
      %vm366 = vmand %vm314, %vm365
      %v367 = vld [vmem:[%s313 + $0x8] sm:$0x1]
      %v368 = vsel %vm366, 0, %v367
      %369 = vst [vmem:[%s313 + $0x8] sm:$0x1] %v368
      %v370 = vld [vmem:[%s313 + $0x14] sm:$0x1]
      %v371 = vsel %vm366, 0, %v370
      %372 = vst [vmem:[%s313 + $0x14] sm:$0x1] %v371
      %v373 = vld [vmem:[%s313 + $0x20] sm:$0x1]
      %v374 = vsel %vm366, 0, %v373
      %375 = vst [vmem:[%s313 + $0x20] sm:$0x1] %v374
      %v376 = vld [vmem:[%s313 + $0x2c] sm:$0x1]
      %v377 = vsel %vm366, 0, %v376
      %378 = vst [vmem:[%s313 + $0x2c] sm:$0x1] %v377
      %v379 = vld [vmem:[%s313 + $0x38] sm:$0x1]
      %v380 = vsel %vm366, 0, %v379
      %381 = vst [vmem:[%s313 + $0x38] sm:$0x1] %v380
      %v382 = vld [vmem:[%s313 + $0x44] sm:$0x1]
      %v383 = vsel %vm366, 0, %v382
      %384 = vst [vmem:[%s313 + $0x44] sm:$0x1] %v383
      %v385 = vld [vmem:[%s313 + $0x50] sm:$0x1]
      %v386 = vsel %vm366, 0, %v385
      %387 = vst [vmem:[%s313 + $0x50] sm:$0x1] %v386
      %v388 = vld [vmem:[%s313 + $0x5c] sm:$0x1]
      %v389 = vsel %vm366, 0, %v388
      %390 = vst [vmem:[%s313 + $0x5c] sm:$0x1] %v389
      %v391 = vld [vmem:[%s313 + $0x68] sm:$0x1]
      %v392 = vsel %vm366, 0, %v391
      %393 = vst [vmem:[%s313 + $0x68] sm:$0x1] %v392
      %v394 = vld [vmem:[%s313 + $0x74] sm:$0x1]
      %v395 = vsel %vm366, 0, %v394
      %396 = vst [vmem:[%s313 + $0x74] sm:$0x1] %v395
      %v397 = vld [vmem:[%s313 + $0x80] sm:$0x1]
      %v398 = vsel %vm366, 0, %v397
      %399 = vst [vmem:[%s313 + $0x80] sm:$0x1] %v398
      %v400 = vld [vmem:[%s313 + $0x8c] sm:$0x1]
      %v401 = vsel %vm366, 0, %v400
      %402 = vst [vmem:[%s313 + $0x8c] sm:$0x1] %v401
      %v403 = vld [vmem:[%s313 + $0x98] sm:$0x1]
      %v404 = vsel %vm366, 0, %v403
      %405 = vst [vmem:[%s313 + $0x98] sm:$0x1] %v404
      %v406 = vld [vmem:[%s313 + $0xa4] sm:$0x1]
      %v407 = vsel %vm366, 0, %v406
      %408 = vst [vmem:[%s313 + $0xa4] sm:$0x1] %v407
      %v409 = vld [vmem:[%s313 + $0xb0] sm:$0x1]
      %v410 = vsel %vm366, 0, %v409
      %411 = vst [vmem:[%s313 + $0xb0] sm:$0x1] %v410
      %v412 = vld [vmem:[%s313 + $0xbc] sm:$0x1]
      %v413 = vsel %vm366, 0, %v412
      %414 = vst [vmem:[%s313 + $0xbc] sm:$0x1] %v413
      %vm415 = vsmask.f32 4368
      %vm416 = vmor %vm315, %vm415
      %v418 = vshrl.u32 %v274, 16
      %v420 = vrot.slane %v418, 7
      %v421 = vshll.u32 %v274, 16
      %v423 = vor.u32 %v420, %v421
      %v424 = vrot.slane %v420, 4
      %v426 = vshrl.u32 %v275, 16
      %v428 = vrot.slane %v426, 7
      %v429 = vshll.u32 %v275, 16
      %v431 = vor.u32 %v428, %v429
      %v432 = vsel %vm416, %v424, %v431
      %v433 = vrot.slane %v428, 4
      %v435 = vshrl.u32 %v276, 16
      %v437 = vrot.slane %v435, 7
      %v438 = vshll.u32 %v276, 16
      %v440 = vor.u32 %v437, %v438
      %v441 = vrot.slane %v437, 4
      %v443 = vshrl.u32 %v277, 16
      %v445 = vrot.slane %v443, 7
      %v446 = vshll.u32 %v277, 16
      %v448 = vor.u32 %v445, %v446
      %v449 = vsel %vm416, %v441, %v448
      %v450 = vrot.slane %v445, 4
      %v452 = vshrl.u32 %v278, 16
      %v454 = vrot.slane %v452, 7
      %v455 = vshll.u32 %v278, 16
      %v457 = vor.u32 %v454, %v455
      %v458 = vrot.slane %v454, 4
      %v460 = vshrl.u32 %v279, 16
      %v462 = vrot.slane %v460, 7
      %v463 = vshll.u32 %v279, 16
      %v465 = vor.u32 %v462, %v463
      %v466 = vsel %vm416, %v458, %v465
      %v467 = vrot.slane %v462, 4
      %v469 = vshrl.u32 %v280, 16
      %v471 = vrot.slane %v469, 7
      %v472 = vshll.u32 %v280, 16
      %v474 = vor.u32 %v471, %v472
      %v475 = vrot.slane %v471, 4
      %v477 = vshrl.u32 %v281, 16
      %v479 = vrot.slane %v477, 7
      %v480 = vshll.u32 %v281, 16
      %v482 = vor.u32 %v479, %v480
      %v483 = vsel %vm416, %v475, %v482
      %v484 = vrot.slane %v479, 4
      %v486 = vshrl.u32 %v282, 16
      %v488 = vrot.slane %v486, 7
      %v489 = vshll.u32 %v282, 16
      %v491 = vor.u32 %v488, %v489
      %v492 = vrot.slane %v488, 4
      %v494 = vshrl.u32 %v283, 16
      %v496 = vrot.slane %v494, 7
      %v497 = vshll.u32 %v283, 16
      %v499 = vor.u32 %v496, %v497
      %v500 = vsel %vm416, %v492, %v499
      %v501 = vrot.slane %v496, 4
      %v503 = vshrl.u32 %v284, 16
      %v505 = vrot.slane %v503, 7
      %v506 = vshll.u32 %v284, 16
      %v508 = vor.u32 %v505, %v506
      %v509 = vrot.slane %v505, 4
      %v511 = vshrl.u32 %v285, 16
      %v513 = vrot.slane %v511, 7
      %v514 = vshll.u32 %v285, 16
      %v516 = vor.u32 %v513, %v514
      %v517 = vsel %vm416, %v509, %v516
      %v518 = vrot.slane %v513, 4
      %v520 = vshrl.u32 %v286, 16
      %v522 = vrot.slane %v520, 7
      %v523 = vshll.u32 %v286, 16
      %v525 = vor.u32 %v522, %v523
      %v526 = vrot.slane %v522, 4
      %v528 = vshrl.u32 %v287, 16
      %v530 = vrot.slane %v528, 7
      %v531 = vshll.u32 %v287, 16
      %v533 = vor.u32 %v530, %v531
      %v534 = vsel %vm416, %v526, %v533
      %v535 = vrot.slane %v530, 4
      %v537 = vshrl.u32 %v288, 16
      %v539 = vrot.slane %v537, 7
      %v540 = vshll.u32 %v288, 16
      %v542 = vor.u32 %v539, %v540
      %v543 = vrot.slane %v539, 4
      %v545 = vshrl.u32 %v289, 16
      %v547 = vrot.slane %v545, 7
      %v548 = vshll.u32 %v289, 16
      %v550 = vor.u32 %v547, %v548
      %v551 = vsel %vm416, %v543, %v550
      %v552 = vrot.slane %v547, 4
      %v554 = vshrl.u32 %v290, 16
      %v556 = vrot.slane %v554, 7
      %v557 = vshll.u32 %v290, 16
      %v559 = vor.u32 %v556, %v557
      %v560 = vrot.slane %v556, 4
      %v562 = vshrl.u32 %v291, 16
      %v564 = vrot.slane %v562, 7
      %v565 = vshll.u32 %v291, 16
      %v567 = vor.u32 %v564, %v565
      %v568 = vsel %vm416, %v560, %v567
      %v569 = vrot.slane %v564, 4
      %v571 = vshrl.u32 %v292, 16
      %v573 = vrot.slane %v571, 7
      %v574 = vshll.u32 %v292, 16
      %v576 = vor.u32 %v573, %v574
      %v577 = vrot.slane %v573, 4
      %v579 = vshrl.u32 %v293, 16
      %v581 = vrot.slane %v579, 7
      %v582 = vshll.u32 %v293, 16
      %v584 = vor.u32 %v581, %v582
      %v585 = vsel %vm416, %v577, %v584
      %v586 = vrot.slane %v581, 4
      %v588 = vshrl.u32 %v294, 16
      %v590 = vrot.slane %v588, 7
      %v591 = vshll.u32 %v294, 16
      %v593 = vor.u32 %v590, %v591
      %v594 = vrot.slane %v590, 4
      %v596 = vshrl.u32 %v295, 16
      %v598 = vrot.slane %v596, 7
      %v599 = vshll.u32 %v295, 16
      %v601 = vor.u32 %v598, %v599
      %v602 = vsel %vm416, %v594, %v601
      %v603 = vrot.slane %v598, 4
      %v605 = vshrl.u32 %v296, 16
      %v607 = vrot.slane %v605, 7
      %v608 = vshll.u32 %v296, 16
      %v610 = vor.u32 %v607, %v608
      %v611 = vrot.slane %v607, 4
      %v613 = vshrl.u32 %v297, 16
      %v615 = vrot.slane %v613, 7
      %v616 = vshll.u32 %v297, 16
      %v618 = vor.u32 %v615, %v616
      %v619 = vsel %vm416, %v611, %v618
      %v620 = vrot.slane %v615, 4
      %v622 = vshrl.u32 %v298, 16
      %v624 = vrot.slane %v622, 7
      %v625 = vshll.u32 %v298, 16
      %v627 = vor.u32 %v624, %v625
      %v628 = vrot.slane %v624, 4
      %v630 = vshrl.u32 %v299, 16
      %v632 = vrot.slane %v630, 7
      %v633 = vshll.u32 %v299, 16
      %v635 = vor.u32 %v632, %v633
      %v636 = vsel %vm416, %v628, %v635
      %v637 = vrot.slane %v632, 4
      %v639 = vshrl.u32 %v300, 16
      %v641 = vrot.slane %v639, 7
      %v642 = vshll.u32 %v300, 16
      %v644 = vor.u32 %v641, %v642
      %v645 = vrot.slane %v641, 4
      %v647 = vshrl.u32 %v301, 16
      %v649 = vrot.slane %v647, 7
      %v650 = vshll.u32 %v301, 16
      %v652 = vor.u32 %v649, %v650
      %v653 = vsel %vm416, %v645, %v652
      %v654 = vrot.slane %v649, 4
      %v656 = vshrl.u32 %v302, 16
      %v658 = vrot.slane %v656, 7
      %v659 = vshll.u32 %v302, 16
      %v661 = vor.u32 %v658, %v659
      %v662 = vrot.slane %v658, 4
      %v664 = vshrl.u32 %v303, 16
      %v666 = vrot.slane %v664, 7
      %v667 = vshll.u32 %v303, 16
      %v669 = vor.u32 %v666, %v667
      %v670 = vsel %vm416, %v662, %v669
      %v671 = vrot.slane %v666, 4
      %v673 = vshrl.u32 %v304, 16
      %v675 = vrot.slane %v673, 7
      %v676 = vshll.u32 %v304, 16
      %v678 = vor.u32 %v675, %v676
      %v679 = vrot.slane %v675, 4
      %v681 = vshrl.u32 %v305, 16
      %v683 = vrot.slane %v681, 7
      %v684 = vshll.u32 %v305, 16
      %v686 = vor.u32 %v683, %v684
      %v687 = vsel %vm416, %v679, %v686
      %v688 = vrot.slane %v683, 4
      %vm737 = vcmask 1043456
      %vm738 = vmand %vm737, %vm365
      %v739 = vld [vmem:[%s313] sm:$0xf]
      %v740 = vsel %vm738, %v423, %v739
      %741 = vst [vmem:[%s313] sm:$0xf] %v740
      %742 = vst [vmem:[%s313 + $0x4] sm:$0xf] %v432
      %v743 = vld [vmem:[%s313 + $0x8] sm:$0x1]
      %v744 = vsel %vm316, %v433, %v743
      %745 = vst [vmem:[%s313 + $0x8] sm:$0x1] %v744
      %v746 = vld [vmem:[%s313 + $0xc] sm:$0xf]
      %v747 = vsel %vm738, %v440, %v746
      %748 = vst [vmem:[%s313 + $0xc] sm:$0xf] %v747
      %749 = vst [vmem:[%s313 + $0x10] sm:$0xf] %v449
      %v750 = vld [vmem:[%s313 + $0x14] sm:$0x1]
      %v751 = vsel %vm316, %v450, %v750
      %752 = vst [vmem:[%s313 + $0x14] sm:$0x1] %v751
      %v753 = vld [vmem:[%s313 + $0x18] sm:$0xf]
      %v754 = vsel %vm738, %v457, %v753
      %755 = vst [vmem:[%s313 + $0x18] sm:$0xf] %v754
      %756 = vst [vmem:[%s313 + $0x1c] sm:$0xf] %v466
      %v757 = vld [vmem:[%s313 + $0x20] sm:$0x1]
      %v758 = vsel %vm316, %v467, %v757
      %759 = vst [vmem:[%s313 + $0x20] sm:$0x1] %v758
      %v760 = vld [vmem:[%s313 + $0x24] sm:$0xf]
      %v761 = vsel %vm738, %v474, %v760
      %762 = vst [vmem:[%s313 + $0x24] sm:$0xf] %v761
      %763 = vst [vmem:[%s313 + $0x28] sm:$0xf] %v483
      %v764 = vld [vmem:[%s313 + $0x2c] sm:$0x1]
      %v765 = vsel %vm316, %v484, %v764
      %766 = vst [vmem:[%s313 + $0x2c] sm:$0x1] %v765
      %v767 = vld [vmem:[%s313 + $0x30] sm:$0xf]
      %v768 = vsel %vm738, %v491, %v767
      %769 = vst [vmem:[%s313 + $0x30] sm:$0xf] %v768
      %770 = vst [vmem:[%s313 + $0x34] sm:$0xf] %v500
      %v771 = vld [vmem:[%s313 + $0x38] sm:$0x1]
      %v772 = vsel %vm316, %v501, %v771
      %773 = vst [vmem:[%s313 + $0x38] sm:$0x1] %v772
      %v774 = vld [vmem:[%s313 + $0x3c] sm:$0xf]
      %v775 = vsel %vm738, %v508, %v774
      %776 = vst [vmem:[%s313 + $0x3c] sm:$0xf] %v775
      %777 = vst [vmem:[%s313 + $0x40] sm:$0xf] %v517
      %v778 = vld [vmem:[%s313 + $0x44] sm:$0x1]
      %v779 = vsel %vm316, %v518, %v778
      %780 = vst [vmem:[%s313 + $0x44] sm:$0x1] %v779
      %v781 = vld [vmem:[%s313 + $0x48] sm:$0xf]
      %v782 = vsel %vm738, %v525, %v781
      %783 = vst [vmem:[%s313 + $0x48] sm:$0xf] %v782
      %784 = vst [vmem:[%s313 + $0x4c] sm:$0xf] %v534
      %v785 = vld [vmem:[%s313 + $0x50] sm:$0x1]
      %v786 = vsel %vm316, %v535, %v785
      %787 = vst [vmem:[%s313 + $0x50] sm:$0x1] %v786
      %v788 = vld [vmem:[%s313 + $0x54] sm:$0xf]
      %v789 = vsel %vm738, %v542, %v788
      %790 = vst [vmem:[%s313 + $0x54] sm:$0xf] %v789
      %791 = vst [vmem:[%s313 + $0x58] sm:$0xf] %v551
      %v792 = vld [vmem:[%s313 + $0x5c] sm:$0x1]
      %v793 = vsel %vm316, %v552, %v792
      %794 = vst [vmem:[%s313 + $0x5c] sm:$0x1] %v793
      %v795 = vld [vmem:[%s313 + $0x60] sm:$0xf]
      %v796 = vsel %vm738, %v559, %v795
      %797 = vst [vmem:[%s313 + $0x60] sm:$0xf] %v796
      %798 = vst [vmem:[%s313 + $0x64] sm:$0xf] %v568
      %v799 = vld [vmem:[%s313 + $0x68] sm:$0x1]
      %v800 = vsel %vm316, %v569, %v799
      %801 = vst [vmem:[%s313 + $0x68] sm:$0x1] %v800
      %v802 = vld [vmem:[%s313 + $0x6c] sm:$0xf]
      %v803 = vsel %vm738, %v576, %v802
      %804 = vst [vmem:[%s313 + $0x6c] sm:$0xf] %v803
      %805 = vst [vmem:[%s313 + $0x70] sm:$0xf] %v585
      %v806 = vld [vmem:[%s313 + $0x74] sm:$0x1]
      %v807 = vsel %vm316, %v586, %v806
      %808 = vst [vmem:[%s313 + $0x74] sm:$0x1] %v807
      %v809 = vld [vmem:[%s313 + $0x78] sm:$0xf]
      %v810 = vsel %vm738, %v593, %v809
      %811 = vst [vmem:[%s313 + $0x78] sm:$0xf] %v810
      %812 = vst [vmem:[%s313 + $0x7c] sm:$0xf] %v602
      %v813 = vld [vmem:[%s313 + $0x80] sm:$0x1]
      %v814 = vsel %vm316, %v603, %v813
      %815 = vst [vmem:[%s313 + $0x80] sm:$0x1] %v814
      %v816 = vld [vmem:[%s313 + $0x84] sm:$0xf]
      %v817 = vsel %vm738, %v610, %v816
      %818 = vst [vmem:[%s313 + $0x84] sm:$0xf] %v817
      %819 = vst [vmem:[%s313 + $0x88] sm:$0xf] %v619
      %v820 = vld [vmem:[%s313 + $0x8c] sm:$0x1]
      %v821 = vsel %vm316, %v620, %v820
      %822 = vst [vmem:[%s313 + $0x8c] sm:$0x1] %v821
      %v823 = vld [vmem:[%s313 + $0x90] sm:$0xf]
      %v824 = vsel %vm738, %v627, %v823
      %825 = vst [vmem:[%s313 + $0x90] sm:$0xf] %v824
      %826 = vst [vmem:[%s313 + $0x94] sm:$0xf] %v636
      %v827 = vld [vmem:[%s313 + $0x98] sm:$0x1]
      %v828 = vsel %vm316, %v637, %v827
      %829 = vst [vmem:[%s313 + $0x98] sm:$0x1] %v828
      %v830 = vld [vmem:[%s313 + $0x9c] sm:$0xf]
      %v831 = vsel %vm738, %v644, %v830
      %832 = vst [vmem:[%s313 + $0x9c] sm:$0xf] %v831
      %833 = vst [vmem:[%s313 + $0xa0] sm:$0xf] %v653
      %v834 = vld [vmem:[%s313 + $0xa4] sm:$0x1]
      %v835 = vsel %vm316, %v654, %v834
      %836 = vst [vmem:[%s313 + $0xa4] sm:$0x1] %v835
      %v837 = vld [vmem:[%s313 + $0xa8] sm:$0xf]
      %v838 = vsel %vm738, %v661, %v837
      %839 = vst [vmem:[%s313 + $0xa8] sm:$0xf] %v838
      %840 = vst [vmem:[%s313 + $0xac] sm:$0xf] %v670
      %v841 = vld [vmem:[%s313 + $0xb0] sm:$0x1]
      %v842 = vsel %vm316, %v671, %v841
      %843 = vst [vmem:[%s313 + $0xb0] sm:$0x1] %v842
      %v844 = vld [vmem:[%s313 + $0xb4] sm:$0xf]
      %v845 = vsel %vm738, %v678, %v844
      %846 = vst [vmem:[%s313 + $0xb4] sm:$0xf] %v845
      %847 = vst [vmem:[%s313 + $0xb8] sm:$0xf] %v687
      %v848 = vld [vmem:[%s313 + $0xbc] sm:$0x1]
      %v849 = vsel %vm316, %v688, %v848
      %850 = vst [vmem:[%s313 + $0xbc] sm:$0x1] %v849
      %v851 = vld [vmem:[#allocation2] sm:$0xf]
      %v852 = vld [vmem:[#allocation2 + $0x4] sm:$0xf]
      %v853 = vld [vmem:[#allocation2 + $0xc] sm:$0xf]
      %v854 = vld [vmem:[#allocation2 + $0x10] sm:$0xf]
      %v855 = vld [vmem:[#allocation2 + $0x18] sm:$0xf]
      %v856 = vld [vmem:[#allocation2 + $0x1c] sm:$0xf]
      %v857 = vld [vmem:[#allocation2 + $0x24] sm:$0xf]
      %v858 = vld [vmem:[#allocation2 + $0x28] sm:$0xf]
      %v859 = vld [vmem:[#allocation2 + $0x30] sm:$0xf]
      %v860 = vld [vmem:[#allocation2 + $0x34] sm:$0xf]
      %v861 = vld [vmem:[#allocation2 + $0x3c] sm:$0xf]
      %v862 = vld [vmem:[#allocation2 + $0x40] sm:$0xf]
      %v863 = vld [vmem:[#allocation2 + $0x48] sm:$0xf]
      %v864 = vld [vmem:[#allocation2 + $0x4c] sm:$0xf]
      %v865 = vld [vmem:[#allocation2 + $0x54] sm:$0xf]
      %v866 = vld [vmem:[#allocation2 + $0x58] sm:$0xf]
      %v867 = vld [vmem:[#allocation2 + $0x60] sm:$0xf]
      %v868 = vld [vmem:[#allocation2 + $0x64] sm:$0xf]
      %v869 = vld [vmem:[#allocation2 + $0x6c] sm:$0xf]
      %v870 = vld [vmem:[#allocation2 + $0x70] sm:$0xf]
      %v871 = vld [vmem:[#allocation2 + $0x78] sm:$0xf]
      %v872 = vld [vmem:[#allocation2 + $0x7c] sm:$0xf]
      %v873 = vld [vmem:[#allocation2 + $0x84] sm:$0xf]
      %v874 = vld [vmem:[#allocation2 + $0x88] sm:$0xf]
      %v875 = vld [vmem:[#allocation2 + $0x90] sm:$0xf]
      %v876 = vld [vmem:[#allocation2 + $0x94] sm:$0xf]
      %v877 = vld [vmem:[#allocation2 + $0x9c] sm:$0xf]
      %v878 = vld [vmem:[#allocation2 + $0xa0] sm:$0xf]
      %v879 = vld [vmem:[#allocation2 + $0xa8] sm:$0xf]
      %v880 = vld [vmem:[#allocation2 + $0xac] sm:$0xf]
      %v881 = vld [vmem:[#allocation2 + $0xb4] sm:$0xf]
      %v882 = vld [vmem:[#allocation2 + $0xb8] sm:$0xf]
      %v883 = vld [vmem:[%s1] sm:$0xf]
      %v884 = vld [vmem:[%s1 + $0x4] sm:$0xf]
      %v885 = vld [vmem:[%s1 + $0x8] sm:$0xf]
      %v886 = vld [vmem:[%s1 + $0xc] sm:$0xf]
      %v887 = vld [vmem:[%s1 + $0x10] sm:$0xf]
      %v888 = vld [vmem:[%s1 + $0x14] sm:$0xf]
      %v889 = vld [vmem:[%s1 + $0x18] sm:$0xf]
      %v890 = vld [vmem:[%s1 + $0x1c] sm:$0xf]
      %v891 = vld [vmem:[%s1 + $0x20] sm:$0xf]
      %v892 = vld [vmem:[%s1 + $0x24] sm:$0xf]
      %v893 = vld [vmem:[%s1 + $0x28] sm:$0xf]
      %v894 = vld [vmem:[%s1 + $0x2c] sm:$0xf]
      %v895 = vld [vmem:[%s1 + $0x30] sm:$0xf]
      %v896 = vld [vmem:[%s1 + $0x34] sm:$0xf]
      %v897 = vld [vmem:[%s1 + $0x38] sm:$0xf]
      %v898 = vld [vmem:[%s1 + $0x3c] sm:$0xf]
      %v899 = vld [vmem:[#allocation2 + $0x8] sm:$0x1]
      %v900 = vld [vmem:[#allocation2 + $0x14] sm:$0x1]
      %v901 = vld [vmem:[#allocation2 + $0x20] sm:$0x1]
      %v902 = vld [vmem:[#allocation2 + $0x2c] sm:$0x1]
      %v903 = vld [vmem:[#allocation2 + $0x38] sm:$0x1]
      %v904 = vld [vmem:[#allocation2 + $0x44] sm:$0x1]
      %v905 = vld [vmem:[#allocation2 + $0x50] sm:$0x1]
      %v906 = vld [vmem:[#allocation2 + $0x5c] sm:$0x1]
      %v907 = vld [vmem:[#allocation2 + $0x68] sm:$0x1]
      %v908 = vld [vmem:[#allocation2 + $0x74] sm:$0x1]
      %v909 = vld [vmem:[#allocation2 + $0x80] sm:$0x1]
      %v910 = vld [vmem:[#allocation2 + $0x8c] sm:$0x1]
      %v911 = vld [vmem:[#allocation2 + $0x98] sm:$0x1]
      %v912 = vld [vmem:[#allocation2 + $0xa4] sm:$0x1]
      %v913 = vld [vmem:[#allocation2 + $0xb0] sm:$0x1]
      %v914 = vld [vmem:[#allocation2 + $0xbc] sm:$0x1]
      %vm915 = vsmask.f32 3328
      %vm916 = vsmask.f32 7440
      %vm917 = vmor %vm915, %vm916
      %v919 = vshrl.u32 %v851, 16
      %v921 = vrot.slane %v919, 4
      %v922 = vshll.u32 %v851, 16
      %v924 = vrot.slane %v922, 5
      %v925 = vor.u32 %v921, %v924
      %v926 = vrot.slane %v925, 4
      %v928 = vshll.u32 %v852, 16
      %v930 = vrot.slane %v928, 5
      %v931 = vsel %vm917, %v926, %v930
      %v932 = vshrl.u32 %v852, 16
      %v934 = vrot.slane %v932, 4
      %v935 = vor.u32 %v934, %v930
      %v936 = vrot.slane %v935, 4
      %v938 = vshll.u32 %v899, 16
      %v940 = vrot.slane %v938, 5
      %v941 = vsel %vm917, %v936, %v940
      %v943 = vshrl.u32 %v853, 16
      %v945 = vrot.slane %v943, 4
      %v946 = vshll.u32 %v853, 16
      %v948 = vrot.slane %v946, 5
      %v949 = vor.u32 %v945, %v948
      %v950 = vrot.slane %v949, 4
      %v952 = vshll.u32 %v854, 16
      %v954 = vrot.slane %v952, 5
      %v955 = vsel %vm917, %v950, %v954
      %v956 = vshrl.u32 %v854, 16
      %v958 = vrot.slane %v956, 4
      %v959 = vor.u32 %v958, %v954
      %v960 = vrot.slane %v959, 4
      %v962 = vshll.u32 %v900, 16
      %v964 = vrot.slane %v962, 5
      %v965 = vsel %vm917, %v960, %v964
      %v967 = vshrl.u32 %v855, 16
      %v969 = vrot.slane %v967, 4
      %v970 = vshll.u32 %v855, 16
      %v972 = vrot.slane %v970, 5
      %v973 = vor.u32 %v969, %v972
      %v974 = vrot.slane %v973, 4
      %v976 = vshll.u32 %v856, 16
      %v978 = vrot.slane %v976, 5
      %v979 = vsel %vm917, %v974, %v978
      %v980 = vshrl.u32 %v856, 16
      %v982 = vrot.slane %v980, 4
      %v983 = vor.u32 %v982, %v978
      %v984 = vrot.slane %v983, 4
      %v986 = vshll.u32 %v901, 16
      %v988 = vrot.slane %v986, 5
      %v989 = vsel %vm917, %v984, %v988
      %v991 = vshrl.u32 %v857, 16
      %v993 = vrot.slane %v991, 4
      %v994 = vshll.u32 %v857, 16
      %v996 = vrot.slane %v994, 5
      %v997 = vor.u32 %v993, %v996
      %v998 = vrot.slane %v997, 4
      %v1000 = vshll.u32 %v858, 16
      %v1002 = vrot.slane %v1000, 5
      %v1003 = vsel %vm917, %v998, %v1002
      %v1004 = vshrl.u32 %v858, 16
      %v1006 = vrot.slane %v1004, 4
      %v1007 = vor.u32 %v1006, %v1002
      %v1008 = vrot.slane %v1007, 4
      %v1010 = vshll.u32 %v902, 16
      %v1012 = vrot.slane %v1010, 5
      %v1013 = vsel %vm917, %v1008, %v1012
      %v1015 = vshrl.u32 %v859, 16
      %v1017 = vrot.slane %v1015, 4
      %v1018 = vshll.u32 %v859, 16
      %v1020 = vrot.slane %v1018, 5
      %v1021 = vor.u32 %v1017, %v1020
      %v1022 = vrot.slane %v1021, 4
      %v1024 = vshll.u32 %v860, 16
      %v1026 = vrot.slane %v1024, 5
      %v1027 = vsel %vm917, %v1022, %v1026
      %v1028 = vshrl.u32 %v860, 16
      %v1030 = vrot.slane %v1028, 4
      %v1031 = vor.u32 %v1030, %v1026
      %v1032 = vrot.slane %v1031, 4
      %v1034 = vshll.u32 %v903, 16
      %v1036 = vrot.slane %v1034, 5
      %v1037 = vsel %vm917, %v1032, %v1036
      %v1039 = vshrl.u32 %v861, 16
      %v1041 = vrot.slane %v1039, 4
      %v1042 = vshll.u32 %v861, 16
      %v1044 = vrot.slane %v1042, 5
      %v1045 = vor.u32 %v1041, %v1044
      %v1046 = vrot.slane %v1045, 4
      %v1048 = vshll.u32 %v862, 16
      %v1050 = vrot.slane %v1048, 5
      %v1051 = vsel %vm917, %v1046, %v1050
      %v1052 = vshrl.u32 %v862, 16
      %v1054 = vrot.slane %v1052, 4
      %v1055 = vor.u32 %v1054, %v1050
      %v1056 = vrot.slane %v1055, 4
      %v1058 = vshll.u32 %v904, 16
      %v1060 = vrot.slane %v1058, 5
      %v1061 = vsel %vm917, %v1056, %v1060
      %v1063 = vshrl.u32 %v863, 16
      %v1065 = vrot.slane %v1063, 4
      %v1066 = vshll.u32 %v863, 16
      %v1068 = vrot.slane %v1066, 5
      %v1069 = vor.u32 %v1065, %v1068
      %v1070 = vrot.slane %v1069, 4
      %v1072 = vshll.u32 %v864, 16
      %v1074 = vrot.slane %v1072, 5
      %v1075 = vsel %vm917, %v1070, %v1074
      %v1076 = vshrl.u32 %v864, 16
      %v1078 = vrot.slane %v1076, 4
      %v1079 = vor.u32 %v1078, %v1074
      %v1080 = vrot.slane %v1079, 4
      %v1082 = vshll.u32 %v905, 16
      %v1084 = vrot.slane %v1082, 5
      %v1085 = vsel %vm917, %v1080, %v1084
      %v1087 = vshrl.u32 %v865, 16
      %v1089 = vrot.slane %v1087, 4
      %v1090 = vshll.u32 %v865, 16
      %v1092 = vrot.slane %v1090, 5
      %v1093 = vor.u32 %v1089, %v1092
      %v1094 = vrot.slane %v1093, 4
      %v1096 = vshll.u32 %v866, 16
      %v1098 = vrot.slane %v1096, 5
      %v1099 = vsel %vm917, %v1094, %v1098
      %v1100 = vshrl.u32 %v866, 16
      %v1102 = vrot.slane %v1100, 4
      %v1103 = vor.u32 %v1102, %v1098
      %v1104 = vrot.slane %v1103, 4
      %v1106 = vshll.u32 %v906, 16
      %v1108 = vrot.slane %v1106, 5
      %v1109 = vsel %vm917, %v1104, %v1108
      %v1111 = vshrl.u32 %v867, 16
      %v1113 = vrot.slane %v1111, 4
      %v1114 = vshll.u32 %v867, 16
      %v1116 = vrot.slane %v1114, 5
      %v1117 = vor.u32 %v1113, %v1116
      %v1118 = vrot.slane %v1117, 4
      %v1120 = vshll.u32 %v868, 16
      %v1122 = vrot.slane %v1120, 5
      %v1123 = vsel %vm917, %v1118, %v1122
      %v1124 = vshrl.u32 %v868, 16
      %v1126 = vrot.slane %v1124, 4
      %v1127 = vor.u32 %v1126, %v1122
      %v1128 = vrot.slane %v1127, 4
      %v1130 = vshll.u32 %v907, 16
      %v1132 = vrot.slane %v1130, 5
      %v1133 = vsel %vm917, %v1128, %v1132
      %v1135 = vshrl.u32 %v869, 16
      %v1137 = vrot.slane %v1135, 4
      %v1138 = vshll.u32 %v869, 16
      %v1140 = vrot.slane %v1138, 5
      %v1141 = vor.u32 %v1137, %v1140
      %v1142 = vrot.slane %v1141, 4
      %v1144 = vshll.u32 %v870, 16
      %v1146 = vrot.slane %v1144, 5
      %v1147 = vsel %vm917, %v1142, %v1146
      %v1148 = vshrl.u32 %v870, 16
      %v1150 = vrot.slane %v1148, 4
      %v1151 = vor.u32 %v1150, %v1146
      %v1152 = vrot.slane %v1151, 4
      %v1154 = vshll.u32 %v908, 16
      %v1156 = vrot.slane %v1154, 5
      %v1157 = vsel %vm917, %v1152, %v1156
      %v1159 = vshrl.u32 %v871, 16
      %v1161 = vrot.slane %v1159, 4
      %v1162 = vshll.u32 %v871, 16
      %v1164 = vrot.slane %v1162, 5
      %v1165 = vor.u32 %v1161, %v1164
      %v1166 = vrot.slane %v1165, 4
      %v1168 = vshll.u32 %v872, 16
      %v1170 = vrot.slane %v1168, 5
      %v1171 = vsel %vm917, %v1166, %v1170
      %v1172 = vshrl.u32 %v872, 16
      %v1174 = vrot.slane %v1172, 4
      %v1175 = vor.u32 %v1174, %v1170
      %v1176 = vrot.slane %v1175, 4
      %v1178 = vshll.u32 %v909, 16
      %v1180 = vrot.slane %v1178, 5
      %v1181 = vsel %vm917, %v1176, %v1180
      %v1183 = vshrl.u32 %v873, 16
      %v1185 = vrot.slane %v1183, 4
      %v1186 = vshll.u32 %v873, 16
      %v1188 = vrot.slane %v1186, 5
      %v1189 = vor.u32 %v1185, %v1188
      %v1190 = vrot.slane %v1189, 4
      %v1192 = vshll.u32 %v874, 16
      %v1194 = vrot.slane %v1192, 5
      %v1195 = vsel %vm917, %v1190, %v1194
      %v1196 = vshrl.u32 %v874, 16
      %v1198 = vrot.slane %v1196, 4
      %v1199 = vor.u32 %v1198, %v1194
      %v1200 = vrot.slane %v1199, 4
      %v1202 = vshll.u32 %v910, 16
      %v1204 = vrot.slane %v1202, 5
      %v1205 = vsel %vm917, %v1200, %v1204
      %v1207 = vshrl.u32 %v875, 16
      %v1209 = vrot.slane %v1207, 4
      %v1210 = vshll.u32 %v875, 16
      %v1212 = vrot.slane %v1210, 5
      %v1213 = vor.u32 %v1209, %v1212
      %v1214 = vrot.slane %v1213, 4
      %v1216 = vshll.u32 %v876, 16
      %v1218 = vrot.slane %v1216, 5
      %v1219 = vsel %vm917, %v1214, %v1218
      %v1220 = vshrl.u32 %v876, 16
      %v1222 = vrot.slane %v1220, 4
      %v1223 = vor.u32 %v1222, %v1218
      %v1224 = vrot.slane %v1223, 4
      %v1226 = vshll.u32 %v911, 16
      %v1228 = vrot.slane %v1226, 5
      %v1229 = vsel %vm917, %v1224, %v1228
      %v1231 = vshrl.u32 %v877, 16
      %v1233 = vrot.slane %v1231, 4
      %v1234 = vshll.u32 %v877, 16
      %v1236 = vrot.slane %v1234, 5
      %v1237 = vor.u32 %v1233, %v1236
      %v1238 = vrot.slane %v1237, 4
      %v1240 = vshll.u32 %v878, 16
      %v1242 = vrot.slane %v1240, 5
      %v1243 = vsel %vm917, %v1238, %v1242
      %v1244 = vshrl.u32 %v878, 16
      %v1246 = vrot.slane %v1244, 4
      %v1247 = vor.u32 %v1246, %v1242
      %v1248 = vrot.slane %v1247, 4
      %v1250 = vshll.u32 %v912, 16
      %v1252 = vrot.slane %v1250, 5
      %v1253 = vsel %vm917, %v1248, %v1252
      %v1255 = vshrl.u32 %v879, 16
      %v1257 = vrot.slane %v1255, 4
      %v1258 = vshll.u32 %v879, 16
      %v1260 = vrot.slane %v1258, 5
      %v1261 = vor.u32 %v1257, %v1260
      %v1262 = vrot.slane %v1261, 4
      %v1264 = vshll.u32 %v880, 16
      %v1266 = vrot.slane %v1264, 5
      %v1267 = vsel %vm917, %v1262, %v1266
      %v1268 = vshrl.u32 %v880, 16
      %v1270 = vrot.slane %v1268, 4
      %v1271 = vor.u32 %v1270, %v1266
      %v1272 = vrot.slane %v1271, 4
      %v1274 = vshll.u32 %v913, 16
      %v1276 = vrot.slane %v1274, 5
      %v1277 = vsel %vm917, %v1272, %v1276
      %v1279 = vshrl.u32 %v881, 16
      %v1281 = vrot.slane %v1279, 4
      %v1282 = vshll.u32 %v881, 16
      %v1284 = vrot.slane %v1282, 5
      %v1285 = vor.u32 %v1281, %v1284
      %v1286 = vrot.slane %v1285, 4
      %v1288 = vshll.u32 %v882, 16
      %v1290 = vrot.slane %v1288, 5
      %v1291 = vsel %vm917, %v1286, %v1290
      %v1292 = vshrl.u32 %v882, 16
      %v1294 = vrot.slane %v1292, 4
      %v1295 = vor.u32 %v1294, %v1290
      %v1296 = vrot.slane %v1295, 4
      %v1298 = vshll.u32 %v914, 16
      %v1300 = vrot.slane %v1298, 5
      %v1301 = vsel %vm917, %v1296, %v1300
      %s1302 = scalar_lea.vmem %s1, 64
      %v1303 = vld [vmem:[%s1302] sm:$0xf]
      %v1304 = vld [vmem:[%s1302 + $0x4] sm:$0xf]
      %v1305 = vld [vmem:[%s1302 + $0x8] sm:$0xf]
      %v1306 = vld [vmem:[%s1302 + $0xc] sm:$0xf]
      %v1307 = vld [vmem:[%s1302 + $0x10] sm:$0xf]
      %v1308 = vld [vmem:[%s1302 + $0x14] sm:$0xf]
      %v1309 = vld [vmem:[%s1302 + $0x18] sm:$0xf]
      %v1310 = vld [vmem:[%s1302 + $0x1c] sm:$0xf]
      %v1311 = vld [vmem:[%s1302 + $0x20] sm:$0xf]
      %v1312 = vld [vmem:[%s1302 + $0x24] sm:$0xf]
      %v1313 = vld [vmem:[%s1302 + $0x28] sm:$0xf]
      %v1314 = vld [vmem:[%s1302 + $0x2c] sm:$0xf]
      %v1315 = vld [vmem:[%s1302 + $0x30] sm:$0xf]
      %v1316 = vld [vmem:[%s1302 + $0x34] sm:$0xf]
      %v1317 = vld [vmem:[%s1302 + $0x38] sm:$0xf]
      %v1318 = vld [vmem:[%s1302 + $0x3c] sm:$0xf]
      %v1319 = vunpack.c.l.b16 %v931
      %v1320 = vunpack.c.l.b16 %v941
      %v1321 = vunpack.c.l.b16 %v955
      %v1322 = vunpack.c.l.b16 %v965
      %v1323 = vunpack.c.l.b16 %v979
      %v1324 = vunpack.c.l.b16 %v989
      %v1325 = vunpack.c.l.b16 %v1003
      %v1326 = vunpack.c.l.b16 %v1013
      %v1327 = vunpack.c.l.b16 %v1027
      %v1328 = vunpack.c.l.b16 %v1037
      %v1329 = vunpack.c.l.b16 %v1051
      %v1330 = vunpack.c.l.b16 %v1061
      %v1331 = vunpack.c.l.b16 %v1075
      %v1332 = vunpack.c.l.b16 %v1085
      %v1333 = vunpack.c.l.b16 %v1099
      %v1334 = vunpack.c.l.b16 %v1109
      %v1335 = vunpack.c.l.b16 %v1123
      %v1336 = vunpack.c.l.b16 %v1133
      %v1337 = vunpack.c.l.b16 %v1147
      %v1338 = vunpack.c.l.b16 %v1157
      %v1339 = vunpack.c.l.b16 %v1171
      %v1340 = vunpack.c.l.b16 %v1181
      %v1341 = vunpack.c.l.b16 %v1195
      %v1342 = vunpack.c.l.b16 %v1205
      %v1343 = vunpack.c.l.b16 %v1219
      %v1344 = vunpack.c.l.b16 %v1229
      %v1345 = vunpack.c.l.b16 %v1243
      %v1346 = vunpack.c.l.b16 %v1253
      %v1347 = vunpack.c.l.b16 %v1267
      %v1348 = vunpack.c.l.b16 %v1277
      %v1349 = vunpack.c.l.b16 %v1291
      %v1350 = vunpack.c.l.b16 %v1301
      %v1351 = vpack.c.b16 %v1320, %v1319
      %v1352 = vpack.c.b16 %v1322, %v1321
      %v1353 = vpack.c.b16 %v1324, %v1323
      %v1354 = vpack.c.b16 %v1326, %v1325
      %v1355 = vpack.c.b16 %v1328, %v1327
      %v1356 = vpack.c.b16 %v1330, %v1329
      %v1357 = vpack.c.b16 %v1332, %v1331
      %v1358 = vpack.c.b16 %v1334, %v1333
      %v1359 = vpack.c.b16 %v1336, %v1335
      %v1360 = vpack.c.b16 %v1338, %v1337
      %v1361 = vpack.c.b16 %v1340, %v1339
      %v1362 = vpack.c.b16 %v1342, %v1341
      %v1363 = vpack.c.b16 %v1344, %v1343
      %v1364 = vpack.c.b16 %v1346, %v1345
      %v1365 = vpack.c.b16 %v1348, %v1347
      %v1366 = vpack.c.b16 %v1350, %v1349
      %v1399 = vunpack.c.l.b16 %v1303
      %v1400 = vunpack.c.l.b16 %v1304
      %v1401 = vunpack.c.l.b16 %v1305
      %v1402 = vunpack.c.l.b16 %v1306
      %v1403 = vunpack.c.l.b16 %v1307
      %v1404 = vunpack.c.l.b16 %v1308
      %v1405 = vunpack.c.l.b16 %v1309
      %v1406 = vunpack.c.l.b16 %v1310
      %v1407 = vunpack.c.l.b16 %v1311
      %v1408 = vunpack.c.l.b16 %v1312
      %v1409 = vunpack.c.l.b16 %v1313
      %v1410 = vunpack.c.l.b16 %v1314
      %v1411 = vunpack.c.l.b16 %v1315
      %v1412 = vunpack.c.l.b16 %v1316
      %v1413 = vunpack.c.l.b16 %v1317
      %v1414 = vunpack.c.l.b16 %v1318
      %v1415 = vpack.c.b16 %v1400, %v1399
      %v1416 = vpack.c.b16 %v1402, %v1401
      %v1417 = vpack.c.b16 %v1404, %v1403
      %v1418 = vpack.c.b16 %v1406, %v1405
      %v1419 = vpack.c.b16 %v1408, %v1407
      %v1420 = vpack.c.b16 %v1410, %v1409
      %v1421 = vpack.c.b16 %v1412, %v1411
      %v1422 = vpack.c.b16 %v1414, %v1413
      %1431 = vmatprep.subr.bf16.mxu0 0
      %1432 = vmatpush1.bf16.msra.mxu0 %v1422
      %1433 = vmatprep.subr.bf16.mxu0 0
      %1434 = vmatpush1.bf16.msra.mxu0 %v1421
      %1435 = vmatprep.subr.bf16.mxu0 0
      %1436 = vmatpush1.bf16.msra.mxu0 %v1420
      %1437 = vmatprep.subr.bf16.mxu0 0
      %1438 = vmatpush1.bf16.msra.mxu0 %v1419
      %1439 = vmatprep.subr.bf16.mxu0 0
      %1440 = vmatpush1.bf16.msra.mxu0 %v1418
      %1441 = vmatprep.subr.bf16.mxu0 0
      %1442 = vmatpush1.bf16.msra.mxu0 %v1417
      %1443 = vmatprep.subr.bf16.mxu0 0
      %1444 = vmatpush1.bf16.msra.mxu0 %v1416
      %1445 = vmatprep.subr.bf16.mxu0 0
      %1446 = vmatpush1.bf16.msra.mxu0 %v1415
      %1447 = vmatprep.subr.bf16.mxu0 0
      %1448 = vmatpush2.bf16.msra.mxu0 0
      %1449 = vmatprep.subr.bf16.mxu0 0
      %1450 = vmatpush2.bf16.msra.mxu0 0
      %1451 = vmatprep.subr.bf16.mxu0 0
      %1452 = vmatpush2.bf16.msra.mxu0 0
      %1453 = vmatprep.subr.bf16.mxu0 0
      %1454 = vmatpush2.bf16.msra.mxu0 0
      %1455 = vmatprep.subr.bf16.mxu0 0
      %1456 = vmatpush2.bf16.msra.mxu0 0
      %1457 = vmatprep.subr.bf16.mxu0 0
      %1458 = vmatpush2.bf16.msra.mxu0 0
      %1459 = vmatprep.subr.bf16.mxu0 0
      %1460 = vmatpush2.bf16.msra.mxu0 0
      %1461 = vmatprep.subr.bf16.mxu0 0
      %1462 = vmatpush2.bf16.msra.mxu0 0
      %1463 = vmatprep.mubr.bf16.mxu0 0
      %1464 = vmatmul.mubr.bf16.gmra.mxu0 %v1351
      %v1465 = vpop.f32.mrf.mxu0
      %v1466 = vadd.f32 0.0, %v1465
      %v1467 = vpop.f32.mrf.mxu0
      %v1468 = vpop.f32.mrf.mxu0
      %v1469 = vadd.f32 0.0, %v1468
      %v1470 = vpop.f32.mrf.mxu0
      %1471 = vmatprep.mubr.bf16.mxu0 0
      %1472 = vmatmul.mubr.bf16.gmra.mxu0 %v1352
      %v1473 = vpop.f32.mrf.mxu0
      %v1474 = vadd.f32 0.0, %v1473
      %v1475 = vpop.f32.mrf.mxu0
      %v1476 = vpop.f32.mrf.mxu0
      %v1477 = vadd.f32 0.0, %v1476
      %v1478 = vpop.f32.mrf.mxu0
      %1479 = vmatprep.mubr.bf16.mxu0 0
      %1480 = vmatmul.mubr.bf16.gmra.mxu0 %v1353
      %v1481 = vpop.f32.mrf.mxu0
      %v1482 = vadd.f32 0.0, %v1481
      %v1483 = vpop.f32.mrf.mxu0
      %v1484 = vpop.f32.mrf.mxu0
      %v1485 = vadd.f32 0.0, %v1484
      %v1486 = vpop.f32.mrf.mxu0
      %1487 = vmatprep.mubr.bf16.mxu0 0
      %1488 = vmatmul.mubr.bf16.gmra.mxu0 %v1354
      %v1489 = vpop.f32.mrf.mxu0
      %v1490 = vadd.f32 0.0, %v1489
      %v1491 = vpop.f32.mrf.mxu0
      %v1492 = vpop.f32.mrf.mxu0
      %v1493 = vadd.f32 0.0, %v1492
      %v1494 = vpop.f32.mrf.mxu0
      %1495 = vmatprep.mubr.bf16.mxu0 0
      %1496 = vmatmul.mubr.bf16.gmra.mxu0 %v1355
      %v1497 = vpop.f32.mrf.mxu0
      %v1498 = vadd.f32 0.0, %v1497
      %v1499 = vpop.f32.mrf.mxu0
      %v1500 = vpop.f32.mrf.mxu0
      %v1501 = vadd.f32 0.0, %v1500
      %v1502 = vpop.f32.mrf.mxu0
      %1503 = vmatprep.mubr.bf16.mxu0 0
      %1504 = vmatmul.mubr.bf16.gmra.mxu0 %v1356
      %v1505 = vpop.f32.mrf.mxu0
      %v1506 = vadd.f32 0.0, %v1505
      %v1507 = vpop.f32.mrf.mxu0
      %v1508 = vpop.f32.mrf.mxu0
      %v1509 = vadd.f32 0.0, %v1508
      %v1510 = vpop.f32.mrf.mxu0
      %1511 = vmatprep.mubr.bf16.mxu0 0
      %1512 = vmatmul.mubr.bf16.gmra.mxu0 %v1357
      %v1513 = vpop.f32.mrf.mxu0
      %v1514 = vadd.f32 0.0, %v1513
      %v1515 = vpop.f32.mrf.mxu0
      %v1516 = vpop.f32.mrf.mxu0
      %v1517 = vadd.f32 0.0, %v1516
      %v1518 = vpop.f32.mrf.mxu0
      %1519 = vmatprep.mubr.bf16.mxu0 0
      %1520 = vmatmul.mubr.bf16.gmra.mxu0 %v1358
      %v1521 = vpop.f32.mrf.mxu0
      %v1522 = vadd.f32 0.0, %v1521
      %v1523 = vpop.f32.mrf.mxu0
      %v1524 = vpop.f32.mrf.mxu0
      %v1525 = vadd.f32 0.0, %v1524
      %v1526 = vpop.f32.mrf.mxu0
      %1527 = vmatprep.mubr.bf16.mxu0 0
      %1528 = vmatmul.mubr.bf16.gmra.mxu0 %v1359
      %v1529 = vpop.f32.mrf.mxu0
      %v1530 = vadd.f32 0.0, %v1529
      %v1531 = vpop.f32.mrf.mxu0
      %v1532 = vpop.f32.mrf.mxu0
      %v1533 = vadd.f32 0.0, %v1532
      %v1534 = vpop.f32.mrf.mxu0
      %1535 = vmatprep.mubr.bf16.mxu0 0
      %1536 = vmatmul.mubr.bf16.gmra.mxu0 %v1360
      %v1537 = vpop.f32.mrf.mxu0
      %v1538 = vadd.f32 0.0, %v1537
      %v1539 = vpop.f32.mrf.mxu0
      %v1540 = vpop.f32.mrf.mxu0
      %v1541 = vadd.f32 0.0, %v1540
      %v1542 = vpop.f32.mrf.mxu0
      %1543 = vmatprep.mubr.bf16.mxu0 0
      %1544 = vmatmul.mubr.bf16.gmra.mxu0 %v1361
      %v1545 = vpop.f32.mrf.mxu0
      %v1546 = vadd.f32 0.0, %v1545
      %v1547 = vpop.f32.mrf.mxu0
      %v1548 = vpop.f32.mrf.mxu0
      %v1549 = vadd.f32 0.0, %v1548
      %v1550 = vpop.f32.mrf.mxu0
      %1551 = vmatprep.mubr.bf16.mxu0 0
      %1552 = vmatmul.mubr.bf16.gmra.mxu0 %v1362
      %v1553 = vpop.f32.mrf.mxu0
      %v1554 = vadd.f32 0.0, %v1553
      %v1555 = vpop.f32.mrf.mxu0
      %v1556 = vpop.f32.mrf.mxu0
      %v1557 = vadd.f32 0.0, %v1556
      %v1558 = vpop.f32.mrf.mxu0
      %1559 = vmatprep.mubr.bf16.mxu0 0
      %1560 = vmatmul.mubr.bf16.gmra.mxu0 %v1363
      %v1561 = vpop.f32.mrf.mxu0
      %v1562 = vadd.f32 0.0, %v1561
      %v1563 = vpop.f32.mrf.mxu0
      %v1564 = vpop.f32.mrf.mxu0
      %v1565 = vadd.f32 0.0, %v1564
      %v1566 = vpop.f32.mrf.mxu0
      %1567 = vmatprep.mubr.bf16.mxu0 0
      %1568 = vmatmul.mubr.bf16.gmra.mxu0 %v1364
      %v1569 = vpop.f32.mrf.mxu0
      %v1570 = vadd.f32 0.0, %v1569
      %v1571 = vpop.f32.mrf.mxu0
      %v1572 = vpop.f32.mrf.mxu0
      %v1573 = vadd.f32 0.0, %v1572
      %v1574 = vpop.f32.mrf.mxu0
      %1575 = vmatprep.mubr.bf16.mxu0 0
      %1576 = vmatmul.mubr.bf16.gmra.mxu0 %v1365
      %v1577 = vpop.f32.mrf.mxu0
      %v1578 = vadd.f32 0.0, %v1577
      %v1579 = vpop.f32.mrf.mxu0
      %v1580 = vpop.f32.mrf.mxu0
      %v1581 = vadd.f32 0.0, %v1580
      %v1582 = vpop.f32.mrf.mxu0
      %1583 = vmatprep.mubr.bf16.mxu0 0
      %1584 = vmatmul.mubr.bf16.gmra.mxu0 %v1366
      %v1585 = vpop.f32.mrf.mxu0
      %v1586 = vadd.f32 0.0, %v1585
      %v1587 = vpop.f32.mrf.mxu0
      %v1588 = vpop.f32.mrf.mxu0
      %v1589 = vadd.f32 0.0, %v1588
      %v1590 = vpop.f32.mrf.mxu0
      %1591 = vdwg.mxu0
      %v1624 = vunpack.c.l.b16 %v851
      %v1625 = vunpack.c.l.b16 %v852
      %v1626 = vunpack.c.l.b16 %v853
      %v1627 = vunpack.c.l.b16 %v854
      %v1628 = vunpack.c.l.b16 %v855
      %v1629 = vunpack.c.l.b16 %v856
      %v1630 = vunpack.c.l.b16 %v857
      %v1631 = vunpack.c.l.b16 %v858
      %v1632 = vunpack.c.l.b16 %v859
      %v1633 = vunpack.c.l.b16 %v860
      %v1634 = vunpack.c.l.b16 %v861
      %v1635 = vunpack.c.l.b16 %v862
      %v1636 = vunpack.c.l.b16 %v863
      %v1637 = vunpack.c.l.b16 %v864
      %v1638 = vunpack.c.l.b16 %v865
      %v1639 = vunpack.c.l.b16 %v866
      %v1640 = vunpack.c.l.b16 %v867
      %v1641 = vunpack.c.l.b16 %v868
      %v1642 = vunpack.c.l.b16 %v869
      %v1643 = vunpack.c.l.b16 %v870
      %v1644 = vunpack.c.l.b16 %v871
      %v1645 = vunpack.c.l.b16 %v872
      %v1646 = vunpack.c.l.b16 %v873
      %v1647 = vunpack.c.l.b16 %v874
      %v1648 = vunpack.c.l.b16 %v875
      %v1649 = vunpack.c.l.b16 %v876
      %v1650 = vunpack.c.l.b16 %v877
      %v1651 = vunpack.c.l.b16 %v878
      %v1652 = vunpack.c.l.b16 %v879
      %v1653 = vunpack.c.l.b16 %v880
      %v1654 = vunpack.c.l.b16 %v881
      %v1655 = vunpack.c.l.b16 %v882
      %v1656 = vpack.c.b16 %v1625, %v1624
      %v1657 = vpack.c.b16 %v1627, %v1626
      %v1658 = vpack.c.b16 %v1629, %v1628
      %v1659 = vpack.c.b16 %v1631, %v1630
      %v1660 = vpack.c.b16 %v1633, %v1632
      %v1661 = vpack.c.b16 %v1635, %v1634
      %v1662 = vpack.c.b16 %v1637, %v1636
      %v1663 = vpack.c.b16 %v1639, %v1638
      %v1664 = vpack.c.b16 %v1641, %v1640
      %v1665 = vpack.c.b16 %v1643, %v1642
      %v1666 = vpack.c.b16 %v1645, %v1644
      %v1667 = vpack.c.b16 %v1647, %v1646
      %v1668 = vpack.c.b16 %v1649, %v1648
      %v1669 = vpack.c.b16 %v1651, %v1650
      %v1670 = vpack.c.b16 %v1653, %v1652
      %v1671 = vpack.c.b16 %v1655, %v1654
      %v1704 = vunpack.c.l.b16 %v883
      %v1705 = vunpack.c.l.b16 %v884
      %v1706 = vunpack.c.l.b16 %v885
      %v1707 = vunpack.c.l.b16 %v886
      %v1708 = vunpack.c.l.b16 %v887
      %v1709 = vunpack.c.l.b16 %v888
      %v1710 = vunpack.c.l.b16 %v889
      %v1711 = vunpack.c.l.b16 %v890
      %v1712 = vunpack.c.l.b16 %v891
      %v1713 = vunpack.c.l.b16 %v892
      %v1714 = vunpack.c.l.b16 %v893
      %v1715 = vunpack.c.l.b16 %v894
      %v1716 = vunpack.c.l.b16 %v895
      %v1717 = vunpack.c.l.b16 %v896
      %v1718 = vunpack.c.l.b16 %v897
      %v1719 = vunpack.c.l.b16 %v898
      %v1720 = vpack.c.b16 %v1705, %v1704
      %v1721 = vpack.c.b16 %v1707, %v1706
      %v1722 = vpack.c.b16 %v1709, %v1708
      %v1723 = vpack.c.b16 %v1711, %v1710
      %v1724 = vpack.c.b16 %v1713, %v1712
      %v1725 = vpack.c.b16 %v1715, %v1714
      %v1726 = vpack.c.b16 %v1717, %v1716
      %v1727 = vpack.c.b16 %v1719, %v1718
      %1736 = vmatprep.subr.bf16.mxu0 0
      %1737 = vmatpush1.bf16.msra.mxu0 %v1727
      %1738 = vmatprep.subr.bf16.mxu0 0
      %1739 = vmatpush1.bf16.msra.mxu0 %v1726
      %1740 = vmatprep.subr.bf16.mxu0 0
      %1741 = vmatpush1.bf16.msra.mxu0 %v1725
      %1742 = vmatprep.subr.bf16.mxu0 0
      %1743 = vmatpush1.bf16.msra.mxu0 %v1724
      %1744 = vmatprep.subr.bf16.mxu0 0
      %1745 = vmatpush1.bf16.msra.mxu0 %v1723
      %1746 = vmatprep.subr.bf16.mxu0 0
      %1747 = vmatpush1.bf16.msra.mxu0 %v1722
      %1748 = vmatprep.subr.bf16.mxu0 0
      %1749 = vmatpush1.bf16.msra.mxu0 %v1721
      %1750 = vmatprep.subr.bf16.mxu0 0
      %1751 = vmatpush1.bf16.msra.mxu0 %v1720
      %1752 = vmatprep.subr.bf16.mxu0 0
      %1753 = vmatpush2.bf16.msra.mxu0 0
      %1754 = vmatprep.subr.bf16.mxu0 0
      %1755 = vmatpush2.bf16.msra.mxu0 0
      %1756 = vmatprep.subr.bf16.mxu0 0
      %1757 = vmatpush2.bf16.msra.mxu0 0
      %1758 = vmatprep.subr.bf16.mxu0 0
      %1759 = vmatpush2.bf16.msra.mxu0 0
      %1760 = vmatprep.subr.bf16.mxu0 0
      %1761 = vmatpush2.bf16.msra.mxu0 0
      %1762 = vmatprep.subr.bf16.mxu0 0
      %1763 = vmatpush2.bf16.msra.mxu0 0
      %1764 = vmatprep.subr.bf16.mxu0 0
      %1765 = vmatpush2.bf16.msra.mxu0 0
      %1766 = vmatprep.subr.bf16.mxu0 0
      %1767 = vmatpush2.bf16.msra.mxu0 0
      %1768 = vmatprep.mubr.bf16.mxu0 0
      %1769 = vmatmul.mubr.bf16.gmra.mxu0 %v1656
      %v1770 = vpop.f32.mrf.mxu0
      %v1771 = vadd.f32 %v1466, %v1770
      %v1772 = vpop.f32.mrf.mxu0
      %v1773 = vpop.f32.mrf.mxu0
      %v1774 = vadd.f32 %v1469, %v1773
      %v1775 = vpop.f32.mrf.mxu0
      %1776 = vmatprep.mubr.bf16.mxu0 0
      %1777 = vmatmul.mubr.bf16.gmra.mxu0 %v1657
      %v1778 = vpop.f32.mrf.mxu0
      %v1779 = vadd.f32 %v1474, %v1778
      %v1780 = vpop.f32.mrf.mxu0
      %v1781 = vpop.f32.mrf.mxu0
      %v1782 = vadd.f32 %v1477, %v1781
      %v1783 = vpop.f32.mrf.mxu0
      %1784 = vmatprep.mubr.bf16.mxu0 0
      %1785 = vmatmul.mubr.bf16.gmra.mxu0 %v1658
      %v1786 = vpop.f32.mrf.mxu0
      %v1787 = vadd.f32 %v1482, %v1786
      %v1788 = vpop.f32.mrf.mxu0
      %v1789 = vpop.f32.mrf.mxu0
      %v1790 = vadd.f32 %v1485, %v1789
      %v1791 = vpop.f32.mrf.mxu0
      %1792 = vmatprep.mubr.bf16.mxu0 0
      %1793 = vmatmul.mubr.bf16.gmra.mxu0 %v1659
      %v1794 = vpop.f32.mrf.mxu0
      %v1795 = vadd.f32 %v1490, %v1794
      %v1796 = vpop.f32.mrf.mxu0
      %v1797 = vpop.f32.mrf.mxu0
      %v1798 = vadd.f32 %v1493, %v1797
      %v1799 = vpop.f32.mrf.mxu0
      %1800 = vmatprep.mubr.bf16.mxu0 0
      %1801 = vmatmul.mubr.bf16.gmra.mxu0 %v1660
      %v1802 = vpop.f32.mrf.mxu0
      %v1803 = vadd.f32 %v1498, %v1802
      %v1804 = vpop.f32.mrf.mxu0
      %v1805 = vpop.f32.mrf.mxu0
      %v1806 = vadd.f32 %v1501, %v1805
      %v1807 = vpop.f32.mrf.mxu0
      %1808 = vmatprep.mubr.bf16.mxu0 0
      %1809 = vmatmul.mubr.bf16.gmra.mxu0 %v1661
      %v1810 = vpop.f32.mrf.mxu0
      %v1811 = vadd.f32 %v1506, %v1810
      %v1812 = vpop.f32.mrf.mxu0
      %v1813 = vpop.f32.mrf.mxu0
      %v1814 = vadd.f32 %v1509, %v1813
      %v1815 = vpop.f32.mrf.mxu0
      %1816 = vmatprep.mubr.bf16.mxu0 0
      %1817 = vmatmul.mubr.bf16.gmra.mxu0 %v1662
      %v1818 = vpop.f32.mrf.mxu0
      %v1819 = vadd.f32 %v1514, %v1818
      %v1820 = vpop.f32.mrf.mxu0
      %v1821 = vpop.f32.mrf.mxu0
      %v1822 = vadd.f32 %v1517, %v1821
      %v1823 = vpop.f32.mrf.mxu0
      %1824 = vmatprep.mubr.bf16.mxu0 0
      %1825 = vmatmul.mubr.bf16.gmra.mxu0 %v1663
      %v1826 = vpop.f32.mrf.mxu0
      %v1827 = vadd.f32 %v1522, %v1826
      %v1828 = vpop.f32.mrf.mxu0
      %v1829 = vpop.f32.mrf.mxu0
      %v1830 = vadd.f32 %v1525, %v1829
      %v1831 = vpop.f32.mrf.mxu0
      %1832 = vmatprep.mubr.bf16.mxu0 0
      %1833 = vmatmul.mubr.bf16.gmra.mxu0 %v1664
      %v1834 = vpop.f32.mrf.mxu0
      %v1835 = vadd.f32 %v1530, %v1834
      %v1836 = vpop.f32.mrf.mxu0
      %v1837 = vpop.f32.mrf.mxu0
      %v1838 = vadd.f32 %v1533, %v1837
      %v1839 = vpop.f32.mrf.mxu0
      %1840 = vmatprep.mubr.bf16.mxu0 0
      %1841 = vmatmul.mubr.bf16.gmra.mxu0 %v1665
      %v1842 = vpop.f32.mrf.mxu0
      %v1843 = vadd.f32 %v1538, %v1842
      %v1844 = vpop.f32.mrf.mxu0
      %v1845 = vpop.f32.mrf.mxu0
      %v1846 = vadd.f32 %v1541, %v1845
      %v1847 = vpop.f32.mrf.mxu0
      %1848 = vmatprep.mubr.bf16.mxu0 0
      %1849 = vmatmul.mubr.bf16.gmra.mxu0 %v1666
      %v1850 = vpop.f32.mrf.mxu0
      %v1851 = vadd.f32 %v1546, %v1850
      %v1852 = vpop.f32.mrf.mxu0
      %v1853 = vpop.f32.mrf.mxu0
      %v1854 = vadd.f32 %v1549, %v1853
      %v1855 = vpop.f32.mrf.mxu0
      %1856 = vmatprep.mubr.bf16.mxu0 0
      %1857 = vmatmul.mubr.bf16.gmra.mxu0 %v1667
      %v1858 = vpop.f32.mrf.mxu0
      %v1859 = vadd.f32 %v1554, %v1858
      %v1860 = vpop.f32.mrf.mxu0
      %v1861 = vpop.f32.mrf.mxu0
      %v1862 = vadd.f32 %v1557, %v1861
      %v1863 = vpop.f32.mrf.mxu0
      %1864 = vmatprep.mubr.bf16.mxu0 0
      %1865 = vmatmul.mubr.bf16.gmra.mxu0 %v1668
      %v1866 = vpop.f32.mrf.mxu0
      %v1867 = vadd.f32 %v1562, %v1866
      %v1868 = vpop.f32.mrf.mxu0
      %v1869 = vpop.f32.mrf.mxu0
      %v1870 = vadd.f32 %v1565, %v1869
      %v1871 = vpop.f32.mrf.mxu0
      %1872 = vmatprep.mubr.bf16.mxu0 0
      %1873 = vmatmul.mubr.bf16.gmra.mxu0 %v1669
      %v1874 = vpop.f32.mrf.mxu0
      %v1875 = vadd.f32 %v1570, %v1874
      %v1876 = vpop.f32.mrf.mxu0
      %v1877 = vpop.f32.mrf.mxu0
      %v1878 = vadd.f32 %v1573, %v1877
      %v1879 = vpop.f32.mrf.mxu0
      %1880 = vmatprep.mubr.bf16.mxu0 0
      %1881 = vmatmul.mubr.bf16.gmra.mxu0 %v1670
      %v1882 = vpop.f32.mrf.mxu0
      %v1883 = vadd.f32 %v1578, %v1882
      %v1884 = vpop.f32.mrf.mxu0
      %v1885 = vpop.f32.mrf.mxu0
      %v1886 = vadd.f32 %v1581, %v1885
      %v1887 = vpop.f32.mrf.mxu0
      %1888 = vmatprep.mubr.bf16.mxu0 0
      %1889 = vmatmul.mubr.bf16.gmra.mxu0 %v1671
      %v1890 = vpop.f32.mrf.mxu0
      %v1891 = vadd.f32 %v1586, %v1890
      %v1892 = vpop.f32.mrf.mxu0
      %v1893 = vpop.f32.mrf.mxu0
      %v1894 = vadd.f32 %v1589, %v1893
      %v1895 = vpop.f32.mrf.mxu0
      %1896 = vdwg.mxu0
      %v1897 = vld [vmem:[#allocation2] sm:$0xe]
      %v1898 = vld [vmem:[#allocation2 + $0xc] sm:$0xe]
      %v1899 = vld [vmem:[#allocation2 + $0x18] sm:$0xe]
      %v1900 = vld [vmem:[#allocation2 + $0x24] sm:$0xe]
      %v1901 = vld [vmem:[#allocation2 + $0x30] sm:$0xe]
      %v1902 = vld [vmem:[#allocation2 + $0x3c] sm:$0xe]
      %v1903 = vld [vmem:[#allocation2 + $0x48] sm:$0xe]
      %v1904 = vld [vmem:[#allocation2 + $0x54] sm:$0xe]
      %v1905 = vld [vmem:[#allocation2 + $0x60] sm:$0xe]
      %v1906 = vld [vmem:[#allocation2 + $0x6c] sm:$0xe]
      %v1907 = vld [vmem:[#allocation2 + $0x78] sm:$0xe]
      %v1908 = vld [vmem:[#allocation2 + $0x84] sm:$0xe]
      %v1909 = vld [vmem:[#allocation2 + $0x90] sm:$0xe]
      %v1910 = vld [vmem:[#allocation2 + $0x9c] sm:$0xe]
      %v1911 = vld [vmem:[#allocation2 + $0xa8] sm:$0xe]
      %v1912 = vld [vmem:[#allocation2 + $0xb4] sm:$0xe]
      %vm1945 = vcmask 1042432
      %vm1946 = vcmask 1046532
      %vm1947 = vmor %vm1945, %vm1946
      %v1948 = vrot.slane %v1897, 5
      %v1949 = vrot.slane %v1948, 4
      %v1950 = vrot.slane %v852, 5
      %v1951 = vsel %vm1947, %v1949, %v1950
      %v1952 = vrot.slane %v1950, 4
      %v1953 = vrot.slane %v899, 5
      %v1954 = vsel %vm1947, %v1952, %v1953
      %v1955 = vrot.slane %v1898, 5
      %v1956 = vrot.slane %v1955, 4
      %v1957 = vrot.slane %v854, 5
      %v1958 = vsel %vm1947, %v1956, %v1957
      %v1959 = vrot.slane %v1957, 4
      %v1960 = vrot.slane %v900, 5
      %v1961 = vsel %vm1947, %v1959, %v1960
      %v1962 = vrot.slane %v1899, 5
      %v1963 = vrot.slane %v1962, 4
      %v1964 = vrot.slane %v856, 5
      %v1965 = vsel %vm1947, %v1963, %v1964
      %v1966 = vrot.slane %v1964, 4
      %v1967 = vrot.slane %v901, 5
      %v1968 = vsel %vm1947, %v1966, %v1967
      %v1969 = vrot.slane %v1900, 5
      %v1970 = vrot.slane %v1969, 4
      %v1971 = vrot.slane %v858, 5
      %v1972 = vsel %vm1947, %v1970, %v1971
      %v1973 = vrot.slane %v1971, 4
      %v1974 = vrot.slane %v902, 5
      %v1975 = vsel %vm1947, %v1973, %v1974
      %v1976 = vrot.slane %v1901, 5
      %v1977 = vrot.slane %v1976, 4
      %v1978 = vrot.slane %v860, 5
      %v1979 = vsel %vm1947, %v1977, %v1978
      %v1980 = vrot.slane %v1978, 4
      %v1981 = vrot.slane %v903, 5
      %v1982 = vsel %vm1947, %v1980, %v1981
      %v1983 = vrot.slane %v1902, 5
      %v1984 = vrot.slane %v1983, 4
      %v1985 = vrot.slane %v862, 5
      %v1986 = vsel %vm1947, %v1984, %v1985
      %v1987 = vrot.slane %v1985, 4
      %v1988 = vrot.slane %v904, 5
      %v1989 = vsel %vm1947, %v1987, %v1988
      %v1990 = vrot.slane %v1903, 5
      %v1991 = vrot.slane %v1990, 4
      %v1992 = vrot.slane %v864, 5
      %v1993 = vsel %vm1947, %v1991, %v1992
      %v1994 = vrot.slane %v1992, 4
      %v1995 = vrot.slane %v905, 5
      %v1996 = vsel %vm1947, %v1994, %v1995
      %v1997 = vrot.slane %v1904, 5
      %v1998 = vrot.slane %v1997, 4
      %v1999 = vrot.slane %v866, 5
      %v2000 = vsel %vm1947, %v1998, %v1999
      %v2001 = vrot.slane %v1999, 4
      %v2002 = vrot.slane %v906, 5
      %v2003 = vsel %vm1947, %v2001, %v2002
      %v2004 = vrot.slane %v1905, 5
      %v2005 = vrot.slane %v2004, 4
      %v2006 = vrot.slane %v868, 5
      %v2007 = vsel %vm1947, %v2005, %v2006
      %v2008 = vrot.slane %v2006, 4
      %v2009 = vrot.slane %v907, 5
      %v2010 = vsel %vm1947, %v2008, %v2009
      %v2011 = vrot.slane %v1906, 5
      %v2012 = vrot.slane %v2011, 4
      %v2013 = vrot.slane %v870, 5
      %v2014 = vsel %vm1947, %v2012, %v2013
      %v2015 = vrot.slane %v2013, 4
      %v2016 = vrot.slane %v908, 5
      %v2017 = vsel %vm1947, %v2015, %v2016
      %v2018 = vrot.slane %v1907, 5
      %v2019 = vrot.slane %v2018, 4
      %v2020 = vrot.slane %v872, 5
      %v2021 = vsel %vm1947, %v2019, %v2020
      %v2022 = vrot.slane %v2020, 4
      %v2023 = vrot.slane %v909, 5
      %v2024 = vsel %vm1947, %v2022, %v2023
      %v2025 = vrot.slane %v1908, 5
      %v2026 = vrot.slane %v2025, 4
      %v2027 = vrot.slane %v874, 5
      %v2028 = vsel %vm1947, %v2026, %v2027
      %v2029 = vrot.slane %v2027, 4
      %v2030 = vrot.slane %v910, 5
      %v2031 = vsel %vm1947, %v2029, %v2030
      %v2032 = vrot.slane %v1909, 5
      %v2033 = vrot.slane %v2032, 4
      %v2034 = vrot.slane %v876, 5
      %v2035 = vsel %vm1947, %v2033, %v2034
      %v2036 = vrot.slane %v2034, 4
      %v2037 = vrot.slane %v911, 5
      %v2038 = vsel %vm1947, %v2036, %v2037
      %v2039 = vrot.slane %v1910, 5
      %v2040 = vrot.slane %v2039, 4
      %v2041 = vrot.slane %v878, 5
      %v2042 = vsel %vm1947, %v2040, %v2041
      %v2043 = vrot.slane %v2041, 4
      %v2044 = vrot.slane %v912, 5
      %v2045 = vsel %vm1947, %v2043, %v2044
      %v2046 = vrot.slane %v1911, 5
      %v2047 = vrot.slane %v2046, 4
      %v2048 = vrot.slane %v880, 5
      %v2049 = vsel %vm1947, %v2047, %v2048
      %v2050 = vrot.slane %v2048, 4
      %v2051 = vrot.slane %v913, 5
      %v2052 = vsel %vm1947, %v2050, %v2051
      %v2053 = vrot.slane %v1912, 5
      %v2054 = vrot.slane %v2053, 4
      %v2055 = vrot.slane %v882, 5
      %v2056 = vsel %vm1947, %v2054, %v2055
      %v2057 = vrot.slane %v2055, 4
      %v2058 = vrot.slane %v914, 5
      %v2059 = vsel %vm1947, %v2057, %v2058
      %s2060 = scalar_lea.vmem %s1, 128
      %v2061 = vld [vmem:[%s2060] sm:$0xf]
      %v2062 = vld [vmem:[%s2060 + $0x4] sm:$0xf]
      %v2063 = vld [vmem:[%s2060 + $0x8] sm:$0xf]
      %v2064 = vld [vmem:[%s2060 + $0xc] sm:$0xf]
      %v2065 = vld [vmem:[%s2060 + $0x10] sm:$0xf]
      %v2066 = vld [vmem:[%s2060 + $0x14] sm:$0xf]
      %v2067 = vld [vmem:[%s2060 + $0x18] sm:$0xf]
      %v2068 = vld [vmem:[%s2060 + $0x1c] sm:$0xf]
      %v2069 = vld [vmem:[%s2060 + $0x20] sm:$0xf]
      %v2070 = vld [vmem:[%s2060 + $0x24] sm:$0xf]
      %v2071 = vld [vmem:[%s2060 + $0x28] sm:$0xf]
      %v2072 = vld [vmem:[%s2060 + $0x2c] sm:$0xf]
      %v2073 = vld [vmem:[%s2060 + $0x30] sm:$0xf]
      %v2074 = vld [vmem:[%s2060 + $0x34] sm:$0xf]
      %v2075 = vld [vmem:[%s2060 + $0x38] sm:$0xf]
      %v2076 = vld [vmem:[%s2060 + $0x3c] sm:$0xf]
      %v2077 = vunpack.c.l.b16 %v1951
      %v2078 = vunpack.c.l.b16 %v1954
      %v2079 = vunpack.c.l.b16 %v1958
      %v2080 = vunpack.c.l.b16 %v1961
      %v2081 = vunpack.c.l.b16 %v1965
      %v2082 = vunpack.c.l.b16 %v1968
      %v2083 = vunpack.c.l.b16 %v1972
      %v2084 = vunpack.c.l.b16 %v1975
      %v2085 = vunpack.c.l.b16 %v1979
      %v2086 = vunpack.c.l.b16 %v1982
      %v2087 = vunpack.c.l.b16 %v1986
      %v2088 = vunpack.c.l.b16 %v1989
      %v2089 = vunpack.c.l.b16 %v1993
      %v2090 = vunpack.c.l.b16 %v1996
      %v2091 = vunpack.c.l.b16 %v2000
      %v2092 = vunpack.c.l.b16 %v2003
      %v2093 = vunpack.c.l.b16 %v2007
      %v2094 = vunpack.c.l.b16 %v2010
      %v2095 = vunpack.c.l.b16 %v2014
      %v2096 = vunpack.c.l.b16 %v2017
      %v2097 = vunpack.c.l.b16 %v2021
      %v2098 = vunpack.c.l.b16 %v2024
      %v2099 = vunpack.c.l.b16 %v2028
      %v2100 = vunpack.c.l.b16 %v2031
      %v2101 = vunpack.c.l.b16 %v2035
      %v2102 = vunpack.c.l.b16 %v2038
      %v2103 = vunpack.c.l.b16 %v2042
      %v2104 = vunpack.c.l.b16 %v2045
      %v2105 = vunpack.c.l.b16 %v2049
      %v2106 = vunpack.c.l.b16 %v2052
      %v2107 = vunpack.c.l.b16 %v2056
      %v2108 = vunpack.c.l.b16 %v2059
      %v2109 = vpack.c.b16 %v2078, %v2077
      %v2110 = vpack.c.b16 %v2080, %v2079
      %v2111 = vpack.c.b16 %v2082, %v2081
      %v2112 = vpack.c.b16 %v2084, %v2083
      %v2113 = vpack.c.b16 %v2086, %v2085
      %v2114 = vpack.c.b16 %v2088, %v2087
      %v2115 = vpack.c.b16 %v2090, %v2089
      %v2116 = vpack.c.b16 %v2092, %v2091
      %v2117 = vpack.c.b16 %v2094, %v2093
      %v2118 = vpack.c.b16 %v2096, %v2095
      %v2119 = vpack.c.b16 %v2098, %v2097
      %v2120 = vpack.c.b16 %v2100, %v2099
      %v2121 = vpack.c.b16 %v2102, %v2101
      %v2122 = vpack.c.b16 %v2104, %v2103
      %v2123 = vpack.c.b16 %v2106, %v2105
      %v2124 = vpack.c.b16 %v2108, %v2107
      %v2157 = vunpack.c.l.b16 %v2061
      %v2158 = vunpack.c.l.b16 %v2062
      %v2159 = vunpack.c.l.b16 %v2063
      %v2160 = vunpack.c.l.b16 %v2064
      %v2161 = vunpack.c.l.b16 %v2065
      %v2162 = vunpack.c.l.b16 %v2066
      %v2163 = vunpack.c.l.b16 %v2067
      %v2164 = vunpack.c.l.b16 %v2068
      %v2165 = vunpack.c.l.b16 %v2069
      %v2166 = vunpack.c.l.b16 %v2070
      %v2167 = vunpack.c.l.b16 %v2071
      %v2168 = vunpack.c.l.b16 %v2072
      %v2169 = vunpack.c.l.b16 %v2073
      %v2170 = vunpack.c.l.b16 %v2074
      %v2171 = vunpack.c.l.b16 %v2075
      %v2172 = vunpack.c.l.b16 %v2076
      %v2173 = vpack.c.b16 %v2158, %v2157
      %v2174 = vpack.c.b16 %v2160, %v2159
      %v2175 = vpack.c.b16 %v2162, %v2161
      %v2176 = vpack.c.b16 %v2164, %v2163
      %v2177 = vpack.c.b16 %v2166, %v2165
      %v2178 = vpack.c.b16 %v2168, %v2167
      %v2179 = vpack.c.b16 %v2170, %v2169
      %v2180 = vpack.c.b16 %v2172, %v2171
      %2189 = vmatprep.subr.bf16.mxu0 0
      %2190 = vmatpush1.bf16.msra.mxu0 %v2180
      %2191 = vmatprep.subr.bf16.mxu0 0
      %2192 = vmatpush1.bf16.msra.mxu0 %v2179
      %2193 = vmatprep.subr.bf16.mxu0 0
      %2194 = vmatpush1.bf16.msra.mxu0 %v2178
      %2195 = vmatprep.subr.bf16.mxu0 0
      %2196 = vmatpush1.bf16.msra.mxu0 %v2177
      %2197 = vmatprep.subr.bf16.mxu0 0
      %2198 = vmatpush1.bf16.msra.mxu0 %v2176
      %2199 = vmatprep.subr.bf16.mxu0 0
      %2200 = vmatpush1.bf16.msra.mxu0 %v2175
      %2201 = vmatprep.subr.bf16.mxu0 0
      %2202 = vmatpush1.bf16.msra.mxu0 %v2174
      %2203 = vmatprep.subr.bf16.mxu0 0
      %2204 = vmatpush1.bf16.msra.mxu0 %v2173
      %2205 = vmatprep.subr.bf16.mxu0 0
      %2206 = vmatpush2.bf16.msra.mxu0 0
      %2207 = vmatprep.subr.bf16.mxu0 0
      %2208 = vmatpush2.bf16.msra.mxu0 0
      %2209 = vmatprep.subr.bf16.mxu0 0
      %2210 = vmatpush2.bf16.msra.mxu0 0
      %2211 = vmatprep.subr.bf16.mxu0 0
      %2212 = vmatpush2.bf16.msra.mxu0 0
      %2213 = vmatprep.subr.bf16.mxu0 0
      %2214 = vmatpush2.bf16.msra.mxu0 0
      %2215 = vmatprep.subr.bf16.mxu0 0
      %2216 = vmatpush2.bf16.msra.mxu0 0
      %2217 = vmatprep.subr.bf16.mxu0 0
      %2218 = vmatpush2.bf16.msra.mxu0 0
      %2219 = vmatprep.subr.bf16.mxu0 0
      %2220 = vmatpush2.bf16.msra.mxu0 0
      %2221 = vmatprep.mubr.bf16.mxu0 0
      %2222 = vmatmul.mubr.bf16.gmra.mxu0 %v2109
      %v2223 = vpop.f32.mrf.mxu0
      %v2224 = vadd.f32 0.0, %v2223
      %v2225 = vpop.f32.mrf.mxu0
      %v2226 = vpop.f32.mrf.mxu0
      %v2227 = vadd.f32 0.0, %v2226
      %v2228 = vpop.f32.mrf.mxu0
      %2229 = vmatprep.mubr.bf16.mxu0 0
      %2230 = vmatmul.mubr.bf16.gmra.mxu0 %v2110
      %v2231 = vpop.f32.mrf.mxu0
      %v2232 = vadd.f32 0.0, %v2231
      %v2233 = vpop.f32.mrf.mxu0
      %v2234 = vpop.f32.mrf.mxu0
      %v2235 = vadd.f32 0.0, %v2234
      %v2236 = vpop.f32.mrf.mxu0
      %2237 = vmatprep.mubr.bf16.mxu0 0
      %2238 = vmatmul.mubr.bf16.gmra.mxu0 %v2111
      %v2239 = vpop.f32.mrf.mxu0
      %v2240 = vadd.f32 0.0, %v2239
      %v2241 = vpop.f32.mrf.mxu0
      %v2242 = vpop.f32.mrf.mxu0
      %v2243 = vadd.f32 0.0, %v2242
      %v2244 = vpop.f32.mrf.mxu0
      %2245 = vmatprep.mubr.bf16.mxu0 0
      %2246 = vmatmul.mubr.bf16.gmra.mxu0 %v2112
      %v2247 = vpop.f32.mrf.mxu0
      %v2248 = vadd.f32 0.0, %v2247
      %v2249 = vpop.f32.mrf.mxu0
      %v2250 = vpop.f32.mrf.mxu0
      %v2251 = vadd.f32 0.0, %v2250
      %v2252 = vpop.f32.mrf.mxu0
      %2253 = vmatprep.mubr.bf16.mxu0 0
      %2254 = vmatmul.mubr.bf16.gmra.mxu0 %v2113
      %v2255 = vpop.f32.mrf.mxu0
      %v2256 = vadd.f32 0.0, %v2255
      %v2257 = vpop.f32.mrf.mxu0
      %v2258 = vpop.f32.mrf.mxu0
      %v2259 = vadd.f32 0.0, %v2258
      %v2260 = vpop.f32.mrf.mxu0
      %2261 = vmatprep.mubr.bf16.mxu0 0
      %2262 = vmatmul.mubr.bf16.gmra.mxu0 %v2114
      %v2263 = vpop.f32.mrf.mxu0
      %v2264 = vadd.f32 0.0, %v2263
      %v2265 = vpop.f32.mrf.mxu0
      %v2266 = vpop.f32.mrf.mxu0
      %v2267 = vadd.f32 0.0, %v2266
      %v2268 = vpop.f32.mrf.mxu0
      %2269 = vmatprep.mubr.bf16.mxu0 0
      %2270 = vmatmul.mubr.bf16.gmra.mxu0 %v2115
      %v2271 = vpop.f32.mrf.mxu0
      %v2272 = vadd.f32 0.0, %v2271
      %v2273 = vpop.f32.mrf.mxu0
      %v2274 = vpop.f32.mrf.mxu0
      %v2275 = vadd.f32 0.0, %v2274
      %v2276 = vpop.f32.mrf.mxu0
      %2277 = vmatprep.mubr.bf16.mxu0 0
      %2278 = vmatmul.mubr.bf16.gmra.mxu0 %v2116
      %v2279 = vpop.f32.mrf.mxu0
      %v2280 = vadd.f32 0.0, %v2279
      %v2281 = vpop.f32.mrf.mxu0
      %v2282 = vpop.f32.mrf.mxu0
      %v2283 = vadd.f32 0.0, %v2282
      %v2284 = vpop.f32.mrf.mxu0
      %2285 = vmatprep.mubr.bf16.mxu0 0
      %2286 = vmatmul.mubr.bf16.gmra.mxu0 %v2117
      %v2287 = vpop.f32.mrf.mxu0
      %v2288 = vadd.f32 0.0, %v2287
      %v2289 = vpop.f32.mrf.mxu0
      %v2290 = vpop.f32.mrf.mxu0
      %v2291 = vadd.f32 0.0, %v2290
      %v2292 = vpop.f32.mrf.mxu0
      %2293 = vmatprep.mubr.bf16.mxu0 0
      %2294 = vmatmul.mubr.bf16.gmra.mxu0 %v2118
      %v2295 = vpop.f32.mrf.mxu0
      %v2296 = vadd.f32 0.0, %v2295
      %v2297 = vpop.f32.mrf.mxu0
      %v2298 = vpop.f32.mrf.mxu0
      %v2299 = vadd.f32 0.0, %v2298
      %v2300 = vpop.f32.mrf.mxu0
      %2301 = vmatprep.mubr.bf16.mxu0 0
      %2302 = vmatmul.mubr.bf16.gmra.mxu0 %v2119
      %v2303 = vpop.f32.mrf.mxu0
      %v2304 = vadd.f32 0.0, %v2303
      %v2305 = vpop.f32.mrf.mxu0
      %v2306 = vpop.f32.mrf.mxu0
      %v2307 = vadd.f32 0.0, %v2306
      %v2308 = vpop.f32.mrf.mxu0
      %2309 = vmatprep.mubr.bf16.mxu0 0
      %2310 = vmatmul.mubr.bf16.gmra.mxu0 %v2120
      %v2311 = vpop.f32.mrf.mxu0
      %v2312 = vadd.f32 0.0, %v2311
      %v2313 = vpop.f32.mrf.mxu0
      %v2314 = vpop.f32.mrf.mxu0
      %v2315 = vadd.f32 0.0, %v2314
      %v2316 = vpop.f32.mrf.mxu0
      %2317 = vmatprep.mubr.bf16.mxu0 0
      %2318 = vmatmul.mubr.bf16.gmra.mxu0 %v2121
      %v2319 = vpop.f32.mrf.mxu0
      %v2320 = vadd.f32 0.0, %v2319
      %v2321 = vpop.f32.mrf.mxu0
      %v2322 = vpop.f32.mrf.mxu0
      %v2323 = vadd.f32 0.0, %v2322
      %v2324 = vpop.f32.mrf.mxu0
      %2325 = vmatprep.mubr.bf16.mxu0 0
      %2326 = vmatmul.mubr.bf16.gmra.mxu0 %v2122
      %v2327 = vpop.f32.mrf.mxu0
      %v2328 = vadd.f32 0.0, %v2327
      %v2329 = vpop.f32.mrf.mxu0
      %v2330 = vpop.f32.mrf.mxu0
      %v2331 = vadd.f32 0.0, %v2330
      %v2332 = vpop.f32.mrf.mxu0
      %2333 = vmatprep.mubr.bf16.mxu0 0
      %2334 = vmatmul.mubr.bf16.gmra.mxu0 %v2123
      %v2335 = vpop.f32.mrf.mxu0
      %v2336 = vadd.f32 0.0, %v2335
      %v2337 = vpop.f32.mrf.mxu0
      %v2338 = vpop.f32.mrf.mxu0
      %v2339 = vadd.f32 0.0, %v2338
      %v2340 = vpop.f32.mrf.mxu0
      %2341 = vmatprep.mubr.bf16.mxu0 0
      %2342 = vmatmul.mubr.bf16.gmra.mxu0 %v2124
      %v2343 = vpop.f32.mrf.mxu0
      %v2344 = vadd.f32 0.0, %v2343
      %v2345 = vpop.f32.mrf.mxu0
      %v2346 = vpop.f32.mrf.mxu0
      %v2347 = vadd.f32 0.0, %v2346
      %v2348 = vpop.f32.mrf.mxu0
      %2349 = vdwg.mxu0
      %v2350 = vadd.f32 %v1771, %v2224
      %v2351 = vadd.f32 %v1774, %v2227
      %v2352 = vadd.f32 %v1779, %v2232
      %v2353 = vadd.f32 %v1782, %v2235
      %v2354 = vadd.f32 %v1787, %v2240
      %v2355 = vadd.f32 %v1790, %v2243
      %v2356 = vadd.f32 %v1795, %v2248
      %v2357 = vadd.f32 %v1798, %v2251
      %v2358 = vadd.f32 %v1803, %v2256
      %v2359 = vadd.f32 %v1806, %v2259
      %v2360 = vadd.f32 %v1811, %v2264
      %v2361 = vadd.f32 %v1814, %v2267
      %v2362 = vadd.f32 %v1819, %v2272
      %v2363 = vadd.f32 %v1822, %v2275
      %v2364 = vadd.f32 %v1827, %v2280
      %v2365 = vadd.f32 %v1830, %v2283
      %v2366 = vadd.f32 %v1835, %v2288
      %v2367 = vadd.f32 %v1838, %v2291
      %v2368 = vadd.f32 %v1843, %v2296
      %v2369 = vadd.f32 %v1846, %v2299
      %v2370 = vadd.f32 %v1851, %v2304
      %v2371 = vadd.f32 %v1854, %v2307
      %v2372 = vadd.f32 %v1859, %v2312
      %v2373 = vadd.f32 %v1862, %v2315
      %v2374 = vadd.f32 %v1867, %v2320
      %v2375 = vadd.f32 %v1870, %v2323
      %v2376 = vadd.f32 %v1875, %v2328
      %v2377 = vadd.f32 %v1878, %v2331
      %v2378 = vadd.f32 %v1883, %v2336
      %v2379 = vadd.f32 %v1886, %v2339
      %v2380 = vadd.f32 %v1891, %v2344
      %v2381 = vadd.f32 %v1894, %v2347
      %v2382 = vld [vmem:[%s313] sm:$0xf]
      %v2383 = vld [vmem:[%s313 + $0x4] sm:$0xf]
      %v2384 = vld [vmem:[%s313 + $0xc] sm:$0xf]
      %v2385 = vld [vmem:[%s313 + $0x10] sm:$0xf]
      %v2386 = vld [vmem:[%s313 + $0x18] sm:$0xf]
      %v2387 = vld [vmem:[%s313 + $0x1c] sm:$0xf]
      %v2388 = vld [vmem:[%s313 + $0x24] sm:$0xf]
      %v2389 = vld [vmem:[%s313 + $0x28] sm:$0xf]
      %v2390 = vld [vmem:[%s313 + $0x30] sm:$0xf]
      %v2391 = vld [vmem:[%s313 + $0x34] sm:$0xf]
      %v2392 = vld [vmem:[%s313 + $0x3c] sm:$0xf]
      %v2393 = vld [vmem:[%s313 + $0x40] sm:$0xf]
      %v2394 = vld [vmem:[%s313 + $0x48] sm:$0xf]
      %v2395 = vld [vmem:[%s313 + $0x4c] sm:$0xf]
      %v2396 = vld [vmem:[%s313 + $0x54] sm:$0xf]
      %v2397 = vld [vmem:[%s313 + $0x58] sm:$0xf]
      %v2398 = vld [vmem:[%s313 + $0x60] sm:$0xf]
      %v2399 = vld [vmem:[%s313 + $0x64] sm:$0xf]
      %v2400 = vld [vmem:[%s313 + $0x6c] sm:$0xf]
      %v2401 = vld [vmem:[%s313 + $0x70] sm:$0xf]
      %v2402 = vld [vmem:[%s313 + $0x78] sm:$0xf]
      %v2403 = vld [vmem:[%s313 + $0x7c] sm:$0xf]
      %v2404 = vld [vmem:[%s313 + $0x84] sm:$0xf]
      %v2405 = vld [vmem:[%s313 + $0x88] sm:$0xf]
      %v2406 = vld [vmem:[%s313 + $0x90] sm:$0xf]
      %v2407 = vld [vmem:[%s313 + $0x94] sm:$0xf]
      %v2408 = vld [vmem:[%s313 + $0x9c] sm:$0xf]
      %v2409 = vld [vmem:[%s313 + $0xa0] sm:$0xf]
      %v2410 = vld [vmem:[%s313 + $0xa8] sm:$0xf]
      %v2411 = vld [vmem:[%s313 + $0xac] sm:$0xf]
      %v2412 = vld [vmem:[%s313 + $0xb4] sm:$0xf]
      %v2413 = vld [vmem:[%s313 + $0xb8] sm:$0xf]
      %s2414 = scalar_lea.vmem %s1, 192
      %v2415 = vld [vmem:[%s2414] sm:$0xf]
      %v2416 = vld [vmem:[%s2414 + $0x4] sm:$0xf]
      %v2417 = vld [vmem:[%s2414 + $0x8] sm:$0xf]
      %v2418 = vld [vmem:[%s2414 + $0xc] sm:$0xf]
      %v2419 = vld [vmem:[%s2414 + $0x10] sm:$0xf]
      %v2420 = vld [vmem:[%s2414 + $0x14] sm:$0xf]
      %v2421 = vld [vmem:[%s2414 + $0x18] sm:$0xf]
      %v2422 = vld [vmem:[%s2414 + $0x1c] sm:$0xf]
      %v2423 = vld [vmem:[%s2414 + $0x20] sm:$0xf]
      %v2424 = vld [vmem:[%s2414 + $0x24] sm:$0xf]
      %v2425 = vld [vmem:[%s2414 + $0x28] sm:$0xf]
      %v2426 = vld [vmem:[%s2414 + $0x2c] sm:$0xf]
      %v2427 = vld [vmem:[%s2414 + $0x30] sm:$0xf]
      %v2428 = vld [vmem:[%s2414 + $0x34] sm:$0xf]
      %v2429 = vld [vmem:[%s2414 + $0x38] sm:$0xf]
      %v2430 = vld [vmem:[%s2414 + $0x3c] sm:$0xf]
      %v2463 = vunpack.c.l.b16 %v2382
      %v2464 = vunpack.c.l.b16 %v2383
      %v2465 = vunpack.c.l.b16 %v2384
      %v2466 = vunpack.c.l.b16 %v2385
      %v2467 = vunpack.c.l.b16 %v2386
      %v2468 = vunpack.c.l.b16 %v2387
      %v2469 = vunpack.c.l.b16 %v2388
      %v2470 = vunpack.c.l.b16 %v2389
      %v2471 = vunpack.c.l.b16 %v2390
      %v2472 = vunpack.c.l.b16 %v2391
      %v2473 = vunpack.c.l.b16 %v2392
      %v2474 = vunpack.c.l.b16 %v2393
      %v2475 = vunpack.c.l.b16 %v2394
      %v2476 = vunpack.c.l.b16 %v2395
      %v2477 = vunpack.c.l.b16 %v2396
      %v2478 = vunpack.c.l.b16 %v2397
      %v2479 = vunpack.c.l.b16 %v2398
      %v2480 = vunpack.c.l.b16 %v2399
      %v2481 = vunpack.c.l.b16 %v2400
      %v2482 = vunpack.c.l.b16 %v2401
      %v2483 = vunpack.c.l.b16 %v2402
      %v2484 = vunpack.c.l.b16 %v2403
      %v2485 = vunpack.c.l.b16 %v2404
      %v2486 = vunpack.c.l.b16 %v2405
      %v2487 = vunpack.c.l.b16 %v2406
      %v2488 = vunpack.c.l.b16 %v2407
      %v2489 = vunpack.c.l.b16 %v2408
      %v2490 = vunpack.c.l.b16 %v2409
      %v2491 = vunpack.c.l.b16 %v2410
      %v2492 = vunpack.c.l.b16 %v2411
      %v2493 = vunpack.c.l.b16 %v2412
      %v2494 = vunpack.c.l.b16 %v2413
      %v2495 = vpack.c.b16 %v2464, %v2463
      %v2496 = vpack.c.b16 %v2466, %v2465
      %v2497 = vpack.c.b16 %v2468, %v2467
      %v2498 = vpack.c.b16 %v2470, %v2469
      %v2499 = vpack.c.b16 %v2472, %v2471
      %v2500 = vpack.c.b16 %v2474, %v2473
      %v2501 = vpack.c.b16 %v2476, %v2475
      %v2502 = vpack.c.b16 %v2478, %v2477
      %v2503 = vpack.c.b16 %v2480, %v2479
      %v2504 = vpack.c.b16 %v2482, %v2481
      %v2505 = vpack.c.b16 %v2484, %v2483
      %v2506 = vpack.c.b16 %v2486, %v2485
      %v2507 = vpack.c.b16 %v2488, %v2487
      %v2508 = vpack.c.b16 %v2490, %v2489
      %v2509 = vpack.c.b16 %v2492, %v2491
      %v2510 = vpack.c.b16 %v2494, %v2493
      %v2543 = vunpack.c.l.b16 %v2415
      %v2544 = vunpack.c.l.b16 %v2416
      %v2545 = vunpack.c.l.b16 %v2417
      %v2546 = vunpack.c.l.b16 %v2418
      %v2547 = vunpack.c.l.b16 %v2419
      %v2548 = vunpack.c.l.b16 %v2420
      %v2549 = vunpack.c.l.b16 %v2421
      %v2550 = vunpack.c.l.b16 %v2422
      %v2551 = vunpack.c.l.b16 %v2423
      %v2552 = vunpack.c.l.b16 %v2424
      %v2553 = vunpack.c.l.b16 %v2425
      %v2554 = vunpack.c.l.b16 %v2426
      %v2555 = vunpack.c.l.b16 %v2427
      %v2556 = vunpack.c.l.b16 %v2428
      %v2557 = vunpack.c.l.b16 %v2429
      %v2558 = vunpack.c.l.b16 %v2430
      %v2559 = vpack.c.b16 %v2544, %v2543
      %v2560 = vpack.c.b16 %v2546, %v2545
      %v2561 = vpack.c.b16 %v2548, %v2547
      %v2562 = vpack.c.b16 %v2550, %v2549
      %v2563 = vpack.c.b16 %v2552, %v2551
      %v2564 = vpack.c.b16 %v2554, %v2553
      %v2565 = vpack.c.b16 %v2556, %v2555
      %v2566 = vpack.c.b16 %v2558, %v2557
      %2575 = vmatprep.subr.bf16.mxu0 0
      %2576 = vmatpush1.bf16.msra.mxu0 %v2566
      %2577 = vmatprep.subr.bf16.mxu0 0
      %2578 = vmatpush1.bf16.msra.mxu0 %v2565
      %2579 = vmatprep.subr.bf16.mxu0 0
      %2580 = vmatpush1.bf16.msra.mxu0 %v2564
      %2581 = vmatprep.subr.bf16.mxu0 0
      %2582 = vmatpush1.bf16.msra.mxu0 %v2563
      %2583 = vmatprep.subr.bf16.mxu0 0
      %2584 = vmatpush1.bf16.msra.mxu0 %v2562
      %2585 = vmatprep.subr.bf16.mxu0 0
      %2586 = vmatpush1.bf16.msra.mxu0 %v2561
      %2587 = vmatprep.subr.bf16.mxu0 0
      %2588 = vmatpush1.bf16.msra.mxu0 %v2560
      %2589 = vmatprep.subr.bf16.mxu0 0
      %2590 = vmatpush1.bf16.msra.mxu0 %v2559
      %2591 = vmatprep.subr.bf16.mxu0 0
      %2592 = vmatpush2.bf16.msra.mxu0 0
      %2593 = vmatprep.subr.bf16.mxu0 0
      %2594 = vmatpush2.bf16.msra.mxu0 0
      %2595 = vmatprep.subr.bf16.mxu0 0
      %2596 = vmatpush2.bf16.msra.mxu0 0
      %2597 = vmatprep.subr.bf16.mxu0 0
      %2598 = vmatpush2.bf16.msra.mxu0 0
      %2599 = vmatprep.subr.bf16.mxu0 0
      %2600 = vmatpush2.bf16.msra.mxu0 0
      %2601 = vmatprep.subr.bf16.mxu0 0
      %2602 = vmatpush2.bf16.msra.mxu0 0
      %2603 = vmatprep.subr.bf16.mxu0 0
      %2604 = vmatpush2.bf16.msra.mxu0 0
      %2605 = vmatprep.subr.bf16.mxu0 0
      %2606 = vmatpush2.bf16.msra.mxu0 0
      %2607 = vmatprep.mubr.bf16.mxu0 0
      %2608 = vmatmul.mubr.bf16.gmra.mxu0 %v2495
      %v2609 = vpop.f32.mrf.mxu0
      %v2610 = vadd.f32 0.0, %v2609
      %v2611 = vpop.f32.mrf.mxu0
      %v2612 = vpop.f32.mrf.mxu0
      %v2613 = vadd.f32 0.0, %v2612
      %v2614 = vpop.f32.mrf.mxu0
      %2615 = vmatprep.mubr.bf16.mxu0 0
      %2616 = vmatmul.mubr.bf16.gmra.mxu0 %v2496
      %v2617 = vpop.f32.mrf.mxu0
      %v2618 = vadd.f32 0.0, %v2617
      %v2619 = vpop.f32.mrf.mxu0
      %v2620 = vpop.f32.mrf.mxu0
      %v2621 = vadd.f32 0.0, %v2620
      %v2622 = vpop.f32.mrf.mxu0
      %2623 = vmatprep.mubr.bf16.mxu0 0
      %2624 = vmatmul.mubr.bf16.gmra.mxu0 %v2497
      %v2625 = vpop.f32.mrf.mxu0
      %v2626 = vadd.f32 0.0, %v2625
      %v2627 = vpop.f32.mrf.mxu0
      %v2628 = vpop.f32.mrf.mxu0
      %v2629 = vadd.f32 0.0, %v2628
      %v2630 = vpop.f32.mrf.mxu0
      %2631 = vmatprep.mubr.bf16.mxu0 0
      %2632 = vmatmul.mubr.bf16.gmra.mxu0 %v2498
      %v2633 = vpop.f32.mrf.mxu0
      %v2634 = vadd.f32 0.0, %v2633
      %v2635 = vpop.f32.mrf.mxu0
      %v2636 = vpop.f32.mrf.mxu0
      %v2637 = vadd.f32 0.0, %v2636
      %v2638 = vpop.f32.mrf.mxu0
      %2639 = vmatprep.mubr.bf16.mxu0 0
      %2640 = vmatmul.mubr.bf16.gmra.mxu0 %v2499
      %v2641 = vpop.f32.mrf.mxu0
      %v2642 = vadd.f32 0.0, %v2641
      %v2643 = vpop.f32.mrf.mxu0
      %v2644 = vpop.f32.mrf.mxu0
      %v2645 = vadd.f32 0.0, %v2644
      %v2646 = vpop.f32.mrf.mxu0
      %2647 = vmatprep.mubr.bf16.mxu0 0
      %2648 = vmatmul.mubr.bf16.gmra.mxu0 %v2500
      %v2649 = vpop.f32.mrf.mxu0
      %v2650 = vadd.f32 0.0, %v2649
      %v2651 = vpop.f32.mrf.mxu0
      %v2652 = vpop.f32.mrf.mxu0
      %v2653 = vadd.f32 0.0, %v2652
      %v2654 = vpop.f32.mrf.mxu0
      %2655 = vmatprep.mubr.bf16.mxu0 0
      %2656 = vmatmul.mubr.bf16.gmra.mxu0 %v2501
      %v2657 = vpop.f32.mrf.mxu0
      %v2658 = vadd.f32 0.0, %v2657
      %v2659 = vpop.f32.mrf.mxu0
      %v2660 = vpop.f32.mrf.mxu0
      %v2661 = vadd.f32 0.0, %v2660
      %v2662 = vpop.f32.mrf.mxu0
      %2663 = vmatprep.mubr.bf16.mxu0 0
      %2664 = vmatmul.mubr.bf16.gmra.mxu0 %v2502
      %v2665 = vpop.f32.mrf.mxu0
      %v2666 = vadd.f32 0.0, %v2665
      %v2667 = vpop.f32.mrf.mxu0
      %v2668 = vpop.f32.mrf.mxu0
      %v2669 = vadd.f32 0.0, %v2668
      %v2670 = vpop.f32.mrf.mxu0
      %2671 = vmatprep.mubr.bf16.mxu0 0
      %2672 = vmatmul.mubr.bf16.gmra.mxu0 %v2503
      %v2673 = vpop.f32.mrf.mxu0
      %v2674 = vadd.f32 0.0, %v2673
      %v2675 = vpop.f32.mrf.mxu0
      %v2676 = vpop.f32.mrf.mxu0
      %v2677 = vadd.f32 0.0, %v2676
      %v2678 = vpop.f32.mrf.mxu0
      %2679 = vmatprep.mubr.bf16.mxu0 0
      %2680 = vmatmul.mubr.bf16.gmra.mxu0 %v2504
      %v2681 = vpop.f32.mrf.mxu0
      %v2682 = vadd.f32 0.0, %v2681
      %v2683 = vpop.f32.mrf.mxu0
      %v2684 = vpop.f32.mrf.mxu0
      %v2685 = vadd.f32 0.0, %v2684
      %v2686 = vpop.f32.mrf.mxu0
      %2687 = vmatprep.mubr.bf16.mxu0 0
      %2688 = vmatmul.mubr.bf16.gmra.mxu0 %v2505
      %v2689 = vpop.f32.mrf.mxu0
      %v2690 = vadd.f32 0.0, %v2689
      %v2691 = vpop.f32.mrf.mxu0
      %v2692 = vpop.f32.mrf.mxu0
      %v2693 = vadd.f32 0.0, %v2692
      %v2694 = vpop.f32.mrf.mxu0
      %2695 = vmatprep.mubr.bf16.mxu0 0
      %2696 = vmatmul.mubr.bf16.gmra.mxu0 %v2506
      %v2697 = vpop.f32.mrf.mxu0
      %v2698 = vadd.f32 0.0, %v2697
      %v2699 = vpop.f32.mrf.mxu0
      %v2700 = vpop.f32.mrf.mxu0
      %v2701 = vadd.f32 0.0, %v2700
      %v2702 = vpop.f32.mrf.mxu0
      %2703 = vmatprep.mubr.bf16.mxu0 0
      %2704 = vmatmul.mubr.bf16.gmra.mxu0 %v2507
      %v2705 = vpop.f32.mrf.mxu0
      %v2706 = vadd.f32 0.0, %v2705
      %v2707 = vpop.f32.mrf.mxu0
      %v2708 = vpop.f32.mrf.mxu0
      %v2709 = vadd.f32 0.0, %v2708
      %v2710 = vpop.f32.mrf.mxu0
      %2711 = vmatprep.mubr.bf16.mxu0 0
      %2712 = vmatmul.mubr.bf16.gmra.mxu0 %v2508
      %v2713 = vpop.f32.mrf.mxu0
      %v2714 = vadd.f32 0.0, %v2713
      %v2715 = vpop.f32.mrf.mxu0
      %v2716 = vpop.f32.mrf.mxu0
      %v2717 = vadd.f32 0.0, %v2716
      %v2718 = vpop.f32.mrf.mxu0
      %2719 = vmatprep.mubr.bf16.mxu0 0
      %2720 = vmatmul.mubr.bf16.gmra.mxu0 %v2509
      %v2721 = vpop.f32.mrf.mxu0
      %v2722 = vadd.f32 0.0, %v2721
      %v2723 = vpop.f32.mrf.mxu0
      %v2724 = vpop.f32.mrf.mxu0
      %v2725 = vadd.f32 0.0, %v2724
      %v2726 = vpop.f32.mrf.mxu0
      %2727 = vmatprep.mubr.bf16.mxu0 0
      %2728 = vmatmul.mubr.bf16.gmra.mxu0 %v2510
      %v2729 = vpop.f32.mrf.mxu0
      %v2730 = vadd.f32 0.0, %v2729
      %v2731 = vpop.f32.mrf.mxu0
      %v2732 = vpop.f32.mrf.mxu0
      %v2733 = vadd.f32 0.0, %v2732
      %v2734 = vpop.f32.mrf.mxu0
      %2735 = vdwg.mxu0
      %v2736 = vadd.f32 %v2350, %v2610
      %v2737 = vadd.f32 %v2351, %v2613
      %v2738 = vadd.f32 %v2352, %v2618
      %v2739 = vadd.f32 %v2353, %v2621
      %v2740 = vadd.f32 %v2354, %v2626
      %v2741 = vadd.f32 %v2355, %v2629
      %v2742 = vadd.f32 %v2356, %v2634
      %v2743 = vadd.f32 %v2357, %v2637
      %v2744 = vadd.f32 %v2358, %v2642
      %v2745 = vadd.f32 %v2359, %v2645
      %v2746 = vadd.f32 %v2360, %v2650
      %v2747 = vadd.f32 %v2361, %v2653
      %v2748 = vadd.f32 %v2362, %v2658
      %v2749 = vadd.f32 %v2363, %v2661
      %v2750 = vadd.f32 %v2364, %v2666
      %v2751 = vadd.f32 %v2365, %v2669
      %v2752 = vadd.f32 %v2366, %v2674
      %v2753 = vadd.f32 %v2367, %v2677
      %v2754 = vadd.f32 %v2368, %v2682
      %v2755 = vadd.f32 %v2369, %v2685
      %v2756 = vadd.f32 %v2370, %v2690
      %v2757 = vadd.f32 %v2371, %v2693
      %v2758 = vadd.f32 %v2372, %v2698
      %v2759 = vadd.f32 %v2373, %v2701
      %v2760 = vadd.f32 %v2374, %v2706
      %v2761 = vadd.f32 %v2375, %v2709
      %v2762 = vadd.f32 %v2376, %v2714
      %v2763 = vadd.f32 %v2377, %v2717
      %v2764 = vadd.f32 %v2378, %v2722
      %v2765 = vadd.f32 %v2379, %v2725
      %v2766 = vadd.f32 %v2380, %v2730
      %v2767 = vadd.f32 %v2381, %v2733
      %v2768 = vld [vmem:[%s313] sm:$0xf]
      %v2769 = vld [vmem:[%s313 + $0x4] sm:$0xf]
      %v2770 = vld [vmem:[%s313 + $0x8] sm:$0x1]
      %v2771 = vld [vmem:[%s313 + $0xc] sm:$0xf]
      %v2772 = vld [vmem:[%s313 + $0x10] sm:$0xf]
      %v2773 = vld [vmem:[%s313 + $0x14] sm:$0x1]
      %v2774 = vld [vmem:[%s313 + $0x18] sm:$0xf]
      %v2775 = vld [vmem:[%s313 + $0x1c] sm:$0xf]
      %v2776 = vld [vmem:[%s313 + $0x20] sm:$0x1]
      %v2777 = vld [vmem:[%s313 + $0x24] sm:$0xf]
      %v2778 = vld [vmem:[%s313 + $0x28] sm:$0xf]
      %v2779 = vld [vmem:[%s313 + $0x2c] sm:$0x1]
      %v2780 = vld [vmem:[%s313 + $0x30] sm:$0xf]
      %v2781 = vld [vmem:[%s313 + $0x34] sm:$0xf]
      %v2782 = vld [vmem:[%s313 + $0x38] sm:$0x1]
      %v2783 = vld [vmem:[%s313 + $0x3c] sm:$0xf]
      %v2784 = vld [vmem:[%s313 + $0x40] sm:$0xf]
      %v2785 = vld [vmem:[%s313 + $0x44] sm:$0x1]
      %v2786 = vld [vmem:[%s313 + $0x48] sm:$0xf]
      %v2787 = vld [vmem:[%s313 + $0x4c] sm:$0xf]
      %v2788 = vld [vmem:[%s313 + $0x50] sm:$0x1]
      %v2789 = vld [vmem:[%s313 + $0x54] sm:$0xf]
      %v2790 = vld [vmem:[%s313 + $0x58] sm:$0xf]
      %v2791 = vld [vmem:[%s313 + $0x5c] sm:$0x1]
      %v2792 = vld [vmem:[%s313 + $0x60] sm:$0xf]
      %v2793 = vld [vmem:[%s313 + $0x64] sm:$0xf]
      %v2794 = vld [vmem:[%s313 + $0x68] sm:$0x1]
      %v2795 = vld [vmem:[%s313 + $0x6c] sm:$0xf]
      %v2796 = vld [vmem:[%s313 + $0x70] sm:$0xf]
      %v2797 = vld [vmem:[%s313 + $0x74] sm:$0x1]
      %v2798 = vld [vmem:[%s313 + $0x78] sm:$0xf]
      %v2799 = vld [vmem:[%s313 + $0x7c] sm:$0xf]
      %v2800 = vld [vmem:[%s313 + $0x80] sm:$0x1]
      %v2801 = vld [vmem:[%s313 + $0x84] sm:$0xf]
      %v2802 = vld [vmem:[%s313 + $0x88] sm:$0xf]
      %v2803 = vld [vmem:[%s313 + $0x8c] sm:$0x1]
      %v2804 = vld [vmem:[%s313 + $0x90] sm:$0xf]
      %v2805 = vld [vmem:[%s313 + $0x94] sm:$0xf]
      %v2806 = vld [vmem:[%s313 + $0x98] sm:$0x1]
      %v2807 = vld [vmem:[%s313 + $0x9c] sm:$0xf]
      %v2808 = vld [vmem:[%s313 + $0xa0] sm:$0xf]
      %v2809 = vld [vmem:[%s313 + $0xa4] sm:$0x1]
      %v2810 = vld [vmem:[%s313 + $0xa8] sm:$0xf]
      %v2811 = vld [vmem:[%s313 + $0xac] sm:$0xf]
      %v2812 = vld [vmem:[%s313 + $0xb0] sm:$0x1]
      %v2813 = vld [vmem:[%s313 + $0xb4] sm:$0xf]
      %v2814 = vld [vmem:[%s313 + $0xb8] sm:$0xf]
      %v2815 = vld [vmem:[%s313 + $0xbc] sm:$0x1]
      %v2817 = vshrl.u32 %v2768, 16
      %v2819 = vrot.slane %v2817, 4
      %v2820 = vshll.u32 %v2768, 16
      %v2822 = vrot.slane %v2820, 5
      %v2823 = vor.u32 %v2819, %v2822
      %v2824 = vrot.slane %v2823, 4
      %v2826 = vshll.u32 %v2769, 16
      %v2828 = vrot.slane %v2826, 5
      %v2829 = vsel %vm917, %v2824, %v2828
      %v2830 = vshrl.u32 %v2769, 16
      %v2832 = vrot.slane %v2830, 4
      %v2833 = vor.u32 %v2832, %v2828
      %v2834 = vrot.slane %v2833, 4
      %v2836 = vshll.u32 %v2770, 16
      %v2838 = vrot.slane %v2836, 5
      %v2839 = vsel %vm917, %v2834, %v2838
      %v2841 = vshrl.u32 %v2771, 16
      %v2843 = vrot.slane %v2841, 4
      %v2844 = vshll.u32 %v2771, 16
      %v2846 = vrot.slane %v2844, 5
      %v2847 = vor.u32 %v2843, %v2846
      %v2848 = vrot.slane %v2847, 4
      %v2850 = vshll.u32 %v2772, 16
      %v2852 = vrot.slane %v2850, 5
      %v2853 = vsel %vm917, %v2848, %v2852
      %v2854 = vshrl.u32 %v2772, 16
      %v2856 = vrot.slane %v2854, 4
      %v2857 = vor.u32 %v2856, %v2852
      %v2858 = vrot.slane %v2857, 4
      %v2860 = vshll.u32 %v2773, 16
      %v2862 = vrot.slane %v2860, 5
      %v2863 = vsel %vm917, %v2858, %v2862
      %v2865 = vshrl.u32 %v2774, 16
      %v2867 = vrot.slane %v2865, 4
      %v2868 = vshll.u32 %v2774, 16
      %v2870 = vrot.slane %v2868, 5
      %v2871 = vor.u32 %v2867, %v2870
      %v2872 = vrot.slane %v2871, 4
      %v2874 = vshll.u32 %v2775, 16
      %v2876 = vrot.slane %v2874, 5
      %v2877 = vsel %vm917, %v2872, %v2876
      %v2878 = vshrl.u32 %v2775, 16
      %v2880 = vrot.slane %v2878, 4
      %v2881 = vor.u32 %v2880, %v2876
      %v2882 = vrot.slane %v2881, 4
      %v2884 = vshll.u32 %v2776, 16
      %v2886 = vrot.slane %v2884, 5
      %v2887 = vsel %vm917, %v2882, %v2886
      %v2889 = vshrl.u32 %v2777, 16
      %v2891 = vrot.slane %v2889, 4
      %v2892 = vshll.u32 %v2777, 16
      %v2894 = vrot.slane %v2892, 5
      %v2895 = vor.u32 %v2891, %v2894
      %v2896 = vrot.slane %v2895, 4
      %v2898 = vshll.u32 %v2778, 16
      %v2900 = vrot.slane %v2898, 5
      %v2901 = vsel %vm917, %v2896, %v2900
      %v2902 = vshrl.u32 %v2778, 16
      %v2904 = vrot.slane %v2902, 4
      %v2905 = vor.u32 %v2904, %v2900
      %v2906 = vrot.slane %v2905, 4
      %v2908 = vshll.u32 %v2779, 16
      %v2910 = vrot.slane %v2908, 5
      %v2911 = vsel %vm917, %v2906, %v2910
      %v2913 = vshrl.u32 %v2780, 16
      %v2915 = vrot.slane %v2913, 4
      %v2916 = vshll.u32 %v2780, 16
      %v2918 = vrot.slane %v2916, 5
      %v2919 = vor.u32 %v2915, %v2918
      %v2920 = vrot.slane %v2919, 4
      %v2922 = vshll.u32 %v2781, 16
      %v2924 = vrot.slane %v2922, 5
      %v2925 = vsel %vm917, %v2920, %v2924
      %v2926 = vshrl.u32 %v2781, 16
      %v2928 = vrot.slane %v2926, 4
      %v2929 = vor.u32 %v2928, %v2924
      %v2930 = vrot.slane %v2929, 4
      %v2932 = vshll.u32 %v2782, 16
      %v2934 = vrot.slane %v2932, 5
      %v2935 = vsel %vm917, %v2930, %v2934
      %v2937 = vshrl.u32 %v2783, 16
      %v2939 = vrot.slane %v2937, 4
      %v2940 = vshll.u32 %v2783, 16
      %v2942 = vrot.slane %v2940, 5
      %v2943 = vor.u32 %v2939, %v2942
      %v2944 = vrot.slane %v2943, 4
      %v2946 = vshll.u32 %v2784, 16
      %v2948 = vrot.slane %v2946, 5
      %v2949 = vsel %vm917, %v2944, %v2948
      %v2950 = vshrl.u32 %v2784, 16
      %v2952 = vrot.slane %v2950, 4
      %v2953 = vor.u32 %v2952, %v2948
      %v2954 = vrot.slane %v2953, 4
      %v2956 = vshll.u32 %v2785, 16
      %v2958 = vrot.slane %v2956, 5
      %v2959 = vsel %vm917, %v2954, %v2958
      %v2961 = vshrl.u32 %v2786, 16
      %v2963 = vrot.slane %v2961, 4
      %v2964 = vshll.u32 %v2786, 16
      %v2966 = vrot.slane %v2964, 5
      %v2967 = vor.u32 %v2963, %v2966
      %v2968 = vrot.slane %v2967, 4
      %v2970 = vshll.u32 %v2787, 16
      %v2972 = vrot.slane %v2970, 5
      %v2973 = vsel %vm917, %v2968, %v2972
      %v2974 = vshrl.u32 %v2787, 16
      %v2976 = vrot.slane %v2974, 4
      %v2977 = vor.u32 %v2976, %v2972
      %v2978 = vrot.slane %v2977, 4
      %v2980 = vshll.u32 %v2788, 16
      %v2982 = vrot.slane %v2980, 5
      %v2983 = vsel %vm917, %v2978, %v2982
      %v2985 = vshrl.u32 %v2789, 16
      %v2987 = vrot.slane %v2985, 4
      %v2988 = vshll.u32 %v2789, 16
      %v2990 = vrot.slane %v2988, 5
      %v2991 = vor.u32 %v2987, %v2990
      %v2992 = vrot.slane %v2991, 4
      %v2994 = vshll.u32 %v2790, 16
      %v2996 = vrot.slane %v2994, 5
      %v2997 = vsel %vm917, %v2992, %v2996
      %v2998 = vshrl.u32 %v2790, 16
      %v3000 = vrot.slane %v2998, 4
      %v3001 = vor.u32 %v3000, %v2996
      %v3002 = vrot.slane %v3001, 4
      %v3004 = vshll.u32 %v2791, 16
      %v3006 = vrot.slane %v3004, 5
      %v3007 = vsel %vm917, %v3002, %v3006
      %v3009 = vshrl.u32 %v2792, 16
      %v3011 = vrot.slane %v3009, 4
      %v3012 = vshll.u32 %v2792, 16
      %v3014 = vrot.slane %v3012, 5
      %v3015 = vor.u32 %v3011, %v3014
      %v3016 = vrot.slane %v3015, 4
      %v3018 = vshll.u32 %v2793, 16
      %v3020 = vrot.slane %v3018, 5
      %v3021 = vsel %vm917, %v3016, %v3020
      %v3022 = vshrl.u32 %v2793, 16
      %v3024 = vrot.slane %v3022, 4
      %v3025 = vor.u32 %v3024, %v3020
      %v3026 = vrot.slane %v3025, 4
      %v3028 = vshll.u32 %v2794, 16
      %v3030 = vrot.slane %v3028, 5
      %v3031 = vsel %vm917, %v3026, %v3030
      %v3033 = vshrl.u32 %v2795, 16
      %v3035 = vrot.slane %v3033, 4
      %v3036 = vshll.u32 %v2795, 16
      %v3038 = vrot.slane %v3036, 5
      %v3039 = vor.u32 %v3035, %v3038
      %v3040 = vrot.slane %v3039, 4
      %v3042 = vshll.u32 %v2796, 16
      %v3044 = vrot.slane %v3042, 5
      %v3045 = vsel %vm917, %v3040, %v3044
      %v3046 = vshrl.u32 %v2796, 16
      %v3048 = vrot.slane %v3046, 4
      %v3049 = vor.u32 %v3048, %v3044
      %v3050 = vrot.slane %v3049, 4
      %v3052 = vshll.u32 %v2797, 16
      %v3054 = vrot.slane %v3052, 5
      %v3055 = vsel %vm917, %v3050, %v3054
      %v3057 = vshrl.u32 %v2798, 16
      %v3059 = vrot.slane %v3057, 4
      %v3060 = vshll.u32 %v2798, 16
      %v3062 = vrot.slane %v3060, 5
      %v3063 = vor.u32 %v3059, %v3062
      %v3064 = vrot.slane %v3063, 4
      %v3066 = vshll.u32 %v2799, 16
      %v3068 = vrot.slane %v3066, 5
      %v3069 = vsel %vm917, %v3064, %v3068
      %v3070 = vshrl.u32 %v2799, 16
      %v3072 = vrot.slane %v3070, 4
      %v3073 = vor.u32 %v3072, %v3068
      %v3074 = vrot.slane %v3073, 4
      %v3076 = vshll.u32 %v2800, 16
      %v3078 = vrot.slane %v3076, 5
      %v3079 = vsel %vm917, %v3074, %v3078
      %v3081 = vshrl.u32 %v2801, 16
      %v3083 = vrot.slane %v3081, 4
      %v3084 = vshll.u32 %v2801, 16
      %v3086 = vrot.slane %v3084, 5
      %v3087 = vor.u32 %v3083, %v3086
      %v3088 = vrot.slane %v3087, 4
      %v3090 = vshll.u32 %v2802, 16
      %v3092 = vrot.slane %v3090, 5
      %v3093 = vsel %vm917, %v3088, %v3092
      %v3094 = vshrl.u32 %v2802, 16
      %v3096 = vrot.slane %v3094, 4
      %v3097 = vor.u32 %v3096, %v3092
      %v3098 = vrot.slane %v3097, 4
      %v3100 = vshll.u32 %v2803, 16
      %v3102 = vrot.slane %v3100, 5
      %v3103 = vsel %vm917, %v3098, %v3102
      %v3105 = vshrl.u32 %v2804, 16
      %v3107 = vrot.slane %v3105, 4
      %v3108 = vshll.u32 %v2804, 16
      %v3110 = vrot.slane %v3108, 5
      %v3111 = vor.u32 %v3107, %v3110
      %v3112 = vrot.slane %v3111, 4
      %v3114 = vshll.u32 %v2805, 16
      %v3116 = vrot.slane %v3114, 5
      %v3117 = vsel %vm917, %v3112, %v3116
      %v3118 = vshrl.u32 %v2805, 16
      %v3120 = vrot.slane %v3118, 4
      %v3121 = vor.u32 %v3120, %v3116
      %v3122 = vrot.slane %v3121, 4
      %v3124 = vshll.u32 %v2806, 16
      %v3126 = vrot.slane %v3124, 5
      %v3127 = vsel %vm917, %v3122, %v3126
      %v3129 = vshrl.u32 %v2807, 16
      %v3131 = vrot.slane %v3129, 4
      %v3132 = vshll.u32 %v2807, 16
      %v3134 = vrot.slane %v3132, 5
      %v3135 = vor.u32 %v3131, %v3134
      %v3136 = vrot.slane %v3135, 4
      %v3138 = vshll.u32 %v2808, 16
      %v3140 = vrot.slane %v3138, 5
      %v3141 = vsel %vm917, %v3136, %v3140
      %v3142 = vshrl.u32 %v2808, 16
      %v3144 = vrot.slane %v3142, 4
      %v3145 = vor.u32 %v3144, %v3140
      %v3146 = vrot.slane %v3145, 4
      %v3148 = vshll.u32 %v2809, 16
      %v3150 = vrot.slane %v3148, 5
      %v3151 = vsel %vm917, %v3146, %v3150
      %v3153 = vshrl.u32 %v2810, 16
      %v3155 = vrot.slane %v3153, 4
      %v3156 = vshll.u32 %v2810, 16
      %v3158 = vrot.slane %v3156, 5
      %v3159 = vor.u32 %v3155, %v3158
      %v3160 = vrot.slane %v3159, 4
      %v3162 = vshll.u32 %v2811, 16
      %v3164 = vrot.slane %v3162, 5
      %v3165 = vsel %vm917, %v3160, %v3164
      %v3166 = vshrl.u32 %v2811, 16
      %v3168 = vrot.slane %v3166, 4
      %v3169 = vor.u32 %v3168, %v3164
      %v3170 = vrot.slane %v3169, 4
      %v3172 = vshll.u32 %v2812, 16
      %v3174 = vrot.slane %v3172, 5
      %v3175 = vsel %vm917, %v3170, %v3174
      %v3177 = vshrl.u32 %v2813, 16
      %v3179 = vrot.slane %v3177, 4
      %v3180 = vshll.u32 %v2813, 16
      %v3182 = vrot.slane %v3180, 5
      %v3183 = vor.u32 %v3179, %v3182
      %v3184 = vrot.slane %v3183, 4
      %v3186 = vshll.u32 %v2814, 16
      %v3188 = vrot.slane %v3186, 5
      %v3189 = vsel %vm917, %v3184, %v3188
      %v3190 = vshrl.u32 %v2814, 16
      %v3192 = vrot.slane %v3190, 4
      %v3193 = vor.u32 %v3192, %v3188
      %v3194 = vrot.slane %v3193, 4
      %v3196 = vshll.u32 %v2815, 16
      %v3198 = vrot.slane %v3196, 5
      %v3199 = vsel %vm917, %v3194, %v3198
      %s3200 = scalar_lea.vmem %s1, 256
      %v3201 = vld [vmem:[%s3200] sm:$0xf]
      %v3202 = vld [vmem:[%s3200 + $0x4] sm:$0xf]
      %v3203 = vld [vmem:[%s3200 + $0x8] sm:$0xf]
      %v3204 = vld [vmem:[%s3200 + $0xc] sm:$0xf]
      %v3205 = vld [vmem:[%s3200 + $0x10] sm:$0xf]
      %v3206 = vld [vmem:[%s3200 + $0x14] sm:$0xf]
      %v3207 = vld [vmem:[%s3200 + $0x18] sm:$0xf]
      %v3208 = vld [vmem:[%s3200 + $0x1c] sm:$0xf]
      %v3209 = vld [vmem:[%s3200 + $0x20] sm:$0xf]
      %v3210 = vld [vmem:[%s3200 + $0x24] sm:$0xf]
      %v3211 = vld [vmem:[%s3200 + $0x28] sm:$0xf]
      %v3212 = vld [vmem:[%s3200 + $0x2c] sm:$0xf]
      %v3213 = vld [vmem:[%s3200 + $0x30] sm:$0xf]
      %v3214 = vld [vmem:[%s3200 + $0x34] sm:$0xf]
      %v3215 = vld [vmem:[%s3200 + $0x38] sm:$0xf]
      %v3216 = vld [vmem:[%s3200 + $0x3c] sm:$0xf]
      %v3217 = vunpack.c.l.b16 %v2829
      %v3218 = vunpack.c.l.b16 %v2839
      %v3219 = vunpack.c.l.b16 %v2853
      %v3220 = vunpack.c.l.b16 %v2863
      %v3221 = vunpack.c.l.b16 %v2877
      %v3222 = vunpack.c.l.b16 %v2887
      %v3223 = vunpack.c.l.b16 %v2901
      %v3224 = vunpack.c.l.b16 %v2911
      %v3225 = vunpack.c.l.b16 %v2925
      %v3226 = vunpack.c.l.b16 %v2935
      %v3227 = vunpack.c.l.b16 %v2949
      %v3228 = vunpack.c.l.b16 %v2959
      %v3229 = vunpack.c.l.b16 %v2973
      %v3230 = vunpack.c.l.b16 %v2983
      %v3231 = vunpack.c.l.b16 %v2997
      %v3232 = vunpack.c.l.b16 %v3007
      %v3233 = vunpack.c.l.b16 %v3021
      %v3234 = vunpack.c.l.b16 %v3031
      %v3235 = vunpack.c.l.b16 %v3045
      %v3236 = vunpack.c.l.b16 %v3055
      %v3237 = vunpack.c.l.b16 %v3069
      %v3238 = vunpack.c.l.b16 %v3079
      %v3239 = vunpack.c.l.b16 %v3093
      %v3240 = vunpack.c.l.b16 %v3103
      %v3241 = vunpack.c.l.b16 %v3117
      %v3242 = vunpack.c.l.b16 %v3127
      %v3243 = vunpack.c.l.b16 %v3141
      %v3244 = vunpack.c.l.b16 %v3151
      %v3245 = vunpack.c.l.b16 %v3165
      %v3246 = vunpack.c.l.b16 %v3175
      %v3247 = vunpack.c.l.b16 %v3189
      %v3248 = vunpack.c.l.b16 %v3199
      %v3249 = vpack.c.b16 %v3218, %v3217
      %v3250 = vpack.c.b16 %v3220, %v3219
      %v3251 = vpack.c.b16 %v3222, %v3221
      %v3252 = vpack.c.b16 %v3224, %v3223
      %v3253 = vpack.c.b16 %v3226, %v3225
      %v3254 = vpack.c.b16 %v3228, %v3227
      %v3255 = vpack.c.b16 %v3230, %v3229
      %v3256 = vpack.c.b16 %v3232, %v3231
      %v3257 = vpack.c.b16 %v3234, %v3233
      %v3258 = vpack.c.b16 %v3236, %v3235
      %v3259 = vpack.c.b16 %v3238, %v3237
      %v3260 = vpack.c.b16 %v3240, %v3239
      %v3261 = vpack.c.b16 %v3242, %v3241
      %v3262 = vpack.c.b16 %v3244, %v3243
      %v3263 = vpack.c.b16 %v3246, %v3245
      %v3264 = vpack.c.b16 %v3248, %v3247
      %v3297 = vunpack.c.l.b16 %v3201
      %v3298 = vunpack.c.l.b16 %v3202
      %v3299 = vunpack.c.l.b16 %v3203
      %v3300 = vunpack.c.l.b16 %v3204
      %v3301 = vunpack.c.l.b16 %v3205
      %v3302 = vunpack.c.l.b16 %v3206
      %v3303 = vunpack.c.l.b16 %v3207
      %v3304 = vunpack.c.l.b16 %v3208
      %v3305 = vunpack.c.l.b16 %v3209
      %v3306 = vunpack.c.l.b16 %v3210
      %v3307 = vunpack.c.l.b16 %v3211
      %v3308 = vunpack.c.l.b16 %v3212
      %v3309 = vunpack.c.l.b16 %v3213
      %v3310 = vunpack.c.l.b16 %v3214
      %v3311 = vunpack.c.l.b16 %v3215
      %v3312 = vunpack.c.l.b16 %v3216
      %v3313 = vpack.c.b16 %v3298, %v3297
      %v3314 = vpack.c.b16 %v3300, %v3299
      %v3315 = vpack.c.b16 %v3302, %v3301
      %v3316 = vpack.c.b16 %v3304, %v3303
      %v3317 = vpack.c.b16 %v3306, %v3305
      %v3318 = vpack.c.b16 %v3308, %v3307
      %v3319 = vpack.c.b16 %v3310, %v3309
      %v3320 = vpack.c.b16 %v3312, %v3311
      %3329 = vmatprep.subr.bf16.mxu0 0
      %3330 = vmatpush1.bf16.msra.mxu0 %v3320
      %3331 = vmatprep.subr.bf16.mxu0 0
      %3332 = vmatpush1.bf16.msra.mxu0 %v3319
      %3333 = vmatprep.subr.bf16.mxu0 0
      %3334 = vmatpush1.bf16.msra.mxu0 %v3318
      %3335 = vmatprep.subr.bf16.mxu0 0
      %3336 = vmatpush1.bf16.msra.mxu0 %v3317
      %3337 = vmatprep.subr.bf16.mxu0 0
      %3338 = vmatpush1.bf16.msra.mxu0 %v3316
      %3339 = vmatprep.subr.bf16.mxu0 0
      %3340 = vmatpush1.bf16.msra.mxu0 %v3315
      %3341 = vmatprep.subr.bf16.mxu0 0
      %3342 = vmatpush1.bf16.msra.mxu0 %v3314
      %3343 = vmatprep.subr.bf16.mxu0 0
      %3344 = vmatpush1.bf16.msra.mxu0 %v3313
      %3345 = vmatprep.subr.bf16.mxu0 0
      %3346 = vmatpush2.bf16.msra.mxu0 0
      %3347 = vmatprep.subr.bf16.mxu0 0
      %3348 = vmatpush2.bf16.msra.mxu0 0
      %3349 = vmatprep.subr.bf16.mxu0 0
      %3350 = vmatpush2.bf16.msra.mxu0 0
      %3351 = vmatprep.subr.bf16.mxu0 0
      %3352 = vmatpush2.bf16.msra.mxu0 0
      %3353 = vmatprep.subr.bf16.mxu0 0
      %3354 = vmatpush2.bf16.msra.mxu0 0
      %3355 = vmatprep.subr.bf16.mxu0 0
      %3356 = vmatpush2.bf16.msra.mxu0 0
      %3357 = vmatprep.subr.bf16.mxu0 0
      %3358 = vmatpush2.bf16.msra.mxu0 0
      %3359 = vmatprep.subr.bf16.mxu0 0
      %3360 = vmatpush2.bf16.msra.mxu0 0
      %3361 = vmatprep.mubr.bf16.mxu0 0
      %3362 = vmatmul.mubr.bf16.gmra.mxu0 %v3249
      %v3363 = vpop.f32.mrf.mxu0
      %v3364 = vadd.f32 0.0, %v3363
      %v3365 = vpop.f32.mrf.mxu0
      %v3366 = vpop.f32.mrf.mxu0
      %v3367 = vadd.f32 0.0, %v3366
      %v3368 = vpop.f32.mrf.mxu0
      %3369 = vmatprep.mubr.bf16.mxu0 0
      %3370 = vmatmul.mubr.bf16.gmra.mxu0 %v3250
      %v3371 = vpop.f32.mrf.mxu0
      %v3372 = vadd.f32 0.0, %v3371
      %v3373 = vpop.f32.mrf.mxu0
      %v3374 = vpop.f32.mrf.mxu0
      %v3375 = vadd.f32 0.0, %v3374
      %v3376 = vpop.f32.mrf.mxu0
      %3377 = vmatprep.mubr.bf16.mxu0 0
      %3378 = vmatmul.mubr.bf16.gmra.mxu0 %v3251
      %v3379 = vpop.f32.mrf.mxu0
      %v3380 = vadd.f32 0.0, %v3379
      %v3381 = vpop.f32.mrf.mxu0
      %v3382 = vpop.f32.mrf.mxu0
      %v3383 = vadd.f32 0.0, %v3382
      %v3384 = vpop.f32.mrf.mxu0
      %3385 = vmatprep.mubr.bf16.mxu0 0
      %3386 = vmatmul.mubr.bf16.gmra.mxu0 %v3252
      %v3387 = vpop.f32.mrf.mxu0
      %v3388 = vadd.f32 0.0, %v3387
      %v3389 = vpop.f32.mrf.mxu0
      %v3390 = vpop.f32.mrf.mxu0
      %v3391 = vadd.f32 0.0, %v3390
      %v3392 = vpop.f32.mrf.mxu0
      %3393 = vmatprep.mubr.bf16.mxu0 0
      %3394 = vmatmul.mubr.bf16.gmra.mxu0 %v3253
      %v3395 = vpop.f32.mrf.mxu0
      %v3396 = vadd.f32 0.0, %v3395
      %v3397 = vpop.f32.mrf.mxu0
      %v3398 = vpop.f32.mrf.mxu0
      %v3399 = vadd.f32 0.0, %v3398
      %v3400 = vpop.f32.mrf.mxu0
      %3401 = vmatprep.mubr.bf16.mxu0 0
      %3402 = vmatmul.mubr.bf16.gmra.mxu0 %v3254
      %v3403 = vpop.f32.mrf.mxu0
      %v3404 = vadd.f32 0.0, %v3403
      %v3405 = vpop.f32.mrf.mxu0
      %v3406 = vpop.f32.mrf.mxu0
      %v3407 = vadd.f32 0.0, %v3406
      %v3408 = vpop.f32.mrf.mxu0
      %3409 = vmatprep.mubr.bf16.mxu0 0
      %3410 = vmatmul.mubr.bf16.gmra.mxu0 %v3255
      %v3411 = vpop.f32.mrf.mxu0
      %v3412 = vadd.f32 0.0, %v3411
      %v3413 = vpop.f32.mrf.mxu0
      %v3414 = vpop.f32.mrf.mxu0
      %v3415 = vadd.f32 0.0, %v3414
      %v3416 = vpop.f32.mrf.mxu0
      %3417 = vmatprep.mubr.bf16.mxu0 0
      %3418 = vmatmul.mubr.bf16.gmra.mxu0 %v3256
      %v3419 = vpop.f32.mrf.mxu0
      %v3420 = vadd.f32 0.0, %v3419
      %v3421 = vpop.f32.mrf.mxu0
      %v3422 = vpop.f32.mrf.mxu0
      %v3423 = vadd.f32 0.0, %v3422
      %v3424 = vpop.f32.mrf.mxu0
      %3425 = vmatprep.mubr.bf16.mxu0 0
      %3426 = vmatmul.mubr.bf16.gmra.mxu0 %v3257
      %v3427 = vpop.f32.mrf.mxu0
      %v3428 = vadd.f32 0.0, %v3427
      %v3429 = vpop.f32.mrf.mxu0
      %v3430 = vpop.f32.mrf.mxu0
      %v3431 = vadd.f32 0.0, %v3430
      %v3432 = vpop.f32.mrf.mxu0
      %3433 = vmatprep.mubr.bf16.mxu0 0
      %3434 = vmatmul.mubr.bf16.gmra.mxu0 %v3258
      %v3435 = vpop.f32.mrf.mxu0
      %v3436 = vadd.f32 0.0, %v3435
      %v3437 = vpop.f32.mrf.mxu0
      %v3438 = vpop.f32.mrf.mxu0
      %v3439 = vadd.f32 0.0, %v3438
      %v3440 = vpop.f32.mrf.mxu0
      %3441 = vmatprep.mubr.bf16.mxu0 0
      %3442 = vmatmul.mubr.bf16.gmra.mxu0 %v3259
      %v3443 = vpop.f32.mrf.mxu0
      %v3444 = vadd.f32 0.0, %v3443
      %v3445 = vpop.f32.mrf.mxu0
      %v3446 = vpop.f32.mrf.mxu0
      %v3447 = vadd.f32 0.0, %v3446
      %v3448 = vpop.f32.mrf.mxu0
      %3449 = vmatprep.mubr.bf16.mxu0 0
      %3450 = vmatmul.mubr.bf16.gmra.mxu0 %v3260
      %v3451 = vpop.f32.mrf.mxu0
      %v3452 = vadd.f32 0.0, %v3451
      %v3453 = vpop.f32.mrf.mxu0
      %v3454 = vpop.f32.mrf.mxu0
      %v3455 = vadd.f32 0.0, %v3454
      %v3456 = vpop.f32.mrf.mxu0
      %3457 = vmatprep.mubr.bf16.mxu0 0
      %3458 = vmatmul.mubr.bf16.gmra.mxu0 %v3261
      %v3459 = vpop.f32.mrf.mxu0
      %v3460 = vadd.f32 0.0, %v3459
      %v3461 = vpop.f32.mrf.mxu0
      %v3462 = vpop.f32.mrf.mxu0
      %v3463 = vadd.f32 0.0, %v3462
      %v3464 = vpop.f32.mrf.mxu0
      %3465 = vmatprep.mubr.bf16.mxu0 0
      %3466 = vmatmul.mubr.bf16.gmra.mxu0 %v3262
      %v3467 = vpop.f32.mrf.mxu0
      %v3468 = vadd.f32 0.0, %v3467
      %v3469 = vpop.f32.mrf.mxu0
      %v3470 = vpop.f32.mrf.mxu0
      %v3471 = vadd.f32 0.0, %v3470
      %v3472 = vpop.f32.mrf.mxu0
      %3473 = vmatprep.mubr.bf16.mxu0 0
      %3474 = vmatmul.mubr.bf16.gmra.mxu0 %v3263
      %v3475 = vpop.f32.mrf.mxu0
      %v3476 = vadd.f32 0.0, %v3475
      %v3477 = vpop.f32.mrf.mxu0
      %v3478 = vpop.f32.mrf.mxu0
      %v3479 = vadd.f32 0.0, %v3478
      %v3480 = vpop.f32.mrf.mxu0
      %3481 = vmatprep.mubr.bf16.mxu0 0
      %3482 = vmatmul.mubr.bf16.gmra.mxu0 %v3264
      %v3483 = vpop.f32.mrf.mxu0
      %v3484 = vadd.f32 0.0, %v3483
      %v3485 = vpop.f32.mrf.mxu0
      %v3486 = vpop.f32.mrf.mxu0
      %v3487 = vadd.f32 0.0, %v3486
      %v3488 = vpop.f32.mrf.mxu0
      %3489 = vdwg.mxu0
      %v3490 = vadd.f32 %v2736, %v3364
      %v3491 = vadd.f32 %v2737, %v3367
      %v3492 = vadd.f32 %v2738, %v3372
      %v3493 = vadd.f32 %v2739, %v3375
      %v3494 = vadd.f32 %v2740, %v3380
      %v3495 = vadd.f32 %v2741, %v3383
      %v3496 = vadd.f32 %v2742, %v3388
      %v3497 = vadd.f32 %v2743, %v3391
      %v3498 = vadd.f32 %v2744, %v3396
      %v3499 = vadd.f32 %v2745, %v3399
      %v3500 = vadd.f32 %v2746, %v3404
      %v3501 = vadd.f32 %v2747, %v3407
      %v3502 = vadd.f32 %v2748, %v3412
      %v3503 = vadd.f32 %v2749, %v3415
      %v3504 = vadd.f32 %v2750, %v3420
      %v3505 = vadd.f32 %v2751, %v3423
      %v3506 = vadd.f32 %v2752, %v3428
      %v3507 = vadd.f32 %v2753, %v3431
      %v3508 = vadd.f32 %v2754, %v3436
      %v3509 = vadd.f32 %v2755, %v3439
      %v3510 = vadd.f32 %v2756, %v3444
      %v3511 = vadd.f32 %v2757, %v3447
      %v3512 = vadd.f32 %v2758, %v3452
      %v3513 = vadd.f32 %v2759, %v3455
      %v3514 = vadd.f32 %v2760, %v3460
      %v3515 = vadd.f32 %v2761, %v3463
      %v3516 = vadd.f32 %v2762, %v3468
      %v3517 = vadd.f32 %v2763, %v3471
      %v3518 = vadd.f32 %v2764, %v3476
      %v3519 = vadd.f32 %v2765, %v3479
      %v3520 = vadd.f32 %v2766, %v3484
      %v3521 = vadd.f32 %v2767, %v3487
      %v3522 = vld [vmem:[%s313] sm:$0xe]
      %v3523 = vld [vmem:[%s313 + $0xc] sm:$0xe]
      %v3524 = vld [vmem:[%s313 + $0x18] sm:$0xe]
      %v3525 = vld [vmem:[%s313 + $0x24] sm:$0xe]
      %v3526 = vld [vmem:[%s313 + $0x30] sm:$0xe]
      %v3527 = vld [vmem:[%s313 + $0x3c] sm:$0xe]
      %v3528 = vld [vmem:[%s313 + $0x48] sm:$0xe]
      %v3529 = vld [vmem:[%s313 + $0x54] sm:$0xe]
      %v3530 = vld [vmem:[%s313 + $0x60] sm:$0xe]
      %v3531 = vld [vmem:[%s313 + $0x6c] sm:$0xe]
      %v3532 = vld [vmem:[%s313 + $0x78] sm:$0xe]
      %v3533 = vld [vmem:[%s313 + $0x84] sm:$0xe]
      %v3534 = vld [vmem:[%s313 + $0x90] sm:$0xe]
      %v3535 = vld [vmem:[%s313 + $0x9c] sm:$0xe]
      %v3536 = vld [vmem:[%s313 + $0xa8] sm:$0xe]
      %v3537 = vld [vmem:[%s313 + $0xb4] sm:$0xe]
      %v3586 = vrot.slane %v3522, 5
      %v3587 = vrot.slane %v3586, 4
      %v3588 = vrot.slane %v2769, 5
      %v3589 = vsel %vm1947, %v3587, %v3588
      %v3590 = vrot.slane %v3588, 4
      %v3591 = vrot.slane %v2770, 5
      %v3592 = vsel %vm1947, %v3590, %v3591
      %v3593 = vrot.slane %v3523, 5
      %v3594 = vrot.slane %v3593, 4
      %v3595 = vrot.slane %v2772, 5
      %v3596 = vsel %vm1947, %v3594, %v3595
      %v3597 = vrot.slane %v3595, 4
      %v3598 = vrot.slane %v2773, 5
      %v3599 = vsel %vm1947, %v3597, %v3598
      %v3600 = vrot.slane %v3524, 5
      %v3601 = vrot.slane %v3600, 4
      %v3602 = vrot.slane %v2775, 5
      %v3603 = vsel %vm1947, %v3601, %v3602
      %v3604 = vrot.slane %v3602, 4
      %v3605 = vrot.slane %v2776, 5
      %v3606 = vsel %vm1947, %v3604, %v3605
      %v3607 = vrot.slane %v3525, 5
      %v3608 = vrot.slane %v3607, 4
      %v3609 = vrot.slane %v2778, 5
      %v3610 = vsel %vm1947, %v3608, %v3609
      %v3611 = vrot.slane %v3609, 4
      %v3612 = vrot.slane %v2779, 5
      %v3613 = vsel %vm1947, %v3611, %v3612
      %v3614 = vrot.slane %v3526, 5
      %v3615 = vrot.slane %v3614, 4
      %v3616 = vrot.slane %v2781, 5
      %v3617 = vsel %vm1947, %v3615, %v3616
      %v3618 = vrot.slane %v3616, 4
      %v3619 = vrot.slane %v2782, 5
      %v3620 = vsel %vm1947, %v3618, %v3619
      %v3621 = vrot.slane %v3527, 5
      %v3622 = vrot.slane %v3621, 4
      %v3623 = vrot.slane %v2784, 5
      %v3624 = vsel %vm1947, %v3622, %v3623
      %v3625 = vrot.slane %v3623, 4
      %v3626 = vrot.slane %v2785, 5
      %v3627 = vsel %vm1947, %v3625, %v3626
      %v3628 = vrot.slane %v3528, 5
      %v3629 = vrot.slane %v3628, 4
      %v3630 = vrot.slane %v2787, 5
      %v3631 = vsel %vm1947, %v3629, %v3630
      %v3632 = vrot.slane %v3630, 4
      %v3633 = vrot.slane %v2788, 5
      %v3634 = vsel %vm1947, %v3632, %v3633
      %v3635 = vrot.slane %v3529, 5
      %v3636 = vrot.slane %v3635, 4
      %v3637 = vrot.slane %v2790, 5
      %v3638 = vsel %vm1947, %v3636, %v3637
      %v3639 = vrot.slane %v3637, 4
      %v3640 = vrot.slane %v2791, 5
      %v3641 = vsel %vm1947, %v3639, %v3640
      %v3642 = vrot.slane %v3530, 5
      %v3643 = vrot.slane %v3642, 4
      %v3644 = vrot.slane %v2793, 5
      %v3645 = vsel %vm1947, %v3643, %v3644
      %v3646 = vrot.slane %v3644, 4
      %v3647 = vrot.slane %v2794, 5
      %v3648 = vsel %vm1947, %v3646, %v3647
      %v3649 = vrot.slane %v3531, 5
      %v3650 = vrot.slane %v3649, 4
      %v3651 = vrot.slane %v2796, 5
      %v3652 = vsel %vm1947, %v3650, %v3651
      %v3653 = vrot.slane %v3651, 4
      %v3654 = vrot.slane %v2797, 5
      %v3655 = vsel %vm1947, %v3653, %v3654
      %v3656 = vrot.slane %v3532, 5
      %v3657 = vrot.slane %v3656, 4
      %v3658 = vrot.slane %v2799, 5
      %v3659 = vsel %vm1947, %v3657, %v3658
      %v3660 = vrot.slane %v3658, 4
      %v3661 = vrot.slane %v2800, 5
      %v3662 = vsel %vm1947, %v3660, %v3661
      %v3663 = vrot.slane %v3533, 5
      %v3664 = vrot.slane %v3663, 4
      %v3665 = vrot.slane %v2802, 5
      %v3666 = vsel %vm1947, %v3664, %v3665
      %v3667 = vrot.slane %v3665, 4
      %v3668 = vrot.slane %v2803, 5
      %v3669 = vsel %vm1947, %v3667, %v3668
      %v3670 = vrot.slane %v3534, 5
      %v3671 = vrot.slane %v3670, 4
      %v3672 = vrot.slane %v2805, 5
      %v3673 = vsel %vm1947, %v3671, %v3672
      %v3674 = vrot.slane %v3672, 4
      %v3675 = vrot.slane %v2806, 5
      %v3676 = vsel %vm1947, %v3674, %v3675
      %v3677 = vrot.slane %v3535, 5
      %v3678 = vrot.slane %v3677, 4
      %v3679 = vrot.slane %v2808, 5
      %v3680 = vsel %vm1947, %v3678, %v3679
      %v3681 = vrot.slane %v3679, 4
      %v3682 = vrot.slane %v2809, 5
      %v3683 = vsel %vm1947, %v3681, %v3682
      %v3684 = vrot.slane %v3536, 5
      %v3685 = vrot.slane %v3684, 4
      %v3686 = vrot.slane %v2811, 5
      %v3687 = vsel %vm1947, %v3685, %v3686
      %v3688 = vrot.slane %v3686, 4
      %v3689 = vrot.slane %v2812, 5
      %v3690 = vsel %vm1947, %v3688, %v3689
      %v3691 = vrot.slane %v3537, 5
      %v3692 = vrot.slane %v3691, 4
      %v3693 = vrot.slane %v2814, 5
      %v3694 = vsel %vm1947, %v3692, %v3693
      %v3695 = vrot.slane %v3693, 4
      %v3696 = vrot.slane %v2815, 5
      %v3697 = vsel %vm1947, %v3695, %v3696
      %s3698 = scalar_lea.vmem %s1, 320
      %v3699 = vld [vmem:[%s3698] sm:$0xf]
      %v3700 = vld [vmem:[%s3698 + $0x4] sm:$0xf]
      %v3701 = vld [vmem:[%s3698 + $0x8] sm:$0xf]
      %v3702 = vld [vmem:[%s3698 + $0xc] sm:$0xf]
      %v3703 = vld [vmem:[%s3698 + $0x10] sm:$0xf]
      %v3704 = vld [vmem:[%s3698 + $0x14] sm:$0xf]
      %v3705 = vld [vmem:[%s3698 + $0x18] sm:$0xf]
      %v3706 = vld [vmem:[%s3698 + $0x1c] sm:$0xf]
      %v3707 = vld [vmem:[%s3698 + $0x20] sm:$0xf]
      %v3708 = vld [vmem:[%s3698 + $0x24] sm:$0xf]
      %v3709 = vld [vmem:[%s3698 + $0x28] sm:$0xf]
      %v3710 = vld [vmem:[%s3698 + $0x2c] sm:$0xf]
      %v3711 = vld [vmem:[%s3698 + $0x30] sm:$0xf]
      %v3712 = vld [vmem:[%s3698 + $0x34] sm:$0xf]
      %v3713 = vld [vmem:[%s3698 + $0x38] sm:$0xf]
      %v3714 = vld [vmem:[%s3698 + $0x3c] sm:$0xf]
      %v3715 = vunpack.c.l.b16 %v3589
      %v3716 = vunpack.c.l.b16 %v3592
      %v3717 = vunpack.c.l.b16 %v3596
      %v3718 = vunpack.c.l.b16 %v3599
      %v3719 = vunpack.c.l.b16 %v3603
      %v3720 = vunpack.c.l.b16 %v3606
      %v3721 = vunpack.c.l.b16 %v3610
      %v3722 = vunpack.c.l.b16 %v3613
      %v3723 = vunpack.c.l.b16 %v3617
      %v3724 = vunpack.c.l.b16 %v3620
      %v3725 = vunpack.c.l.b16 %v3624
      %v3726 = vunpack.c.l.b16 %v3627
      %v3727 = vunpack.c.l.b16 %v3631
      %v3728 = vunpack.c.l.b16 %v3634
      %v3729 = vunpack.c.l.b16 %v3638
      %v3730 = vunpack.c.l.b16 %v3641
      %v3731 = vunpack.c.l.b16 %v3645
      %v3732 = vunpack.c.l.b16 %v3648
      %v3733 = vunpack.c.l.b16 %v3652
      %v3734 = vunpack.c.l.b16 %v3655
      %v3735 = vunpack.c.l.b16 %v3659
      %v3736 = vunpack.c.l.b16 %v3662
      %v3737 = vunpack.c.l.b16 %v3666
      %v3738 = vunpack.c.l.b16 %v3669
      %v3739 = vunpack.c.l.b16 %v3673
      %v3740 = vunpack.c.l.b16 %v3676
      %v3741 = vunpack.c.l.b16 %v3680
      %v3742 = vunpack.c.l.b16 %v3683
      %v3743 = vunpack.c.l.b16 %v3687
      %v3744 = vunpack.c.l.b16 %v3690
      %v3745 = vunpack.c.l.b16 %v3694
      %v3746 = vunpack.c.l.b16 %v3697
      %v3747 = vpack.c.b16 %v3716, %v3715
      %v3748 = vpack.c.b16 %v3718, %v3717
      %v3749 = vpack.c.b16 %v3720, %v3719
      %v3750 = vpack.c.b16 %v3722, %v3721
      %v3751 = vpack.c.b16 %v3724, %v3723
      %v3752 = vpack.c.b16 %v3726, %v3725
      %v3753 = vpack.c.b16 %v3728, %v3727
      %v3754 = vpack.c.b16 %v3730, %v3729
      %v3755 = vpack.c.b16 %v3732, %v3731
      %v3756 = vpack.c.b16 %v3734, %v3733
      %v3757 = vpack.c.b16 %v3736, %v3735
      %v3758 = vpack.c.b16 %v3738, %v3737
      %v3759 = vpack.c.b16 %v3740, %v3739
      %v3760 = vpack.c.b16 %v3742, %v3741
      %v3761 = vpack.c.b16 %v3744, %v3743
      %v3762 = vpack.c.b16 %v3746, %v3745
      %v3795 = vunpack.c.l.b16 %v3699
      %v3796 = vunpack.c.l.b16 %v3700
      %v3797 = vunpack.c.l.b16 %v3701
      %v3798 = vunpack.c.l.b16 %v3702
      %v3799 = vunpack.c.l.b16 %v3703
      %v3800 = vunpack.c.l.b16 %v3704
      %v3801 = vunpack.c.l.b16 %v3705
      %v3802 = vunpack.c.l.b16 %v3706
      %v3803 = vunpack.c.l.b16 %v3707
      %v3804 = vunpack.c.l.b16 %v3708
      %v3805 = vunpack.c.l.b16 %v3709
      %v3806 = vunpack.c.l.b16 %v3710
      %v3807 = vunpack.c.l.b16 %v3711
      %v3808 = vunpack.c.l.b16 %v3712
      %v3809 = vunpack.c.l.b16 %v3713
      %v3810 = vunpack.c.l.b16 %v3714
      %v3811 = vpack.c.b16 %v3796, %v3795
      %v3812 = vpack.c.b16 %v3798, %v3797
      %v3813 = vpack.c.b16 %v3800, %v3799
      %v3814 = vpack.c.b16 %v3802, %v3801
      %v3815 = vpack.c.b16 %v3804, %v3803
      %v3816 = vpack.c.b16 %v3806, %v3805
      %v3817 = vpack.c.b16 %v3808, %v3807
      %v3818 = vpack.c.b16 %v3810, %v3809
      %3827 = vmatprep.subr.bf16.mxu0 0
      %3828 = vmatpush1.bf16.msra.mxu0 %v3818
      %3829 = vmatprep.subr.bf16.mxu0 0
      %3830 = vmatpush1.bf16.msra.mxu0 %v3817
      %3831 = vmatprep.subr.bf16.mxu0 0
      %3832 = vmatpush1.bf16.msra.mxu0 %v3816
      %3833 = vmatprep.subr.bf16.mxu0 0
      %3834 = vmatpush1.bf16.msra.mxu0 %v3815
      %3835 = vmatprep.subr.bf16.mxu0 0
      %3836 = vmatpush1.bf16.msra.mxu0 %v3814
      %3837 = vmatprep.subr.bf16.mxu0 0
      %3838 = vmatpush1.bf16.msra.mxu0 %v3813
      %3839 = vmatprep.subr.bf16.mxu0 0
      %3840 = vmatpush1.bf16.msra.mxu0 %v3812
      %3841 = vmatprep.subr.bf16.mxu0 0
      %3842 = vmatpush1.bf16.msra.mxu0 %v3811
      %3843 = vmatprep.subr.bf16.mxu0 0
      %3844 = vmatpush2.bf16.msra.mxu0 0
      %3845 = vmatprep.subr.bf16.mxu0 0
      %3846 = vmatpush2.bf16.msra.mxu0 0
      %3847 = vmatprep.subr.bf16.mxu0 0
      %3848 = vmatpush2.bf16.msra.mxu0 0
      %3849 = vmatprep.subr.bf16.mxu0 0
      %3850 = vmatpush2.bf16.msra.mxu0 0
      %3851 = vmatprep.subr.bf16.mxu0 0
      %3852 = vmatpush2.bf16.msra.mxu0 0
      %3853 = vmatprep.subr.bf16.mxu0 0
      %3854 = vmatpush2.bf16.msra.mxu0 0
      %3855 = vmatprep.subr.bf16.mxu0 0
      %3856 = vmatpush2.bf16.msra.mxu0 0
      %3857 = vmatprep.subr.bf16.mxu0 0
      %3858 = vmatpush2.bf16.msra.mxu0 0
      %3859 = vmatprep.mubr.bf16.mxu0 0
      %3860 = vmatmul.mubr.bf16.gmra.mxu0 %v3747
      %v3861 = vpop.f32.mrf.mxu0
      %v3862 = vadd.f32 0.0, %v3861
      %v3863 = vpop.f32.mrf.mxu0
      %v3864 = vpop.f32.mrf.mxu0
      %v3865 = vadd.f32 0.0, %v3864
      %v3866 = vpop.f32.mrf.mxu0
      %3867 = vmatprep.mubr.bf16.mxu0 0
      %3868 = vmatmul.mubr.bf16.gmra.mxu0 %v3748
      %v3869 = vpop.f32.mrf.mxu0
      %v3870 = vadd.f32 0.0, %v3869
      %v3871 = vpop.f32.mrf.mxu0
      %v3872 = vpop.f32.mrf.mxu0
      %v3873 = vadd.f32 0.0, %v3872
      %v3874 = vpop.f32.mrf.mxu0
      %3875 = vmatprep.mubr.bf16.mxu0 0
      %3876 = vmatmul.mubr.bf16.gmra.mxu0 %v3749
      %v3877 = vpop.f32.mrf.mxu0
      %v3878 = vadd.f32 0.0, %v3877
      %v3879 = vpop.f32.mrf.mxu0
      %v3880 = vpop.f32.mrf.mxu0
      %v3881 = vadd.f32 0.0, %v3880
      %v3882 = vpop.f32.mrf.mxu0
      %3883 = vmatprep.mubr.bf16.mxu0 0
      %3884 = vmatmul.mubr.bf16.gmra.mxu0 %v3750
      %v3885 = vpop.f32.mrf.mxu0
      %v3886 = vadd.f32 0.0, %v3885
      %v3887 = vpop.f32.mrf.mxu0
      %v3888 = vpop.f32.mrf.mxu0
      %v3889 = vadd.f32 0.0, %v3888
      %v3890 = vpop.f32.mrf.mxu0
      %3891 = vmatprep.mubr.bf16.mxu0 0
      %3892 = vmatmul.mubr.bf16.gmra.mxu0 %v3751
      %v3893 = vpop.f32.mrf.mxu0
      %v3894 = vadd.f32 0.0, %v3893
      %v3895 = vpop.f32.mrf.mxu0
      %v3896 = vpop.f32.mrf.mxu0
      %v3897 = vadd.f32 0.0, %v3896
      %v3898 = vpop.f32.mrf.mxu0
      %3899 = vmatprep.mubr.bf16.mxu0 0
      %3900 = vmatmul.mubr.bf16.gmra.mxu0 %v3752
      %v3901 = vpop.f32.mrf.mxu0
      %v3902 = vadd.f32 0.0, %v3901
      %v3903 = vpop.f32.mrf.mxu0
      %v3904 = vpop.f32.mrf.mxu0
      %v3905 = vadd.f32 0.0, %v3904
      %v3906 = vpop.f32.mrf.mxu0
      %3907 = vmatprep.mubr.bf16.mxu0 0
      %3908 = vmatmul.mubr.bf16.gmra.mxu0 %v3753
      %v3909 = vpop.f32.mrf.mxu0
      %v3910 = vadd.f32 0.0, %v3909
      %v3911 = vpop.f32.mrf.mxu0
      %v3912 = vpop.f32.mrf.mxu0
      %v3913 = vadd.f32 0.0, %v3912
      %v3914 = vpop.f32.mrf.mxu0
      %3915 = vmatprep.mubr.bf16.mxu0 0
      %3916 = vmatmul.mubr.bf16.gmra.mxu0 %v3754
      %v3917 = vpop.f32.mrf.mxu0
      %v3918 = vadd.f32 0.0, %v3917
      %v3919 = vpop.f32.mrf.mxu0
      %v3920 = vpop.f32.mrf.mxu0
      %v3921 = vadd.f32 0.0, %v3920
      %v3922 = vpop.f32.mrf.mxu0
      %3923 = vmatprep.mubr.bf16.mxu0 0
      %3924 = vmatmul.mubr.bf16.gmra.mxu0 %v3755
      %v3925 = vpop.f32.mrf.mxu0
      %v3926 = vadd.f32 0.0, %v3925
      %v3927 = vpop.f32.mrf.mxu0
      %v3928 = vpop.f32.mrf.mxu0
      %v3929 = vadd.f32 0.0, %v3928
      %v3930 = vpop.f32.mrf.mxu0
      %3931 = vmatprep.mubr.bf16.mxu0 0
      %3932 = vmatmul.mubr.bf16.gmra.mxu0 %v3756
      %v3933 = vpop.f32.mrf.mxu0
      %v3934 = vadd.f32 0.0, %v3933
      %v3935 = vpop.f32.mrf.mxu0
      %v3936 = vpop.f32.mrf.mxu0
      %v3937 = vadd.f32 0.0, %v3936
      %v3938 = vpop.f32.mrf.mxu0
      %3939 = vmatprep.mubr.bf16.mxu0 0
      %3940 = vmatmul.mubr.bf16.gmra.mxu0 %v3757
      %v3941 = vpop.f32.mrf.mxu0
      %v3942 = vadd.f32 0.0, %v3941
      %v3943 = vpop.f32.mrf.mxu0
      %v3944 = vpop.f32.mrf.mxu0
      %v3945 = vadd.f32 0.0, %v3944
      %v3946 = vpop.f32.mrf.mxu0
      %3947 = vmatprep.mubr.bf16.mxu0 0
      %3948 = vmatmul.mubr.bf16.gmra.mxu0 %v3758
      %v3949 = vpop.f32.mrf.mxu0
      %v3950 = vadd.f32 0.0, %v3949
      %v3951 = vpop.f32.mrf.mxu0
      %v3952 = vpop.f32.mrf.mxu0
      %v3953 = vadd.f32 0.0, %v3952
      %v3954 = vpop.f32.mrf.mxu0
      %3955 = vmatprep.mubr.bf16.mxu0 0
      %3956 = vmatmul.mubr.bf16.gmra.mxu0 %v3759
      %v3957 = vpop.f32.mrf.mxu0
      %v3958 = vadd.f32 0.0, %v3957
      %v3959 = vpop.f32.mrf.mxu0
      %v3960 = vpop.f32.mrf.mxu0
      %v3961 = vadd.f32 0.0, %v3960
      %v3962 = vpop.f32.mrf.mxu0
      %3963 = vmatprep.mubr.bf16.mxu0 0
      %3964 = vmatmul.mubr.bf16.gmra.mxu0 %v3760
      %v3965 = vpop.f32.mrf.mxu0
      %v3966 = vadd.f32 0.0, %v3965
      %v3967 = vpop.f32.mrf.mxu0
      %v3968 = vpop.f32.mrf.mxu0
      %v3969 = vadd.f32 0.0, %v3968
      %v3970 = vpop.f32.mrf.mxu0
      %3971 = vmatprep.mubr.bf16.mxu0 0
      %3972 = vmatmul.mubr.bf16.gmra.mxu0 %v3761
      %v3973 = vpop.f32.mrf.mxu0
      %v3974 = vadd.f32 0.0, %v3973
      %v3975 = vpop.f32.mrf.mxu0
      %v3976 = vpop.f32.mrf.mxu0
      %v3977 = vadd.f32 0.0, %v3976
      %v3978 = vpop.f32.mrf.mxu0
      %3979 = vmatprep.mubr.bf16.mxu0 0
      %3980 = vmatmul.mubr.bf16.gmra.mxu0 %v3762
      %v3981 = vpop.f32.mrf.mxu0
      %v3982 = vadd.f32 0.0, %v3981
      %v3983 = vpop.f32.mrf.mxu0
      %v3984 = vpop.f32.mrf.mxu0
      %v3985 = vadd.f32 0.0, %v3984
      %v3986 = vpop.f32.mrf.mxu0
      %3987 = vdwg.mxu0
      %v3988 = vadd.f32 %v3490, %v3862
      %v3989 = vadd.f32 %v3491, %v3865
      %v3990 = vadd.f32 %v3492, %v3870
      %v3991 = vadd.f32 %v3493, %v3873
      %v3992 = vadd.f32 %v3494, %v3878
      %v3993 = vadd.f32 %v3495, %v3881
      %v3994 = vadd.f32 %v3496, %v3886
      %v3995 = vadd.f32 %v3497, %v3889
      %v3996 = vadd.f32 %v3498, %v3894
      %v3997 = vadd.f32 %v3499, %v3897
      %v3998 = vadd.f32 %v3500, %v3902
      %v3999 = vadd.f32 %v3501, %v3905
      %v4000 = vadd.f32 %v3502, %v3910
      %v4001 = vadd.f32 %v3503, %v3913
      %v4002 = vadd.f32 %v3504, %v3918
      %v4003 = vadd.f32 %v3505, %v3921
      %v4004 = vadd.f32 %v3506, %v3926
      %v4005 = vadd.f32 %v3507, %v3929
      %v4006 = vadd.f32 %v3508, %v3934
      %v4007 = vadd.f32 %v3509, %v3937
      %v4008 = vadd.f32 %v3510, %v3942
      %v4009 = vadd.f32 %v3511, %v3945
      %v4010 = vadd.f32 %v3512, %v3950
      %v4011 = vadd.f32 %v3513, %v3953
      %v4012 = vadd.f32 %v3514, %v3958
      %v4013 = vadd.f32 %v3515, %v3961
      %v4014 = vadd.f32 %v3516, %v3966
      %v4015 = vadd.f32 %v3517, %v3969
      %v4016 = vadd.f32 %v3518, %v3974
      %v4017 = vadd.f32 %v3519, %v3977
      %v4018 = vadd.f32 %v3520, %v3982
      %v4019 = vadd.f32 %v3521, %v3985
      %s4020 = scalar_lea.vmem [#allocation2], 24
      %v4021 = vld [vmem:[%s4020] sm:$0xf]
      %v4022 = vld [vmem:[%s4020 + $0x4] sm:$0xf]
      %v4023 = vld [vmem:[%s4020 + $0xc] sm:$0xf]
      %v4024 = vld [vmem:[%s4020 + $0x10] sm:$0xf]
      %v4025 = vld [vmem:[%s4020 + $0x18] sm:$0xf]
      %v4026 = vld [vmem:[%s4020 + $0x1c] sm:$0xf]
      %v4027 = vld [vmem:[%s4020 + $0x24] sm:$0xf]
      %v4028 = vld [vmem:[%s4020 + $0x28] sm:$0xf]
      %v4029 = vld [vmem:[%s4020 + $0x30] sm:$0xf]
      %v4030 = vld [vmem:[%s4020 + $0x34] sm:$0xf]
      %v4031 = vld [vmem:[%s4020 + $0x3c] sm:$0xf]
      %v4032 = vld [vmem:[%s4020 + $0x40] sm:$0xf]
      %v4033 = vld [vmem:[%s4020 + $0x48] sm:$0xf]
      %v4034 = vld [vmem:[%s4020 + $0x4c] sm:$0xf]
      %v4035 = vld [vmem:[%s4020 + $0x54] sm:$0xf]
      %v4036 = vld [vmem:[%s4020 + $0x58] sm:$0xf]
      %v4037 = vld [vmem:[%s4020 + $0x60] sm:$0xf]
      %v4038 = vld [vmem:[%s4020 + $0x64] sm:$0xf]
      %v4039 = vld [vmem:[%s4020 + $0x6c] sm:$0xf]
      %v4040 = vld [vmem:[%s4020 + $0x70] sm:$0xf]
      %v4041 = vld [vmem:[%s4020 + $0x78] sm:$0xf]
      %v4042 = vld [vmem:[%s4020 + $0x7c] sm:$0xf]
      %v4043 = vld [vmem:[%s4020 + $0x84] sm:$0xf]
      %v4044 = vld [vmem:[%s4020 + $0x88] sm:$0xf]
      %v4045 = vld [vmem:[%s4020 + $0x90] sm:$0xf]
      %v4046 = vld [vmem:[%s4020 + $0x94] sm:$0xf]
      %v4047 = vld [vmem:[%s4020 + $0x9c] sm:$0xf]
      %v4048 = vld [vmem:[%s4020 + $0xa0] sm:$0xf]
      %v4049 = vld [vmem:[%s4020 + $0xa8] sm:$0xf]
      %v4050 = vld [vmem:[%s4020 + $0xac] sm:$0xf]
      %v4051 = vld [vmem:[%s4020 + $0xb4] sm:$0xf]
      %v4052 = vld [vmem:[%s4020 + $0xb8] sm:$0xf]
      %s4053 = scalar_lea.vmem %s1, 384
      %v4054 = vld [vmem:[%s4053] sm:$0xf]
      %v4055 = vld [vmem:[%s4053 + $0x4] sm:$0xf]
      %v4056 = vld [vmem:[%s4053 + $0x8] sm:$0xf]
      %v4057 = vld [vmem:[%s4053 + $0xc] sm:$0xf]
      %v4058 = vld [vmem:[%s4053 + $0x10] sm:$0xf]
      %v4059 = vld [vmem:[%s4053 + $0x14] sm:$0xf]
      %v4060 = vld [vmem:[%s4053 + $0x18] sm:$0xf]
      %v4061 = vld [vmem:[%s4053 + $0x1c] sm:$0xf]
      %v4062 = vld [vmem:[%s4053 + $0x20] sm:$0xf]
      %v4063 = vld [vmem:[%s4053 + $0x24] sm:$0xf]
      %v4064 = vld [vmem:[%s4053 + $0x28] sm:$0xf]
      %v4065 = vld [vmem:[%s4053 + $0x2c] sm:$0xf]
      %v4066 = vld [vmem:[%s4053 + $0x30] sm:$0xf]
      %v4067 = vld [vmem:[%s4053 + $0x34] sm:$0xf]
      %v4068 = vld [vmem:[%s4053 + $0x38] sm:$0xf]
      %v4069 = vld [vmem:[%s4053 + $0x3c] sm:$0xf]
      %v4102 = vunpack.c.l.b16 %v4021
      %v4103 = vunpack.c.l.b16 %v4022
      %v4104 = vunpack.c.l.b16 %v4023
      %v4105 = vunpack.c.l.b16 %v4024
      %v4106 = vunpack.c.l.b16 %v4025
      %v4107 = vunpack.c.l.b16 %v4026
      %v4108 = vunpack.c.l.b16 %v4027
      %v4109 = vunpack.c.l.b16 %v4028
      %v4110 = vunpack.c.l.b16 %v4029
      %v4111 = vunpack.c.l.b16 %v4030
      %v4112 = vunpack.c.l.b16 %v4031
      %v4113 = vunpack.c.l.b16 %v4032
      %v4114 = vunpack.c.l.b16 %v4033
      %v4115 = vunpack.c.l.b16 %v4034
      %v4116 = vunpack.c.l.b16 %v4035
      %v4117 = vunpack.c.l.b16 %v4036
      %v4118 = vunpack.c.l.b16 %v4037
      %v4119 = vunpack.c.l.b16 %v4038
      %v4120 = vunpack.c.l.b16 %v4039
      %v4121 = vunpack.c.l.b16 %v4040
      %v4122 = vunpack.c.l.b16 %v4041
      %v4123 = vunpack.c.l.b16 %v4042
      %v4124 = vunpack.c.l.b16 %v4043
      %v4125 = vunpack.c.l.b16 %v4044
      %v4126 = vunpack.c.l.b16 %v4045
      %v4127 = vunpack.c.l.b16 %v4046
      %v4128 = vunpack.c.l.b16 %v4047
      %v4129 = vunpack.c.l.b16 %v4048
      %v4130 = vunpack.c.l.b16 %v4049
      %v4131 = vunpack.c.l.b16 %v4050
      %v4132 = vunpack.c.l.b16 %v4051
      %v4133 = vunpack.c.l.b16 %v4052
      %v4134 = vpack.c.b16 %v4103, %v4102
      %v4135 = vpack.c.b16 %v4105, %v4104
      %v4136 = vpack.c.b16 %v4107, %v4106
      %v4137 = vpack.c.b16 %v4109, %v4108
      %v4138 = vpack.c.b16 %v4111, %v4110
      %v4139 = vpack.c.b16 %v4113, %v4112
      %v4140 = vpack.c.b16 %v4115, %v4114
      %v4141 = vpack.c.b16 %v4117, %v4116
      %v4142 = vpack.c.b16 %v4119, %v4118
      %v4143 = vpack.c.b16 %v4121, %v4120
      %v4144 = vpack.c.b16 %v4123, %v4122
      %v4145 = vpack.c.b16 %v4125, %v4124
      %v4146 = vpack.c.b16 %v4127, %v4126
      %v4147 = vpack.c.b16 %v4129, %v4128
      %v4148 = vpack.c.b16 %v4131, %v4130
      %v4149 = vpack.c.b16 %v4133, %v4132
      %v4182 = vunpack.c.l.b16 %v4054
      %v4183 = vunpack.c.l.b16 %v4055
      %v4184 = vunpack.c.l.b16 %v4056
      %v4185 = vunpack.c.l.b16 %v4057
      %v4186 = vunpack.c.l.b16 %v4058
      %v4187 = vunpack.c.l.b16 %v4059
      %v4188 = vunpack.c.l.b16 %v4060
      %v4189 = vunpack.c.l.b16 %v4061
      %v4190 = vunpack.c.l.b16 %v4062
      %v4191 = vunpack.c.l.b16 %v4063
      %v4192 = vunpack.c.l.b16 %v4064
      %v4193 = vunpack.c.l.b16 %v4065
      %v4194 = vunpack.c.l.b16 %v4066
      %v4195 = vunpack.c.l.b16 %v4067
      %v4196 = vunpack.c.l.b16 %v4068
      %v4197 = vunpack.c.l.b16 %v4069
      %v4198 = vpack.c.b16 %v4183, %v4182
      %v4199 = vpack.c.b16 %v4185, %v4184
      %v4200 = vpack.c.b16 %v4187, %v4186
      %v4201 = vpack.c.b16 %v4189, %v4188
      %v4202 = vpack.c.b16 %v4191, %v4190
      %v4203 = vpack.c.b16 %v4193, %v4192
      %v4204 = vpack.c.b16 %v4195, %v4194
      %v4205 = vpack.c.b16 %v4197, %v4196
      %4214 = vmatprep.subr.bf16.mxu0 0
      %4215 = vmatpush1.bf16.msra.mxu0 %v4205
      %4216 = vmatprep.subr.bf16.mxu0 0
      %4217 = vmatpush1.bf16.msra.mxu0 %v4204
      %4218 = vmatprep.subr.bf16.mxu0 0
      %4219 = vmatpush1.bf16.msra.mxu0 %v4203
      %4220 = vmatprep.subr.bf16.mxu0 0
      %4221 = vmatpush1.bf16.msra.mxu0 %v4202
      %4222 = vmatprep.subr.bf16.mxu0 0
      %4223 = vmatpush1.bf16.msra.mxu0 %v4201
      %4224 = vmatprep.subr.bf16.mxu0 0
      %4225 = vmatpush1.bf16.msra.mxu0 %v4200
      %4226 = vmatprep.subr.bf16.mxu0 0
      %4227 = vmatpush1.bf16.msra.mxu0 %v4199
      %4228 = vmatprep.subr.bf16.mxu0 0
      %4229 = vmatpush1.bf16.msra.mxu0 %v4198
      %4230 = vmatprep.subr.bf16.mxu0 0
      %4231 = vmatpush2.bf16.msra.mxu0 0
      %4232 = vmatprep.subr.bf16.mxu0 0
      %4233 = vmatpush2.bf16.msra.mxu0 0
      %4234 = vmatprep.subr.bf16.mxu0 0
      %4235 = vmatpush2.bf16.msra.mxu0 0
      %4236 = vmatprep.subr.bf16.mxu0 0
      %4237 = vmatpush2.bf16.msra.mxu0 0
      %4238 = vmatprep.subr.bf16.mxu0 0
      %4239 = vmatpush2.bf16.msra.mxu0 0
      %4240 = vmatprep.subr.bf16.mxu0 0
      %4241 = vmatpush2.bf16.msra.mxu0 0
      %4242 = vmatprep.subr.bf16.mxu0 0
      %4243 = vmatpush2.bf16.msra.mxu0 0
      %4244 = vmatprep.subr.bf16.mxu0 0
      %4245 = vmatpush2.bf16.msra.mxu0 0
      %4246 = vmatprep.mubr.bf16.mxu0 0
      %4247 = vmatmul.mubr.bf16.gmra.mxu0 %v4134
      %v4248 = vpop.f32.mrf.mxu0
      %v4249 = vadd.f32 0.0, %v4248
      %v4250 = vpop.f32.mrf.mxu0
      %v4251 = vpop.f32.mrf.mxu0
      %v4252 = vadd.f32 0.0, %v4251
      %v4253 = vpop.f32.mrf.mxu0
      %4254 = vmatprep.mubr.bf16.mxu0 0
      %4255 = vmatmul.mubr.bf16.gmra.mxu0 %v4135
      %v4256 = vpop.f32.mrf.mxu0
      %v4257 = vadd.f32 0.0, %v4256
      %v4258 = vpop.f32.mrf.mxu0
      %v4259 = vpop.f32.mrf.mxu0
      %v4260 = vadd.f32 0.0, %v4259
      %v4261 = vpop.f32.mrf.mxu0
      %4262 = vmatprep.mubr.bf16.mxu0 0
      %4263 = vmatmul.mubr.bf16.gmra.mxu0 %v4136
      %v4264 = vpop.f32.mrf.mxu0
      %v4265 = vadd.f32 0.0, %v4264
      %v4266 = vpop.f32.mrf.mxu0
      %v4267 = vpop.f32.mrf.mxu0
      %v4268 = vadd.f32 0.0, %v4267
      %v4269 = vpop.f32.mrf.mxu0
      %4270 = vmatprep.mubr.bf16.mxu0 0
      %4271 = vmatmul.mubr.bf16.gmra.mxu0 %v4137
      %v4272 = vpop.f32.mrf.mxu0
      %v4273 = vadd.f32 0.0, %v4272
      %v4274 = vpop.f32.mrf.mxu0
      %v4275 = vpop.f32.mrf.mxu0
      %v4276 = vadd.f32 0.0, %v4275
      %v4277 = vpop.f32.mrf.mxu0
      %4278 = vmatprep.mubr.bf16.mxu0 0
      %4279 = vmatmul.mubr.bf16.gmra.mxu0 %v4138
      %v4280 = vpop.f32.mrf.mxu0
      %v4281 = vadd.f32 0.0, %v4280
      %v4282 = vpop.f32.mrf.mxu0
      %v4283 = vpop.f32.mrf.mxu0
      %v4284 = vadd.f32 0.0, %v4283
      %v4285 = vpop.f32.mrf.mxu0
      %4286 = vmatprep.mubr.bf16.mxu0 0
      %4287 = vmatmul.mubr.bf16.gmra.mxu0 %v4139
      %v4288 = vpop.f32.mrf.mxu0
      %v4289 = vadd.f32 0.0, %v4288
      %v4290 = vpop.f32.mrf.mxu0
      %v4291 = vpop.f32.mrf.mxu0
      %v4292 = vadd.f32 0.0, %v4291
      %v4293 = vpop.f32.mrf.mxu0
      %4294 = vmatprep.mubr.bf16.mxu0 0
      %4295 = vmatmul.mubr.bf16.gmra.mxu0 %v4140
      %v4296 = vpop.f32.mrf.mxu0
      %v4297 = vadd.f32 0.0, %v4296
      %v4298 = vpop.f32.mrf.mxu0
      %v4299 = vpop.f32.mrf.mxu0
      %v4300 = vadd.f32 0.0, %v4299
      %v4301 = vpop.f32.mrf.mxu0
      %4302 = vmatprep.mubr.bf16.mxu0 0
      %4303 = vmatmul.mubr.bf16.gmra.mxu0 %v4141
      %v4304 = vpop.f32.mrf.mxu0
      %v4305 = vadd.f32 0.0, %v4304
      %v4306 = vpop.f32.mrf.mxu0
      %v4307 = vpop.f32.mrf.mxu0
      %v4308 = vadd.f32 0.0, %v4307
      %v4309 = vpop.f32.mrf.mxu0
      %4310 = vmatprep.mubr.bf16.mxu0 0
      %4311 = vmatmul.mubr.bf16.gmra.mxu0 %v4142
      %v4312 = vpop.f32.mrf.mxu0
      %v4313 = vadd.f32 0.0, %v4312
      %v4314 = vpop.f32.mrf.mxu0
      %v4315 = vpop.f32.mrf.mxu0
      %v4316 = vadd.f32 0.0, %v4315
      %v4317 = vpop.f32.mrf.mxu0
      %4318 = vmatprep.mubr.bf16.mxu0 0
      %4319 = vmatmul.mubr.bf16.gmra.mxu0 %v4143
      %v4320 = vpop.f32.mrf.mxu0
      %v4321 = vadd.f32 0.0, %v4320
      %v4322 = vpop.f32.mrf.mxu0
      %v4323 = vpop.f32.mrf.mxu0
      %v4324 = vadd.f32 0.0, %v4323
      %v4325 = vpop.f32.mrf.mxu0
      %4326 = vmatprep.mubr.bf16.mxu0 0
      %4327 = vmatmul.mubr.bf16.gmra.mxu0 %v4144
      %v4328 = vpop.f32.mrf.mxu0
      %v4329 = vadd.f32 0.0, %v4328
      %v4330 = vpop.f32.mrf.mxu0
      %v4331 = vpop.f32.mrf.mxu0
      %v4332 = vadd.f32 0.0, %v4331
      %v4333 = vpop.f32.mrf.mxu0
      %4334 = vmatprep.mubr.bf16.mxu0 0
      %4335 = vmatmul.mubr.bf16.gmra.mxu0 %v4145
      %v4336 = vpop.f32.mrf.mxu0
      %v4337 = vadd.f32 0.0, %v4336
      %v4338 = vpop.f32.mrf.mxu0
      %v4339 = vpop.f32.mrf.mxu0
      %v4340 = vadd.f32 0.0, %v4339
      %v4341 = vpop.f32.mrf.mxu0
      %4342 = vmatprep.mubr.bf16.mxu0 0
      %4343 = vmatmul.mubr.bf16.gmra.mxu0 %v4146
      %v4344 = vpop.f32.mrf.mxu0
      %v4345 = vadd.f32 0.0, %v4344
      %v4346 = vpop.f32.mrf.mxu0
      %v4347 = vpop.f32.mrf.mxu0
      %v4348 = vadd.f32 0.0, %v4347
      %v4349 = vpop.f32.mrf.mxu0
      %4350 = vmatprep.mubr.bf16.mxu0 0
      %4351 = vmatmul.mubr.bf16.gmra.mxu0 %v4147
      %v4352 = vpop.f32.mrf.mxu0
      %v4353 = vadd.f32 0.0, %v4352
      %v4354 = vpop.f32.mrf.mxu0
      %v4355 = vpop.f32.mrf.mxu0
      %v4356 = vadd.f32 0.0, %v4355
      %v4357 = vpop.f32.mrf.mxu0
      %4358 = vmatprep.mubr.bf16.mxu0 0
      %4359 = vmatmul.mubr.bf16.gmra.mxu0 %v4148
      %v4360 = vpop.f32.mrf.mxu0
      %v4361 = vadd.f32 0.0, %v4360
      %v4362 = vpop.f32.mrf.mxu0
      %v4363 = vpop.f32.mrf.mxu0
      %v4364 = vadd.f32 0.0, %v4363
      %v4365 = vpop.f32.mrf.mxu0
      %4366 = vmatprep.mubr.bf16.mxu0 0
      %4367 = vmatmul.mubr.bf16.gmra.mxu0 %v4149
      %v4368 = vpop.f32.mrf.mxu0
      %v4369 = vadd.f32 0.0, %v4368
      %v4370 = vpop.f32.mrf.mxu0
      %v4371 = vpop.f32.mrf.mxu0
      %v4372 = vadd.f32 0.0, %v4371
      %v4373 = vpop.f32.mrf.mxu0
      %4374 = vdwg.mxu0
      %v4375 = vadd.f32 %v3988, %v4249
      %v4376 = vadd.f32 %v3989, %v4252
      %v4377 = vadd.f32 %v3990, %v4257
      %v4378 = vadd.f32 %v3991, %v4260
      %v4379 = vadd.f32 %v3992, %v4265
      %v4380 = vadd.f32 %v3993, %v4268
      %v4381 = vadd.f32 %v3994, %v4273
      %v4382 = vadd.f32 %v3995, %v4276
      %v4383 = vadd.f32 %v3996, %v4281
      %v4384 = vadd.f32 %v3997, %v4284
      %v4385 = vadd.f32 %v3998, %v4289
      %v4386 = vadd.f32 %v3999, %v4292
      %v4387 = vadd.f32 %v4000, %v4297
      %v4388 = vadd.f32 %v4001, %v4300
      %v4389 = vadd.f32 %v4002, %v4305
      %v4390 = vadd.f32 %v4003, %v4308
      %v4391 = vadd.f32 %v4004, %v4313
      %v4392 = vadd.f32 %v4005, %v4316
      %v4393 = vadd.f32 %v4006, %v4321
      %v4394 = vadd.f32 %v4007, %v4324
      %v4395 = vadd.f32 %v4008, %v4329
      %v4396 = vadd.f32 %v4009, %v4332
      %v4397 = vadd.f32 %v4010, %v4337
      %v4398 = vadd.f32 %v4011, %v4340
      %v4399 = vadd.f32 %v4012, %v4345
      %v4400 = vadd.f32 %v4013, %v4348
      %v4401 = vadd.f32 %v4014, %v4353
      %v4402 = vadd.f32 %v4015, %v4356
      %v4403 = vadd.f32 %v4016, %v4361
      %v4404 = vadd.f32 %v4017, %v4364
      %v4405 = vadd.f32 %v4018, %v4369
      %v4406 = vadd.f32 %v4019, %v4372
      %v4407 = vld [vmem:[%s4020] sm:$0xf]
      %v4408 = vld [vmem:[%s4020 + $0x4] sm:$0xf]
      %v4409 = vld [vmem:[%s4020 + $0x8] sm:$0x1]
      %v4410 = vld [vmem:[%s4020 + $0xc] sm:$0xf]
      %v4411 = vld [vmem:[%s4020 + $0x10] sm:$0xf]
      %v4412 = vld [vmem:[%s4020 + $0x14] sm:$0x1]
      %v4413 = vld [vmem:[%s4020 + $0x18] sm:$0xf]
      %v4414 = vld [vmem:[%s4020 + $0x1c] sm:$0xf]
      %v4415 = vld [vmem:[%s4020 + $0x20] sm:$0x1]
      %v4416 = vld [vmem:[%s4020 + $0x24] sm:$0xf]
      %v4417 = vld [vmem:[%s4020 + $0x28] sm:$0xf]
      %v4418 = vld [vmem:[%s4020 + $0x2c] sm:$0x1]
      %v4419 = vld [vmem:[%s4020 + $0x30] sm:$0xf]
      %v4420 = vld [vmem:[%s4020 + $0x34] sm:$0xf]
      %v4421 = vld [vmem:[%s4020 + $0x38] sm:$0x1]
      %v4422 = vld [vmem:[%s4020 + $0x3c] sm:$0xf]
      %v4423 = vld [vmem:[%s4020 + $0x40] sm:$0xf]
      %v4424 = vld [vmem:[%s4020 + $0x44] sm:$0x1]
      %v4425 = vld [vmem:[%s4020 + $0x48] sm:$0xf]
      %v4426 = vld [vmem:[%s4020 + $0x4c] sm:$0xf]
      %v4427 = vld [vmem:[%s4020 + $0x50] sm:$0x1]
      %v4428 = vld [vmem:[%s4020 + $0x54] sm:$0xf]
      %v4429 = vld [vmem:[%s4020 + $0x58] sm:$0xf]
      %v4430 = vld [vmem:[%s4020 + $0x5c] sm:$0x1]
      %v4431 = vld [vmem:[%s4020 + $0x60] sm:$0xf]
      %v4432 = vld [vmem:[%s4020 + $0x64] sm:$0xf]
      %v4433 = vld [vmem:[%s4020 + $0x68] sm:$0x1]
      %v4434 = vld [vmem:[%s4020 + $0x6c] sm:$0xf]
      %v4435 = vld [vmem:[%s4020 + $0x70] sm:$0xf]
      %v4436 = vld [vmem:[%s4020 + $0x74] sm:$0x1]
      %v4437 = vld [vmem:[%s4020 + $0x78] sm:$0xf]
      %v4438 = vld [vmem:[%s4020 + $0x7c] sm:$0xf]
      %v4439 = vld [vmem:[%s4020 + $0x80] sm:$0x1]
      %v4440 = vld [vmem:[%s4020 + $0x84] sm:$0xf]
      %v4441 = vld [vmem:[%s4020 + $0x88] sm:$0xf]
      %v4442 = vld [vmem:[%s4020 + $0x8c] sm:$0x1]
      %v4443 = vld [vmem:[%s4020 + $0x90] sm:$0xf]
      %v4444 = vld [vmem:[%s4020 + $0x94] sm:$0xf]
      %v4445 = vld [vmem:[%s4020 + $0x98] sm:$0x1]
      %v4446 = vld [vmem:[%s4020 + $0x9c] sm:$0xf]
      %v4447 = vld [vmem:[%s4020 + $0xa0] sm:$0xf]
      %v4448 = vld [vmem:[%s4020 + $0xa4] sm:$0x1]
      %v4449 = vld [vmem:[%s4020 + $0xa8] sm:$0xf]
      %v4450 = vld [vmem:[%s4020 + $0xac] sm:$0xf]
      %v4451 = vld [vmem:[%s4020 + $0xb0] sm:$0x1]
      %v4452 = vld [vmem:[%s4020 + $0xb4] sm:$0xf]
      %v4453 = vld [vmem:[%s4020 + $0xb8] sm:$0xf]
      %v4454 = vld [vmem:[%s4020 + $0xbc] sm:$0x1]
      %v4456 = vshrl.u32 %v4407, 16
      %v4458 = vrot.slane %v4456, 4
      %v4459 = vshll.u32 %v4407, 16
      %v4461 = vrot.slane %v4459, 5
      %v4462 = vor.u32 %v4458, %v4461
      %v4463 = vrot.slane %v4462, 4
      %v4465 = vshll.u32 %v4408, 16
      %v4467 = vrot.slane %v4465, 5
      %v4468 = vsel %vm917, %v4463, %v4467
      %v4469 = vshrl.u32 %v4408, 16
      %v4471 = vrot.slane %v4469, 4
      %v4472 = vor.u32 %v4471, %v4467
      %v4473 = vrot.slane %v4472, 4
      %v4475 = vshll.u32 %v4409, 16
      %v4477 = vrot.slane %v4475, 5
      %v4478 = vsel %vm917, %v4473, %v4477
      %v4480 = vshrl.u32 %v4410, 16
      %v4482 = vrot.slane %v4480, 4
      %v4483 = vshll.u32 %v4410, 16
      %v4485 = vrot.slane %v4483, 5
      %v4486 = vor.u32 %v4482, %v4485
      %v4487 = vrot.slane %v4486, 4
      %v4489 = vshll.u32 %v4411, 16
      %v4491 = vrot.slane %v4489, 5
      %v4492 = vsel %vm917, %v4487, %v4491
      %v4493 = vshrl.u32 %v4411, 16
      %v4495 = vrot.slane %v4493, 4
      %v4496 = vor.u32 %v4495, %v4491
      %v4497 = vrot.slane %v4496, 4
      %v4499 = vshll.u32 %v4412, 16
      %v4501 = vrot.slane %v4499, 5
      %v4502 = vsel %vm917, %v4497, %v4501
      %v4504 = vshrl.u32 %v4413, 16
      %v4506 = vrot.slane %v4504, 4
      %v4507 = vshll.u32 %v4413, 16
      %v4509 = vrot.slane %v4507, 5
      %v4510 = vor.u32 %v4506, %v4509
      %v4511 = vrot.slane %v4510, 4
      %v4513 = vshll.u32 %v4414, 16
      %v4515 = vrot.slane %v4513, 5
      %v4516 = vsel %vm917, %v4511, %v4515
      %v4517 = vshrl.u32 %v4414, 16
      %v4519 = vrot.slane %v4517, 4
      %v4520 = vor.u32 %v4519, %v4515
      %v4521 = vrot.slane %v4520, 4
      %v4523 = vshll.u32 %v4415, 16
      %v4525 = vrot.slane %v4523, 5
      %v4526 = vsel %vm917, %v4521, %v4525
      %v4528 = vshrl.u32 %v4416, 16
      %v4530 = vrot.slane %v4528, 4
      %v4531 = vshll.u32 %v4416, 16
      %v4533 = vrot.slane %v4531, 5
      %v4534 = vor.u32 %v4530, %v4533
      %v4535 = vrot.slane %v4534, 4
      %v4537 = vshll.u32 %v4417, 16
      %v4539 = vrot.slane %v4537, 5
      %v4540 = vsel %vm917, %v4535, %v4539
      %v4541 = vshrl.u32 %v4417, 16
      %v4543 = vrot.slane %v4541, 4
      %v4544 = vor.u32 %v4543, %v4539
      %v4545 = vrot.slane %v4544, 4
      %v4547 = vshll.u32 %v4418, 16
      %v4549 = vrot.slane %v4547, 5
      %v4550 = vsel %vm917, %v4545, %v4549
      %v4552 = vshrl.u32 %v4419, 16
      %v4554 = vrot.slane %v4552, 4
      %v4555 = vshll.u32 %v4419, 16
      %v4557 = vrot.slane %v4555, 5
      %v4558 = vor.u32 %v4554, %v4557
      %v4559 = vrot.slane %v4558, 4
      %v4561 = vshll.u32 %v4420, 16
      %v4563 = vrot.slane %v4561, 5
      %v4564 = vsel %vm917, %v4559, %v4563
      %v4565 = vshrl.u32 %v4420, 16
      %v4567 = vrot.slane %v4565, 4
      %v4568 = vor.u32 %v4567, %v4563
      %v4569 = vrot.slane %v4568, 4
      %v4571 = vshll.u32 %v4421, 16
      %v4573 = vrot.slane %v4571, 5
      %v4574 = vsel %vm917, %v4569, %v4573
      %v4576 = vshrl.u32 %v4422, 16
      %v4578 = vrot.slane %v4576, 4
      %v4579 = vshll.u32 %v4422, 16
      %v4581 = vrot.slane %v4579, 5
      %v4582 = vor.u32 %v4578, %v4581
      %v4583 = vrot.slane %v4582, 4
      %v4585 = vshll.u32 %v4423, 16
      %v4587 = vrot.slane %v4585, 5
      %v4588 = vsel %vm917, %v4583, %v4587
      %v4589 = vshrl.u32 %v4423, 16
      %v4591 = vrot.slane %v4589, 4
      %v4592 = vor.u32 %v4591, %v4587
      %v4593 = vrot.slane %v4592, 4
      %v4595 = vshll.u32 %v4424, 16
      %v4597 = vrot.slane %v4595, 5
      %v4598 = vsel %vm917, %v4593, %v4597
      %v4600 = vshrl.u32 %v4425, 16
      %v4602 = vrot.slane %v4600, 4
      %v4603 = vshll.u32 %v4425, 16
      %v4605 = vrot.slane %v4603, 5
      %v4606 = vor.u32 %v4602, %v4605
      %v4607 = vrot.slane %v4606, 4
      %v4609 = vshll.u32 %v4426, 16
      %v4611 = vrot.slane %v4609, 5
      %v4612 = vsel %vm917, %v4607, %v4611
      %v4613 = vshrl.u32 %v4426, 16
      %v4615 = vrot.slane %v4613, 4
      %v4616 = vor.u32 %v4615, %v4611
      %v4617 = vrot.slane %v4616, 4
      %v4619 = vshll.u32 %v4427, 16
      %v4621 = vrot.slane %v4619, 5
      %v4622 = vsel %vm917, %v4617, %v4621
      %v4624 = vshrl.u32 %v4428, 16
      %v4626 = vrot.slane %v4624, 4
      %v4627 = vshll.u32 %v4428, 16
      %v4629 = vrot.slane %v4627, 5
      %v4630 = vor.u32 %v4626, %v4629
      %v4631 = vrot.slane %v4630, 4
      %v4633 = vshll.u32 %v4429, 16
      %v4635 = vrot.slane %v4633, 5
      %v4636 = vsel %vm917, %v4631, %v4635
      %v4637 = vshrl.u32 %v4429, 16
      %v4639 = vrot.slane %v4637, 4
      %v4640 = vor.u32 %v4639, %v4635
      %v4641 = vrot.slane %v4640, 4
      %v4643 = vshll.u32 %v4430, 16
      %v4645 = vrot.slane %v4643, 5
      %v4646 = vsel %vm917, %v4641, %v4645
      %v4648 = vshrl.u32 %v4431, 16
      %v4650 = vrot.slane %v4648, 4
      %v4651 = vshll.u32 %v4431, 16
      %v4653 = vrot.slane %v4651, 5
      %v4654 = vor.u32 %v4650, %v4653
      %v4655 = vrot.slane %v4654, 4
      %v4657 = vshll.u32 %v4432, 16
      %v4659 = vrot.slane %v4657, 5
      %v4660 = vsel %vm917, %v4655, %v4659
      %v4661 = vshrl.u32 %v4432, 16
      %v4663 = vrot.slane %v4661, 4
      %v4664 = vor.u32 %v4663, %v4659
      %v4665 = vrot.slane %v4664, 4
      %v4667 = vshll.u32 %v4433, 16
      %v4669 = vrot.slane %v4667, 5
      %v4670 = vsel %vm917, %v4665, %v4669
      %v4672 = vshrl.u32 %v4434, 16
      %v4674 = vrot.slane %v4672, 4
      %v4675 = vshll.u32 %v4434, 16
      %v4677 = vrot.slane %v4675, 5
      %v4678 = vor.u32 %v4674, %v4677
      %v4679 = vrot.slane %v4678, 4
      %v4681 = vshll.u32 %v4435, 16
      %v4683 = vrot.slane %v4681, 5
      %v4684 = vsel %vm917, %v4679, %v4683
      %v4685 = vshrl.u32 %v4435, 16
      %v4687 = vrot.slane %v4685, 4
      %v4688 = vor.u32 %v4687, %v4683
      %v4689 = vrot.slane %v4688, 4
      %v4691 = vshll.u32 %v4436, 16
      %v4693 = vrot.slane %v4691, 5
      %v4694 = vsel %vm917, %v4689, %v4693
      %v4696 = vshrl.u32 %v4437, 16
      %v4698 = vrot.slane %v4696, 4
      %v4699 = vshll.u32 %v4437, 16
      %v4701 = vrot.slane %v4699, 5
      %v4702 = vor.u32 %v4698, %v4701
      %v4703 = vrot.slane %v4702, 4
      %v4705 = vshll.u32 %v4438, 16
      %v4707 = vrot.slane %v4705, 5
      %v4708 = vsel %vm917, %v4703, %v4707
      %v4709 = vshrl.u32 %v4438, 16
      %v4711 = vrot.slane %v4709, 4
      %v4712 = vor.u32 %v4711, %v4707
      %v4713 = vrot.slane %v4712, 4
      %v4715 = vshll.u32 %v4439, 16
      %v4717 = vrot.slane %v4715, 5
      %v4718 = vsel %vm917, %v4713, %v4717
      %v4720 = vshrl.u32 %v4440, 16
      %v4722 = vrot.slane %v4720, 4
      %v4723 = vshll.u32 %v4440, 16
      %v4725 = vrot.slane %v4723, 5
      %v4726 = vor.u32 %v4722, %v4725
      %v4727 = vrot.slane %v4726, 4
      %v4729 = vshll.u32 %v4441, 16
      %v4731 = vrot.slane %v4729, 5
      %v4732 = vsel %vm917, %v4727, %v4731
      %v4733 = vshrl.u32 %v4441, 16
      %v4735 = vrot.slane %v4733, 4
      %v4736 = vor.u32 %v4735, %v4731
      %v4737 = vrot.slane %v4736, 4
      %v4739 = vshll.u32 %v4442, 16
      %v4741 = vrot.slane %v4739, 5
      %v4742 = vsel %vm917, %v4737, %v4741
      %v4744 = vshrl.u32 %v4443, 16
      %v4746 = vrot.slane %v4744, 4
      %v4747 = vshll.u32 %v4443, 16
      %v4749 = vrot.slane %v4747, 5
      %v4750 = vor.u32 %v4746, %v4749
      %v4751 = vrot.slane %v4750, 4
      %v4753 = vshll.u32 %v4444, 16
      %v4755 = vrot.slane %v4753, 5
      %v4756 = vsel %vm917, %v4751, %v4755
      %v4757 = vshrl.u32 %v4444, 16
      %v4759 = vrot.slane %v4757, 4
      %v4760 = vor.u32 %v4759, %v4755
      %v4761 = vrot.slane %v4760, 4
      %v4763 = vshll.u32 %v4445, 16
      %v4765 = vrot.slane %v4763, 5
      %v4766 = vsel %vm917, %v4761, %v4765
      %v4768 = vshrl.u32 %v4446, 16
      %v4770 = vrot.slane %v4768, 4
      %v4771 = vshll.u32 %v4446, 16
      %v4773 = vrot.slane %v4771, 5
      %v4774 = vor.u32 %v4770, %v4773
      %v4775 = vrot.slane %v4774, 4
      %v4777 = vshll.u32 %v4447, 16
      %v4779 = vrot.slane %v4777, 5
      %v4780 = vsel %vm917, %v4775, %v4779
      %v4781 = vshrl.u32 %v4447, 16
      %v4783 = vrot.slane %v4781, 4
      %v4784 = vor.u32 %v4783, %v4779
      %v4785 = vrot.slane %v4784, 4
      %v4787 = vshll.u32 %v4448, 16
      %v4789 = vrot.slane %v4787, 5
      %v4790 = vsel %vm917, %v4785, %v4789
      %v4792 = vshrl.u32 %v4449, 16
      %v4794 = vrot.slane %v4792, 4
      %v4795 = vshll.u32 %v4449, 16
      %v4797 = vrot.slane %v4795, 5
      %v4798 = vor.u32 %v4794, %v4797
      %v4799 = vrot.slane %v4798, 4
      %v4801 = vshll.u32 %v4450, 16
      %v4803 = vrot.slane %v4801, 5
      %v4804 = vsel %vm917, %v4799, %v4803
      %v4805 = vshrl.u32 %v4450, 16
      %v4807 = vrot.slane %v4805, 4
      %v4808 = vor.u32 %v4807, %v4803
      %v4809 = vrot.slane %v4808, 4
      %v4811 = vshll.u32 %v4451, 16
      %v4813 = vrot.slane %v4811, 5
      %v4814 = vsel %vm917, %v4809, %v4813
      %v4816 = vshrl.u32 %v4452, 16
      %v4818 = vrot.slane %v4816, 4
      %v4819 = vshll.u32 %v4452, 16
      %v4821 = vrot.slane %v4819, 5
      %v4822 = vor.u32 %v4818, %v4821
      %v4823 = vrot.slane %v4822, 4
      %v4825 = vshll.u32 %v4453, 16
      %v4827 = vrot.slane %v4825, 5
      %v4828 = vsel %vm917, %v4823, %v4827
      %v4829 = vshrl.u32 %v4453, 16
      %v4831 = vrot.slane %v4829, 4
      %v4832 = vor.u32 %v4831, %v4827
      %v4833 = vrot.slane %v4832, 4
      %v4835 = vshll.u32 %v4454, 16
      %v4837 = vrot.slane %v4835, 5
      %v4838 = vsel %vm917, %v4833, %v4837
      %s4839 = scalar_lea.vmem %s1, 448
      %v4840 = vld [vmem:[%s4839] sm:$0xf]
      %v4841 = vld [vmem:[%s4839 + $0x4] sm:$0xf]
      %v4842 = vld [vmem:[%s4839 + $0x8] sm:$0xf]
      %v4843 = vld [vmem:[%s4839 + $0xc] sm:$0xf]
      %v4844 = vld [vmem:[%s4839 + $0x10] sm:$0xf]
      %v4845 = vld [vmem:[%s4839 + $0x14] sm:$0xf]
      %v4846 = vld [vmem:[%s4839 + $0x18] sm:$0xf]
      %v4847 = vld [vmem:[%s4839 + $0x1c] sm:$0xf]
      %v4848 = vld [vmem:[%s4839 + $0x20] sm:$0xf]
      %v4849 = vld [vmem:[%s4839 + $0x24] sm:$0xf]
      %v4850 = vld [vmem:[%s4839 + $0x28] sm:$0xf]
      %v4851 = vld [vmem:[%s4839 + $0x2c] sm:$0xf]
      %v4852 = vld [vmem:[%s4839 + $0x30] sm:$0xf]
      %v4853 = vld [vmem:[%s4839 + $0x34] sm:$0xf]
      %v4854 = vld [vmem:[%s4839 + $0x38] sm:$0xf]
      %v4855 = vld [vmem:[%s4839 + $0x3c] sm:$0xf]
      %v4856 = vunpack.c.l.b16 %v4468
      %v4857 = vunpack.c.l.b16 %v4478
      %v4858 = vunpack.c.l.b16 %v4492
      %v4859 = vunpack.c.l.b16 %v4502
      %v4860 = vunpack.c.l.b16 %v4516
      %v4861 = vunpack.c.l.b16 %v4526
      %v4862 = vunpack.c.l.b16 %v4540
      %v4863 = vunpack.c.l.b16 %v4550
      %v4864 = vunpack.c.l.b16 %v4564
      %v4865 = vunpack.c.l.b16 %v4574
      %v4866 = vunpack.c.l.b16 %v4588
      %v4867 = vunpack.c.l.b16 %v4598
      %v4868 = vunpack.c.l.b16 %v4612
      %v4869 = vunpack.c.l.b16 %v4622
      %v4870 = vunpack.c.l.b16 %v4636
      %v4871 = vunpack.c.l.b16 %v4646
      %v4872 = vunpack.c.l.b16 %v4660
      %v4873 = vunpack.c.l.b16 %v4670
      %v4874 = vunpack.c.l.b16 %v4684
      %v4875 = vunpack.c.l.b16 %v4694
      %v4876 = vunpack.c.l.b16 %v4708
      %v4877 = vunpack.c.l.b16 %v4718
      %v4878 = vunpack.c.l.b16 %v4732
      %v4879 = vunpack.c.l.b16 %v4742
      %v4880 = vunpack.c.l.b16 %v4756
      %v4881 = vunpack.c.l.b16 %v4766
      %v4882 = vunpack.c.l.b16 %v4780
      %v4883 = vunpack.c.l.b16 %v4790
      %v4884 = vunpack.c.l.b16 %v4804
      %v4885 = vunpack.c.l.b16 %v4814
      %v4886 = vunpack.c.l.b16 %v4828
      %v4887 = vunpack.c.l.b16 %v4838
      %v4888 = vpack.c.b16 %v4857, %v4856
      %v4889 = vpack.c.b16 %v4859, %v4858
      %v4890 = vpack.c.b16 %v4861, %v4860
      %v4891 = vpack.c.b16 %v4863, %v4862
      %v4892 = vpack.c.b16 %v4865, %v4864
      %v4893 = vpack.c.b16 %v4867, %v4866
      %v4894 = vpack.c.b16 %v4869, %v4868
      %v4895 = vpack.c.b16 %v4871, %v4870
      %v4896 = vpack.c.b16 %v4873, %v4872
      %v4897 = vpack.c.b16 %v4875, %v4874
      %v4898 = vpack.c.b16 %v4877, %v4876
      %v4899 = vpack.c.b16 %v4879, %v4878
      %v4900 = vpack.c.b16 %v4881, %v4880
      %v4901 = vpack.c.b16 %v4883, %v4882
      %v4902 = vpack.c.b16 %v4885, %v4884
      %v4903 = vpack.c.b16 %v4887, %v4886
      %v4936 = vunpack.c.l.b16 %v4840
      %v4937 = vunpack.c.l.b16 %v4841
      %v4938 = vunpack.c.l.b16 %v4842
      %v4939 = vunpack.c.l.b16 %v4843
      %v4940 = vunpack.c.l.b16 %v4844
      %v4941 = vunpack.c.l.b16 %v4845
      %v4942 = vunpack.c.l.b16 %v4846
      %v4943 = vunpack.c.l.b16 %v4847
      %v4944 = vunpack.c.l.b16 %v4848
      %v4945 = vunpack.c.l.b16 %v4849
      %v4946 = vunpack.c.l.b16 %v4850
      %v4947 = vunpack.c.l.b16 %v4851
      %v4948 = vunpack.c.l.b16 %v4852
      %v4949 = vunpack.c.l.b16 %v4853
      %v4950 = vunpack.c.l.b16 %v4854
      %v4951 = vunpack.c.l.b16 %v4855
      %v4952 = vpack.c.b16 %v4937, %v4936
      %v4953 = vpack.c.b16 %v4939, %v4938
      %v4954 = vpack.c.b16 %v4941, %v4940
      %v4955 = vpack.c.b16 %v4943, %v4942
      %v4956 = vpack.c.b16 %v4945, %v4944
      %v4957 = vpack.c.b16 %v4947, %v4946
      %v4958 = vpack.c.b16 %v4949, %v4948
      %v4959 = vpack.c.b16 %v4951, %v4950
      %4968 = vmatprep.subr.bf16.mxu0 0
      %4969 = vmatpush1.bf16.msra.mxu0 %v4959
      %4970 = vmatprep.subr.bf16.mxu0 0
      %4971 = vmatpush1.bf16.msra.mxu0 %v4958
      %4972 = vmatprep.subr.bf16.mxu0 0
      %4973 = vmatpush1.bf16.msra.mxu0 %v4957
      %4974 = vmatprep.subr.bf16.mxu0 0
      %4975 = vmatpush1.bf16.msra.mxu0 %v4956
      %4976 = vmatprep.subr.bf16.mxu0 0
      %4977 = vmatpush1.bf16.msra.mxu0 %v4955
      %4978 = vmatprep.subr.bf16.mxu0 0
      %4979 = vmatpush1.bf16.msra.mxu0 %v4954
      %4980 = vmatprep.subr.bf16.mxu0 0
      %4981 = vmatpush1.bf16.msra.mxu0 %v4953
      %4982 = vmatprep.subr.bf16.mxu0 0
      %4983 = vmatpush1.bf16.msra.mxu0 %v4952
      %4984 = vmatprep.subr.bf16.mxu0 0
      %4985 = vmatpush2.bf16.msra.mxu0 0
      %4986 = vmatprep.subr.bf16.mxu0 0
      %4987 = vmatpush2.bf16.msra.mxu0 0
      %4988 = vmatprep.subr.bf16.mxu0 0
      %4989 = vmatpush2.bf16.msra.mxu0 0
      %4990 = vmatprep.subr.bf16.mxu0 0
      %4991 = vmatpush2.bf16.msra.mxu0 0
      %4992 = vmatprep.subr.bf16.mxu0 0
      %4993 = vmatpush2.bf16.msra.mxu0 0
      %4994 = vmatprep.subr.bf16.mxu0 0
      %4995 = vmatpush2.bf16.msra.mxu0 0
      %4996 = vmatprep.subr.bf16.mxu0 0
      %4997 = vmatpush2.bf16.msra.mxu0 0
      %4998 = vmatprep.subr.bf16.mxu0 0
      %4999 = vmatpush2.bf16.msra.mxu0 0
      %5000 = vmatprep.mubr.bf16.mxu0 0
      %5001 = vmatmul.mubr.bf16.gmra.mxu0 %v4888
      %v5002 = vpop.f32.mrf.mxu0
      %v5003 = vadd.f32 0.0, %v5002
      %v5004 = vpop.f32.mrf.mxu0
      %v5005 = vpop.f32.mrf.mxu0
      %v5006 = vadd.f32 0.0, %v5005
      %v5007 = vpop.f32.mrf.mxu0
      %5008 = vmatprep.mubr.bf16.mxu0 0
      %5009 = vmatmul.mubr.bf16.gmra.mxu0 %v4889
      %v5010 = vpop.f32.mrf.mxu0
      %v5011 = vadd.f32 0.0, %v5010
      %v5012 = vpop.f32.mrf.mxu0
      %v5013 = vpop.f32.mrf.mxu0
      %v5014 = vadd.f32 0.0, %v5013
      %v5015 = vpop.f32.mrf.mxu0
      %5016 = vmatprep.mubr.bf16.mxu0 0
      %5017 = vmatmul.mubr.bf16.gmra.mxu0 %v4890
      %v5018 = vpop.f32.mrf.mxu0
      %v5019 = vadd.f32 0.0, %v5018
      %v5020 = vpop.f32.mrf.mxu0
      %v5021 = vpop.f32.mrf.mxu0
      %v5022 = vadd.f32 0.0, %v5021
      %v5023 = vpop.f32.mrf.mxu0
      %5024 = vmatprep.mubr.bf16.mxu0 0
      %5025 = vmatmul.mubr.bf16.gmra.mxu0 %v4891
      %v5026 = vpop.f32.mrf.mxu0
      %v5027 = vadd.f32 0.0, %v5026
      %v5028 = vpop.f32.mrf.mxu0
      %v5029 = vpop.f32.mrf.mxu0
      %v5030 = vadd.f32 0.0, %v5029
      %v5031 = vpop.f32.mrf.mxu0
      %5032 = vmatprep.mubr.bf16.mxu0 0
      %5033 = vmatmul.mubr.bf16.gmra.mxu0 %v4892
      %v5034 = vpop.f32.mrf.mxu0
      %v5035 = vadd.f32 0.0, %v5034
      %v5036 = vpop.f32.mrf.mxu0
      %v5037 = vpop.f32.mrf.mxu0
      %v5038 = vadd.f32 0.0, %v5037
      %v5039 = vpop.f32.mrf.mxu0
      %5040 = vmatprep.mubr.bf16.mxu0 0
      %5041 = vmatmul.mubr.bf16.gmra.mxu0 %v4893
      %v5042 = vpop.f32.mrf.mxu0
      %v5043 = vadd.f32 0.0, %v5042
      %v5044 = vpop.f32.mrf.mxu0
      %v5045 = vpop.f32.mrf.mxu0
      %v5046 = vadd.f32 0.0, %v5045
      %v5047 = vpop.f32.mrf.mxu0
      %5048 = vmatprep.mubr.bf16.mxu0 0
      %5049 = vmatmul.mubr.bf16.gmra.mxu0 %v4894
      %v5050 = vpop.f32.mrf.mxu0
      %v5051 = vadd.f32 0.0, %v5050
      %v5052 = vpop.f32.mrf.mxu0
      %v5053 = vpop.f32.mrf.mxu0
      %v5054 = vadd.f32 0.0, %v5053
      %v5055 = vpop.f32.mrf.mxu0
      %5056 = vmatprep.mubr.bf16.mxu0 0
      %5057 = vmatmul.mubr.bf16.gmra.mxu0 %v4895
      %v5058 = vpop.f32.mrf.mxu0
      %v5059 = vadd.f32 0.0, %v5058
      %v5060 = vpop.f32.mrf.mxu0
      %v5061 = vpop.f32.mrf.mxu0
      %v5062 = vadd.f32 0.0, %v5061
      %v5063 = vpop.f32.mrf.mxu0
      %5064 = vmatprep.mubr.bf16.mxu0 0
      %5065 = vmatmul.mubr.bf16.gmra.mxu0 %v4896
      %v5066 = vpop.f32.mrf.mxu0
      %v5067 = vadd.f32 0.0, %v5066
      %v5068 = vpop.f32.mrf.mxu0
      %v5069 = vpop.f32.mrf.mxu0
      %v5070 = vadd.f32 0.0, %v5069
      %v5071 = vpop.f32.mrf.mxu0
      %5072 = vmatprep.mubr.bf16.mxu0 0
      %5073 = vmatmul.mubr.bf16.gmra.mxu0 %v4897
      %v5074 = vpop.f32.mrf.mxu0
      %v5075 = vadd.f32 0.0, %v5074
      %v5076 = vpop.f32.mrf.mxu0
      %v5077 = vpop.f32.mrf.mxu0
      %v5078 = vadd.f32 0.0, %v5077
      %v5079 = vpop.f32.mrf.mxu0
      %5080 = vmatprep.mubr.bf16.mxu0 0
      %5081 = vmatmul.mubr.bf16.gmra.mxu0 %v4898
      %v5082 = vpop.f32.mrf.mxu0
      %v5083 = vadd.f32 0.0, %v5082
      %v5084 = vpop.f32.mrf.mxu0
      %v5085 = vpop.f32.mrf.mxu0
      %v5086 = vadd.f32 0.0, %v5085
      %v5087 = vpop.f32.mrf.mxu0
      %5088 = vmatprep.mubr.bf16.mxu0 0
      %5089 = vmatmul.mubr.bf16.gmra.mxu0 %v4899
      %v5090 = vpop.f32.mrf.mxu0
      %v5091 = vadd.f32 0.0, %v5090
      %v5092 = vpop.f32.mrf.mxu0
      %v5093 = vpop.f32.mrf.mxu0
      %v5094 = vadd.f32 0.0, %v5093
      %v5095 = vpop.f32.mrf.mxu0
      %5096 = vmatprep.mubr.bf16.mxu0 0
      %5097 = vmatmul.mubr.bf16.gmra.mxu0 %v4900
      %v5098 = vpop.f32.mrf.mxu0
      %v5099 = vadd.f32 0.0, %v5098
      %v5100 = vpop.f32.mrf.mxu0
      %v5101 = vpop.f32.mrf.mxu0
      %v5102 = vadd.f32 0.0, %v5101
      %v5103 = vpop.f32.mrf.mxu0
      %5104 = vmatprep.mubr.bf16.mxu0 0
      %5105 = vmatmul.mubr.bf16.gmra.mxu0 %v4901
      %v5106 = vpop.f32.mrf.mxu0
      %v5107 = vadd.f32 0.0, %v5106
      %v5108 = vpop.f32.mrf.mxu0
      %v5109 = vpop.f32.mrf.mxu0
      %v5110 = vadd.f32 0.0, %v5109
      %v5111 = vpop.f32.mrf.mxu0
      %5112 = vmatprep.mubr.bf16.mxu0 0
      %5113 = vmatmul.mubr.bf16.gmra.mxu0 %v4902
      %v5114 = vpop.f32.mrf.mxu0
      %v5115 = vadd.f32 0.0, %v5114
      %v5116 = vpop.f32.mrf.mxu0
      %v5117 = vpop.f32.mrf.mxu0
      %v5118 = vadd.f32 0.0, %v5117
      %v5119 = vpop.f32.mrf.mxu0
      %5120 = vmatprep.mubr.bf16.mxu0 0
      %5121 = vmatmul.mubr.bf16.gmra.mxu0 %v4903
      %v5122 = vpop.f32.mrf.mxu0
      %v5123 = vadd.f32 0.0, %v5122
      %v5124 = vpop.f32.mrf.mxu0
      %v5125 = vpop.f32.mrf.mxu0
      %v5126 = vadd.f32 0.0, %v5125
      %v5127 = vpop.f32.mrf.mxu0
      %5128 = vdwg.mxu0
      %v5129 = vadd.f32 %v4375, %v5003
      %v5130 = vadd.f32 %v4376, %v5006
      %v5131 = vadd.f32 %v4377, %v5011
      %v5132 = vadd.f32 %v4378, %v5014
      %v5133 = vadd.f32 %v4379, %v5019
      %v5134 = vadd.f32 %v4380, %v5022
      %v5135 = vadd.f32 %v4381, %v5027
      %v5136 = vadd.f32 %v4382, %v5030
      %v5137 = vadd.f32 %v4383, %v5035
      %v5138 = vadd.f32 %v4384, %v5038
      %v5139 = vadd.f32 %v4385, %v5043
      %v5140 = vadd.f32 %v4386, %v5046
      %v5141 = vadd.f32 %v4387, %v5051
      %v5142 = vadd.f32 %v4388, %v5054
      %v5143 = vadd.f32 %v4389, %v5059
      %v5144 = vadd.f32 %v4390, %v5062
      %v5145 = vadd.f32 %v4391, %v5067
      %v5146 = vadd.f32 %v4392, %v5070
      %v5147 = vadd.f32 %v4393, %v5075
      %v5148 = vadd.f32 %v4394, %v5078
      %v5149 = vadd.f32 %v4395, %v5083
      %v5150 = vadd.f32 %v4396, %v5086
      %v5151 = vadd.f32 %v4397, %v5091
      %v5152 = vadd.f32 %v4398, %v5094
      %v5153 = vadd.f32 %v4399, %v5099
      %v5154 = vadd.f32 %v4400, %v5102
      %v5155 = vadd.f32 %v4401, %v5107
      %v5156 = vadd.f32 %v4402, %v5110
      %v5157 = vadd.f32 %v4403, %v5115
      %v5158 = vadd.f32 %v4404, %v5118
      %v5159 = vadd.f32 %v4405, %v5123
      %v5160 = vadd.f32 %v4406, %v5126
      %v5161 = vld [vmem:[%s4020] sm:$0xe]
      %v5162 = vld [vmem:[%s4020 + $0xc] sm:$0xe]
      %v5163 = vld [vmem:[%s4020 + $0x18] sm:$0xe]
      %v5164 = vld [vmem:[%s4020 + $0x24] sm:$0xe]
      %v5165 = vld [vmem:[%s4020 + $0x30] sm:$0xe]
      %v5166 = vld [vmem:[%s4020 + $0x3c] sm:$0xe]
      %v5167 = vld [vmem:[%s4020 + $0x48] sm:$0xe]
      %v5168 = vld [vmem:[%s4020 + $0x54] sm:$0xe]
      %v5169 = vld [vmem:[%s4020 + $0x60] sm:$0xe]
      %v5170 = vld [vmem:[%s4020 + $0x6c] sm:$0xe]
      %v5171 = vld [vmem:[%s4020 + $0x78] sm:$0xe]
      %v5172 = vld [vmem:[%s4020 + $0x84] sm:$0xe]
      %v5173 = vld [vmem:[%s4020 + $0x90] sm:$0xe]
      %v5174 = vld [vmem:[%s4020 + $0x9c] sm:$0xe]
      %v5175 = vld [vmem:[%s4020 + $0xa8] sm:$0xe]
      %v5176 = vld [vmem:[%s4020 + $0xb4] sm:$0xe]
      %v5225 = vrot.slane %v5161, 5
      %v5226 = vrot.slane %v5225, 4
      %v5227 = vrot.slane %v4408, 5
      %v5228 = vsel %vm1947, %v5226, %v5227
      %v5229 = vrot.slane %v5227, 4
      %v5230 = vrot.slane %v4409, 5
      %v5231 = vsel %vm1947, %v5229, %v5230
      %v5232 = vrot.slane %v5162, 5
      %v5233 = vrot.slane %v5232, 4
      %v5234 = vrot.slane %v4411, 5
      %v5235 = vsel %vm1947, %v5233, %v5234
      %v5236 = vrot.slane %v5234, 4
      %v5237 = vrot.slane %v4412, 5
      %v5238 = vsel %vm1947, %v5236, %v5237
      %v5239 = vrot.slane %v5163, 5
      %v5240 = vrot.slane %v5239, 4
      %v5241 = vrot.slane %v4414, 5
      %v5242 = vsel %vm1947, %v5240, %v5241
      %v5243 = vrot.slane %v5241, 4
      %v5244 = vrot.slane %v4415, 5
      %v5245 = vsel %vm1947, %v5243, %v5244
      %v5246 = vrot.slane %v5164, 5
      %v5247 = vrot.slane %v5246, 4
      %v5248 = vrot.slane %v4417, 5
      %v5249 = vsel %vm1947, %v5247, %v5248
      %v5250 = vrot.slane %v5248, 4
      %v5251 = vrot.slane %v4418, 5
      %v5252 = vsel %vm1947, %v5250, %v5251
      %v5253 = vrot.slane %v5165, 5
      %v5254 = vrot.slane %v5253, 4
      %v5255 = vrot.slane %v4420, 5
      %v5256 = vsel %vm1947, %v5254, %v5255
      %v5257 = vrot.slane %v5255, 4
      %v5258 = vrot.slane %v4421, 5
      %v5259 = vsel %vm1947, %v5257, %v5258
      %v5260 = vrot.slane %v5166, 5
      %v5261 = vrot.slane %v5260, 4
      %v5262 = vrot.slane %v4423, 5
      %v5263 = vsel %vm1947, %v5261, %v5262
      %v5264 = vrot.slane %v5262, 4
      %v5265 = vrot.slane %v4424, 5
      %v5266 = vsel %vm1947, %v5264, %v5265
      %v5267 = vrot.slane %v5167, 5
      %v5268 = vrot.slane %v5267, 4
      %v5269 = vrot.slane %v4426, 5
      %v5270 = vsel %vm1947, %v5268, %v5269
      %v5271 = vrot.slane %v5269, 4
      %v5272 = vrot.slane %v4427, 5
      %v5273 = vsel %vm1947, %v5271, %v5272
      %v5274 = vrot.slane %v5168, 5
      %v5275 = vrot.slane %v5274, 4
      %v5276 = vrot.slane %v4429, 5
      %v5277 = vsel %vm1947, %v5275, %v5276
      %v5278 = vrot.slane %v5276, 4
      %v5279 = vrot.slane %v4430, 5
      %v5280 = vsel %vm1947, %v5278, %v5279
      %v5281 = vrot.slane %v5169, 5
      %v5282 = vrot.slane %v5281, 4
      %v5283 = vrot.slane %v4432, 5
      %v5284 = vsel %vm1947, %v5282, %v5283
      %v5285 = vrot.slane %v5283, 4
      %v5286 = vrot.slane %v4433, 5
      %v5287 = vsel %vm1947, %v5285, %v5286
      %v5288 = vrot.slane %v5170, 5
      %v5289 = vrot.slane %v5288, 4
      %v5290 = vrot.slane %v4435, 5
      %v5291 = vsel %vm1947, %v5289, %v5290
      %v5292 = vrot.slane %v5290, 4
      %v5293 = vrot.slane %v4436, 5
      %v5294 = vsel %vm1947, %v5292, %v5293
      %v5295 = vrot.slane %v5171, 5
      %v5296 = vrot.slane %v5295, 4
      %v5297 = vrot.slane %v4438, 5
      %v5298 = vsel %vm1947, %v5296, %v5297
      %v5299 = vrot.slane %v5297, 4
      %v5300 = vrot.slane %v4439, 5
      %v5301 = vsel %vm1947, %v5299, %v5300
      %v5302 = vrot.slane %v5172, 5
      %v5303 = vrot.slane %v5302, 4
      %v5304 = vrot.slane %v4441, 5
      %v5305 = vsel %vm1947, %v5303, %v5304
      %v5306 = vrot.slane %v5304, 4
      %v5307 = vrot.slane %v4442, 5
      %v5308 = vsel %vm1947, %v5306, %v5307
      %v5309 = vrot.slane %v5173, 5
      %v5310 = vrot.slane %v5309, 4
      %v5311 = vrot.slane %v4444, 5
      %v5312 = vsel %vm1947, %v5310, %v5311
      %v5313 = vrot.slane %v5311, 4
      %v5314 = vrot.slane %v4445, 5
      %v5315 = vsel %vm1947, %v5313, %v5314
      %v5316 = vrot.slane %v5174, 5
      %v5317 = vrot.slane %v5316, 4
      %v5318 = vrot.slane %v4447, 5
      %v5319 = vsel %vm1947, %v5317, %v5318
      %v5320 = vrot.slane %v5318, 4
      %v5321 = vrot.slane %v4448, 5
      %v5322 = vsel %vm1947, %v5320, %v5321
      %v5323 = vrot.slane %v5175, 5
      %v5324 = vrot.slane %v5323, 4
      %v5325 = vrot.slane %v4450, 5
      %v5326 = vsel %vm1947, %v5324, %v5325
      %v5327 = vrot.slane %v5325, 4
      %v5328 = vrot.slane %v4451, 5
      %v5329 = vsel %vm1947, %v5327, %v5328
      %v5330 = vrot.slane %v5176, 5
      %v5331 = vrot.slane %v5330, 4
      %v5332 = vrot.slane %v4453, 5
      %v5333 = vsel %vm1947, %v5331, %v5332
      %v5334 = vrot.slane %v5332, 4
      %v5335 = vrot.slane %v4454, 5
      %v5336 = vsel %vm1947, %v5334, %v5335
      %s5337 = scalar_lea.vmem %s1, 512
      %v5338 = vld [vmem:[%s5337] sm:$0xf]
      %v5339 = vld [vmem:[%s5337 + $0x4] sm:$0xf]
      %v5340 = vld [vmem:[%s5337 + $0x8] sm:$0xf]
      %v5341 = vld [vmem:[%s5337 + $0xc] sm:$0xf]
      %v5342 = vld [vmem:[%s5337 + $0x10] sm:$0xf]
      %v5343 = vld [vmem:[%s5337 + $0x14] sm:$0xf]
      %v5344 = vld [vmem:[%s5337 + $0x18] sm:$0xf]
      %v5345 = vld [vmem:[%s5337 + $0x1c] sm:$0xf]
      %v5346 = vld [vmem:[%s5337 + $0x20] sm:$0xf]
      %v5347 = vld [vmem:[%s5337 + $0x24] sm:$0xf]
      %v5348 = vld [vmem:[%s5337 + $0x28] sm:$0xf]
      %v5349 = vld [vmem:[%s5337 + $0x2c] sm:$0xf]
      %v5350 = vld [vmem:[%s5337 + $0x30] sm:$0xf]
      %v5351 = vld [vmem:[%s5337 + $0x34] sm:$0xf]
      %v5352 = vld [vmem:[%s5337 + $0x38] sm:$0xf]
      %v5353 = vld [vmem:[%s5337 + $0x3c] sm:$0xf]
      %v5354 = vunpack.c.l.b16 %v5228
      %v5355 = vunpack.c.l.b16 %v5231
      %v5356 = vunpack.c.l.b16 %v5235
      %v5357 = vunpack.c.l.b16 %v5238
      %v5358 = vunpack.c.l.b16 %v5242
      %v5359 = vunpack.c.l.b16 %v5245
      %v5360 = vunpack.c.l.b16 %v5249
      %v5361 = vunpack.c.l.b16 %v5252
      %v5362 = vunpack.c.l.b16 %v5256
      %v5363 = vunpack.c.l.b16 %v5259
      %v5364 = vunpack.c.l.b16 %v5263
      %v5365 = vunpack.c.l.b16 %v5266
      %v5366 = vunpack.c.l.b16 %v5270
      %v5367 = vunpack.c.l.b16 %v5273
      %v5368 = vunpack.c.l.b16 %v5277
      %v5369 = vunpack.c.l.b16 %v5280
      %v5370 = vunpack.c.l.b16 %v5284
      %v5371 = vunpack.c.l.b16 %v5287
      %v5372 = vunpack.c.l.b16 %v5291
      %v5373 = vunpack.c.l.b16 %v5294
      %v5374 = vunpack.c.l.b16 %v5298
      %v5375 = vunpack.c.l.b16 %v5301
      %v5376 = vunpack.c.l.b16 %v5305
      %v5377 = vunpack.c.l.b16 %v5308
      %v5378 = vunpack.c.l.b16 %v5312
      %v5379 = vunpack.c.l.b16 %v5315
      %v5380 = vunpack.c.l.b16 %v5319
      %v5381 = vunpack.c.l.b16 %v5322
      %v5382 = vunpack.c.l.b16 %v5326
      %v5383 = vunpack.c.l.b16 %v5329
      %v5384 = vunpack.c.l.b16 %v5333
      %v5385 = vunpack.c.l.b16 %v5336
      %v5386 = vpack.c.b16 %v5355, %v5354
      %v5387 = vpack.c.b16 %v5357, %v5356
      %v5388 = vpack.c.b16 %v5359, %v5358
      %v5389 = vpack.c.b16 %v5361, %v5360
      %v5390 = vpack.c.b16 %v5363, %v5362
      %v5391 = vpack.c.b16 %v5365, %v5364
      %v5392 = vpack.c.b16 %v5367, %v5366
      %v5393 = vpack.c.b16 %v5369, %v5368
      %v5394 = vpack.c.b16 %v5371, %v5370
      %v5395 = vpack.c.b16 %v5373, %v5372
      %v5396 = vpack.c.b16 %v5375, %v5374
      %v5397 = vpack.c.b16 %v5377, %v5376
      %v5398 = vpack.c.b16 %v5379, %v5378
      %v5399 = vpack.c.b16 %v5381, %v5380
      %v5400 = vpack.c.b16 %v5383, %v5382
      %v5401 = vpack.c.b16 %v5385, %v5384
      %v5434 = vunpack.c.l.b16 %v5338
      %v5435 = vunpack.c.l.b16 %v5339
      %v5436 = vunpack.c.l.b16 %v5340
      %v5437 = vunpack.c.l.b16 %v5341
      %v5438 = vunpack.c.l.b16 %v5342
      %v5439 = vunpack.c.l.b16 %v5343
      %v5440 = vunpack.c.l.b16 %v5344
      %v5441 = vunpack.c.l.b16 %v5345
      %v5442 = vunpack.c.l.b16 %v5346
      %v5443 = vunpack.c.l.b16 %v5347
      %v5444 = vunpack.c.l.b16 %v5348
      %v5445 = vunpack.c.l.b16 %v5349
      %v5446 = vunpack.c.l.b16 %v5350
      %v5447 = vunpack.c.l.b16 %v5351
      %v5448 = vunpack.c.l.b16 %v5352
      %v5449 = vunpack.c.l.b16 %v5353
      %v5450 = vpack.c.b16 %v5435, %v5434
      %v5451 = vpack.c.b16 %v5437, %v5436
      %v5452 = vpack.c.b16 %v5439, %v5438
      %v5453 = vpack.c.b16 %v5441, %v5440
      %v5454 = vpack.c.b16 %v5443, %v5442
      %v5455 = vpack.c.b16 %v5445, %v5444
      %v5456 = vpack.c.b16 %v5447, %v5446
      %v5457 = vpack.c.b16 %v5449, %v5448
      %5466 = vmatprep.subr.bf16.mxu0 0
      %5467 = vmatpush1.bf16.msra.mxu0 %v5457
      %5468 = vmatprep.subr.bf16.mxu0 0
      %5469 = vmatpush1.bf16.msra.mxu0 %v5456
      %5470 = vmatprep.subr.bf16.mxu0 0
      %5471 = vmatpush1.bf16.msra.mxu0 %v5455
      %5472 = vmatprep.subr.bf16.mxu0 0
      %5473 = vmatpush1.bf16.msra.mxu0 %v5454
      %5474 = vmatprep.subr.bf16.mxu0 0
      %5475 = vmatpush1.bf16.msra.mxu0 %v5453
      %5476 = vmatprep.subr.bf16.mxu0 0
      %5477 = vmatpush1.bf16.msra.mxu0 %v5452
      %5478 = vmatprep.subr.bf16.mxu0 0
      %5479 = vmatpush1.bf16.msra.mxu0 %v5451
      %5480 = vmatprep.subr.bf16.mxu0 0
      %5481 = vmatpush1.bf16.msra.mxu0 %v5450
      %5482 = vmatprep.subr.bf16.mxu0 0
      %5483 = vmatpush2.bf16.msra.mxu0 0
      %5484 = vmatprep.subr.bf16.mxu0 0
      %5485 = vmatpush2.bf16.msra.mxu0 0
      %5486 = vmatprep.subr.bf16.mxu0 0
      %5487 = vmatpush2.bf16.msra.mxu0 0
      %5488 = vmatprep.subr.bf16.mxu0 0
      %5489 = vmatpush2.bf16.msra.mxu0 0
      %5490 = vmatprep.subr.bf16.mxu0 0
      %5491 = vmatpush2.bf16.msra.mxu0 0
      %5492 = vmatprep.subr.bf16.mxu0 0
      %5493 = vmatpush2.bf16.msra.mxu0 0
      %5494 = vmatprep.subr.bf16.mxu0 0
      %5495 = vmatpush2.bf16.msra.mxu0 0
      %5496 = vmatprep.subr.bf16.mxu0 0
      %5497 = vmatpush2.bf16.msra.mxu0 0
      %5498 = vmatprep.mubr.bf16.mxu0 0
      %5499 = vmatmul.mubr.bf16.gmra.mxu0 %v5386
      %v5500 = vpop.f32.mrf.mxu0
      %v5501 = vadd.f32 0.0, %v5500
      %v5502 = vpop.f32.mrf.mxu0
      %v5503 = vpop.f32.mrf.mxu0
      %v5504 = vadd.f32 0.0, %v5503
      %v5505 = vpop.f32.mrf.mxu0
      %5506 = vmatprep.mubr.bf16.mxu0 0
      %5507 = vmatmul.mubr.bf16.gmra.mxu0 %v5387
      %v5508 = vpop.f32.mrf.mxu0
      %v5509 = vadd.f32 0.0, %v5508
      %v5510 = vpop.f32.mrf.mxu0
      %v5511 = vpop.f32.mrf.mxu0
      %v5512 = vadd.f32 0.0, %v5511
      %v5513 = vpop.f32.mrf.mxu0
      %5514 = vmatprep.mubr.bf16.mxu0 0
      %5515 = vmatmul.mubr.bf16.gmra.mxu0 %v5388
      %v5516 = vpop.f32.mrf.mxu0
      %v5517 = vadd.f32 0.0, %v5516
      %v5518 = vpop.f32.mrf.mxu0
      %v5519 = vpop.f32.mrf.mxu0
      %v5520 = vadd.f32 0.0, %v5519
      %v5521 = vpop.f32.mrf.mxu0
      %5522 = vmatprep.mubr.bf16.mxu0 0
      %5523 = vmatmul.mubr.bf16.gmra.mxu0 %v5389
      %v5524 = vpop.f32.mrf.mxu0
      %v5525 = vadd.f32 0.0, %v5524
      %v5526 = vpop.f32.mrf.mxu0
      %v5527 = vpop.f32.mrf.mxu0
      %v5528 = vadd.f32 0.0, %v5527
      %v5529 = vpop.f32.mrf.mxu0
      %5530 = vmatprep.mubr.bf16.mxu0 0
      %5531 = vmatmul.mubr.bf16.gmra.mxu0 %v5390
      %v5532 = vpop.f32.mrf.mxu0
      %v5533 = vadd.f32 0.0, %v5532
      %v5534 = vpop.f32.mrf.mxu0
      %v5535 = vpop.f32.mrf.mxu0
      %v5536 = vadd.f32 0.0, %v5535
      %v5537 = vpop.f32.mrf.mxu0
      %5538 = vmatprep.mubr.bf16.mxu0 0
      %5539 = vmatmul.mubr.bf16.gmra.mxu0 %v5391
      %v5540 = vpop.f32.mrf.mxu0
      %v5541 = vadd.f32 0.0, %v5540
      %v5542 = vpop.f32.mrf.mxu0
      %v5543 = vpop.f32.mrf.mxu0
      %v5544 = vadd.f32 0.0, %v5543
      %v5545 = vpop.f32.mrf.mxu0
      %5546 = vmatprep.mubr.bf16.mxu0 0
      %5547 = vmatmul.mubr.bf16.gmra.mxu0 %v5392
      %v5548 = vpop.f32.mrf.mxu0
      %v5549 = vadd.f32 0.0, %v5548
      %v5550 = vpop.f32.mrf.mxu0
      %v5551 = vpop.f32.mrf.mxu0
      %v5552 = vadd.f32 0.0, %v5551
      %v5553 = vpop.f32.mrf.mxu0
      %5554 = vmatprep.mubr.bf16.mxu0 0
      %5555 = vmatmul.mubr.bf16.gmra.mxu0 %v5393
      %v5556 = vpop.f32.mrf.mxu0
      %v5557 = vadd.f32 0.0, %v5556
      %v5558 = vpop.f32.mrf.mxu0
      %v5559 = vpop.f32.mrf.mxu0
      %v5560 = vadd.f32 0.0, %v5559
      %v5561 = vpop.f32.mrf.mxu0
      %5562 = vmatprep.mubr.bf16.mxu0 0
      %5563 = vmatmul.mubr.bf16.gmra.mxu0 %v5394
      %v5564 = vpop.f32.mrf.mxu0
      %v5565 = vadd.f32 0.0, %v5564
      %v5566 = vpop.f32.mrf.mxu0
      %v5567 = vpop.f32.mrf.mxu0
      %v5568 = vadd.f32 0.0, %v5567
      %v5569 = vpop.f32.mrf.mxu0
      %5570 = vmatprep.mubr.bf16.mxu0 0
      %5571 = vmatmul.mubr.bf16.gmra.mxu0 %v5395
      %v5572 = vpop.f32.mrf.mxu0
      %v5573 = vadd.f32 0.0, %v5572
      %v5574 = vpop.f32.mrf.mxu0
      %v5575 = vpop.f32.mrf.mxu0
      %v5576 = vadd.f32 0.0, %v5575
      %v5577 = vpop.f32.mrf.mxu0
      %5578 = vmatprep.mubr.bf16.mxu0 0
      %5579 = vmatmul.mubr.bf16.gmra.mxu0 %v5396
      %v5580 = vpop.f32.mrf.mxu0
      %v5581 = vadd.f32 0.0, %v5580
      %v5582 = vpop.f32.mrf.mxu0
      %v5583 = vpop.f32.mrf.mxu0
      %v5584 = vadd.f32 0.0, %v5583
      %v5585 = vpop.f32.mrf.mxu0
      %5586 = vmatprep.mubr.bf16.mxu0 0
      %5587 = vmatmul.mubr.bf16.gmra.mxu0 %v5397
      %v5588 = vpop.f32.mrf.mxu0
      %v5589 = vadd.f32 0.0, %v5588
      %v5590 = vpop.f32.mrf.mxu0
      %v5591 = vpop.f32.mrf.mxu0
      %v5592 = vadd.f32 0.0, %v5591
      %v5593 = vpop.f32.mrf.mxu0
      %5594 = vmatprep.mubr.bf16.mxu0 0
      %5595 = vmatmul.mubr.bf16.gmra.mxu0 %v5398
      %v5596 = vpop.f32.mrf.mxu0
      %v5597 = vadd.f32 0.0, %v5596
      %v5598 = vpop.f32.mrf.mxu0
      %v5599 = vpop.f32.mrf.mxu0
      %v5600 = vadd.f32 0.0, %v5599
      %v5601 = vpop.f32.mrf.mxu0
      %5602 = vmatprep.mubr.bf16.mxu0 0
      %5603 = vmatmul.mubr.bf16.gmra.mxu0 %v5399
      %v5604 = vpop.f32.mrf.mxu0
      %v5605 = vadd.f32 0.0, %v5604
      %v5606 = vpop.f32.mrf.mxu0
      %v5607 = vpop.f32.mrf.mxu0
      %v5608 = vadd.f32 0.0, %v5607
      %v5609 = vpop.f32.mrf.mxu0
      %5610 = vmatprep.mubr.bf16.mxu0 0
      %5611 = vmatmul.mubr.bf16.gmra.mxu0 %v5400
      %v5612 = vpop.f32.mrf.mxu0
      %v5613 = vadd.f32 0.0, %v5612
      %v5614 = vpop.f32.mrf.mxu0
      %v5615 = vpop.f32.mrf.mxu0
      %v5616 = vadd.f32 0.0, %v5615
      %v5617 = vpop.f32.mrf.mxu0
      %5618 = vmatprep.mubr.bf16.mxu0 0
      %5619 = vmatmul.mubr.bf16.gmra.mxu0 %v5401
      %v5620 = vpop.f32.mrf.mxu0
      %v5621 = vadd.f32 0.0, %v5620
      %v5622 = vpop.f32.mrf.mxu0
      %v5623 = vpop.f32.mrf.mxu0
      %v5624 = vadd.f32 0.0, %v5623
      %v5625 = vpop.f32.mrf.mxu0
      %5626 = vdwg.mxu0
      %v5627 = vadd.f32 %v5129, %v5501
      %v5628 = vadd.f32 %v5130, %v5504
      %v5629 = vadd.f32 %v5131, %v5509
      %v5630 = vadd.f32 %v5132, %v5512
      %v5631 = vadd.f32 %v5133, %v5517
      %v5632 = vadd.f32 %v5134, %v5520
      %v5633 = vadd.f32 %v5135, %v5525
      %v5634 = vadd.f32 %v5136, %v5528
      %v5635 = vadd.f32 %v5137, %v5533
      %v5636 = vadd.f32 %v5138, %v5536
      %v5637 = vadd.f32 %v5139, %v5541
      %v5638 = vadd.f32 %v5140, %v5544
      %v5639 = vadd.f32 %v5141, %v5549
      %v5640 = vadd.f32 %v5142, %v5552
      %v5641 = vadd.f32 %v5143, %v5557
      %v5642 = vadd.f32 %v5144, %v5560
      %v5643 = vadd.f32 %v5145, %v5565
      %v5644 = vadd.f32 %v5146, %v5568
      %v5645 = vadd.f32 %v5147, %v5573
      %v5646 = vadd.f32 %v5148, %v5576
      %v5647 = vadd.f32 %v5149, %v5581
      %v5648 = vadd.f32 %v5150, %v5584
      %v5649 = vadd.f32 %v5151, %v5589
      %v5650 = vadd.f32 %v5152, %v5592
      %v5651 = vadd.f32 %v5153, %v5597
      %v5652 = vadd.f32 %v5154, %v5600
      %v5653 = vadd.f32 %v5155, %v5605
      %v5654 = vadd.f32 %v5156, %v5608
      %v5655 = vadd.f32 %v5157, %v5613
      %v5656 = vadd.f32 %v5158, %v5616
      %v5657 = vadd.f32 %v5159, %v5621
      %v5658 = vadd.f32 %v5160, %v5624
      %v5659 = vpack.c.bf16 %v5628, %v5627
      %v5660 = vpack.c.bf16 %v5630, %v5629
      %v5661 = vpack.c.bf16 %v5632, %v5631
      %v5662 = vpack.c.bf16 %v5634, %v5633
      %v5663 = vpack.c.bf16 %v5636, %v5635
      %v5664 = vpack.c.bf16 %v5638, %v5637
      %v5665 = vpack.c.bf16 %v5640, %v5639
      %v5666 = vpack.c.bf16 %v5642, %v5641
      %v5667 = vpack.c.bf16 %v5644, %v5643
      %v5668 = vpack.c.bf16 %v5646, %v5645
      %v5669 = vpack.c.bf16 %v5648, %v5647
      %v5670 = vpack.c.bf16 %v5650, %v5649
      %v5671 = vpack.c.bf16 %v5652, %v5651
      %v5672 = vpack.c.bf16 %v5654, %v5653
      %v5673 = vpack.c.bf16 %v5656, %v5655
      %v5674 = vpack.c.bf16 %v5658, %v5657
      %v5691 = vunpack.c.l.b16 %v5659
      %v5692 = vunpack.c.h.b16 %v5659
      %v5693 = vunpack.c.l.b16 %v5660
      %v5694 = vunpack.c.h.b16 %v5660
      %v5695 = vunpack.c.l.b16 %v5661
      %v5696 = vunpack.c.h.b16 %v5661
      %v5697 = vunpack.c.l.b16 %v5662
      %v5698 = vunpack.c.h.b16 %v5662
      %v5699 = vunpack.c.l.b16 %v5663
      %v5700 = vunpack.c.h.b16 %v5663
      %v5701 = vunpack.c.l.b16 %v5664
      %v5702 = vunpack.c.h.b16 %v5664
      %v5703 = vunpack.c.l.b16 %v5665
      %v5704 = vunpack.c.h.b16 %v5665
      %v5705 = vunpack.c.l.b16 %v5666
      %v5706 = vunpack.c.h.b16 %v5666
      %v5707 = vunpack.c.l.b16 %v5667
      %v5708 = vunpack.c.h.b16 %v5667
      %v5709 = vunpack.c.l.b16 %v5668
      %v5710 = vunpack.c.h.b16 %v5668
      %v5711 = vunpack.c.l.b16 %v5669
      %v5712 = vunpack.c.h.b16 %v5669
      %v5713 = vunpack.c.l.b16 %v5670
      %v5714 = vunpack.c.h.b16 %v5670
      %v5715 = vunpack.c.l.b16 %v5671
      %v5716 = vunpack.c.h.b16 %v5671
      %v5717 = vunpack.c.l.b16 %v5672
      %v5718 = vunpack.c.h.b16 %v5672
      %v5719 = vunpack.c.l.b16 %v5673
      %v5720 = vunpack.c.h.b16 %v5673
      %v5721 = vunpack.c.l.b16 %v5674
      %v5722 = vunpack.c.h.b16 %v5674
      %v5723 = vpack.c.b16 %v5691, %v5691
      %v5724 = vpack.c.b16 %v5692, %v5692
      %v5725 = vpack.c.b16 %v5693, %v5693
      %v5726 = vpack.c.b16 %v5694, %v5694
      %v5727 = vpack.c.b16 %v5695, %v5695
      %v5728 = vpack.c.b16 %v5696, %v5696
      %v5729 = vpack.c.b16 %v5697, %v5697
      %v5730 = vpack.c.b16 %v5698, %v5698
      %v5731 = vpack.c.b16 %v5699, %v5699
      %v5732 = vpack.c.b16 %v5700, %v5700
      %v5733 = vpack.c.b16 %v5701, %v5701
      %v5734 = vpack.c.b16 %v5702, %v5702
      %v5735 = vpack.c.b16 %v5703, %v5703
      %v5736 = vpack.c.b16 %v5704, %v5704
      %v5737 = vpack.c.b16 %v5705, %v5705
      %v5738 = vpack.c.b16 %v5706, %v5706
      %v5739 = vpack.c.b16 %v5707, %v5707
      %v5740 = vpack.c.b16 %v5708, %v5708
      %v5741 = vpack.c.b16 %v5709, %v5709
      %v5742 = vpack.c.b16 %v5710, %v5710
      %v5743 = vpack.c.b16 %v5711, %v5711
      %v5744 = vpack.c.b16 %v5712, %v5712
      %v5745 = vpack.c.b16 %v5713, %v5713
      %v5746 = vpack.c.b16 %v5714, %v5714
      %v5747 = vpack.c.b16 %v5715, %v5715
      %v5748 = vpack.c.b16 %v5716, %v5716
      %v5749 = vpack.c.b16 %v5717, %v5717
      %v5750 = vpack.c.b16 %v5718, %v5718
      %v5751 = vpack.c.b16 %v5719, %v5719
      %v5752 = vpack.c.b16 %v5720, %v5720
      %v5753 = vpack.c.b16 %v5721, %v5721
      %v5754 = vpack.c.b16 %v5722, %v5722
      %5787 = vst [vmem:[%s264] sm:$0xf] %v5723
      %5788 = vst [vmem:[%s264 + $0x4] sm:$0xf] %v5724
      %5789 = vst [vmem:[%s264 + $0x8] sm:$0xf] %v5725
      %5790 = vst [vmem:[%s264 + $0xc] sm:$0xf] %v5726
      %5791 = vst [vmem:[%s264 + $0x10] sm:$0xf] %v5727
      %5792 = vst [vmem:[%s264 + $0x14] sm:$0xf] %v5728
      %5793 = vst [vmem:[%s264 + $0x18] sm:$0xf] %v5729
      %5794 = vst [vmem:[%s264 + $0x1c] sm:$0xf] %v5730
      %5795 = vst [vmem:[%s264 + $0x20] sm:$0xf] %v5731
      %5796 = vst [vmem:[%s264 + $0x24] sm:$0xf] %v5732
      %5797 = vst [vmem:[%s264 + $0x28] sm:$0xf] %v5733
      %5798 = vst [vmem:[%s264 + $0x2c] sm:$0xf] %v5734
      %5799 = vst [vmem:[%s264 + $0x30] sm:$0xf] %v5735
      %5800 = vst [vmem:[%s264 + $0x34] sm:$0xf] %v5736
      %5801 = vst [vmem:[%s264 + $0x38] sm:$0xf] %v5737
      %5802 = vst [vmem:[%s264 + $0x3c] sm:$0xf] %v5738
      %5803 = vst [vmem:[%s264 + $0x40] sm:$0xf] %v5739
      %5804 = vst [vmem:[%s264 + $0x44] sm:$0xf] %v5740
      %5805 = vst [vmem:[%s264 + $0x48] sm:$0xf] %v5741
      %5806 = vst [vmem:[%s264 + $0x4c] sm:$0xf] %v5742
      %5807 = vst [vmem:[%s264 + $0x50] sm:$0xf] %v5743
      %5808 = vst [vmem:[%s264 + $0x54] sm:$0xf] %v5744
      %5809 = vst [vmem:[%s264 + $0x58] sm:$0xf] %v5745
      %5810 = vst [vmem:[%s264 + $0x5c] sm:$0xf] %v5746
      %5811 = vst [vmem:[%s264 + $0x60] sm:$0xf] %v5747
      %5812 = vst [vmem:[%s264 + $0x64] sm:$0xf] %v5748
      %5813 = vst [vmem:[%s264 + $0x68] sm:$0xf] %v5749
      %5814 = vst [vmem:[%s264 + $0x6c] sm:$0xf] %v5750
      %5815 = vst [vmem:[%s264 + $0x70] sm:$0xf] %v5751
      %5816 = vst [vmem:[%s264 + $0x74] sm:$0xf] %v5752
      %5817 = vst [vmem:[%s264 + $0x78] sm:$0xf] %v5753
      %5818 = vst [vmem:[%s264 + $0x7c] sm:$0xf] %v5754
      %v5819 = vadd.f32 %v5627, %v5628
      %v5820 = vadd.f32 %v5819, %v5629
      %v5821 = vadd.f32 %v5820, %v5630
      %v5822 = vadd.f32 %v5821, %v5631
      %v5823 = vadd.f32 %v5822, %v5632
      %v5824 = vadd.f32 %v5823, %v5633
      %v5825 = vadd.f32 %v5824, %v5634
      %v5826 = vadd.f32 %v5825, %v5635
      %v5827 = vadd.f32 %v5826, %v5636
      %v5828 = vadd.f32 %v5827, %v5637
      %v5829 = vadd.f32 %v5828, %v5638
      %v5830 = vadd.f32 %v5829, %v5639
      %v5831 = vadd.f32 %v5830, %v5640
      %v5832 = vadd.f32 %v5831, %v5641
      %v5833 = vadd.f32 %v5832, %v5642
      %v5834 = vadd.f32 %v5833, %v5643
      %v5835 = vadd.f32 %v5834, %v5644
      %v5836 = vadd.f32 %v5835, %v5645
      %v5837 = vadd.f32 %v5836, %v5646
      %v5838 = vadd.f32 %v5837, %v5647
      %v5839 = vadd.f32 %v5838, %v5648
      %v5840 = vadd.f32 %v5839, %v5649
      %v5841 = vadd.f32 %v5840, %v5650
      %v5842 = vadd.f32 %v5841, %v5651
      %v5843 = vadd.f32 %v5842, %v5652
      %v5844 = vadd.f32 %v5843, %v5653
      %v5845 = vadd.f32 %v5844, %v5654
      %v5846 = vadd.f32 %v5845, %v5655
      %v5847 = vadd.f32 %v5846, %v5656
      %v5848 = vadd.f32 %v5847, %v5657
      %v5849 = vadd.f32 %v5848, %v5658
      %5850 = vst [vmem:[%s268] sm:$0xff] %v5849
      %v5851 = vmul.f32 %v5627, %v5627
      %v5852 = vmul.f32 %v5628, %v5628
      %v5853 = vmul.f32 %v5629, %v5629
      %v5854 = vmul.f32 %v5630, %v5630
      %v5855 = vmul.f32 %v5631, %v5631
      %v5856 = vmul.f32 %v5632, %v5632
      %v5857 = vmul.f32 %v5633, %v5633
      %v5858 = vmul.f32 %v5634, %v5634
      %v5859 = vmul.f32 %v5635, %v5635
      %v5860 = vmul.f32 %v5636, %v5636
      %v5861 = vmul.f32 %v5637, %v5637
      %v5862 = vmul.f32 %v5638, %v5638
      %v5863 = vmul.f32 %v5639, %v5639
      %v5864 = vmul.f32 %v5640, %v5640
      %v5865 = vmul.f32 %v5641, %v5641
      %v5866 = vmul.f32 %v5642, %v5642
      %v5867 = vmul.f32 %v5643, %v5643
      %v5868 = vmul.f32 %v5644, %v5644
      %v5869 = vmul.f32 %v5645, %v5645
      %v5870 = vmul.f32 %v5646, %v5646
      %v5871 = vmul.f32 %v5647, %v5647
      %v5872 = vmul.f32 %v5648, %v5648
      %v5873 = vmul.f32 %v5649, %v5649
      %v5874 = vmul.f32 %v5650, %v5650
      %v5875 = vmul.f32 %v5651, %v5651
      %v5876 = vmul.f32 %v5652, %v5652
      %v5877 = vmul.f32 %v5653, %v5653
      %v5878 = vmul.f32 %v5654, %v5654
      %v5879 = vmul.f32 %v5655, %v5655
      %v5880 = vmul.f32 %v5656, %v5656
      %v5881 = vmul.f32 %v5657, %v5657
      %v5882 = vmul.f32 %v5658, %v5658
      %v5883 = vadd.f32 %v5851, %v5852
      %v5884 = vadd.f32 %v5883, %v5853
      %v5885 = vadd.f32 %v5884, %v5854
      %v5886 = vadd.f32 %v5885, %v5855
      %v5887 = vadd.f32 %v5886, %v5856
      %v5888 = vadd.f32 %v5887, %v5857
      %v5889 = vadd.f32 %v5888, %v5858
      %v5890 = vadd.f32 %v5889, %v5859
      %v5891 = vadd.f32 %v5890, %v5860
      %v5892 = vadd.f32 %v5891, %v5861
      %v5893 = vadd.f32 %v5892, %v5862
      %v5894 = vadd.f32 %v5893, %v5863
      %v5895 = vadd.f32 %v5894, %v5864
      %v5896 = vadd.f32 %v5895, %v5865
      %v5897 = vadd.f32 %v5896, %v5866
      %v5898 = vadd.f32 %v5897, %v5867
      %v5899 = vadd.f32 %v5898, %v5868
      %v5900 = vadd.f32 %v5899, %v5869
      %v5901 = vadd.f32 %v5900, %v5870
      %v5902 = vadd.f32 %v5901, %v5871
      %v5903 = vadd.f32 %v5902, %v5872
      %v5904 = vadd.f32 %v5903, %v5873
      %v5905 = vadd.f32 %v5904, %v5874
      %v5906 = vadd.f32 %v5905, %v5875
      %v5907 = vadd.f32 %v5906, %v5876
      %v5908 = vadd.f32 %v5907, %v5877
      %v5909 = vadd.f32 %v5908, %v5878
      %v5910 = vadd.f32 %v5909, %v5879
      %v5911 = vadd.f32 %v5910, %v5880
      %v5912 = vadd.f32 %v5911, %v5881
      %v5913 = vadd.f32 %v5912, %v5882
      %5914 = vst [vmem:[%s272] sm:$0xff] %v5913
      %p5915 = scmp.lt.s32.totalorder %s18, 1
      %s5916 = scalar_select %p5915, %s18, 1
      %s5917 = smul.addr %s5916, 32
      %s5918 = smul.addr %s5917, 4
      %s5919 = scalar_lea.vmem %s4, %s5918
      %p5920 = scmp.lt.s32.totalorder %s18, 1
      %s5921 = scalar_select %p5920, %s18, 1
      %s5922 = smul.addr %s5921, 8
      %s5923 = scalar_lea.vmem %s5, %s5922
      %p5924 = scmp.lt.s32.totalorder %s18, 1
      %s5925 = scalar_select %p5924, %s18, 1
      %s5926 = smul.addr %s5925, 8
      %s5927 = scalar_lea.vmem %s6, %s5926
      // Predicated region
      $region37: #{conv_block_forward.3} parent=35 // pred_check
        %p5928 = pneg %p125
      $region38: #{conv_block_forward.3} parent=35 // pred_check_branch
        %5930 = sbr.rel (%p5928) target = $region40
      $region39: #{conv_block_forward.3} parent=35 // pred_region
        _
      $region40: #{conv_block_forward.3} parent=35 // pred_fallthru
        _
      // Predicated region
      $region41: #{conv_block_forward.3} parent=35 // pred_check
        %p5931 = pneg %p151
      $region42: #{conv_block_forward.3} parent=35 // pred_check_branch
        %5933 = sbr.rel (%p5931) target = $region44
      $region43: #{conv_block_forward.3} parent=35 // pred_region
        _
      $region44: #{conv_block_forward.3} parent=35 // pred_fallthru
        _
      // Predicated region
      $region45: #{conv_block_forward.3} parent=35 // pred_check
        %p5934 = pneg %p177
      $region46: #{conv_block_forward.3} parent=35 // pred_check_branch
        %5936 = sbr.rel (%p5934) target = $region48
      $region47: #{conv_block_forward.3} parent=35 // pred_region
        _
      $region48: #{conv_block_forward.3} parent=35 // pred_fallthru
        _
    $region36: #{conv_block_forward.3} parent=5 // pred_fallthru
      _
    %p5937 = scmp.le.s32.totalorder 2, %s13
    // Predicated region
    $region49: #{conv_block_forward.3} parent=5 // pred_check
      %p5938 = pneg %p5937
    $region50: #{conv_block_forward.3} parent=5 // pred_check_branch
      %5940 = sbr.rel (%p5938) target = $region52
    $region51: #{conv_block_forward.3} parent=5 // pred_region
      %s5941 = ssub.s32 %s13, 2
      // Predicated region
      $region53: #{conv_block_forward.3} parent=51 // pred_check
        %p5942 = pneg %p131
      $region54: #{conv_block_forward.3} parent=51 // pred_check_branch
        %5944 = sbr.rel (%p5942) target = $region56
      $region55: #{conv_block_forward.3} parent=51 // pred_region
        %p5945 = scmp.lt.s32.totalorder %s19, 1
        %s5946 = scalar_select %p5945, %s19, 1
        %s5947 = smul.addr %s5946, 32
        %s5948 = smul.addr %s5947, 4
        %s5949 = scalar_lea.vmem %s4, %s5948
      $region56: #{conv_block_forward.3} parent=51 // pred_fallthru
        _
      // Predicated region
      $region57: #{conv_block_forward.3} parent=51 // pred_check
        %p5950 = pneg %p157
      $region58: #{conv_block_forward.3} parent=51 // pred_check_branch
        %5952 = sbr.rel (%p5950) target = $region60
      $region59: #{conv_block_forward.3} parent=51 // pred_region
        %p5953 = scmp.lt.s32.totalorder %s19, 1
        %s5954 = scalar_select %p5953, %s19, 1
        %s5955 = smul.addr %s5954, 8
        %s5956 = scalar_lea.vmem %s5, %s5955
      $region60: #{conv_block_forward.3} parent=51 // pred_fallthru
        _
      // Predicated region
      $region61: #{conv_block_forward.3} parent=51 // pred_check
        %p5957 = pneg %p183
      $region62: #{conv_block_forward.3} parent=51 // pred_check_branch
        %5959 = sbr.rel (%p5957) target = $region64
      $region63: #{conv_block_forward.3} parent=51 // pred_region
        %p5960 = scmp.lt.s32.totalorder %s19, 1
        %s5961 = scalar_select %p5960, %s19, 1
        %s5962 = smul.addr %s5961, 8
        %s5963 = scalar_lea.vmem %s6, %s5962
      $region64: #{conv_block_forward.3} parent=51 // pred_fallthru
        _
    $region52: #{conv_block_forward.3} parent=5 // pred_fallthru
      _
  $region6: #{conv_block_forward.3} parent=0 // loop_footer
    %s17 = sadd.s32 1, %s13
  $region7: #{conv_block_forward.3} parent=0 // loop_footer_branch
    %12 = sbr.rel target = $region3
  $region8: #{conv_block_forward.3} parent=0 // loop_exit
    _

// kernel: conv_block_forward.4
$region0: #{conv_block_forward.4}
  #allocation0 [shape = 'u32[]', space=smem, size = 0x4, offset = 0x4, fixed_abs, tag = 'smem constant byte address 0x4 - core index']
  #allocation1 [shape = 'u32[144,128]{1,0:T(1,128)}', space=vmem, size = 0x12000, scoped, tag = 'internal scratch']
  #allocation2 [shape = 'bf16[1,18,18,128]{3,2,1,0:T(8,128)(2,1)}', space=vmem, size = 0x1b000, scoped, tag = 'scratch operand']
  %s0 = inlined_call_operand.vmem [shape: bf16[2,16,16,128], index: 0, kind: input, shape index: {}]
  %s1 = inlined_call_operand.vmem [shape: bf16[3,3,128,128], index: 1, kind: input, shape index: {}]
  %s2 = inlined_call_operand.vmem [shape: f32[1,128], index: 2, kind: input, shape index: {}]
  %s3 = inlined_call_operand.vmem [shape: f32[1,128], index: 3, kind: input, shape index: {}]
  %s4 = inlined_call_operand.vmem [shape: bf16[2,16,16,128], index: 4, kind: output, shape index: {0}]
  %s5 = inlined_call_operand.vmem [shape: f32[16,128], index: 5, kind: output, shape index: {1}]
  %s6 = inlined_call_operand.vmem [shape: f32[16,128], index: 6, kind: output, shape index: {2}]
  %7 = xla_tuple %s4, %s5, %s6
  %s8 = sld [smem:[#allocation0]]
  $region65: #{conv_block_forward.4} parent=0
    _
  %s10 = ssub.s32 1, %s8
  %s11 = scalar_select 0, %s10, %s8
  loop: start=0, step=1, limit=4
  $region2: #{conv_block_forward.4} parent=0 // loop_pre_header
    _
  $region3: #{conv_block_forward.4} parent=0 // loop_header
    %s13 = sphi 0, %s17
    %p14 = scmp.ge.s32.totalorder %s13, 4
    %s23 = sphi 0, %s25
    %s26 = sphi 0, %s23
    %s27 = sphi 0, %s26
    %s43 = sphi 0, %s27
    %s47 = sphi 0, %s47
    %s49 = sphi 0, %s47
    %s50 = sphi 0, %s49
    %s64 = sphi 0, %s50
    %s68 = sphi 0, %s68
    %s70 = sphi 0, %s68
    %s71 = sphi 0, %s70
    %s85 = sphi 0, %s71
    %s89 = sphi 0, %s89
    %s91 = sphi 0, %s89
    %s92 = sphi 0, %s91
    %s106 = sphi 0, %s92
    %s112 = sphi 0, %s114
    %s115 = sphi 0, %s112
    %s116 = sphi 0, %s115
    %s132 = sphi 0, %s116
    %s138 = sphi 0, %s140
    %s141 = sphi 0, %s138
    %s142 = sphi 0, %s141
    %s158 = sphi 0, %s142
    %s164 = sphi 0, %s166
    %s167 = sphi 0, %s164
    %s168 = sphi 0, %s167
    %s184 = sphi 0, %s168
  $region4: #{conv_block_forward.4} parent=0 // loop_header_branch
    %16 = sbr.rel (%p14) target = $region8
  $region5: #{conv_block_forward.4} parent=0 // loop_body
    %s18 = ssub.s32 %s13, 1
    %s19 = ssub.s32 %s13, 2
    %s20 = sadd.s32 %s13, 1
    %s21 = ssub.s32 %s13, %s20
    %p22 = scmp.eq.s32.totalorder %s21, 0
    %s24 = sadd.s32 %s23, 1
    %s25 = scalar_select %p22, %s23, %s24
    %p28 = pneg %p22
    %p29 = scmp.eq.s32.totalorder %s13, 1
    %p30 = por %p28, %p29
    %p31 = scmp.ne.s32.totalorder %s23, %s26
    %p32 = scmp.eq.s32.totalorder %s13, 0
    %p33 = por %p31, %p32
    %p34 = scmp.ne.s32.totalorder %s23, %s26
    %p35 = scmp.eq.s32.totalorder %s18, 1
    %p36 = por %p34, %p35
    %p37 = scmp.ne.s32.totalorder %s26, %s27
    %p38 = scmp.eq.s32.totalorder %s18, 0
    %p39 = por %p37, %p38
    %p40 = scmp.ne.s32.totalorder %s26, %s27
    %p41 = scmp.eq.s32.totalorder %s19, 1
    %p42 = por %p40, %p41
    %p44 = scmp.ne.s32.totalorder %s27, %s43
    %p45 = scmp.eq.s32.totalorder %s19, 0
    %p46 = por %p44, %p45
    %s48 = sadd.s32 %s47, 1
    %p51 = scmp.eq.s32.totalorder %s13, 1
    %p52 = scmp.ne.s32.totalorder %s47, %s49
    %p53 = scmp.eq.s32.totalorder %s13, 0
    %p54 = por %p52, %p53
    %p55 = scmp.ne.s32.totalorder %s47, %s49
    %p56 = scmp.eq.s32.totalorder %s18, 1
    %p57 = por %p55, %p56
    %p58 = scmp.ne.s32.totalorder %s49, %s50
    %p59 = scmp.eq.s32.totalorder %s18, 0
    %p60 = por %p58, %p59
    %p61 = scmp.ne.s32.totalorder %s49, %s50
    %p62 = scmp.eq.s32.totalorder %s19, 1
    %p63 = por %p61, %p62
    %p65 = scmp.ne.s32.totalorder %s50, %s64
    %p66 = scmp.eq.s32.totalorder %s19, 0
    %p67 = por %p65, %p66
    %s69 = sadd.s32 %s68, 1
    %p72 = scmp.eq.s32.totalorder %s13, 1
    %p73 = scmp.ne.s32.totalorder %s68, %s70
    %p74 = scmp.eq.s32.totalorder %s13, 0
    %p75 = por %p73, %p74
    %p76 = scmp.ne.s32.totalorder %s68, %s70
    %p77 = scmp.eq.s32.totalorder %s18, 1
    %p78 = por %p76, %p77
    %p79 = scmp.ne.s32.totalorder %s70, %s71
    %p80 = scmp.eq.s32.totalorder %s18, 0
    %p81 = por %p79, %p80
    %p82 = scmp.ne.s32.totalorder %s70, %s71
    %p83 = scmp.eq.s32.totalorder %s19, 1
    %p84 = por %p82, %p83
    %p86 = scmp.ne.s32.totalorder %s71, %s85
    %p87 = scmp.eq.s32.totalorder %s19, 0
    %p88 = por %p86, %p87
    %s90 = sadd.s32 %s89, 1
    %p93 = scmp.eq.s32.totalorder %s13, 1
    %p94 = scmp.ne.s32.totalorder %s89, %s91
    %p95 = scmp.eq.s32.totalorder %s13, 0
    %p96 = por %p94, %p95
    %p97 = scmp.ne.s32.totalorder %s89, %s91
    %p98 = scmp.eq.s32.totalorder %s18, 1
    %p99 = por %p97, %p98
    %p100 = scmp.ne.s32.totalorder %s91, %s92
    %p101 = scmp.eq.s32.totalorder %s18, 0
    %p102 = por %p100, %p101
    %p103 = scmp.ne.s32.totalorder %s91, %s92
    %p104 = scmp.eq.s32.totalorder %s19, 1
    %p105 = por %p103, %p104
    %p107 = scmp.ne.s32.totalorder %s92, %s106
    %p108 = scmp.eq.s32.totalorder %s19, 0
    %p109 = por %p107, %p108
    %s110 = ssub.s32 %s13, %s20
    %p111 = scmp.eq.s32.totalorder %s110, 0
    %s113 = sadd.s32 %s112, 1
    %s114 = scalar_select %p111, %s112, %s113
    %p117 = pneg %p111
    %p118 = scmp.eq.s32.totalorder %s13, 1
    %p119 = por %p117, %p118
    %p120 = scmp.ne.s32.totalorder %s112, %s115
    %p121 = scmp.eq.s32.totalorder %s13, 0
    %p122 = por %p120, %p121
    %p123 = scmp.ne.s32.totalorder %s112, %s115
    %p124 = scmp.eq.s32.totalorder %s18, 1
    %p125 = por %p123, %p124
    %p126 = scmp.ne.s32.totalorder %s115, %s116
    %p127 = scmp.eq.s32.totalorder %s18, 0
    %p128 = por %p126, %p127
    %p129 = scmp.ne.s32.totalorder %s115, %s116
    %p130 = scmp.eq.s32.totalorder %s19, 1
    %p131 = por %p129, %p130
    %p133 = scmp.ne.s32.totalorder %s116, %s132
    %p134 = scmp.eq.s32.totalorder %s19, 0
    %p135 = por %p133, %p134
    %s136 = ssub.s32 %s13, %s20
    %p137 = scmp.eq.s32.totalorder %s136, 0
    %s139 = sadd.s32 %s138, 1
    %s140 = scalar_select %p137, %s138, %s139
    %p143 = pneg %p137
    %p144 = scmp.eq.s32.totalorder %s13, 1
    %p145 = por %p143, %p144
    %p146 = scmp.ne.s32.totalorder %s138, %s141
    %p147 = scmp.eq.s32.totalorder %s13, 0
    %p148 = por %p146, %p147
    %p149 = scmp.ne.s32.totalorder %s138, %s141
    %p150 = scmp.eq.s32.totalorder %s18, 1
    %p151 = por %p149, %p150
    %p152 = scmp.ne.s32.totalorder %s141, %s142
    %p153 = scmp.eq.s32.totalorder %s18, 0
    %p154 = por %p152, %p153
    %p155 = scmp.ne.s32.totalorder %s141, %s142
    %p156 = scmp.eq.s32.totalorder %s19, 1
    %p157 = por %p155, %p156
    %p159 = scmp.ne.s32.totalorder %s142, %s158
    %p160 = scmp.eq.s32.totalorder %s19, 0
    %p161 = por %p159, %p160
    %s162 = ssub.s32 %s13, %s20
    %p163 = scmp.eq.s32.totalorder %s162, 0
    %s165 = sadd.s32 %s164, 1
    %s166 = scalar_select %p163, %s164, %s165
    %p169 = pneg %p163
    %p170 = scmp.eq.s32.totalorder %s13, 1
    %p171 = por %p169, %p170
    %p172 = scmp.ne.s32.totalorder %s164, %s167
    %p173 = scmp.eq.s32.totalorder %s13, 0
    %p174 = por %p172, %p173
    %p175 = scmp.ne.s32.totalorder %s164, %s167
    %p176 = scmp.eq.s32.totalorder %s18, 1
    %p177 = por %p175, %p176
    %p178 = scmp.ne.s32.totalorder %s167, %s168
    %p179 = scmp.eq.s32.totalorder %s18, 0
    %p180 = por %p178, %p179
    %p181 = scmp.ne.s32.totalorder %s167, %s168
    %p182 = scmp.eq.s32.totalorder %s19, 1
    %p183 = por %p181, %p182
    %p185 = scmp.ne.s32.totalorder %s168, %s184
    %p186 = scmp.eq.s32.totalorder %s19, 0
    %p187 = por %p185, %p186
    %p188 = scmp.le.s32.totalorder 1, %s13
    %p189 = scmp.lt.s32.totalorder %s13, 3
    %p190 = pnand %p188, %p189
    %p191 = pneg %p190
    // Predicated region
    $region9: #{conv_block_forward.4} parent=5 // pred_check
      _
    $region10: #{conv_block_forward.4} parent=5 // pred_check_branch
      %193 = sbr.rel (%p190) target = $region12
    $region11: #{conv_block_forward.4} parent=5 // pred_region
      %s194 = ssub.s32 %s13, 1
      // Predicated region
      $region13: #{conv_block_forward.4} parent=11 // pred_check
        %p195 = pneg %p60
      $region14: #{conv_block_forward.4} parent=11 // pred_check_branch
        %197 = sbr.rel (%p195) target = $region16
      $region15: #{conv_block_forward.4} parent=11 // pred_region
        _
      $region16: #{conv_block_forward.4} parent=11 // pred_fallthru
        _
      // Predicated region
      $region17: #{conv_block_forward.4} parent=11 // pred_check
        %p198 = pneg %p81
      $region18: #{conv_block_forward.4} parent=11 // pred_check_branch
        %200 = sbr.rel (%p198) target = $region20
      $region19: #{conv_block_forward.4} parent=11 // pred_region
        _
      $region20: #{conv_block_forward.4} parent=11 // pred_fallthru
        _
      // Predicated region
      $region21: #{conv_block_forward.4} parent=11 // pred_check
        %p201 = pneg %p102
      $region22: #{conv_block_forward.4} parent=11 // pred_check_branch
        %203 = sbr.rel (%p201) target = $region24
      $region23: #{conv_block_forward.4} parent=11 // pred_region
        _
      $region24: #{conv_block_forward.4} parent=11 // pred_fallthru
        _
    $region12: #{conv_block_forward.4} parent=5 // pred_fallthru
      _
    %p204 = scmp.lt.s32.totalorder %s13, 2
    // Predicated region
    $region25: #{conv_block_forward.4} parent=5 // pred_check
      %p205 = pneg %p204
    $region26: #{conv_block_forward.4} parent=5 // pred_check_branch
      %207 = sbr.rel (%p205) target = $region28
    $region27: #{conv_block_forward.4} parent=5 // pred_region
      // Predicated region
      $region29: #{conv_block_forward.4} parent=27 // pred_check
        %p208 = pneg %p33
      $region30: #{conv_block_forward.4} parent=27 // pred_check_branch
        %210 = sbr.rel (%p208) target = $region32
      $region31: #{conv_block_forward.4} parent=27 // pred_region
        %p211 = scmp.lt.s32.totalorder %s13, 1
        %s212 = scalar_select %p211, %s13, 1
        %s213 = smul.addr %s212, 32
        %s214 = smul.addr %s213, 4
        %s215 = scalar_lea.vmem %s0, %s214
      $region32: #{conv_block_forward.4} parent=27 // pred_fallthru
        _
    $region28: #{conv_block_forward.4} parent=5 // pred_fallthru
      _
    %p216 = scmp.le.s32.totalorder 1, %s13
    %p217 = scmp.lt.s32.totalorder %s13, 3
    %p218 = pnand %p216, %p217
    %p219 = pneg %p218
    // Predicated region
    $region33: #{conv_block_forward.4} parent=5 // pred_check
      _
    $region34: #{conv_block_forward.4} parent=5 // pred_check_branch
      %221 = sbr.rel (%p218) target = $region36
    $region35: #{conv_block_forward.4} parent=5 // pred_region
      %s222 = ssub.s32 %s13, 1
      %p223 = scmp.lt.s32.totalorder %s18, 1
      %s224 = scalar_select %p223, %s18, 1
      %s225 = smul.addr %s224, 32
      %s226 = smul.addr %s225, 4
      %s227 = scalar_lea.vmem %s0, %s226
      %p228 = pneg %p39
      %p229 = pneg %p36
      %p230 = pneg %p60
      %p231 = pneg %p57
      %p232 = pneg %p81
      %p233 = pneg %p78
      %p234 = pneg %p102
      %p235 = pneg %p99
      %p236 = pneg %p128
      %p237 = pneg %p125
      %p238 = scmp.lt.s32.totalorder %s18, 1
      %s239 = scalar_select %p238, %s18, 1
      %s240 = smul.addr %s239, 32
      %s241 = smul.addr %s240, 4
      %s242 = scalar_lea.vmem %s4, %s241
      %p243 = pneg %p154
      %p244 = pneg %p151
      %p245 = scmp.lt.s32.totalorder %s18, 1
      %s246 = scalar_select %p245, %s18, 1
      %s247 = smul.addr %s246, 8
      %s248 = scalar_lea.vmem %s5, %s247
      %p249 = pneg %p180
      %p250 = pneg %p177
      %p251 = scmp.lt.s32.totalorder %s18, 1
      %s252 = scalar_select %p251, %s18, 1
      %s253 = smul.addr %s252, 8
      %s254 = scalar_lea.vmem %s6, %s253
      %p255 = scmp.lt.s32.totalorder %s18, 1
      %s256 = scalar_select %p255, %s18, 1
      %s257 = smul.addr %s256, 32
      %s258 = smul.addr %s257, 4
      %s259 = scalar_lea.vmem %s0, %s258
      %p260 = scmp.lt.s32.totalorder %s18, 1
      %s261 = scalar_select %p260, %s18, 1
      %s262 = smul.addr %s261, 32
      %s263 = smul.addr %s262, 4
      %s264 = scalar_lea.vmem %s4, %s263
      %p265 = scmp.lt.s32.totalorder %s18, 1
      %s266 = scalar_select %p265, %s18, 1
      %s267 = smul.addr %s266, 8
      %s268 = scalar_lea.vmem %s5, %s267
      %p269 = scmp.lt.s32.totalorder %s18, 1
      %s270 = scalar_select %p269, %s18, 1
      %s271 = smul.addr %s270, 8
      %s272 = scalar_lea.vmem %s6, %s271
      %v274 = vld [vmem:[%s259] sm:$0xf]
      %v275 = vld [vmem:[%s259 + $0x4] sm:$0xf]
      %v276 = vld [vmem:[%s259 + $0x8] sm:$0xf]
      %v277 = vld [vmem:[%s259 + $0xc] sm:$0xf]
      %v278 = vld [vmem:[%s259 + $0x10] sm:$0xf]
      %v279 = vld [vmem:[%s259 + $0x14] sm:$0xf]
      %v280 = vld [vmem:[%s259 + $0x18] sm:$0xf]
      %v281 = vld [vmem:[%s259 + $0x1c] sm:$0xf]
      %v282 = vld [vmem:[%s259 + $0x20] sm:$0xf]
      %v283 = vld [vmem:[%s259 + $0x24] sm:$0xf]
      %v284 = vld [vmem:[%s259 + $0x28] sm:$0xf]
      %v285 = vld [vmem:[%s259 + $0x2c] sm:$0xf]
      %v286 = vld [vmem:[%s259 + $0x30] sm:$0xf]
      %v287 = vld [vmem:[%s259 + $0x34] sm:$0xf]
      %v288 = vld [vmem:[%s259 + $0x38] sm:$0xf]
      %v289 = vld [vmem:[%s259 + $0x3c] sm:$0xf]
      %v290 = vld [vmem:[%s259 + $0x40] sm:$0xf]
      %v291 = vld [vmem:[%s259 + $0x44] sm:$0xf]
      %v292 = vld [vmem:[%s259 + $0x48] sm:$0xf]
      %v293 = vld [vmem:[%s259 + $0x4c] sm:$0xf]
      %v294 = vld [vmem:[%s259 + $0x50] sm:$0xf]
      %v295 = vld [vmem:[%s259 + $0x54] sm:$0xf]
      %v296 = vld [vmem:[%s259 + $0x58] sm:$0xf]
      %v297 = vld [vmem:[%s259 + $0x5c] sm:$0xf]
      %v298 = vld [vmem:[%s259 + $0x60] sm:$0xf]
      %v299 = vld [vmem:[%s259 + $0x64] sm:$0xf]
      %v300 = vld [vmem:[%s259 + $0x68] sm:$0xf]
      %v301 = vld [vmem:[%s259 + $0x6c] sm:$0xf]
      %v302 = vld [vmem:[%s259 + $0x70] sm:$0xf]
      %v303 = vld [vmem:[%s259 + $0x74] sm:$0xf]
      %v304 = vld [vmem:[%s259 + $0x78] sm:$0xf]
      %v305 = vld [vmem:[%s259 + $0x7c] sm:$0xf]
      %v306 = vld [vmem:[%s2] sm:$0x1]
      %v307 = vld [vmem:[%s3] sm:$0x1]
      %v308 = vunpack.c.l.bf16 %v274
      %v309 = vunpack.c.l.bf16 %v275
      %v310 = vunpack.c.l.bf16 %v276
      %v311 = vunpack.c.l.bf16 %v277
      %v312 = vunpack.c.l.bf16 %v278
      %v313 = vunpack.c.l.bf16 %v279
      %v314 = vunpack.c.l.bf16 %v280
      %v315 = vunpack.c.l.bf16 %v281
      %v316 = vunpack.c.l.bf16 %v282
      %v317 = vunpack.c.l.bf16 %v283
      %v318 = vunpack.c.l.bf16 %v284
      %v319 = vunpack.c.l.bf16 %v285
      %v320 = vunpack.c.l.bf16 %v286
      %v321 = vunpack.c.l.bf16 %v287
      %v322 = vunpack.c.l.bf16 %v288
      %v323 = vunpack.c.l.bf16 %v289
      %v324 = vunpack.c.l.bf16 %v290
      %v325 = vunpack.c.l.bf16 %v291
      %v326 = vunpack.c.l.bf16 %v292
      %v327 = vunpack.c.l.bf16 %v293
      %v328 = vunpack.c.l.bf16 %v294
      %v329 = vunpack.c.l.bf16 %v295
      %v330 = vunpack.c.l.bf16 %v296
      %v331 = vunpack.c.l.bf16 %v297
      %v332 = vunpack.c.l.bf16 %v298
      %v333 = vunpack.c.l.bf16 %v299
      %v334 = vunpack.c.l.bf16 %v300
      %v335 = vunpack.c.l.bf16 %v301
      %v336 = vunpack.c.l.bf16 %v302
      %v337 = vunpack.c.l.bf16 %v303
      %v338 = vunpack.c.l.bf16 %v304
      %v339 = vunpack.c.l.bf16 %v305
      %v341 = vlaneseq
      %v342 = vshrl.u32 %v341, 7
      %v343 = vsub.s32 0, %v342
      %v344 = vrot.slane %v306, %v343
      %v346 = vmul.f32 %v308, %v344
      %v347 = vmul.f32 %v309, %v344
      %v348 = vmul.f32 %v310, %v344
      %v349 = vmul.f32 %v311, %v344
      %v350 = vmul.f32 %v312, %v344
      %v351 = vmul.f32 %v313, %v344
      %v352 = vmul.f32 %v314, %v344
      %v353 = vmul.f32 %v315, %v344
      %v354 = vmul.f32 %v316, %v344
      %v355 = vmul.f32 %v317, %v344
      %v356 = vmul.f32 %v318, %v344
      %v357 = vmul.f32 %v319, %v344
      %v358 = vmul.f32 %v320, %v344
      %v359 = vmul.f32 %v321, %v344
      %v360 = vmul.f32 %v322, %v344
      %v361 = vmul.f32 %v323, %v344
      %v362 = vmul.f32 %v324, %v344
      %v363 = vmul.f32 %v325, %v344
      %v364 = vmul.f32 %v326, %v344
      %v365 = vmul.f32 %v327, %v344
      %v366 = vmul.f32 %v328, %v344
      %v367 = vmul.f32 %v329, %v344
      %v368 = vmul.f32 %v330, %v344
      %v369 = vmul.f32 %v331, %v344
      %v370 = vmul.f32 %v332, %v344
      %v371 = vmul.f32 %v333, %v344
      %v372 = vmul.f32 %v334, %v344
      %v373 = vmul.f32 %v335, %v344
      %v374 = vmul.f32 %v336, %v344
      %v375 = vmul.f32 %v337, %v344
      %v376 = vmul.f32 %v338, %v344
      %v377 = vmul.f32 %v339, %v344
      %v379 = vlaneseq
      %v380 = vshrl.u32 %v379, 7
      %v381 = vsub.s32 0, %v380
      %v382 = vrot.slane %v307, %v381
      %v384 = vadd.f32 %v346, %v382
      %v385 = vadd.f32 %v347, %v382
      %v386 = vadd.f32 %v348, %v382
      %v387 = vadd.f32 %v349, %v382
      %v388 = vadd.f32 %v350, %v382
      %v389 = vadd.f32 %v351, %v382
      %v390 = vadd.f32 %v352, %v382
      %v391 = vadd.f32 %v353, %v382
      %v392 = vadd.f32 %v354, %v382
      %v393 = vadd.f32 %v355, %v382
      %v394 = vadd.f32 %v356, %v382
      %v395 = vadd.f32 %v357, %v382
      %v396 = vadd.f32 %v358, %v382
      %v397 = vadd.f32 %v359, %v382
      %v398 = vadd.f32 %v360, %v382
      %v399 = vadd.f32 %v361, %v382
      %v400 = vadd.f32 %v362, %v382
      %v401 = vadd.f32 %v363, %v382
      %v402 = vadd.f32 %v364, %v382
      %v403 = vadd.f32 %v365, %v382
      %v404 = vadd.f32 %v366, %v382
      %v405 = vadd.f32 %v367, %v382
      %v406 = vadd.f32 %v368, %v382
      %v407 = vadd.f32 %v369, %v382
      %v408 = vadd.f32 %v370, %v382
      %v409 = vadd.f32 %v371, %v382
      %v410 = vadd.f32 %v372, %v382
      %v411 = vadd.f32 %v373, %v382
      %v412 = vadd.f32 %v374, %v382
      %v413 = vadd.f32 %v375, %v382
      %v414 = vadd.f32 %v376, %v382
      %v415 = vadd.f32 %v377, %v382
      %v416 = vmax.f32 %v384, 0.0
      %v417 = vmax.f32 %v385, 0.0
      %v418 = vmax.f32 %v386, 0.0
      %v419 = vmax.f32 %v387, 0.0
      %v420 = vmax.f32 %v388, 0.0
      %v421 = vmax.f32 %v389, 0.0
      %v422 = vmax.f32 %v390, 0.0
      %v423 = vmax.f32 %v391, 0.0
      %v424 = vmax.f32 %v392, 0.0
      %v425 = vmax.f32 %v393, 0.0
      %v426 = vmax.f32 %v394, 0.0
      %v427 = vmax.f32 %v395, 0.0
      %v428 = vmax.f32 %v396, 0.0
      %v429 = vmax.f32 %v397, 0.0
      %v430 = vmax.f32 %v398, 0.0
      %v431 = vmax.f32 %v399, 0.0
      %v432 = vmax.f32 %v400, 0.0
      %v433 = vmax.f32 %v401, 0.0
      %v434 = vmax.f32 %v402, 0.0
      %v435 = vmax.f32 %v403, 0.0
      %v436 = vmax.f32 %v404, 0.0
      %v437 = vmax.f32 %v405, 0.0
      %v438 = vmax.f32 %v406, 0.0
      %v439 = vmax.f32 %v407, 0.0
      %v440 = vmax.f32 %v408, 0.0
      %v441 = vmax.f32 %v409, 0.0
      %v442 = vmax.f32 %v410, 0.0
      %v443 = vmax.f32 %v411, 0.0
      %v444 = vmax.f32 %v412, 0.0
      %v445 = vmax.f32 %v413, 0.0
      %v446 = vmax.f32 %v414, 0.0
      %v447 = vmax.f32 %v415, 0.0
      %v448 = vpack.c.bf16 %v417, %v416
      %v449 = vpack.c.bf16 %v419, %v418
      %v450 = vpack.c.bf16 %v421, %v420
      %v451 = vpack.c.bf16 %v423, %v422
      %v452 = vpack.c.bf16 %v425, %v424
      %v453 = vpack.c.bf16 %v427, %v426
      %v454 = vpack.c.bf16 %v429, %v428
      %v455 = vpack.c.bf16 %v431, %v430
      %v456 = vpack.c.bf16 %v433, %v432
      %v457 = vpack.c.bf16 %v435, %v434
      %v458 = vpack.c.bf16 %v437, %v436
      %v459 = vpack.c.bf16 %v439, %v438
      %v460 = vpack.c.bf16 %v441, %v440
      %v461 = vpack.c.bf16 %v443, %v442
      %v462 = vpack.c.bf16 %v445, %v444
      %v463 = vpack.c.bf16 %v447, %v446
      %464 = vst [vmem:[#allocation2] sm:$0xf] 0
      %465 = vst [vmem:[#allocation2 + $0x4] sm:$0xf] 0
      %466 = vst [vmem:[#allocation2 + $0x8] sm:$0x1] 0
      %s467 = scalar_lea.vmem [#allocation2], 204
      %468 = vst [vmem:[%s467] sm:$0xf] 0
      %469 = vst [vmem:[%s467 + $0x4] sm:$0xf] 0
      %470 = vst [vmem:[%s467 + $0x8] sm:$0x1] 0
      %s471 = scalar_lea.vmem [#allocation2], 12
      %vm472 = vcmask 1040384
      %vm473 = vsmask.f32 256
      %vm474 = vmand %vm472, %vm473
      %v475 = vld [vmem:[%s471] sm:$0x1]
      %v476 = vsel %vm474, 0, %v475
      %477 = vst [vmem:[%s471] sm:$0x1] %v476
      %v478 = vld [vmem:[%s471 + $0xc] sm:$0x1]
      %v479 = vsel %vm474, 0, %v478
      %480 = vst [vmem:[%s471 + $0xc] sm:$0x1] %v479
      %v481 = vld [vmem:[%s471 + $0x18] sm:$0x1]
      %v482 = vsel %vm474, 0, %v481
      %483 = vst [vmem:[%s471 + $0x18] sm:$0x1] %v482
      %v484 = vld [vmem:[%s471 + $0x24] sm:$0x1]
      %v485 = vsel %vm474, 0, %v484
      %486 = vst [vmem:[%s471 + $0x24] sm:$0x1] %v485
      %v487 = vld [vmem:[%s471 + $0x30] sm:$0x1]
      %v488 = vsel %vm474, 0, %v487
      %489 = vst [vmem:[%s471 + $0x30] sm:$0x1] %v488
      %v490 = vld [vmem:[%s471 + $0x3c] sm:$0x1]
      %v491 = vsel %vm474, 0, %v490
      %492 = vst [vmem:[%s471 + $0x3c] sm:$0x1] %v491
      %v493 = vld [vmem:[%s471 + $0x48] sm:$0x1]
      %v494 = vsel %vm474, 0, %v493
      %495 = vst [vmem:[%s471 + $0x48] sm:$0x1] %v494
      %v496 = vld [vmem:[%s471 + $0x54] sm:$0x1]
      %v497 = vsel %vm474, 0, %v496
      %498 = vst [vmem:[%s471 + $0x54] sm:$0x1] %v497
      %v499 = vld [vmem:[%s471 + $0x60] sm:$0x1]
      %v500 = vsel %vm474, 0, %v499
      %501 = vst [vmem:[%s471 + $0x60] sm:$0x1] %v500
      %v502 = vld [vmem:[%s471 + $0x6c] sm:$0x1]
      %v503 = vsel %vm474, 0, %v502
      %504 = vst [vmem:[%s471 + $0x6c] sm:$0x1] %v503
      %v505 = vld [vmem:[%s471 + $0x78] sm:$0x1]
      %v506 = vsel %vm474, 0, %v505
      %507 = vst [vmem:[%s471 + $0x78] sm:$0x1] %v506
      %v508 = vld [vmem:[%s471 + $0x84] sm:$0x1]
      %v509 = vsel %vm474, 0, %v508
      %510 = vst [vmem:[%s471 + $0x84] sm:$0x1] %v509
      %v511 = vld [vmem:[%s471 + $0x90] sm:$0x1]
      %v512 = vsel %vm474, 0, %v511
      %513 = vst [vmem:[%s471 + $0x90] sm:$0x1] %v512
      %v514 = vld [vmem:[%s471 + $0x9c] sm:$0x1]
      %v515 = vsel %vm474, 0, %v514
      %516 = vst [vmem:[%s471 + $0x9c] sm:$0x1] %v515
      %v517 = vld [vmem:[%s471 + $0xa8] sm:$0x1]
      %v518 = vsel %vm474, 0, %v517
      %519 = vst [vmem:[%s471 + $0xa8] sm:$0x1] %v518
      %v520 = vld [vmem:[%s471 + $0xb4] sm:$0x1]
      %v521 = vsel %vm474, 0, %v520
      %522 = vst [vmem:[%s471 + $0xb4] sm:$0x1] %v521
      %vm523 = vsmask.f32 7938
      %vm524 = vmand %vm472, %vm523
      %v525 = vld [vmem:[%s471 + $0x8] sm:$0x1]
      %v526 = vsel %vm524, 0, %v525
      %527 = vst [vmem:[%s471 + $0x8] sm:$0x1] %v526
      %v528 = vld [vmem:[%s471 + $0x14] sm:$0x1]
      %v529 = vsel %vm524, 0, %v528
      %530 = vst [vmem:[%s471 + $0x14] sm:$0x1] %v529
      %v531 = vld [vmem:[%s471 + $0x20] sm:$0x1]
      %v532 = vsel %vm524, 0, %v531
      %533 = vst [vmem:[%s471 + $0x20] sm:$0x1] %v532
      %v534 = vld [vmem:[%s471 + $0x2c] sm:$0x1]
      %v535 = vsel %vm524, 0, %v534
      %536 = vst [vmem:[%s471 + $0x2c] sm:$0x1] %v535
      %v537 = vld [vmem:[%s471 + $0x38] sm:$0x1]
      %v538 = vsel %vm524, 0, %v537
      %539 = vst [vmem:[%s471 + $0x38] sm:$0x1] %v538
      %v540 = vld [vmem:[%s471 + $0x44] sm:$0x1]
      %v541 = vsel %vm524, 0, %v540
      %542 = vst [vmem:[%s471 + $0x44] sm:$0x1] %v541
      %v543 = vld [vmem:[%s471 + $0x50] sm:$0x1]
      %v544 = vsel %vm524, 0, %v543
      %545 = vst [vmem:[%s471 + $0x50] sm:$0x1] %v544
      %v546 = vld [vmem:[%s471 + $0x5c] sm:$0x1]
      %v547 = vsel %vm524, 0, %v546
      %548 = vst [vmem:[%s471 + $0x5c] sm:$0x1] %v547
      %v549 = vld [vmem:[%s471 + $0x68] sm:$0x1]
      %v550 = vsel %vm524, 0, %v549
      %551 = vst [vmem:[%s471 + $0x68] sm:$0x1] %v550
      %v552 = vld [vmem:[%s471 + $0x74] sm:$0x1]
      %v553 = vsel %vm524, 0, %v552
      %554 = vst [vmem:[%s471 + $0x74] sm:$0x1] %v553
      %v555 = vld [vmem:[%s471 + $0x80] sm:$0x1]
      %v556 = vsel %vm524, 0, %v555
      %557 = vst [vmem:[%s471 + $0x80] sm:$0x1] %v556
      %v558 = vld [vmem:[%s471 + $0x8c] sm:$0x1]
      %v559 = vsel %vm524, 0, %v558
      %560 = vst [vmem:[%s471 + $0x8c] sm:$0x1] %v559
      %v561 = vld [vmem:[%s471 + $0x98] sm:$0x1]
      %v562 = vsel %vm524, 0, %v561
      %563 = vst [vmem:[%s471 + $0x98] sm:$0x1] %v562
      %v564 = vld [vmem:[%s471 + $0xa4] sm:$0x1]
      %v565 = vsel %vm524, 0, %v564
      %566 = vst [vmem:[%s471 + $0xa4] sm:$0x1] %v565
      %v567 = vld [vmem:[%s471 + $0xb0] sm:$0x1]
      %v568 = vsel %vm524, 0, %v567
      %569 = vst [vmem:[%s471 + $0xb0] sm:$0x1] %v568
      %v570 = vld [vmem:[%s471 + $0xbc] sm:$0x1]
      %v571 = vsel %vm524, 0, %v570
      %572 = vst [vmem:[%s471 + $0xbc] sm:$0x1] %v571
      %v589 = vunpack.c.l.b16 %v448
      %v590 = vunpack.c.h.b16 %v448
      %v591 = vunpack.c.l.b16 %v449
      %v592 = vunpack.c.h.b16 %v449
      %v593 = vunpack.c.l.b16 %v450
      %v594 = vunpack.c.h.b16 %v450
      %v595 = vunpack.c.l.b16 %v451
      %v596 = vunpack.c.h.b16 %v451
      %v597 = vunpack.c.l.b16 %v452
      %v598 = vunpack.c.h.b16 %v452
      %v599 = vunpack.c.l.b16 %v453
      %v600 = vunpack.c.h.b16 %v453
      %v601 = vunpack.c.l.b16 %v454
      %v602 = vunpack.c.h.b16 %v454
      %v603 = vunpack.c.l.b16 %v455
      %v604 = vunpack.c.h.b16 %v455
      %v605 = vunpack.c.l.b16 %v456
      %v606 = vunpack.c.h.b16 %v456
      %v607 = vunpack.c.l.b16 %v457
      %v608 = vunpack.c.h.b16 %v457
      %v609 = vunpack.c.l.b16 %v458
      %v610 = vunpack.c.h.b16 %v458
      %v611 = vunpack.c.l.b16 %v459
      %v612 = vunpack.c.h.b16 %v459
      %v613 = vunpack.c.l.b16 %v460
      %v614 = vunpack.c.h.b16 %v460
      %v615 = vunpack.c.l.b16 %v461
      %v616 = vunpack.c.h.b16 %v461
      %v617 = vunpack.c.l.b16 %v462
      %v618 = vunpack.c.h.b16 %v462
      %v619 = vunpack.c.l.b16 %v463
      %v620 = vunpack.c.h.b16 %v463
      %v621 = vpack.c.b16 %v589, %v589
      %v622 = vpack.c.b16 %v590, %v590
      %v623 = vpack.c.b16 %v591, %v591
      %v624 = vpack.c.b16 %v592, %v592
      %v625 = vpack.c.b16 %v593, %v593
      %v626 = vpack.c.b16 %v594, %v594
      %v627 = vpack.c.b16 %v595, %v595
      %v628 = vpack.c.b16 %v596, %v596
      %v629 = vpack.c.b16 %v597, %v597
      %v630 = vpack.c.b16 %v598, %v598
      %v631 = vpack.c.b16 %v599, %v599
      %v632 = vpack.c.b16 %v600, %v600
      %v633 = vpack.c.b16 %v601, %v601
      %v634 = vpack.c.b16 %v602, %v602
      %v635 = vpack.c.b16 %v603, %v603
      %v636 = vpack.c.b16 %v604, %v604
      %v637 = vpack.c.b16 %v605, %v605
      %v638 = vpack.c.b16 %v606, %v606
      %v639 = vpack.c.b16 %v607, %v607
      %v640 = vpack.c.b16 %v608, %v608
      %v641 = vpack.c.b16 %v609, %v609
      %v642 = vpack.c.b16 %v610, %v610
      %v643 = vpack.c.b16 %v611, %v611
      %v644 = vpack.c.b16 %v612, %v612
      %v645 = vpack.c.b16 %v613, %v613
      %v646 = vpack.c.b16 %v614, %v614
      %v647 = vpack.c.b16 %v615, %v615
      %v648 = vpack.c.b16 %v616, %v616
      %v649 = vpack.c.b16 %v617, %v617
      %v650 = vpack.c.b16 %v618, %v618
      %v651 = vpack.c.b16 %v619, %v619
      %v652 = vpack.c.b16 %v620, %v620
      %vm653 = vsmask.f32 4368
      %vm654 = vmor %vm473, %vm653
      %v656 = vshrl.u32 %v621, 16
      %v658 = vrot.slane %v656, 7
      %v659 = vshll.u32 %v621, 16
      %v661 = vor.u32 %v658, %v659
      %v662 = vrot.slane %v658, 4
      %v664 = vshrl.u32 %v622, 16
      %v666 = vrot.slane %v664, 7
      %v667 = vshll.u32 %v622, 16
      %v669 = vor.u32 %v666, %v667
      %v670 = vsel %vm654, %v662, %v669
      %v671 = vrot.slane %v666, 4
      %v673 = vshrl.u32 %v623, 16
      %v675 = vrot.slane %v673, 7
      %v676 = vshll.u32 %v623, 16
      %v678 = vor.u32 %v675, %v676
      %v679 = vrot.slane %v675, 4
      %v681 = vshrl.u32 %v624, 16
      %v683 = vrot.slane %v681, 7
      %v684 = vshll.u32 %v624, 16
      %v686 = vor.u32 %v683, %v684
      %v687 = vsel %vm654, %v679, %v686
      %v688 = vrot.slane %v683, 4
      %v690 = vshrl.u32 %v625, 16
      %v692 = vrot.slane %v690, 7
      %v693 = vshll.u32 %v625, 16
      %v695 = vor.u32 %v692, %v693
      %v696 = vrot.slane %v692, 4
      %v698 = vshrl.u32 %v626, 16
      %v700 = vrot.slane %v698, 7
      %v701 = vshll.u32 %v626, 16
      %v703 = vor.u32 %v700, %v701
      %v704 = vsel %vm654, %v696, %v703
      %v705 = vrot.slane %v700, 4
      %v707 = vshrl.u32 %v627, 16
      %v709 = vrot.slane %v707, 7
      %v710 = vshll.u32 %v627, 16
      %v712 = vor.u32 %v709, %v710
      %v713 = vrot.slane %v709, 4
      %v715 = vshrl.u32 %v628, 16
      %v717 = vrot.slane %v715, 7
      %v718 = vshll.u32 %v628, 16
      %v720 = vor.u32 %v717, %v718
      %v721 = vsel %vm654, %v713, %v720
      %v722 = vrot.slane %v717, 4
      %v724 = vshrl.u32 %v629, 16
      %v726 = vrot.slane %v724, 7
      %v727 = vshll.u32 %v629, 16
      %v729 = vor.u32 %v726, %v727
      %v730 = vrot.slane %v726, 4
      %v732 = vshrl.u32 %v630, 16
      %v734 = vrot.slane %v732, 7
      %v735 = vshll.u32 %v630, 16
      %v737 = vor.u32 %v734, %v735
      %v738 = vsel %vm654, %v730, %v737
      %v739 = vrot.slane %v734, 4
      %v741 = vshrl.u32 %v631, 16
      %v743 = vrot.slane %v741, 7
      %v744 = vshll.u32 %v631, 16
      %v746 = vor.u32 %v743, %v744
      %v747 = vrot.slane %v743, 4
      %v749 = vshrl.u32 %v632, 16
      %v751 = vrot.slane %v749, 7
      %v752 = vshll.u32 %v632, 16
      %v754 = vor.u32 %v751, %v752
      %v755 = vsel %vm654, %v747, %v754
      %v756 = vrot.slane %v751, 4
      %v758 = vshrl.u32 %v633, 16
      %v760 = vrot.slane %v758, 7
      %v761 = vshll.u32 %v633, 16
      %v763 = vor.u32 %v760, %v761
      %v764 = vrot.slane %v760, 4
      %v766 = vshrl.u32 %v634, 16
      %v768 = vrot.slane %v766, 7
      %v769 = vshll.u32 %v634, 16
      %v771 = vor.u32 %v768, %v769
      %v772 = vsel %vm654, %v764, %v771
      %v773 = vrot.slane %v768, 4
      %v775 = vshrl.u32 %v635, 16
      %v777 = vrot.slane %v775, 7
      %v778 = vshll.u32 %v635, 16
      %v780 = vor.u32 %v777, %v778
      %v781 = vrot.slane %v777, 4
      %v783 = vshrl.u32 %v636, 16
      %v785 = vrot.slane %v783, 7
      %v786 = vshll.u32 %v636, 16
      %v788 = vor.u32 %v785, %v786
      %v789 = vsel %vm654, %v781, %v788
      %v790 = vrot.slane %v785, 4
      %v792 = vshrl.u32 %v637, 16
      %v794 = vrot.slane %v792, 7
      %v795 = vshll.u32 %v637, 16
      %v797 = vor.u32 %v794, %v795
      %v798 = vrot.slane %v794, 4
      %v800 = vshrl.u32 %v638, 16
      %v802 = vrot.slane %v800, 7
      %v803 = vshll.u32 %v638, 16
      %v805 = vor.u32 %v802, %v803
      %v806 = vsel %vm654, %v798, %v805
      %v807 = vrot.slane %v802, 4
      %v809 = vshrl.u32 %v639, 16
      %v811 = vrot.slane %v809, 7
      %v812 = vshll.u32 %v639, 16
      %v814 = vor.u32 %v811, %v812
      %v815 = vrot.slane %v811, 4
      %v817 = vshrl.u32 %v640, 16
      %v819 = vrot.slane %v817, 7
      %v820 = vshll.u32 %v640, 16
      %v822 = vor.u32 %v819, %v820
      %v823 = vsel %vm654, %v815, %v822
      %v824 = vrot.slane %v819, 4
      %v826 = vshrl.u32 %v641, 16
      %v828 = vrot.slane %v826, 7
      %v829 = vshll.u32 %v641, 16
      %v831 = vor.u32 %v828, %v829
      %v832 = vrot.slane %v828, 4
      %v834 = vshrl.u32 %v642, 16
      %v836 = vrot.slane %v834, 7
      %v837 = vshll.u32 %v642, 16
      %v839 = vor.u32 %v836, %v837
      %v840 = vsel %vm654, %v832, %v839
      %v841 = vrot.slane %v836, 4
      %v843 = vshrl.u32 %v643, 16
      %v845 = vrot.slane %v843, 7
      %v846 = vshll.u32 %v643, 16
      %v848 = vor.u32 %v845, %v846
      %v849 = vrot.slane %v845, 4
      %v851 = vshrl.u32 %v644, 16
      %v853 = vrot.slane %v851, 7
      %v854 = vshll.u32 %v644, 16
      %v856 = vor.u32 %v853, %v854
      %v857 = vsel %vm654, %v849, %v856
      %v858 = vrot.slane %v853, 4
      %v860 = vshrl.u32 %v645, 16
      %v862 = vrot.slane %v860, 7
      %v863 = vshll.u32 %v645, 16
      %v865 = vor.u32 %v862, %v863
      %v866 = vrot.slane %v862, 4
      %v868 = vshrl.u32 %v646, 16
      %v870 = vrot.slane %v868, 7
      %v871 = vshll.u32 %v646, 16
      %v873 = vor.u32 %v870, %v871
      %v874 = vsel %vm654, %v866, %v873
      %v875 = vrot.slane %v870, 4
      %v877 = vshrl.u32 %v647, 16
      %v879 = vrot.slane %v877, 7
      %v880 = vshll.u32 %v647, 16
      %v882 = vor.u32 %v879, %v880
      %v883 = vrot.slane %v879, 4
      %v885 = vshrl.u32 %v648, 16
      %v887 = vrot.slane %v885, 7
      %v888 = vshll.u32 %v648, 16
      %v890 = vor.u32 %v887, %v888
      %v891 = vsel %vm654, %v883, %v890
      %v892 = vrot.slane %v887, 4
      %v894 = vshrl.u32 %v649, 16
      %v896 = vrot.slane %v894, 7
      %v897 = vshll.u32 %v649, 16
      %v899 = vor.u32 %v896, %v897
      %v900 = vrot.slane %v896, 4
      %v902 = vshrl.u32 %v650, 16
      %v904 = vrot.slane %v902, 7
      %v905 = vshll.u32 %v650, 16
      %v907 = vor.u32 %v904, %v905
      %v908 = vsel %vm654, %v900, %v907
      %v909 = vrot.slane %v904, 4
      %v911 = vshrl.u32 %v651, 16
      %v913 = vrot.slane %v911, 7
      %v914 = vshll.u32 %v651, 16
      %v916 = vor.u32 %v913, %v914
      %v917 = vrot.slane %v913, 4
      %v919 = vshrl.u32 %v652, 16
      %v921 = vrot.slane %v919, 7
      %v922 = vshll.u32 %v652, 16
      %v924 = vor.u32 %v921, %v922
      %v925 = vsel %vm654, %v917, %v924
      %v926 = vrot.slane %v921, 4
      %vm975 = vcmask 1043456
      %vm976 = vmand %vm975, %vm523
      %v977 = vld [vmem:[%s471] sm:$0xf]
      %v978 = vsel %vm976, %v661, %v977
      %979 = vst [vmem:[%s471] sm:$0xf] %v978
      %980 = vst [vmem:[%s471 + $0x4] sm:$0xf] %v670
      %v981 = vld [vmem:[%s471 + $0x8] sm:$0x1]
      %v982 = vsel %vm474, %v671, %v981
      %983 = vst [vmem:[%s471 + $0x8] sm:$0x1] %v982
      %v984 = vld [vmem:[%s471 + $0xc] sm:$0xf]
      %v985 = vsel %vm976, %v678, %v984
      %986 = vst [vmem:[%s471 + $0xc] sm:$0xf] %v985
      %987 = vst [vmem:[%s471 + $0x10] sm:$0xf] %v687
      %v988 = vld [vmem:[%s471 + $0x14] sm:$0x1]
      %v989 = vsel %vm474, %v688, %v988
      %990 = vst [vmem:[%s471 + $0x14] sm:$0x1] %v989
      %v991 = vld [vmem:[%s471 + $0x18] sm:$0xf]
      %v992 = vsel %vm976, %v695, %v991
      %993 = vst [vmem:[%s471 + $0x18] sm:$0xf] %v992
      %994 = vst [vmem:[%s471 + $0x1c] sm:$0xf] %v704
      %v995 = vld [vmem:[%s471 + $0x20] sm:$0x1]
      %v996 = vsel %vm474, %v705, %v995
      %997 = vst [vmem:[%s471 + $0x20] sm:$0x1] %v996
      %v998 = vld [vmem:[%s471 + $0x24] sm:$0xf]
      %v999 = vsel %vm976, %v712, %v998
      %1000 = vst [vmem:[%s471 + $0x24] sm:$0xf] %v999
      %1001 = vst [vmem:[%s471 + $0x28] sm:$0xf] %v721
      %v1002 = vld [vmem:[%s471 + $0x2c] sm:$0x1]
      %v1003 = vsel %vm474, %v722, %v1002
      %1004 = vst [vmem:[%s471 + $0x2c] sm:$0x1] %v1003
      %v1005 = vld [vmem:[%s471 + $0x30] sm:$0xf]
      %v1006 = vsel %vm976, %v729, %v1005
      %1007 = vst [vmem:[%s471 + $0x30] sm:$0xf] %v1006
      %1008 = vst [vmem:[%s471 + $0x34] sm:$0xf] %v738
      %v1009 = vld [vmem:[%s471 + $0x38] sm:$0x1]
      %v1010 = vsel %vm474, %v739, %v1009
      %1011 = vst [vmem:[%s471 + $0x38] sm:$0x1] %v1010
      %v1012 = vld [vmem:[%s471 + $0x3c] sm:$0xf]
      %v1013 = vsel %vm976, %v746, %v1012
      %1014 = vst [vmem:[%s471 + $0x3c] sm:$0xf] %v1013
      %1015 = vst [vmem:[%s471 + $0x40] sm:$0xf] %v755
      %v1016 = vld [vmem:[%s471 + $0x44] sm:$0x1]
      %v1017 = vsel %vm474, %v756, %v1016
      %1018 = vst [vmem:[%s471 + $0x44] sm:$0x1] %v1017
      %v1019 = vld [vmem:[%s471 + $0x48] sm:$0xf]
      %v1020 = vsel %vm976, %v763, %v1019
      %1021 = vst [vmem:[%s471 + $0x48] sm:$0xf] %v1020
      %1022 = vst [vmem:[%s471 + $0x4c] sm:$0xf] %v772
      %v1023 = vld [vmem:[%s471 + $0x50] sm:$0x1]
      %v1024 = vsel %vm474, %v773, %v1023
      %1025 = vst [vmem:[%s471 + $0x50] sm:$0x1] %v1024
      %v1026 = vld [vmem:[%s471 + $0x54] sm:$0xf]
      %v1027 = vsel %vm976, %v780, %v1026
      %1028 = vst [vmem:[%s471 + $0x54] sm:$0xf] %v1027
      %1029 = vst [vmem:[%s471 + $0x58] sm:$0xf] %v789
      %v1030 = vld [vmem:[%s471 + $0x5c] sm:$0x1]
      %v1031 = vsel %vm474, %v790, %v1030
      %1032 = vst [vmem:[%s471 + $0x5c] sm:$0x1] %v1031
      %v1033 = vld [vmem:[%s471 + $0x60] sm:$0xf]
      %v1034 = vsel %vm976, %v797, %v1033
      %1035 = vst [vmem:[%s471 + $0x60] sm:$0xf] %v1034
      %1036 = vst [vmem:[%s471 + $0x64] sm:$0xf] %v806
      %v1037 = vld [vmem:[%s471 + $0x68] sm:$0x1]
      %v1038 = vsel %vm474, %v807, %v1037
      %1039 = vst [vmem:[%s471 + $0x68] sm:$0x1] %v1038
      %v1040 = vld [vmem:[%s471 + $0x6c] sm:$0xf]
      %v1041 = vsel %vm976, %v814, %v1040
      %1042 = vst [vmem:[%s471 + $0x6c] sm:$0xf] %v1041
      %1043 = vst [vmem:[%s471 + $0x70] sm:$0xf] %v823
      %v1044 = vld [vmem:[%s471 + $0x74] sm:$0x1]
      %v1045 = vsel %vm474, %v824, %v1044
      %1046 = vst [vmem:[%s471 + $0x74] sm:$0x1] %v1045
      %v1047 = vld [vmem:[%s471 + $0x78] sm:$0xf]
      %v1048 = vsel %vm976, %v831, %v1047
      %1049 = vst [vmem:[%s471 + $0x78] sm:$0xf] %v1048
      %1050 = vst [vmem:[%s471 + $0x7c] sm:$0xf] %v840
      %v1051 = vld [vmem:[%s471 + $0x80] sm:$0x1]
      %v1052 = vsel %vm474, %v841, %v1051
      %1053 = vst [vmem:[%s471 + $0x80] sm:$0x1] %v1052
      %v1054 = vld [vmem:[%s471 + $0x84] sm:$0xf]
      %v1055 = vsel %vm976, %v848, %v1054
      %1056 = vst [vmem:[%s471 + $0x84] sm:$0xf] %v1055
      %1057 = vst [vmem:[%s471 + $0x88] sm:$0xf] %v857
      %v1058 = vld [vmem:[%s471 + $0x8c] sm:$0x1]
      %v1059 = vsel %vm474, %v858, %v1058
      %1060 = vst [vmem:[%s471 + $0x8c] sm:$0x1] %v1059
      %v1061 = vld [vmem:[%s471 + $0x90] sm:$0xf]
      %v1062 = vsel %vm976, %v865, %v1061
      %1063 = vst [vmem:[%s471 + $0x90] sm:$0xf] %v1062
      %1064 = vst [vmem:[%s471 + $0x94] sm:$0xf] %v874
      %v1065 = vld [vmem:[%s471 + $0x98] sm:$0x1]
      %v1066 = vsel %vm474, %v875, %v1065
      %1067 = vst [vmem:[%s471 + $0x98] sm:$0x1] %v1066
      %v1068 = vld [vmem:[%s471 + $0x9c] sm:$0xf]
      %v1069 = vsel %vm976, %v882, %v1068
      %1070 = vst [vmem:[%s471 + $0x9c] sm:$0xf] %v1069
      %1071 = vst [vmem:[%s471 + $0xa0] sm:$0xf] %v891
      %v1072 = vld [vmem:[%s471 + $0xa4] sm:$0x1]
      %v1073 = vsel %vm474, %v892, %v1072
      %1074 = vst [vmem:[%s471 + $0xa4] sm:$0x1] %v1073
      %v1075 = vld [vmem:[%s471 + $0xa8] sm:$0xf]
      %v1076 = vsel %vm976, %v899, %v1075
      %1077 = vst [vmem:[%s471 + $0xa8] sm:$0xf] %v1076
      %1078 = vst [vmem:[%s471 + $0xac] sm:$0xf] %v908
      %v1079 = vld [vmem:[%s471 + $0xb0] sm:$0x1]
      %v1080 = vsel %vm474, %v909, %v1079
      %1081 = vst [vmem:[%s471 + $0xb0] sm:$0x1] %v1080
      %v1082 = vld [vmem:[%s471 + $0xb4] sm:$0xf]
      %v1083 = vsel %vm976, %v916, %v1082
      %1084 = vst [vmem:[%s471 + $0xb4] sm:$0xf] %v1083
      %1085 = vst [vmem:[%s471 + $0xb8] sm:$0xf] %v925
      %v1086 = vld [vmem:[%s471 + $0xbc] sm:$0x1]
      %v1087 = vsel %vm474, %v926, %v1086
      %1088 = vst [vmem:[%s471 + $0xbc] sm:$0x1] %v1087
      %v1089 = vld [vmem:[#allocation2] sm:$0xf]
      %v1090 = vld [vmem:[#allocation2 + $0x4] sm:$0xf]
      %v1091 = vld [vmem:[#allocation2 + $0xc] sm:$0xf]
      %v1092 = vld [vmem:[#allocation2 + $0x10] sm:$0xf]
      %v1093 = vld [vmem:[#allocation2 + $0x18] sm:$0xf]
      %v1094 = vld [vmem:[#allocation2 + $0x1c] sm:$0xf]
      %v1095 = vld [vmem:[#allocation2 + $0x24] sm:$0xf]
      %v1096 = vld [vmem:[#allocation2 + $0x28] sm:$0xf]
      %v1097 = vld [vmem:[#allocation2 + $0x30] sm:$0xf]
      %v1098 = vld [vmem:[#allocation2 + $0x34] sm:$0xf]
      %v1099 = vld [vmem:[#allocation2 + $0x3c] sm:$0xf]
      %v1100 = vld [vmem:[#allocation2 + $0x40] sm:$0xf]
      %v1101 = vld [vmem:[#allocation2 + $0x48] sm:$0xf]
      %v1102 = vld [vmem:[#allocation2 + $0x4c] sm:$0xf]
      %v1103 = vld [vmem:[#allocation2 + $0x54] sm:$0xf]
      %v1104 = vld [vmem:[#allocation2 + $0x58] sm:$0xf]
      %v1105 = vld [vmem:[#allocation2 + $0x60] sm:$0xf]
      %v1106 = vld [vmem:[#allocation2 + $0x64] sm:$0xf]
      %v1107 = vld [vmem:[#allocation2 + $0x6c] sm:$0xf]
      %v1108 = vld [vmem:[#allocation2 + $0x70] sm:$0xf]
      %v1109 = vld [vmem:[#allocation2 + $0x78] sm:$0xf]
      %v1110 = vld [vmem:[#allocation2 + $0x7c] sm:$0xf]
      %v1111 = vld [vmem:[#allocation2 + $0x84] sm:$0xf]
      %v1112 = vld [vmem:[#allocation2 + $0x88] sm:$0xf]
      %v1113 = vld [vmem:[#allocation2 + $0x90] sm:$0xf]
      %v1114 = vld [vmem:[#allocation2 + $0x94] sm:$0xf]
      %v1115 = vld [vmem:[#allocation2 + $0x9c] sm:$0xf]
      %v1116 = vld [vmem:[#allocation2 + $0xa0] sm:$0xf]
      %v1117 = vld [vmem:[#allocation2 + $0xa8] sm:$0xf]
      %v1118 = vld [vmem:[#allocation2 + $0xac] sm:$0xf]
      %v1119 = vld [vmem:[#allocation2 + $0xb4] sm:$0xf]
      %v1120 = vld [vmem:[#allocation2 + $0xb8] sm:$0xf]
      %v1121 = vld [vmem:[%s1] sm:$0xf]
      %v1122 = vld [vmem:[%s1 + $0x4] sm:$0xf]
      %v1123 = vld [vmem:[%s1 + $0x8] sm:$0xf]
      %v1124 = vld [vmem:[%s1 + $0xc] sm:$0xf]
      %v1125 = vld [vmem:[%s1 + $0x10] sm:$0xf]
      %v1126 = vld [vmem:[%s1 + $0x14] sm:$0xf]
      %v1127 = vld [vmem:[%s1 + $0x18] sm:$0xf]
      %v1128 = vld [vmem:[%s1 + $0x1c] sm:$0xf]
      %v1129 = vld [vmem:[%s1 + $0x20] sm:$0xf]
      %v1130 = vld [vmem:[%s1 + $0x24] sm:$0xf]
      %v1131 = vld [vmem:[%s1 + $0x28] sm:$0xf]
      %v1132 = vld [vmem:[%s1 + $0x2c] sm:$0xf]
      %v1133 = vld [vmem:[%s1 + $0x30] sm:$0xf]
      %v1134 = vld [vmem:[%s1 + $0x34] sm:$0xf]
      %v1135 = vld [vmem:[%s1 + $0x38] sm:$0xf]
      %v1136 = vld [vmem:[%s1 + $0x3c] sm:$0xf]
      %v1137 = vld [vmem:[#allocation2 + $0x8] sm:$0x1]
      %v1138 = vld [vmem:[#allocation2 + $0x14] sm:$0x1]
      %v1139 = vld [vmem:[#allocation2 + $0x20] sm:$0x1]
      %v1140 = vld [vmem:[#allocation2 + $0x2c] sm:$0x1]
      %v1141 = vld [vmem:[#allocation2 + $0x38] sm:$0x1]
      %v1142 = vld [vmem:[#allocation2 + $0x44] sm:$0x1]
      %v1143 = vld [vmem:[#allocation2 + $0x50] sm:$0x1]
      %v1144 = vld [vmem:[#allocation2 + $0x5c] sm:$0x1]
      %v1145 = vld [vmem:[#allocation2 + $0x68] sm:$0x1]
      %v1146 = vld [vmem:[#allocation2 + $0x74] sm:$0x1]
      %v1147 = vld [vmem:[#allocation2 + $0x80] sm:$0x1]
      %v1148 = vld [vmem:[#allocation2 + $0x8c] sm:$0x1]
      %v1149 = vld [vmem:[#allocation2 + $0x98] sm:$0x1]
      %v1150 = vld [vmem:[#allocation2 + $0xa4] sm:$0x1]
      %v1151 = vld [vmem:[#allocation2 + $0xb0] sm:$0x1]
      %v1152 = vld [vmem:[#allocation2 + $0xbc] sm:$0x1]
      %vm1153 = vsmask.f32 3328
      %vm1154 = vsmask.f32 7440
      %vm1155 = vmor %vm1153, %vm1154
      %v1157 = vshrl.u32 %v1089, 16
      %v1159 = vrot.slane %v1157, 4
      %v1160 = vshll.u32 %v1089, 16
      %v1162 = vrot.slane %v1160, 5
      %v1163 = vor.u32 %v1159, %v1162
      %v1164 = vrot.slane %v1163, 4
      %v1166 = vshll.u32 %v1090, 16
      %v1168 = vrot.slane %v1166, 5
      %v1169 = vsel %vm1155, %v1164, %v1168
      %v1170 = vshrl.u32 %v1090, 16
      %v1172 = vrot.slane %v1170, 4
      %v1173 = vor.u32 %v1172, %v1168
      %v1174 = vrot.slane %v1173, 4
      %v1176 = vshll.u32 %v1137, 16
      %v1178 = vrot.slane %v1176, 5
      %v1179 = vsel %vm1155, %v1174, %v1178
      %v1181 = vshrl.u32 %v1091, 16
      %v1183 = vrot.slane %v1181, 4
      %v1184 = vshll.u32 %v1091, 16
      %v1186 = vrot.slane %v1184, 5
      %v1187 = vor.u32 %v1183, %v1186
      %v1188 = vrot.slane %v1187, 4
      %v1190 = vshll.u32 %v1092, 16
      %v1192 = vrot.slane %v1190, 5
      %v1193 = vsel %vm1155, %v1188, %v1192
      %v1194 = vshrl.u32 %v1092, 16
      %v1196 = vrot.slane %v1194, 4
      %v1197 = vor.u32 %v1196, %v1192
      %v1198 = vrot.slane %v1197, 4
      %v1200 = vshll.u32 %v1138, 16
      %v1202 = vrot.slane %v1200, 5
      %v1203 = vsel %vm1155, %v1198, %v1202
      %v1205 = vshrl.u32 %v1093, 16
      %v1207 = vrot.slane %v1205, 4
      %v1208 = vshll.u32 %v1093, 16
      %v1210 = vrot.slane %v1208, 5
      %v1211 = vor.u32 %v1207, %v1210
      %v1212 = vrot.slane %v1211, 4
      %v1214 = vshll.u32 %v1094, 16
      %v1216 = vrot.slane %v1214, 5
      %v1217 = vsel %vm1155, %v1212, %v1216
      %v1218 = vshrl.u32 %v1094, 16
      %v1220 = vrot.slane %v1218, 4
      %v1221 = vor.u32 %v1220, %v1216
      %v1222 = vrot.slane %v1221, 4
      %v1224 = vshll.u32 %v1139, 16
      %v1226 = vrot.slane %v1224, 5
      %v1227 = vsel %vm1155, %v1222, %v1226
      %v1229 = vshrl.u32 %v1095, 16
      %v1231 = vrot.slane %v1229, 4
      %v1232 = vshll.u32 %v1095, 16
      %v1234 = vrot.slane %v1232, 5
      %v1235 = vor.u32 %v1231, %v1234
      %v1236 = vrot.slane %v1235, 4
      %v1238 = vshll.u32 %v1096, 16
      %v1240 = vrot.slane %v1238, 5
      %v1241 = vsel %vm1155, %v1236, %v1240
      %v1242 = vshrl.u32 %v1096, 16
      %v1244 = vrot.slane %v1242, 4
      %v1245 = vor.u32 %v1244, %v1240
      %v1246 = vrot.slane %v1245, 4
      %v1248 = vshll.u32 %v1140, 16
      %v1250 = vrot.slane %v1248, 5
      %v1251 = vsel %vm1155, %v1246, %v1250
      %v1253 = vshrl.u32 %v1097, 16
      %v1255 = vrot.slane %v1253, 4
      %v1256 = vshll.u32 %v1097, 16
      %v1258 = vrot.slane %v1256, 5
      %v1259 = vor.u32 %v1255, %v1258
      %v1260 = vrot.slane %v1259, 4
      %v1262 = vshll.u32 %v1098, 16
      %v1264 = vrot.slane %v1262, 5
      %v1265 = vsel %vm1155, %v1260, %v1264
      %v1266 = vshrl.u32 %v1098, 16
      %v1268 = vrot.slane %v1266, 4
      %v1269 = vor.u32 %v1268, %v1264
      %v1270 = vrot.slane %v1269, 4
      %v1272 = vshll.u32 %v1141, 16
      %v1274 = vrot.slane %v1272, 5
      %v1275 = vsel %vm1155, %v1270, %v1274
      %v1277 = vshrl.u32 %v1099, 16
      %v1279 = vrot.slane %v1277, 4
      %v1280 = vshll.u32 %v1099, 16
      %v1282 = vrot.slane %v1280, 5
      %v1283 = vor.u32 %v1279, %v1282
      %v1284 = vrot.slane %v1283, 4
      %v1286 = vshll.u32 %v1100, 16
      %v1288 = vrot.slane %v1286, 5
      %v1289 = vsel %vm1155, %v1284, %v1288
      %v1290 = vshrl.u32 %v1100, 16
      %v1292 = vrot.slane %v1290, 4
      %v1293 = vor.u32 %v1292, %v1288
      %v1294 = vrot.slane %v1293, 4
      %v1296 = vshll.u32 %v1142, 16
      %v1298 = vrot.slane %v1296, 5
      %v1299 = vsel %vm1155, %v1294, %v1298
      %v1301 = vshrl.u32 %v1101, 16
      %v1303 = vrot.slane %v1301, 4
      %v1304 = vshll.u32 %v1101, 16
      %v1306 = vrot.slane %v1304, 5
      %v1307 = vor.u32 %v1303, %v1306
      %v1308 = vrot.slane %v1307, 4
      %v1310 = vshll.u32 %v1102, 16
      %v1312 = vrot.slane %v1310, 5
      %v1313 = vsel %vm1155, %v1308, %v1312
      %v1314 = vshrl.u32 %v1102, 16
      %v1316 = vrot.slane %v1314, 4
      %v1317 = vor.u32 %v1316, %v1312
      %v1318 = vrot.slane %v1317, 4
      %v1320 = vshll.u32 %v1143, 16
      %v1322 = vrot.slane %v1320, 5
      %v1323 = vsel %vm1155, %v1318, %v1322
      %v1325 = vshrl.u32 %v1103, 16
      %v1327 = vrot.slane %v1325, 4
      %v1328 = vshll.u32 %v1103, 16
      %v1330 = vrot.slane %v1328, 5
      %v1331 = vor.u32 %v1327, %v1330
      %v1332 = vrot.slane %v1331, 4
      %v1334 = vshll.u32 %v1104, 16
      %v1336 = vrot.slane %v1334, 5
      %v1337 = vsel %vm1155, %v1332, %v1336
      %v1338 = vshrl.u32 %v1104, 16
      %v1340 = vrot.slane %v1338, 4
      %v1341 = vor.u32 %v1340, %v1336
      %v1342 = vrot.slane %v1341, 4
      %v1344 = vshll.u32 %v1144, 16
      %v1346 = vrot.slane %v1344, 5
      %v1347 = vsel %vm1155, %v1342, %v1346
      %v1349 = vshrl.u32 %v1105, 16
      %v1351 = vrot.slane %v1349, 4
      %v1352 = vshll.u32 %v1105, 16
      %v1354 = vrot.slane %v1352, 5
      %v1355 = vor.u32 %v1351, %v1354
      %v1356 = vrot.slane %v1355, 4
      %v1358 = vshll.u32 %v1106, 16
      %v1360 = vrot.slane %v1358, 5
      %v1361 = vsel %vm1155, %v1356, %v1360
      %v1362 = vshrl.u32 %v1106, 16
      %v1364 = vrot.slane %v1362, 4
      %v1365 = vor.u32 %v1364, %v1360
      %v1366 = vrot.slane %v1365, 4
      %v1368 = vshll.u32 %v1145, 16
      %v1370 = vrot.slane %v1368, 5
      %v1371 = vsel %vm1155, %v1366, %v1370
      %v1373 = vshrl.u32 %v1107, 16
      %v1375 = vrot.slane %v1373, 4
      %v1376 = vshll.u32 %v1107, 16
      %v1378 = vrot.slane %v1376, 5
      %v1379 = vor.u32 %v1375, %v1378
      %v1380 = vrot.slane %v1379, 4
      %v1382 = vshll.u32 %v1108, 16
      %v1384 = vrot.slane %v1382, 5
      %v1385 = vsel %vm1155, %v1380, %v1384
      %v1386 = vshrl.u32 %v1108, 16
      %v1388 = vrot.slane %v1386, 4
      %v1389 = vor.u32 %v1388, %v1384
      %v1390 = vrot.slane %v1389, 4
      %v1392 = vshll.u32 %v1146, 16
      %v1394 = vrot.slane %v1392, 5
      %v1395 = vsel %vm1155, %v1390, %v1394
      %v1397 = vshrl.u32 %v1109, 16
      %v1399 = vrot.slane %v1397, 4
      %v1400 = vshll.u32 %v1109, 16
      %v1402 = vrot.slane %v1400, 5
      %v1403 = vor.u32 %v1399, %v1402
      %v1404 = vrot.slane %v1403, 4
      %v1406 = vshll.u32 %v1110, 16
      %v1408 = vrot.slane %v1406, 5
      %v1409 = vsel %vm1155, %v1404, %v1408
      %v1410 = vshrl.u32 %v1110, 16
      %v1412 = vrot.slane %v1410, 4
      %v1413 = vor.u32 %v1412, %v1408
      %v1414 = vrot.slane %v1413, 4
      %v1416 = vshll.u32 %v1147, 16
      %v1418 = vrot.slane %v1416, 5
      %v1419 = vsel %vm1155, %v1414, %v1418
      %v1421 = vshrl.u32 %v1111, 16
      %v1423 = vrot.slane %v1421, 4
      %v1424 = vshll.u32 %v1111, 16
      %v1426 = vrot.slane %v1424, 5
      %v1427 = vor.u32 %v1423, %v1426
      %v1428 = vrot.slane %v1427, 4
      %v1430 = vshll.u32 %v1112, 16
      %v1432 = vrot.slane %v1430, 5
      %v1433 = vsel %vm1155, %v1428, %v1432
      %v1434 = vshrl.u32 %v1112, 16
      %v1436 = vrot.slane %v1434, 4
      %v1437 = vor.u32 %v1436, %v1432
      %v1438 = vrot.slane %v1437, 4
      %v1440 = vshll.u32 %v1148, 16
      %v1442 = vrot.slane %v1440, 5
      %v1443 = vsel %vm1155, %v1438, %v1442
      %v1445 = vshrl.u32 %v1113, 16
      %v1447 = vrot.slane %v1445, 4
      %v1448 = vshll.u32 %v1113, 16
      %v1450 = vrot.slane %v1448, 5
      %v1451 = vor.u32 %v1447, %v1450
      %v1452 = vrot.slane %v1451, 4
      %v1454 = vshll.u32 %v1114, 16
      %v1456 = vrot.slane %v1454, 5
      %v1457 = vsel %vm1155, %v1452, %v1456
      %v1458 = vshrl.u32 %v1114, 16
      %v1460 = vrot.slane %v1458, 4
      %v1461 = vor.u32 %v1460, %v1456
      %v1462 = vrot.slane %v1461, 4
      %v1464 = vshll.u32 %v1149, 16
      %v1466 = vrot.slane %v1464, 5
      %v1467 = vsel %vm1155, %v1462, %v1466
      %v1469 = vshrl.u32 %v1115, 16
      %v1471 = vrot.slane %v1469, 4
      %v1472 = vshll.u32 %v1115, 16
      %v1474 = vrot.slane %v1472, 5
      %v1475 = vor.u32 %v1471, %v1474
      %v1476 = vrot.slane %v1475, 4
      %v1478 = vshll.u32 %v1116, 16
      %v1480 = vrot.slane %v1478, 5
      %v1481 = vsel %vm1155, %v1476, %v1480
      %v1482 = vshrl.u32 %v1116, 16
      %v1484 = vrot.slane %v1482, 4
      %v1485 = vor.u32 %v1484, %v1480
      %v1486 = vrot.slane %v1485, 4
      %v1488 = vshll.u32 %v1150, 16
      %v1490 = vrot.slane %v1488, 5
      %v1491 = vsel %vm1155, %v1486, %v1490
      %v1493 = vshrl.u32 %v1117, 16
      %v1495 = vrot.slane %v1493, 4
      %v1496 = vshll.u32 %v1117, 16
      %v1498 = vrot.slane %v1496, 5
      %v1499 = vor.u32 %v1495, %v1498
      %v1500 = vrot.slane %v1499, 4
      %v1502 = vshll.u32 %v1118, 16
      %v1504 = vrot.slane %v1502, 5
      %v1505 = vsel %vm1155, %v1500, %v1504
      %v1506 = vshrl.u32 %v1118, 16
      %v1508 = vrot.slane %v1506, 4
      %v1509 = vor.u32 %v1508, %v1504
      %v1510 = vrot.slane %v1509, 4
      %v1512 = vshll.u32 %v1151, 16
      %v1514 = vrot.slane %v1512, 5
      %v1515 = vsel %vm1155, %v1510, %v1514
      %v1517 = vshrl.u32 %v1119, 16
      %v1519 = vrot.slane %v1517, 4
      %v1520 = vshll.u32 %v1119, 16
      %v1522 = vrot.slane %v1520, 5
      %v1523 = vor.u32 %v1519, %v1522
      %v1524 = vrot.slane %v1523, 4
      %v1526 = vshll.u32 %v1120, 16
      %v1528 = vrot.slane %v1526, 5
      %v1529 = vsel %vm1155, %v1524, %v1528
      %v1530 = vshrl.u32 %v1120, 16
      %v1532 = vrot.slane %v1530, 4
      %v1533 = vor.u32 %v1532, %v1528
      %v1534 = vrot.slane %v1533, 4
      %v1536 = vshll.u32 %v1152, 16
      %v1538 = vrot.slane %v1536, 5
      %v1539 = vsel %vm1155, %v1534, %v1538
      %s1540 = scalar_lea.vmem %s1, 64
      %v1541 = vld [vmem:[%s1540] sm:$0xf]
      %v1542 = vld [vmem:[%s1540 + $0x4] sm:$0xf]
      %v1543 = vld [vmem:[%s1540 + $0x8] sm:$0xf]
      %v1544 = vld [vmem:[%s1540 + $0xc] sm:$0xf]
      %v1545 = vld [vmem:[%s1540 + $0x10] sm:$0xf]
      %v1546 = vld [vmem:[%s1540 + $0x14] sm:$0xf]
      %v1547 = vld [vmem:[%s1540 + $0x18] sm:$0xf]
      %v1548 = vld [vmem:[%s1540 + $0x1c] sm:$0xf]
      %v1549 = vld [vmem:[%s1540 + $0x20] sm:$0xf]
      %v1550 = vld [vmem:[%s1540 + $0x24] sm:$0xf]
      %v1551 = vld [vmem:[%s1540 + $0x28] sm:$0xf]
      %v1552 = vld [vmem:[%s1540 + $0x2c] sm:$0xf]
      %v1553 = vld [vmem:[%s1540 + $0x30] sm:$0xf]
      %v1554 = vld [vmem:[%s1540 + $0x34] sm:$0xf]
      %v1555 = vld [vmem:[%s1540 + $0x38] sm:$0xf]
      %v1556 = vld [vmem:[%s1540 + $0x3c] sm:$0xf]
      %v1557 = vunpack.c.l.b16 %v1169
      %v1558 = vunpack.c.l.b16 %v1179
      %v1559 = vunpack.c.l.b16 %v1193
      %v1560 = vunpack.c.l.b16 %v1203
      %v1561 = vunpack.c.l.b16 %v1217
      %v1562 = vunpack.c.l.b16 %v1227
      %v1563 = vunpack.c.l.b16 %v1241
      %v1564 = vunpack.c.l.b16 %v1251
      %v1565 = vunpack.c.l.b16 %v1265
      %v1566 = vunpack.c.l.b16 %v1275
      %v1567 = vunpack.c.l.b16 %v1289
      %v1568 = vunpack.c.l.b16 %v1299
      %v1569 = vunpack.c.l.b16 %v1313
      %v1570 = vunpack.c.l.b16 %v1323
      %v1571 = vunpack.c.l.b16 %v1337
      %v1572 = vunpack.c.l.b16 %v1347
      %v1573 = vunpack.c.l.b16 %v1361
      %v1574 = vunpack.c.l.b16 %v1371
      %v1575 = vunpack.c.l.b16 %v1385
      %v1576 = vunpack.c.l.b16 %v1395
      %v1577 = vunpack.c.l.b16 %v1409
      %v1578 = vunpack.c.l.b16 %v1419
      %v1579 = vunpack.c.l.b16 %v1433
      %v1580 = vunpack.c.l.b16 %v1443
      %v1581 = vunpack.c.l.b16 %v1457
      %v1582 = vunpack.c.l.b16 %v1467
      %v1583 = vunpack.c.l.b16 %v1481
      %v1584 = vunpack.c.l.b16 %v1491
      %v1585 = vunpack.c.l.b16 %v1505
      %v1586 = vunpack.c.l.b16 %v1515
      %v1587 = vunpack.c.l.b16 %v1529
      %v1588 = vunpack.c.l.b16 %v1539
      %v1589 = vpack.c.b16 %v1558, %v1557
      %v1590 = vpack.c.b16 %v1560, %v1559
      %v1591 = vpack.c.b16 %v1562, %v1561
      %v1592 = vpack.c.b16 %v1564, %v1563
      %v1593 = vpack.c.b16 %v1566, %v1565
      %v1594 = vpack.c.b16 %v1568, %v1567
      %v1595 = vpack.c.b16 %v1570, %v1569
      %v1596 = vpack.c.b16 %v1572, %v1571
      %v1597 = vpack.c.b16 %v1574, %v1573
      %v1598 = vpack.c.b16 %v1576, %v1575
      %v1599 = vpack.c.b16 %v1578, %v1577
      %v1600 = vpack.c.b16 %v1580, %v1579
      %v1601 = vpack.c.b16 %v1582, %v1581
      %v1602 = vpack.c.b16 %v1584, %v1583
      %v1603 = vpack.c.b16 %v1586, %v1585
      %v1604 = vpack.c.b16 %v1588, %v1587
      %v1637 = vunpack.c.l.b16 %v1541
      %v1638 = vunpack.c.l.b16 %v1542
      %v1639 = vunpack.c.l.b16 %v1543
      %v1640 = vunpack.c.l.b16 %v1544
      %v1641 = vunpack.c.l.b16 %v1545
      %v1642 = vunpack.c.l.b16 %v1546
      %v1643 = vunpack.c.l.b16 %v1547
      %v1644 = vunpack.c.l.b16 %v1548
      %v1645 = vunpack.c.l.b16 %v1549
      %v1646 = vunpack.c.l.b16 %v1550
      %v1647 = vunpack.c.l.b16 %v1551
      %v1648 = vunpack.c.l.b16 %v1552
      %v1649 = vunpack.c.l.b16 %v1553
      %v1650 = vunpack.c.l.b16 %v1554
      %v1651 = vunpack.c.l.b16 %v1555
      %v1652 = vunpack.c.l.b16 %v1556
      %v1653 = vpack.c.b16 %v1638, %v1637
      %v1654 = vpack.c.b16 %v1640, %v1639
      %v1655 = vpack.c.b16 %v1642, %v1641
      %v1656 = vpack.c.b16 %v1644, %v1643
      %v1657 = vpack.c.b16 %v1646, %v1645
      %v1658 = vpack.c.b16 %v1648, %v1647
      %v1659 = vpack.c.b16 %v1650, %v1649
      %v1660 = vpack.c.b16 %v1652, %v1651
      %1669 = vmatprep.subr.bf16.mxu0 0
      %1670 = vmatpush1.bf16.msra.mxu0 %v1660
      %1671 = vmatprep.subr.bf16.mxu0 0
      %1672 = vmatpush1.bf16.msra.mxu0 %v1659
      %1673 = vmatprep.subr.bf16.mxu0 0
      %1674 = vmatpush1.bf16.msra.mxu0 %v1658
      %1675 = vmatprep.subr.bf16.mxu0 0
      %1676 = vmatpush1.bf16.msra.mxu0 %v1657
      %1677 = vmatprep.subr.bf16.mxu0 0
      %1678 = vmatpush1.bf16.msra.mxu0 %v1656
      %1679 = vmatprep.subr.bf16.mxu0 0
      %1680 = vmatpush1.bf16.msra.mxu0 %v1655
      %1681 = vmatprep.subr.bf16.mxu0 0
      %1682 = vmatpush1.bf16.msra.mxu0 %v1654
      %1683 = vmatprep.subr.bf16.mxu0 0
      %1684 = vmatpush1.bf16.msra.mxu0 %v1653
      %1685 = vmatprep.subr.bf16.mxu0 0
      %1686 = vmatpush2.bf16.msra.mxu0 0
      %1687 = vmatprep.subr.bf16.mxu0 0
      %1688 = vmatpush2.bf16.msra.mxu0 0
      %1689 = vmatprep.subr.bf16.mxu0 0
      %1690 = vmatpush2.bf16.msra.mxu0 0
      %1691 = vmatprep.subr.bf16.mxu0 0
      %1692 = vmatpush2.bf16.msra.mxu0 0
      %1693 = vmatprep.subr.bf16.mxu0 0
      %1694 = vmatpush2.bf16.msra.mxu0 0
      %1695 = vmatprep.subr.bf16.mxu0 0
      %1696 = vmatpush2.bf16.msra.mxu0 0
      %1697 = vmatprep.subr.bf16.mxu0 0
      %1698 = vmatpush2.bf16.msra.mxu0 0
      %1699 = vmatprep.subr.bf16.mxu0 0
      %1700 = vmatpush2.bf16.msra.mxu0 0
      %1701 = vmatprep.mubr.bf16.mxu0 0
      %1702 = vmatmul.mubr.bf16.gmra.mxu0 %v1589
      %v1703 = vpop.f32.mrf.mxu0
      %v1704 = vadd.f32 0.0, %v1703
      %v1705 = vpop.f32.mrf.mxu0
      %v1706 = vpop.f32.mrf.mxu0
      %v1707 = vadd.f32 0.0, %v1706
      %v1708 = vpop.f32.mrf.mxu0
      %1709 = vmatprep.mubr.bf16.mxu0 0
      %1710 = vmatmul.mubr.bf16.gmra.mxu0 %v1590
      %v1711 = vpop.f32.mrf.mxu0
      %v1712 = vadd.f32 0.0, %v1711
      %v1713 = vpop.f32.mrf.mxu0
      %v1714 = vpop.f32.mrf.mxu0
      %v1715 = vadd.f32 0.0, %v1714
      %v1716 = vpop.f32.mrf.mxu0
      %1717 = vmatprep.mubr.bf16.mxu0 0
      %1718 = vmatmul.mubr.bf16.gmra.mxu0 %v1591
      %v1719 = vpop.f32.mrf.mxu0
      %v1720 = vadd.f32 0.0, %v1719
      %v1721 = vpop.f32.mrf.mxu0
      %v1722 = vpop.f32.mrf.mxu0
      %v1723 = vadd.f32 0.0, %v1722
      %v1724 = vpop.f32.mrf.mxu0
      %1725 = vmatprep.mubr.bf16.mxu0 0
      %1726 = vmatmul.mubr.bf16.gmra.mxu0 %v1592
      %v1727 = vpop.f32.mrf.mxu0
      %v1728 = vadd.f32 0.0, %v1727
      %v1729 = vpop.f32.mrf.mxu0
      %v1730 = vpop.f32.mrf.mxu0
      %v1731 = vadd.f32 0.0, %v1730
      %v1732 = vpop.f32.mrf.mxu0
      %1733 = vmatprep.mubr.bf16.mxu0 0
      %1734 = vmatmul.mubr.bf16.gmra.mxu0 %v1593
      %v1735 = vpop.f32.mrf.mxu0
      %v1736 = vadd.f32 0.0, %v1735
      %v1737 = vpop.f32.mrf.mxu0
      %v1738 = vpop.f32.mrf.mxu0
      %v1739 = vadd.f32 0.0, %v1738
      %v1740 = vpop.f32.mrf.mxu0
      %1741 = vmatprep.mubr.bf16.mxu0 0
      %1742 = vmatmul.mubr.bf16.gmra.mxu0 %v1594
      %v1743 = vpop.f32.mrf.mxu0
      %v1744 = vadd.f32 0.0, %v1743
      %v1745 = vpop.f32.mrf.mxu0
      %v1746 = vpop.f32.mrf.mxu0
      %v1747 = vadd.f32 0.0, %v1746
      %v1748 = vpop.f32.mrf.mxu0
      %1749 = vmatprep.mubr.bf16.mxu0 0
      %1750 = vmatmul.mubr.bf16.gmra.mxu0 %v1595
      %v1751 = vpop.f32.mrf.mxu0
      %v1752 = vadd.f32 0.0, %v1751
      %v1753 = vpop.f32.mrf.mxu0
      %v1754 = vpop.f32.mrf.mxu0
      %v1755 = vadd.f32 0.0, %v1754
      %v1756 = vpop.f32.mrf.mxu0
      %1757 = vmatprep.mubr.bf16.mxu0 0
      %1758 = vmatmul.mubr.bf16.gmra.mxu0 %v1596
      %v1759 = vpop.f32.mrf.mxu0
      %v1760 = vadd.f32 0.0, %v1759
      %v1761 = vpop.f32.mrf.mxu0
      %v1762 = vpop.f32.mrf.mxu0
      %v1763 = vadd.f32 0.0, %v1762
      %v1764 = vpop.f32.mrf.mxu0
      %1765 = vmatprep.mubr.bf16.mxu0 0
      %1766 = vmatmul.mubr.bf16.gmra.mxu0 %v1597
      %v1767 = vpop.f32.mrf.mxu0
      %v1768 = vadd.f32 0.0, %v1767
      %v1769 = vpop.f32.mrf.mxu0
      %v1770 = vpop.f32.mrf.mxu0
      %v1771 = vadd.f32 0.0, %v1770
      %v1772 = vpop.f32.mrf.mxu0
      %1773 = vmatprep.mubr.bf16.mxu0 0
      %1774 = vmatmul.mubr.bf16.gmra.mxu0 %v1598
      %v1775 = vpop.f32.mrf.mxu0
      %v1776 = vadd.f32 0.0, %v1775
      %v1777 = vpop.f32.mrf.mxu0
      %v1778 = vpop.f32.mrf.mxu0
      %v1779 = vadd.f32 0.0, %v1778
      %v1780 = vpop.f32.mrf.mxu0
      %1781 = vmatprep.mubr.bf16.mxu0 0
      %1782 = vmatmul.mubr.bf16.gmra.mxu0 %v1599
      %v1783 = vpop.f32.mrf.mxu0
      %v1784 = vadd.f32 0.0, %v1783
      %v1785 = vpop.f32.mrf.mxu0
      %v1786 = vpop.f32.mrf.mxu0
      %v1787 = vadd.f32 0.0, %v1786
      %v1788 = vpop.f32.mrf.mxu0
      %1789 = vmatprep.mubr.bf16.mxu0 0
      %1790 = vmatmul.mubr.bf16.gmra.mxu0 %v1600
      %v1791 = vpop.f32.mrf.mxu0
      %v1792 = vadd.f32 0.0, %v1791
      %v1793 = vpop.f32.mrf.mxu0
      %v1794 = vpop.f32.mrf.mxu0
      %v1795 = vadd.f32 0.0, %v1794
      %v1796 = vpop.f32.mrf.mxu0
      %1797 = vmatprep.mubr.bf16.mxu0 0
      %1798 = vmatmul.mubr.bf16.gmra.mxu0 %v1601
      %v1799 = vpop.f32.mrf.mxu0
      %v1800 = vadd.f32 0.0, %v1799
      %v1801 = vpop.f32.mrf.mxu0
      %v1802 = vpop.f32.mrf.mxu0
      %v1803 = vadd.f32 0.0, %v1802
      %v1804 = vpop.f32.mrf.mxu0
      %1805 = vmatprep.mubr.bf16.mxu0 0
      %1806 = vmatmul.mubr.bf16.gmra.mxu0 %v1602
      %v1807 = vpop.f32.mrf.mxu0
      %v1808 = vadd.f32 0.0, %v1807
      %v1809 = vpop.f32.mrf.mxu0
      %v1810 = vpop.f32.mrf.mxu0
      %v1811 = vadd.f32 0.0, %v1810
      %v1812 = vpop.f32.mrf.mxu0
      %1813 = vmatprep.mubr.bf16.mxu0 0
      %1814 = vmatmul.mubr.bf16.gmra.mxu0 %v1603
      %v1815 = vpop.f32.mrf.mxu0
      %v1816 = vadd.f32 0.0, %v1815
      %v1817 = vpop.f32.mrf.mxu0
      %v1818 = vpop.f32.mrf.mxu0
      %v1819 = vadd.f32 0.0, %v1818
      %v1820 = vpop.f32.mrf.mxu0
      %1821 = vmatprep.mubr.bf16.mxu0 0
      %1822 = vmatmul.mubr.bf16.gmra.mxu0 %v1604
      %v1823 = vpop.f32.mrf.mxu0
      %v1824 = vadd.f32 0.0, %v1823
      %v1825 = vpop.f32.mrf.mxu0
      %v1826 = vpop.f32.mrf.mxu0
      %v1827 = vadd.f32 0.0, %v1826
      %v1828 = vpop.f32.mrf.mxu0
      %1829 = vdwg.mxu0
      %v1862 = vunpack.c.l.b16 %v1089
      %v1863 = vunpack.c.l.b16 %v1090
      %v1864 = vunpack.c.l.b16 %v1091
      %v1865 = vunpack.c.l.b16 %v1092
      %v1866 = vunpack.c.l.b16 %v1093
      %v1867 = vunpack.c.l.b16 %v1094
      %v1868 = vunpack.c.l.b16 %v1095
      %v1869 = vunpack.c.l.b16 %v1096
      %v1870 = vunpack.c.l.b16 %v1097
      %v1871 = vunpack.c.l.b16 %v1098
      %v1872 = vunpack.c.l.b16 %v1099
      %v1873 = vunpack.c.l.b16 %v1100
      %v1874 = vunpack.c.l.b16 %v1101
      %v1875 = vunpack.c.l.b16 %v1102
      %v1876 = vunpack.c.l.b16 %v1103
      %v1877 = vunpack.c.l.b16 %v1104
      %v1878 = vunpack.c.l.b16 %v1105
      %v1879 = vunpack.c.l.b16 %v1106
      %v1880 = vunpack.c.l.b16 %v1107
      %v1881 = vunpack.c.l.b16 %v1108
      %v1882 = vunpack.c.l.b16 %v1109
      %v1883 = vunpack.c.l.b16 %v1110
      %v1884 = vunpack.c.l.b16 %v1111
      %v1885 = vunpack.c.l.b16 %v1112
      %v1886 = vunpack.c.l.b16 %v1113
      %v1887 = vunpack.c.l.b16 %v1114
      %v1888 = vunpack.c.l.b16 %v1115
      %v1889 = vunpack.c.l.b16 %v1116
      %v1890 = vunpack.c.l.b16 %v1117
      %v1891 = vunpack.c.l.b16 %v1118
      %v1892 = vunpack.c.l.b16 %v1119
      %v1893 = vunpack.c.l.b16 %v1120
      %v1894 = vpack.c.b16 %v1863, %v1862
      %v1895 = vpack.c.b16 %v1865, %v1864
      %v1896 = vpack.c.b16 %v1867, %v1866
      %v1897 = vpack.c.b16 %v1869, %v1868
      %v1898 = vpack.c.b16 %v1871, %v1870
      %v1899 = vpack.c.b16 %v1873, %v1872
      %v1900 = vpack.c.b16 %v1875, %v1874
      %v1901 = vpack.c.b16 %v1877, %v1876
      %v1902 = vpack.c.b16 %v1879, %v1878
      %v1903 = vpack.c.b16 %v1881, %v1880
      %v1904 = vpack.c.b16 %v1883, %v1882
      %v1905 = vpack.c.b16 %v1885, %v1884
      %v1906 = vpack.c.b16 %v1887, %v1886
      %v1907 = vpack.c.b16 %v1889, %v1888
      %v1908 = vpack.c.b16 %v1891, %v1890
      %v1909 = vpack.c.b16 %v1893, %v1892
      %v1942 = vunpack.c.l.b16 %v1121
      %v1943 = vunpack.c.l.b16 %v1122
      %v1944 = vunpack.c.l.b16 %v1123
      %v1945 = vunpack.c.l.b16 %v1124
      %v1946 = vunpack.c.l.b16 %v1125
      %v1947 = vunpack.c.l.b16 %v1126
      %v1948 = vunpack.c.l.b16 %v1127
      %v1949 = vunpack.c.l.b16 %v1128
      %v1950 = vunpack.c.l.b16 %v1129
      %v1951 = vunpack.c.l.b16 %v1130
      %v1952 = vunpack.c.l.b16 %v1131
      %v1953 = vunpack.c.l.b16 %v1132
      %v1954 = vunpack.c.l.b16 %v1133
      %v1955 = vunpack.c.l.b16 %v1134
      %v1956 = vunpack.c.l.b16 %v1135
      %v1957 = vunpack.c.l.b16 %v1136
      %v1958 = vpack.c.b16 %v1943, %v1942
      %v1959 = vpack.c.b16 %v1945, %v1944
      %v1960 = vpack.c.b16 %v1947, %v1946
      %v1961 = vpack.c.b16 %v1949, %v1948
      %v1962 = vpack.c.b16 %v1951, %v1950
      %v1963 = vpack.c.b16 %v1953, %v1952
      %v1964 = vpack.c.b16 %v1955, %v1954
      %v1965 = vpack.c.b16 %v1957, %v1956
      %1974 = vmatprep.subr.bf16.mxu0 0
      %1975 = vmatpush1.bf16.msra.mxu0 %v1965
      %1976 = vmatprep.subr.bf16.mxu0 0
      %1977 = vmatpush1.bf16.msra.mxu0 %v1964
      %1978 = vmatprep.subr.bf16.mxu0 0
      %1979 = vmatpush1.bf16.msra.mxu0 %v1963
      %1980 = vmatprep.subr.bf16.mxu0 0
      %1981 = vmatpush1.bf16.msra.mxu0 %v1962
      %1982 = vmatprep.subr.bf16.mxu0 0
      %1983 = vmatpush1.bf16.msra.mxu0 %v1961
      %1984 = vmatprep.subr.bf16.mxu0 0
      %1985 = vmatpush1.bf16.msra.mxu0 %v1960
      %1986 = vmatprep.subr.bf16.mxu0 0
      %1987 = vmatpush1.bf16.msra.mxu0 %v1959
      %1988 = vmatprep.subr.bf16.mxu0 0
      %1989 = vmatpush1.bf16.msra.mxu0 %v1958
      %1990 = vmatprep.subr.bf16.mxu0 0
      %1991 = vmatpush2.bf16.msra.mxu0 0
      %1992 = vmatprep.subr.bf16.mxu0 0
      %1993 = vmatpush2.bf16.msra.mxu0 0
      %1994 = vmatprep.subr.bf16.mxu0 0
      %1995 = vmatpush2.bf16.msra.mxu0 0
      %1996 = vmatprep.subr.bf16.mxu0 0
      %1997 = vmatpush2.bf16.msra.mxu0 0
      %1998 = vmatprep.subr.bf16.mxu0 0
      %1999 = vmatpush2.bf16.msra.mxu0 0
      %2000 = vmatprep.subr.bf16.mxu0 0
      %2001 = vmatpush2.bf16.msra.mxu0 0
      %2002 = vmatprep.subr.bf16.mxu0 0
      %2003 = vmatpush2.bf16.msra.mxu0 0
      %2004 = vmatprep.subr.bf16.mxu0 0
      %2005 = vmatpush2.bf16.msra.mxu0 0
      %2006 = vmatprep.mubr.bf16.mxu0 0
      %2007 = vmatmul.mubr.bf16.gmra.mxu0 %v1894
      %v2008 = vpop.f32.mrf.mxu0
      %v2009 = vadd.f32 %v1704, %v2008
      %v2010 = vpop.f32.mrf.mxu0
      %v2011 = vpop.f32.mrf.mxu0
      %v2012 = vadd.f32 %v1707, %v2011
      %v2013 = vpop.f32.mrf.mxu0
      %2014 = vmatprep.mubr.bf16.mxu0 0
      %2015 = vmatmul.mubr.bf16.gmra.mxu0 %v1895
      %v2016 = vpop.f32.mrf.mxu0
      %v2017 = vadd.f32 %v1712, %v2016
      %v2018 = vpop.f32.mrf.mxu0
      %v2019 = vpop.f32.mrf.mxu0
      %v2020 = vadd.f32 %v1715, %v2019
      %v2021 = vpop.f32.mrf.mxu0
      %2022 = vmatprep.mubr.bf16.mxu0 0
      %2023 = vmatmul.mubr.bf16.gmra.mxu0 %v1896
      %v2024 = vpop.f32.mrf.mxu0
      %v2025 = vadd.f32 %v1720, %v2024
      %v2026 = vpop.f32.mrf.mxu0
      %v2027 = vpop.f32.mrf.mxu0
      %v2028 = vadd.f32 %v1723, %v2027
      %v2029 = vpop.f32.mrf.mxu0
      %2030 = vmatprep.mubr.bf16.mxu0 0
      %2031 = vmatmul.mubr.bf16.gmra.mxu0 %v1897
      %v2032 = vpop.f32.mrf.mxu0
      %v2033 = vadd.f32 %v1728, %v2032
      %v2034 = vpop.f32.mrf.mxu0
      %v2035 = vpop.f32.mrf.mxu0
      %v2036 = vadd.f32 %v1731, %v2035
      %v2037 = vpop.f32.mrf.mxu0
      %2038 = vmatprep.mubr.bf16.mxu0 0
      %2039 = vmatmul.mubr.bf16.gmra.mxu0 %v1898
      %v2040 = vpop.f32.mrf.mxu0
      %v2041 = vadd.f32 %v1736, %v2040
      %v2042 = vpop.f32.mrf.mxu0
      %v2043 = vpop.f32.mrf.mxu0
      %v2044 = vadd.f32 %v1739, %v2043
      %v2045 = vpop.f32.mrf.mxu0
      %2046 = vmatprep.mubr.bf16.mxu0 0
      %2047 = vmatmul.mubr.bf16.gmra.mxu0 %v1899
      %v2048 = vpop.f32.mrf.mxu0
      %v2049 = vadd.f32 %v1744, %v2048
      %v2050 = vpop.f32.mrf.mxu0
      %v2051 = vpop.f32.mrf.mxu0
      %v2052 = vadd.f32 %v1747, %v2051
      %v2053 = vpop.f32.mrf.mxu0
      %2054 = vmatprep.mubr.bf16.mxu0 0
      %2055 = vmatmul.mubr.bf16.gmra.mxu0 %v1900
      %v2056 = vpop.f32.mrf.mxu0
      %v2057 = vadd.f32 %v1752, %v2056
      %v2058 = vpop.f32.mrf.mxu0
      %v2059 = vpop.f32.mrf.mxu0
      %v2060 = vadd.f32 %v1755, %v2059
      %v2061 = vpop.f32.mrf.mxu0
      %2062 = vmatprep.mubr.bf16.mxu0 0
      %2063 = vmatmul.mubr.bf16.gmra.mxu0 %v1901
      %v2064 = vpop.f32.mrf.mxu0
      %v2065 = vadd.f32 %v1760, %v2064
      %v2066 = vpop.f32.mrf.mxu0
      %v2067 = vpop.f32.mrf.mxu0
      %v2068 = vadd.f32 %v1763, %v2067
      %v2069 = vpop.f32.mrf.mxu0
      %2070 = vmatprep.mubr.bf16.mxu0 0
      %2071 = vmatmul.mubr.bf16.gmra.mxu0 %v1902
      %v2072 = vpop.f32.mrf.mxu0
      %v2073 = vadd.f32 %v1768, %v2072
      %v2074 = vpop.f32.mrf.mxu0
      %v2075 = vpop.f32.mrf.mxu0
      %v2076 = vadd.f32 %v1771, %v2075
      %v2077 = vpop.f32.mrf.mxu0
      %2078 = vmatprep.mubr.bf16.mxu0 0
      %2079 = vmatmul.mubr.bf16.gmra.mxu0 %v1903
      %v2080 = vpop.f32.mrf.mxu0
      %v2081 = vadd.f32 %v1776, %v2080
      %v2082 = vpop.f32.mrf.mxu0
      %v2083 = vpop.f32.mrf.mxu0
      %v2084 = vadd.f32 %v1779, %v2083
      %v2085 = vpop.f32.mrf.mxu0
      %2086 = vmatprep.mubr.bf16.mxu0 0
      %2087 = vmatmul.mubr.bf16.gmra.mxu0 %v1904
      %v2088 = vpop.f32.mrf.mxu0
      %v2089 = vadd.f32 %v1784, %v2088
      %v2090 = vpop.f32.mrf.mxu0
      %v2091 = vpop.f32.mrf.mxu0
      %v2092 = vadd.f32 %v1787, %v2091
      %v2093 = vpop.f32.mrf.mxu0
      %2094 = vmatprep.mubr.bf16.mxu0 0
      %2095 = vmatmul.mubr.bf16.gmra.mxu0 %v1905
      %v2096 = vpop.f32.mrf.mxu0
      %v2097 = vadd.f32 %v1792, %v2096
      %v2098 = vpop.f32.mrf.mxu0
      %v2099 = vpop.f32.mrf.mxu0
      %v2100 = vadd.f32 %v1795, %v2099
      %v2101 = vpop.f32.mrf.mxu0
      %2102 = vmatprep.mubr.bf16.mxu0 0
      %2103 = vmatmul.mubr.bf16.gmra.mxu0 %v1906
      %v2104 = vpop.f32.mrf.mxu0
      %v2105 = vadd.f32 %v1800, %v2104
      %v2106 = vpop.f32.mrf.mxu0
      %v2107 = vpop.f32.mrf.mxu0
      %v2108 = vadd.f32 %v1803, %v2107
      %v2109 = vpop.f32.mrf.mxu0
      %2110 = vmatprep.mubr.bf16.mxu0 0
      %2111 = vmatmul.mubr.bf16.gmra.mxu0 %v1907
      %v2112 = vpop.f32.mrf.mxu0
      %v2113 = vadd.f32 %v1808, %v2112
      %v2114 = vpop.f32.mrf.mxu0
      %v2115 = vpop.f32.mrf.mxu0
      %v2116 = vadd.f32 %v1811, %v2115
      %v2117 = vpop.f32.mrf.mxu0
      %2118 = vmatprep.mubr.bf16.mxu0 0
      %2119 = vmatmul.mubr.bf16.gmra.mxu0 %v1908
      %v2120 = vpop.f32.mrf.mxu0
      %v2121 = vadd.f32 %v1816, %v2120
      %v2122 = vpop.f32.mrf.mxu0
      %v2123 = vpop.f32.mrf.mxu0
      %v2124 = vadd.f32 %v1819, %v2123
      %v2125 = vpop.f32.mrf.mxu0
      %2126 = vmatprep.mubr.bf16.mxu0 0
      %2127 = vmatmul.mubr.bf16.gmra.mxu0 %v1909
      %v2128 = vpop.f32.mrf.mxu0
      %v2129 = vadd.f32 %v1824, %v2128
      %v2130 = vpop.f32.mrf.mxu0
      %v2131 = vpop.f32.mrf.mxu0
      %v2132 = vadd.f32 %v1827, %v2131
      %v2133 = vpop.f32.mrf.mxu0
      %2134 = vdwg.mxu0
      %v2135 = vld [vmem:[#allocation2] sm:$0xe]
      %v2136 = vld [vmem:[#allocation2 + $0xc] sm:$0xe]
      %v2137 = vld [vmem:[#allocation2 + $0x18] sm:$0xe]
      %v2138 = vld [vmem:[#allocation2 + $0x24] sm:$0xe]
      %v2139 = vld [vmem:[#allocation2 + $0x30] sm:$0xe]
      %v2140 = vld [vmem:[#allocation2 + $0x3c] sm:$0xe]
      %v2141 = vld [vmem:[#allocation2 + $0x48] sm:$0xe]
      %v2142 = vld [vmem:[#allocation2 + $0x54] sm:$0xe]
      %v2143 = vld [vmem:[#allocation2 + $0x60] sm:$0xe]
      %v2144 = vld [vmem:[#allocation2 + $0x6c] sm:$0xe]
      %v2145 = vld [vmem:[#allocation2 + $0x78] sm:$0xe]
      %v2146 = vld [vmem:[#allocation2 + $0x84] sm:$0xe]
      %v2147 = vld [vmem:[#allocation2 + $0x90] sm:$0xe]
      %v2148 = vld [vmem:[#allocation2 + $0x9c] sm:$0xe]
      %v2149 = vld [vmem:[#allocation2 + $0xa8] sm:$0xe]
      %v2150 = vld [vmem:[#allocation2 + $0xb4] sm:$0xe]
      %vm2183 = vcmask 1042432
      %vm2184 = vcmask 1046532
      %vm2185 = vmor %vm2183, %vm2184
      %v2186 = vrot.slane %v2135, 5
      %v2187 = vrot.slane %v2186, 4
      %v2188 = vrot.slane %v1090, 5
      %v2189 = vsel %vm2185, %v2187, %v2188
      %v2190 = vrot.slane %v2188, 4
      %v2191 = vrot.slane %v1137, 5
      %v2192 = vsel %vm2185, %v2190, %v2191
      %v2193 = vrot.slane %v2136, 5
      %v2194 = vrot.slane %v2193, 4
      %v2195 = vrot.slane %v1092, 5
      %v2196 = vsel %vm2185, %v2194, %v2195
      %v2197 = vrot.slane %v2195, 4
      %v2198 = vrot.slane %v1138, 5
      %v2199 = vsel %vm2185, %v2197, %v2198
      %v2200 = vrot.slane %v2137, 5
      %v2201 = vrot.slane %v2200, 4
      %v2202 = vrot.slane %v1094, 5
      %v2203 = vsel %vm2185, %v2201, %v2202
      %v2204 = vrot.slane %v2202, 4
      %v2205 = vrot.slane %v1139, 5
      %v2206 = vsel %vm2185, %v2204, %v2205
      %v2207 = vrot.slane %v2138, 5
      %v2208 = vrot.slane %v2207, 4
      %v2209 = vrot.slane %v1096, 5
      %v2210 = vsel %vm2185, %v2208, %v2209
      %v2211 = vrot.slane %v2209, 4
      %v2212 = vrot.slane %v1140, 5
      %v2213 = vsel %vm2185, %v2211, %v2212
      %v2214 = vrot.slane %v2139, 5
      %v2215 = vrot.slane %v2214, 4
      %v2216 = vrot.slane %v1098, 5
      %v2217 = vsel %vm2185, %v2215, %v2216
      %v2218 = vrot.slane %v2216, 4
      %v2219 = vrot.slane %v1141, 5
      %v2220 = vsel %vm2185, %v2218, %v2219
      %v2221 = vrot.slane %v2140, 5
      %v2222 = vrot.slane %v2221, 4
      %v2223 = vrot.slane %v1100, 5
      %v2224 = vsel %vm2185, %v2222, %v2223
      %v2225 = vrot.slane %v2223, 4
      %v2226 = vrot.slane %v1142, 5
      %v2227 = vsel %vm2185, %v2225, %v2226
      %v2228 = vrot.slane %v2141, 5
      %v2229 = vrot.slane %v2228, 4
      %v2230 = vrot.slane %v1102, 5
      %v2231 = vsel %vm2185, %v2229, %v2230
      %v2232 = vrot.slane %v2230, 4
      %v2233 = vrot.slane %v1143, 5
      %v2234 = vsel %vm2185, %v2232, %v2233
      %v2235 = vrot.slane %v2142, 5
      %v2236 = vrot.slane %v2235, 4
      %v2237 = vrot.slane %v1104, 5
      %v2238 = vsel %vm2185, %v2236, %v2237
      %v2239 = vrot.slane %v2237, 4
      %v2240 = vrot.slane %v1144, 5
      %v2241 = vsel %vm2185, %v2239, %v2240
      %v2242 = vrot.slane %v2143, 5
      %v2243 = vrot.slane %v2242, 4
      %v2244 = vrot.slane %v1106, 5
      %v2245 = vsel %vm2185, %v2243, %v2244
      %v2246 = vrot.slane %v2244, 4
      %v2247 = vrot.slane %v1145, 5
      %v2248 = vsel %vm2185, %v2246, %v2247
      %v2249 = vrot.slane %v2144, 5
      %v2250 = vrot.slane %v2249, 4
      %v2251 = vrot.slane %v1108, 5
      %v2252 = vsel %vm2185, %v2250, %v2251
      %v2253 = vrot.slane %v2251, 4
      %v2254 = vrot.slane %v1146, 5
      %v2255 = vsel %vm2185, %v2253, %v2254
      %v2256 = vrot.slane %v2145, 5
      %v2257 = vrot.slane %v2256, 4
      %v2258 = vrot.slane %v1110, 5
      %v2259 = vsel %vm2185, %v2257, %v2258
      %v2260 = vrot.slane %v2258, 4
      %v2261 = vrot.slane %v1147, 5
      %v2262 = vsel %vm2185, %v2260, %v2261
      %v2263 = vrot.slane %v2146, 5
      %v2264 = vrot.slane %v2263, 4
      %v2265 = vrot.slane %v1112, 5
      %v2266 = vsel %vm2185, %v2264, %v2265
      %v2267 = vrot.slane %v2265, 4
      %v2268 = vrot.slane %v1148, 5
      %v2269 = vsel %vm2185, %v2267, %v2268
      %v2270 = vrot.slane %v2147, 5
      %v2271 = vrot.slane %v2270, 4
      %v2272 = vrot.slane %v1114, 5
      %v2273 = vsel %vm2185, %v2271, %v2272
      %v2274 = vrot.slane %v2272, 4
      %v2275 = vrot.slane %v1149, 5
      %v2276 = vsel %vm2185, %v2274, %v2275
      %v2277 = vrot.slane %v2148, 5
      %v2278 = vrot.slane %v2277, 4
      %v2279 = vrot.slane %v1116, 5
      %v2280 = vsel %vm2185, %v2278, %v2279
      %v2281 = vrot.slane %v2279, 4
      %v2282 = vrot.slane %v1150, 5
      %v2283 = vsel %vm2185, %v2281, %v2282
      %v2284 = vrot.slane %v2149, 5
      %v2285 = vrot.slane %v2284, 4
      %v2286 = vrot.slane %v1118, 5
      %v2287 = vsel %vm2185, %v2285, %v2286
      %v2288 = vrot.slane %v2286, 4
      %v2289 = vrot.slane %v1151, 5
      %v2290 = vsel %vm2185, %v2288, %v2289
      %v2291 = vrot.slane %v2150, 5
      %v2292 = vrot.slane %v2291, 4
      %v2293 = vrot.slane %v1120, 5
      %v2294 = vsel %vm2185, %v2292, %v2293
      %v2295 = vrot.slane %v2293, 4
      %v2296 = vrot.slane %v1152, 5
      %v2297 = vsel %vm2185, %v2295, %v2296
      %s2298 = scalar_lea.vmem %s1, 128
      %v2299 = vld [vmem:[%s2298] sm:$0xf]
      %v2300 = vld [vmem:[%s2298 + $0x4] sm:$0xf]
      %v2301 = vld [vmem:[%s2298 + $0x8] sm:$0xf]
      %v2302 = vld [vmem:[%s2298 + $0xc] sm:$0xf]
      %v2303 = vld [vmem:[%s2298 + $0x10] sm:$0xf]
      %v2304 = vld [vmem:[%s2298 + $0x14] sm:$0xf]
      %v2305 = vld [vmem:[%s2298 + $0x18] sm:$0xf]
      %v2306 = vld [vmem:[%s2298 + $0x1c] sm:$0xf]
      %v2307 = vld [vmem:[%s2298 + $0x20] sm:$0xf]
      %v2308 = vld [vmem:[%s2298 + $0x24] sm:$0xf]
      %v2309 = vld [vmem:[%s2298 + $0x28] sm:$0xf]
      %v2310 = vld [vmem:[%s2298 + $0x2c] sm:$0xf]
      %v2311 = vld [vmem:[%s2298 + $0x30] sm:$0xf]
      %v2312 = vld [vmem:[%s2298 + $0x34] sm:$0xf]
      %v2313 = vld [vmem:[%s2298 + $0x38] sm:$0xf]
      %v2314 = vld [vmem:[%s2298 + $0x3c] sm:$0xf]
      %v2315 = vunpack.c.l.b16 %v2189
      %v2316 = vunpack.c.l.b16 %v2192
      %v2317 = vunpack.c.l.b16 %v2196
      %v2318 = vunpack.c.l.b16 %v2199
      %v2319 = vunpack.c.l.b16 %v2203
      %v2320 = vunpack.c.l.b16 %v2206
      %v2321 = vunpack.c.l.b16 %v2210
      %v2322 = vunpack.c.l.b16 %v2213
      %v2323 = vunpack.c.l.b16 %v2217
      %v2324 = vunpack.c.l.b16 %v2220
      %v2325 = vunpack.c.l.b16 %v2224
      %v2326 = vunpack.c.l.b16 %v2227
      %v2327 = vunpack.c.l.b16 %v2231
      %v2328 = vunpack.c.l.b16 %v2234
      %v2329 = vunpack.c.l.b16 %v2238
      %v2330 = vunpack.c.l.b16 %v2241
      %v2331 = vunpack.c.l.b16 %v2245
      %v2332 = vunpack.c.l.b16 %v2248
      %v2333 = vunpack.c.l.b16 %v2252
      %v2334 = vunpack.c.l.b16 %v2255
      %v2335 = vunpack.c.l.b16 %v2259
      %v2336 = vunpack.c.l.b16 %v2262
      %v2337 = vunpack.c.l.b16 %v2266
      %v2338 = vunpack.c.l.b16 %v2269
      %v2339 = vunpack.c.l.b16 %v2273
      %v2340 = vunpack.c.l.b16 %v2276
      %v2341 = vunpack.c.l.b16 %v2280
      %v2342 = vunpack.c.l.b16 %v2283
      %v2343 = vunpack.c.l.b16 %v2287
      %v2344 = vunpack.c.l.b16 %v2290
      %v2345 = vunpack.c.l.b16 %v2294
      %v2346 = vunpack.c.l.b16 %v2297
      %v2347 = vpack.c.b16 %v2316, %v2315
      %v2348 = vpack.c.b16 %v2318, %v2317
      %v2349 = vpack.c.b16 %v2320, %v2319
      %v2350 = vpack.c.b16 %v2322, %v2321
      %v2351 = vpack.c.b16 %v2324, %v2323
      %v2352 = vpack.c.b16 %v2326, %v2325
      %v2353 = vpack.c.b16 %v2328, %v2327
      %v2354 = vpack.c.b16 %v2330, %v2329
      %v2355 = vpack.c.b16 %v2332, %v2331
      %v2356 = vpack.c.b16 %v2334, %v2333
      %v2357 = vpack.c.b16 %v2336, %v2335
      %v2358 = vpack.c.b16 %v2338, %v2337
      %v2359 = vpack.c.b16 %v2340, %v2339
      %v2360 = vpack.c.b16 %v2342, %v2341
      %v2361 = vpack.c.b16 %v2344, %v2343
      %v2362 = vpack.c.b16 %v2346, %v2345
      %v2395 = vunpack.c.l.b16 %v2299
      %v2396 = vunpack.c.l.b16 %v2300
      %v2397 = vunpack.c.l.b16 %v2301
      %v2398 = vunpack.c.l.b16 %v2302
      %v2399 = vunpack.c.l.b16 %v2303
      %v2400 = vunpack.c.l.b16 %v2304
      %v2401 = vunpack.c.l.b16 %v2305
      %v2402 = vunpack.c.l.b16 %v2306
      %v2403 = vunpack.c.l.b16 %v2307
      %v2404 = vunpack.c.l.b16 %v2308
      %v2405 = vunpack.c.l.b16 %v2309
      %v2406 = vunpack.c.l.b16 %v2310
      %v2407 = vunpack.c.l.b16 %v2311
      %v2408 = vunpack.c.l.b16 %v2312
      %v2409 = vunpack.c.l.b16 %v2313
      %v2410 = vunpack.c.l.b16 %v2314
      %v2411 = vpack.c.b16 %v2396, %v2395
      %v2412 = vpack.c.b16 %v2398, %v2397
      %v2413 = vpack.c.b16 %v2400, %v2399
      %v2414 = vpack.c.b16 %v2402, %v2401
      %v2415 = vpack.c.b16 %v2404, %v2403
      %v2416 = vpack.c.b16 %v2406, %v2405
      %v2417 = vpack.c.b16 %v2408, %v2407
      %v2418 = vpack.c.b16 %v2410, %v2409
      %2427 = vmatprep.subr.bf16.mxu0 0
      %2428 = vmatpush1.bf16.msra.mxu0 %v2418
      %2429 = vmatprep.subr.bf16.mxu0 0
      %2430 = vmatpush1.bf16.msra.mxu0 %v2417
      %2431 = vmatprep.subr.bf16.mxu0 0
      %2432 = vmatpush1.bf16.msra.mxu0 %v2416
      %2433 = vmatprep.subr.bf16.mxu0 0
      %2434 = vmatpush1.bf16.msra.mxu0 %v2415
      %2435 = vmatprep.subr.bf16.mxu0 0
      %2436 = vmatpush1.bf16.msra.mxu0 %v2414
      %2437 = vmatprep.subr.bf16.mxu0 0
      %2438 = vmatpush1.bf16.msra.mxu0 %v2413
      %2439 = vmatprep.subr.bf16.mxu0 0
      %2440 = vmatpush1.bf16.msra.mxu0 %v2412
      %2441 = vmatprep.subr.bf16.mxu0 0
      %2442 = vmatpush1.bf16.msra.mxu0 %v2411
      %2443 = vmatprep.subr.bf16.mxu0 0
      %2444 = vmatpush2.bf16.msra.mxu0 0
      %2445 = vmatprep.subr.bf16.mxu0 0
      %2446 = vmatpush2.bf16.msra.mxu0 0
      %2447 = vmatprep.subr.bf16.mxu0 0
      %2448 = vmatpush2.bf16.msra.mxu0 0
      %2449 = vmatprep.subr.bf16.mxu0 0
      %2450 = vmatpush2.bf16.msra.mxu0 0
      %2451 = vmatprep.subr.bf16.mxu0 0
      %2452 = vmatpush2.bf16.msra.mxu0 0
      %2453 = vmatprep.subr.bf16.mxu0 0
      %2454 = vmatpush2.bf16.msra.mxu0 0
      %2455 = vmatprep.subr.bf16.mxu0 0
      %2456 = vmatpush2.bf16.msra.mxu0 0
      %2457 = vmatprep.subr.bf16.mxu0 0
      %2458 = vmatpush2.bf16.msra.mxu0 0
      %2459 = vmatprep.mubr.bf16.mxu0 0
      %2460 = vmatmul.mubr.bf16.gmra.mxu0 %v2347
      %v2461 = vpop.f32.mrf.mxu0
      %v2462 = vadd.f32 0.0, %v2461
      %v2463 = vpop.f32.mrf.mxu0
      %v2464 = vpop.f32.mrf.mxu0
      %v2465 = vadd.f32 0.0, %v2464
      %v2466 = vpop.f32.mrf.mxu0
      %2467 = vmatprep.mubr.bf16.mxu0 0
      %2468 = vmatmul.mubr.bf16.gmra.mxu0 %v2348
      %v2469 = vpop.f32.mrf.mxu0
      %v2470 = vadd.f32 0.0, %v2469
      %v2471 = vpop.f32.mrf.mxu0
      %v2472 = vpop.f32.mrf.mxu0
      %v2473 = vadd.f32 0.0, %v2472
      %v2474 = vpop.f32.mrf.mxu0
      %2475 = vmatprep.mubr.bf16.mxu0 0
      %2476 = vmatmul.mubr.bf16.gmra.mxu0 %v2349
      %v2477 = vpop.f32.mrf.mxu0
      %v2478 = vadd.f32 0.0, %v2477
      %v2479 = vpop.f32.mrf.mxu0
      %v2480 = vpop.f32.mrf.mxu0
      %v2481 = vadd.f32 0.0, %v2480
      %v2482 = vpop.f32.mrf.mxu0
      %2483 = vmatprep.mubr.bf16.mxu0 0
      %2484 = vmatmul.mubr.bf16.gmra.mxu0 %v2350
      %v2485 = vpop.f32.mrf.mxu0
      %v2486 = vadd.f32 0.0, %v2485
      %v2487 = vpop.f32.mrf.mxu0
      %v2488 = vpop.f32.mrf.mxu0
      %v2489 = vadd.f32 0.0, %v2488
      %v2490 = vpop.f32.mrf.mxu0
      %2491 = vmatprep.mubr.bf16.mxu0 0
      %2492 = vmatmul.mubr.bf16.gmra.mxu0 %v2351
      %v2493 = vpop.f32.mrf.mxu0
      %v2494 = vadd.f32 0.0, %v2493
      %v2495 = vpop.f32.mrf.mxu0
      %v2496 = vpop.f32.mrf.mxu0
      %v2497 = vadd.f32 0.0, %v2496
      %v2498 = vpop.f32.mrf.mxu0
      %2499 = vmatprep.mubr.bf16.mxu0 0
      %2500 = vmatmul.mubr.bf16.gmra.mxu0 %v2352
      %v2501 = vpop.f32.mrf.mxu0
      %v2502 = vadd.f32 0.0, %v2501
      %v2503 = vpop.f32.mrf.mxu0
      %v2504 = vpop.f32.mrf.mxu0
      %v2505 = vadd.f32 0.0, %v2504
      %v2506 = vpop.f32.mrf.mxu0
      %2507 = vmatprep.mubr.bf16.mxu0 0
      %2508 = vmatmul.mubr.bf16.gmra.mxu0 %v2353
      %v2509 = vpop.f32.mrf.mxu0
      %v2510 = vadd.f32 0.0, %v2509
      %v2511 = vpop.f32.mrf.mxu0
      %v2512 = vpop.f32.mrf.mxu0
      %v2513 = vadd.f32 0.0, %v2512
      %v2514 = vpop.f32.mrf.mxu0
      %2515 = vmatprep.mubr.bf16.mxu0 0
      %2516 = vmatmul.mubr.bf16.gmra.mxu0 %v2354
      %v2517 = vpop.f32.mrf.mxu0
      %v2518 = vadd.f32 0.0, %v2517
      %v2519 = vpop.f32.mrf.mxu0
      %v2520 = vpop.f32.mrf.mxu0
      %v2521 = vadd.f32 0.0, %v2520
      %v2522 = vpop.f32.mrf.mxu0
      %2523 = vmatprep.mubr.bf16.mxu0 0
      %2524 = vmatmul.mubr.bf16.gmra.mxu0 %v2355
      %v2525 = vpop.f32.mrf.mxu0
      %v2526 = vadd.f32 0.0, %v2525
      %v2527 = vpop.f32.mrf.mxu0
      %v2528 = vpop.f32.mrf.mxu0
      %v2529 = vadd.f32 0.0, %v2528
      %v2530 = vpop.f32.mrf.mxu0
      %2531 = vmatprep.mubr.bf16.mxu0 0
      %2532 = vmatmul.mubr.bf16.gmra.mxu0 %v2356
      %v2533 = vpop.f32.mrf.mxu0
      %v2534 = vadd.f32 0.0, %v2533
      %v2535 = vpop.f32.mrf.mxu0
      %v2536 = vpop.f32.mrf.mxu0
      %v2537 = vadd.f32 0.0, %v2536
      %v2538 = vpop.f32.mrf.mxu0
      %2539 = vmatprep.mubr.bf16.mxu0 0
      %2540 = vmatmul.mubr.bf16.gmra.mxu0 %v2357
      %v2541 = vpop.f32.mrf.mxu0
      %v2542 = vadd.f32 0.0, %v2541
      %v2543 = vpop.f32.mrf.mxu0
      %v2544 = vpop.f32.mrf.mxu0
      %v2545 = vadd.f32 0.0, %v2544
      %v2546 = vpop.f32.mrf.mxu0
      %2547 = vmatprep.mubr.bf16.mxu0 0
      %2548 = vmatmul.mubr.bf16.gmra.mxu0 %v2358
      %v2549 = vpop.f32.mrf.mxu0
      %v2550 = vadd.f32 0.0, %v2549
      %v2551 = vpop.f32.mrf.mxu0
      %v2552 = vpop.f32.mrf.mxu0
      %v2553 = vadd.f32 0.0, %v2552
      %v2554 = vpop.f32.mrf.mxu0
      %2555 = vmatprep.mubr.bf16.mxu0 0
      %2556 = vmatmul.mubr.bf16.gmra.mxu0 %v2359
      %v2557 = vpop.f32.mrf.mxu0
      %v2558 = vadd.f32 0.0, %v2557
      %v2559 = vpop.f32.mrf.mxu0
      %v2560 = vpop.f32.mrf.mxu0
      %v2561 = vadd.f32 0.0, %v2560
      %v2562 = vpop.f32.mrf.mxu0
      %2563 = vmatprep.mubr.bf16.mxu0 0
      %2564 = vmatmul.mubr.bf16.gmra.mxu0 %v2360
      %v2565 = vpop.f32.mrf.mxu0
      %v2566 = vadd.f32 0.0, %v2565
      %v2567 = vpop.f32.mrf.mxu0
      %v2568 = vpop.f32.mrf.mxu0
      %v2569 = vadd.f32 0.0, %v2568
      %v2570 = vpop.f32.mrf.mxu0
      %2571 = vmatprep.mubr.bf16.mxu0 0
      %2572 = vmatmul.mubr.bf16.gmra.mxu0 %v2361
      %v2573 = vpop.f32.mrf.mxu0
      %v2574 = vadd.f32 0.0, %v2573
      %v2575 = vpop.f32.mrf.mxu0
      %v2576 = vpop.f32.mrf.mxu0
      %v2577 = vadd.f32 0.0, %v2576
      %v2578 = vpop.f32.mrf.mxu0
      %2579 = vmatprep.mubr.bf16.mxu0 0
      %2580 = vmatmul.mubr.bf16.gmra.mxu0 %v2362
      %v2581 = vpop.f32.mrf.mxu0
      %v2582 = vadd.f32 0.0, %v2581
      %v2583 = vpop.f32.mrf.mxu0
      %v2584 = vpop.f32.mrf.mxu0
      %v2585 = vadd.f32 0.0, %v2584
      %v2586 = vpop.f32.mrf.mxu0
      %2587 = vdwg.mxu0
      %v2588 = vadd.f32 %v2009, %v2462
      %v2589 = vadd.f32 %v2012, %v2465
      %v2590 = vadd.f32 %v2017, %v2470
      %v2591 = vadd.f32 %v2020, %v2473
      %v2592 = vadd.f32 %v2025, %v2478
      %v2593 = vadd.f32 %v2028, %v2481
      %v2594 = vadd.f32 %v2033, %v2486
      %v2595 = vadd.f32 %v2036, %v2489
      %v2596 = vadd.f32 %v2041, %v2494
      %v2597 = vadd.f32 %v2044, %v2497
      %v2598 = vadd.f32 %v2049, %v2502
      %v2599 = vadd.f32 %v2052, %v2505
      %v2600 = vadd.f32 %v2057, %v2510
      %v2601 = vadd.f32 %v2060, %v2513
      %v2602 = vadd.f32 %v2065, %v2518
      %v2603 = vadd.f32 %v2068, %v2521
      %v2604 = vadd.f32 %v2073, %v2526
      %v2605 = vadd.f32 %v2076, %v2529
      %v2606 = vadd.f32 %v2081, %v2534
      %v2607 = vadd.f32 %v2084, %v2537
      %v2608 = vadd.f32 %v2089, %v2542
      %v2609 = vadd.f32 %v2092, %v2545
      %v2610 = vadd.f32 %v2097, %v2550
      %v2611 = vadd.f32 %v2100, %v2553
      %v2612 = vadd.f32 %v2105, %v2558
      %v2613 = vadd.f32 %v2108, %v2561
      %v2614 = vadd.f32 %v2113, %v2566
      %v2615 = vadd.f32 %v2116, %v2569
      %v2616 = vadd.f32 %v2121, %v2574
      %v2617 = vadd.f32 %v2124, %v2577
      %v2618 = vadd.f32 %v2129, %v2582
      %v2619 = vadd.f32 %v2132, %v2585
      %v2620 = vld [vmem:[%s471] sm:$0xf]
      %v2621 = vld [vmem:[%s471 + $0x4] sm:$0xf]
      %v2622 = vld [vmem:[%s471 + $0xc] sm:$0xf]
      %v2623 = vld [vmem:[%s471 + $0x10] sm:$0xf]
      %v2624 = vld [vmem:[%s471 + $0x18] sm:$0xf]
      %v2625 = vld [vmem:[%s471 + $0x1c] sm:$0xf]
      %v2626 = vld [vmem:[%s471 + $0x24] sm:$0xf]
      %v2627 = vld [vmem:[%s471 + $0x28] sm:$0xf]
      %v2628 = vld [vmem:[%s471 + $0x30] sm:$0xf]
      %v2629 = vld [vmem:[%s471 + $0x34] sm:$0xf]
      %v2630 = vld [vmem:[%s471 + $0x3c] sm:$0xf]
      %v2631 = vld [vmem:[%s471 + $0x40] sm:$0xf]
      %v2632 = vld [vmem:[%s471 + $0x48] sm:$0xf]
      %v2633 = vld [vmem:[%s471 + $0x4c] sm:$0xf]
      %v2634 = vld [vmem:[%s471 + $0x54] sm:$0xf]
      %v2635 = vld [vmem:[%s471 + $0x58] sm:$0xf]
      %v2636 = vld [vmem:[%s471 + $0x60] sm:$0xf]
      %v2637 = vld [vmem:[%s471 + $0x64] sm:$0xf]
      %v2638 = vld [vmem:[%s471 + $0x6c] sm:$0xf]
      %v2639 = vld [vmem:[%s471 + $0x70] sm:$0xf]
      %v2640 = vld [vmem:[%s471 + $0x78] sm:$0xf]
      %v2641 = vld [vmem:[%s471 + $0x7c] sm:$0xf]
      %v2642 = vld [vmem:[%s471 + $0x84] sm:$0xf]
      %v2643 = vld [vmem:[%s471 + $0x88] sm:$0xf]
      %v2644 = vld [vmem:[%s471 + $0x90] sm:$0xf]
      %v2645 = vld [vmem:[%s471 + $0x94] sm:$0xf]
      %v2646 = vld [vmem:[%s471 + $0x9c] sm:$0xf]
      %v2647 = vld [vmem:[%s471 + $0xa0] sm:$0xf]
      %v2648 = vld [vmem:[%s471 + $0xa8] sm:$0xf]
      %v2649 = vld [vmem:[%s471 + $0xac] sm:$0xf]
      %v2650 = vld [vmem:[%s471 + $0xb4] sm:$0xf]
      %v2651 = vld [vmem:[%s471 + $0xb8] sm:$0xf]
      %s2652 = scalar_lea.vmem %s1, 192
      %v2653 = vld [vmem:[%s2652] sm:$0xf]
      %v2654 = vld [vmem:[%s2652 + $0x4] sm:$0xf]
      %v2655 = vld [vmem:[%s2652 + $0x8] sm:$0xf]
      %v2656 = vld [vmem:[%s2652 + $0xc] sm:$0xf]
      %v2657 = vld [vmem:[%s2652 + $0x10] sm:$0xf]
      %v2658 = vld [vmem:[%s2652 + $0x14] sm:$0xf]
      %v2659 = vld [vmem:[%s2652 + $0x18] sm:$0xf]
      %v2660 = vld [vmem:[%s2652 + $0x1c] sm:$0xf]
      %v2661 = vld [vmem:[%s2652 + $0x20] sm:$0xf]
      %v2662 = vld [vmem:[%s2652 + $0x24] sm:$0xf]
      %v2663 = vld [vmem:[%s2652 + $0x28] sm:$0xf]
      %v2664 = vld [vmem:[%s2652 + $0x2c] sm:$0xf]
      %v2665 = vld [vmem:[%s2652 + $0x30] sm:$0xf]
      %v2666 = vld [vmem:[%s2652 + $0x34] sm:$0xf]
      %v2667 = vld [vmem:[%s2652 + $0x38] sm:$0xf]
      %v2668 = vld [vmem:[%s2652 + $0x3c] sm:$0xf]
      %v2701 = vunpack.c.l.b16 %v2620
      %v2702 = vunpack.c.l.b16 %v2621
      %v2703 = vunpack.c.l.b16 %v2622
      %v2704 = vunpack.c.l.b16 %v2623
      %v2705 = vunpack.c.l.b16 %v2624
      %v2706 = vunpack.c.l.b16 %v2625
      %v2707 = vunpack.c.l.b16 %v2626
      %v2708 = vunpack.c.l.b16 %v2627
      %v2709 = vunpack.c.l.b16 %v2628
      %v2710 = vunpack.c.l.b16 %v2629
      %v2711 = vunpack.c.l.b16 %v2630
      %v2712 = vunpack.c.l.b16 %v2631
      %v2713 = vunpack.c.l.b16 %v2632
      %v2714 = vunpack.c.l.b16 %v2633
      %v2715 = vunpack.c.l.b16 %v2634
      %v2716 = vunpack.c.l.b16 %v2635
      %v2717 = vunpack.c.l.b16 %v2636
      %v2718 = vunpack.c.l.b16 %v2637
      %v2719 = vunpack.c.l.b16 %v2638
      %v2720 = vunpack.c.l.b16 %v2639
      %v2721 = vunpack.c.l.b16 %v2640
      %v2722 = vunpack.c.l.b16 %v2641
      %v2723 = vunpack.c.l.b16 %v2642
      %v2724 = vunpack.c.l.b16 %v2643
      %v2725 = vunpack.c.l.b16 %v2644
      %v2726 = vunpack.c.l.b16 %v2645
      %v2727 = vunpack.c.l.b16 %v2646
      %v2728 = vunpack.c.l.b16 %v2647
      %v2729 = vunpack.c.l.b16 %v2648
      %v2730 = vunpack.c.l.b16 %v2649
      %v2731 = vunpack.c.l.b16 %v2650
      %v2732 = vunpack.c.l.b16 %v2651
      %v2733 = vpack.c.b16 %v2702, %v2701
      %v2734 = vpack.c.b16 %v2704, %v2703
      %v2735 = vpack.c.b16 %v2706, %v2705
      %v2736 = vpack.c.b16 %v2708, %v2707
      %v2737 = vpack.c.b16 %v2710, %v2709
      %v2738 = vpack.c.b16 %v2712, %v2711
      %v2739 = vpack.c.b16 %v2714, %v2713
      %v2740 = vpack.c.b16 %v2716, %v2715
      %v2741 = vpack.c.b16 %v2718, %v2717
      %v2742 = vpack.c.b16 %v2720, %v2719
      %v2743 = vpack.c.b16 %v2722, %v2721
      %v2744 = vpack.c.b16 %v2724, %v2723
      %v2745 = vpack.c.b16 %v2726, %v2725
      %v2746 = vpack.c.b16 %v2728, %v2727
      %v2747 = vpack.c.b16 %v2730, %v2729
      %v2748 = vpack.c.b16 %v2732, %v2731
      %v2781 = vunpack.c.l.b16 %v2653
      %v2782 = vunpack.c.l.b16 %v2654
      %v2783 = vunpack.c.l.b16 %v2655
      %v2784 = vunpack.c.l.b16 %v2656
      %v2785 = vunpack.c.l.b16 %v2657
      %v2786 = vunpack.c.l.b16 %v2658
      %v2787 = vunpack.c.l.b16 %v2659
      %v2788 = vunpack.c.l.b16 %v2660
      %v2789 = vunpack.c.l.b16 %v2661
      %v2790 = vunpack.c.l.b16 %v2662
      %v2791 = vunpack.c.l.b16 %v2663
      %v2792 = vunpack.c.l.b16 %v2664
      %v2793 = vunpack.c.l.b16 %v2665
      %v2794 = vunpack.c.l.b16 %v2666
      %v2795 = vunpack.c.l.b16 %v2667
      %v2796 = vunpack.c.l.b16 %v2668
      %v2797 = vpack.c.b16 %v2782, %v2781
      %v2798 = vpack.c.b16 %v2784, %v2783
      %v2799 = vpack.c.b16 %v2786, %v2785
      %v2800 = vpack.c.b16 %v2788, %v2787
      %v2801 = vpack.c.b16 %v2790, %v2789
      %v2802 = vpack.c.b16 %v2792, %v2791
      %v2803 = vpack.c.b16 %v2794, %v2793
      %v2804 = vpack.c.b16 %v2796, %v2795
      %2813 = vmatprep.subr.bf16.mxu0 0
      %2814 = vmatpush1.bf16.msra.mxu0 %v2804
      %2815 = vmatprep.subr.bf16.mxu0 0
      %2816 = vmatpush1.bf16.msra.mxu0 %v2803
      %2817 = vmatprep.subr.bf16.mxu0 0
      %2818 = vmatpush1.bf16.msra.mxu0 %v2802
      %2819 = vmatprep.subr.bf16.mxu0 0
      %2820 = vmatpush1.bf16.msra.mxu0 %v2801
      %2821 = vmatprep.subr.bf16.mxu0 0
      %2822 = vmatpush1.bf16.msra.mxu0 %v2800
      %2823 = vmatprep.subr.bf16.mxu0 0
      %2824 = vmatpush1.bf16.msra.mxu0 %v2799
      %2825 = vmatprep.subr.bf16.mxu0 0
      %2826 = vmatpush1.bf16.msra.mxu0 %v2798
      %2827 = vmatprep.subr.bf16.mxu0 0
      %2828 = vmatpush1.bf16.msra.mxu0 %v2797
      %2829 = vmatprep.subr.bf16.mxu0 0
      %2830 = vmatpush2.bf16.msra.mxu0 0
      %2831 = vmatprep.subr.bf16.mxu0 0
      %2832 = vmatpush2.bf16.msra.mxu0 0
      %2833 = vmatprep.subr.bf16.mxu0 0
      %2834 = vmatpush2.bf16.msra.mxu0 0
      %2835 = vmatprep.subr.bf16.mxu0 0
      %2836 = vmatpush2.bf16.msra.mxu0 0
      %2837 = vmatprep.subr.bf16.mxu0 0
      %2838 = vmatpush2.bf16.msra.mxu0 0
      %2839 = vmatprep.subr.bf16.mxu0 0
      %2840 = vmatpush2.bf16.msra.mxu0 0
      %2841 = vmatprep.subr.bf16.mxu0 0
      %2842 = vmatpush2.bf16.msra.mxu0 0
      %2843 = vmatprep.subr.bf16.mxu0 0
      %2844 = vmatpush2.bf16.msra.mxu0 0
      %2845 = vmatprep.mubr.bf16.mxu0 0
      %2846 = vmatmul.mubr.bf16.gmra.mxu0 %v2733
      %v2847 = vpop.f32.mrf.mxu0
      %v2848 = vadd.f32 0.0, %v2847
      %v2849 = vpop.f32.mrf.mxu0
      %v2850 = vpop.f32.mrf.mxu0
      %v2851 = vadd.f32 0.0, %v2850
      %v2852 = vpop.f32.mrf.mxu0
      %2853 = vmatprep.mubr.bf16.mxu0 0
      %2854 = vmatmul.mubr.bf16.gmra.mxu0 %v2734
      %v2855 = vpop.f32.mrf.mxu0
      %v2856 = vadd.f32 0.0, %v2855
      %v2857 = vpop.f32.mrf.mxu0
      %v2858 = vpop.f32.mrf.mxu0
      %v2859 = vadd.f32 0.0, %v2858
      %v2860 = vpop.f32.mrf.mxu0
      %2861 = vmatprep.mubr.bf16.mxu0 0
      %2862 = vmatmul.mubr.bf16.gmra.mxu0 %v2735
      %v2863 = vpop.f32.mrf.mxu0
      %v2864 = vadd.f32 0.0, %v2863
      %v2865 = vpop.f32.mrf.mxu0
      %v2866 = vpop.f32.mrf.mxu0
      %v2867 = vadd.f32 0.0, %v2866
      %v2868 = vpop.f32.mrf.mxu0
      %2869 = vmatprep.mubr.bf16.mxu0 0
      %2870 = vmatmul.mubr.bf16.gmra.mxu0 %v2736
      %v2871 = vpop.f32.mrf.mxu0
      %v2872 = vadd.f32 0.0, %v2871
      %v2873 = vpop.f32.mrf.mxu0
      %v2874 = vpop.f32.mrf.mxu0
      %v2875 = vadd.f32 0.0, %v2874
      %v2876 = vpop.f32.mrf.mxu0
      %2877 = vmatprep.mubr.bf16.mxu0 0
      %2878 = vmatmul.mubr.bf16.gmra.mxu0 %v2737
      %v2879 = vpop.f32.mrf.mxu0
      %v2880 = vadd.f32 0.0, %v2879
      %v2881 = vpop.f32.mrf.mxu0
      %v2882 = vpop.f32.mrf.mxu0
      %v2883 = vadd.f32 0.0, %v2882
      %v2884 = vpop.f32.mrf.mxu0
      %2885 = vmatprep.mubr.bf16.mxu0 0
      %2886 = vmatmul.mubr.bf16.gmra.mxu0 %v2738
      %v2887 = vpop.f32.mrf.mxu0
      %v2888 = vadd.f32 0.0, %v2887
      %v2889 = vpop.f32.mrf.mxu0
      %v2890 = vpop.f32.mrf.mxu0
      %v2891 = vadd.f32 0.0, %v2890
      %v2892 = vpop.f32.mrf.mxu0
      %2893 = vmatprep.mubr.bf16.mxu0 0
      %2894 = vmatmul.mubr.bf16.gmra.mxu0 %v2739
      %v2895 = vpop.f32.mrf.mxu0
      %v2896 = vadd.f32 0.0, %v2895
      %v2897 = vpop.f32.mrf.mxu0
      %v2898 = vpop.f32.mrf.mxu0
      %v2899 = vadd.f32 0.0, %v2898
      %v2900 = vpop.f32.mrf.mxu0
      %2901 = vmatprep.mubr.bf16.mxu0 0
      %2902 = vmatmul.mubr.bf16.gmra.mxu0 %v2740
      %v2903 = vpop.f32.mrf.mxu0
      %v2904 = vadd.f32 0.0, %v2903
      %v2905 = vpop.f32.mrf.mxu0
      %v2906 = vpop.f32.mrf.mxu0
      %v2907 = vadd.f32 0.0, %v2906
      %v2908 = vpop.f32.mrf.mxu0
      %2909 = vmatprep.mubr.bf16.mxu0 0
      %2910 = vmatmul.mubr.bf16.gmra.mxu0 %v2741
      %v2911 = vpop.f32.mrf.mxu0
      %v2912 = vadd.f32 0.0, %v2911
      %v2913 = vpop.f32.mrf.mxu0
      %v2914 = vpop.f32.mrf.mxu0
      %v2915 = vadd.f32 0.0, %v2914
      %v2916 = vpop.f32.mrf.mxu0
      %2917 = vmatprep.mubr.bf16.mxu0 0
      %2918 = vmatmul.mubr.bf16.gmra.mxu0 %v2742
      %v2919 = vpop.f32.mrf.mxu0
      %v2920 = vadd.f32 0.0, %v2919
      %v2921 = vpop.f32.mrf.mxu0
      %v2922 = vpop.f32.mrf.mxu0
      %v2923 = vadd.f32 0.0, %v2922
      %v2924 = vpop.f32.mrf.mxu0
      %2925 = vmatprep.mubr.bf16.mxu0 0
      %2926 = vmatmul.mubr.bf16.gmra.mxu0 %v2743
      %v2927 = vpop.f32.mrf.mxu0
      %v2928 = vadd.f32 0.0, %v2927
      %v2929 = vpop.f32.mrf.mxu0
      %v2930 = vpop.f32.mrf.mxu0
      %v2931 = vadd.f32 0.0, %v2930
      %v2932 = vpop.f32.mrf.mxu0
      %2933 = vmatprep.mubr.bf16.mxu0 0
      %2934 = vmatmul.mubr.bf16.gmra.mxu0 %v2744
      %v2935 = vpop.f32.mrf.mxu0
      %v2936 = vadd.f32 0.0, %v2935
      %v2937 = vpop.f32.mrf.mxu0
      %v2938 = vpop.f32.mrf.mxu0
      %v2939 = vadd.f32 0.0, %v2938
      %v2940 = vpop.f32.mrf.mxu0
      %2941 = vmatprep.mubr.bf16.mxu0 0
      %2942 = vmatmul.mubr.bf16.gmra.mxu0 %v2745
      %v2943 = vpop.f32.mrf.mxu0
      %v2944 = vadd.f32 0.0, %v2943
      %v2945 = vpop.f32.mrf.mxu0
      %v2946 = vpop.f32.mrf.mxu0
      %v2947 = vadd.f32 0.0, %v2946
      %v2948 = vpop.f32.mrf.mxu0
      %2949 = vmatprep.mubr.bf16.mxu0 0
      %2950 = vmatmul.mubr.bf16.gmra.mxu0 %v2746
      %v2951 = vpop.f32.mrf.mxu0
      %v2952 = vadd.f32 0.0, %v2951
      %v2953 = vpop.f32.mrf.mxu0
      %v2954 = vpop.f32.mrf.mxu0
      %v2955 = vadd.f32 0.0, %v2954
      %v2956 = vpop.f32.mrf.mxu0
      %2957 = vmatprep.mubr.bf16.mxu0 0
      %2958 = vmatmul.mubr.bf16.gmra.mxu0 %v2747
      %v2959 = vpop.f32.mrf.mxu0
      %v2960 = vadd.f32 0.0, %v2959
      %v2961 = vpop.f32.mrf.mxu0
      %v2962 = vpop.f32.mrf.mxu0
      %v2963 = vadd.f32 0.0, %v2962
      %v2964 = vpop.f32.mrf.mxu0
      %2965 = vmatprep.mubr.bf16.mxu0 0
      %2966 = vmatmul.mubr.bf16.gmra.mxu0 %v2748
      %v2967 = vpop.f32.mrf.mxu0
      %v2968 = vadd.f32 0.0, %v2967
      %v2969 = vpop.f32.mrf.mxu0
      %v2970 = vpop.f32.mrf.mxu0
      %v2971 = vadd.f32 0.0, %v2970
      %v2972 = vpop.f32.mrf.mxu0
      %2973 = vdwg.mxu0
      %v2974 = vadd.f32 %v2588, %v2848
      %v2975 = vadd.f32 %v2589, %v2851
      %v2976 = vadd.f32 %v2590, %v2856
      %v2977 = vadd.f32 %v2591, %v2859
      %v2978 = vadd.f32 %v2592, %v2864
      %v2979 = vadd.f32 %v2593, %v2867
      %v2980 = vadd.f32 %v2594, %v2872
      %v2981 = vadd.f32 %v2595, %v2875
      %v2982 = vadd.f32 %v2596, %v2880
      %v2983 = vadd.f32 %v2597, %v2883
      %v2984 = vadd.f32 %v2598, %v2888
      %v2985 = vadd.f32 %v2599, %v2891
      %v2986 = vadd.f32 %v2600, %v2896
      %v2987 = vadd.f32 %v2601, %v2899
      %v2988 = vadd.f32 %v2602, %v2904
      %v2989 = vadd.f32 %v2603, %v2907
      %v2990 = vadd.f32 %v2604, %v2912
      %v2991 = vadd.f32 %v2605, %v2915
      %v2992 = vadd.f32 %v2606, %v2920
      %v2993 = vadd.f32 %v2607, %v2923
      %v2994 = vadd.f32 %v2608, %v2928
      %v2995 = vadd.f32 %v2609, %v2931
      %v2996 = vadd.f32 %v2610, %v2936
      %v2997 = vadd.f32 %v2611, %v2939
      %v2998 = vadd.f32 %v2612, %v2944
      %v2999 = vadd.f32 %v2613, %v2947
      %v3000 = vadd.f32 %v2614, %v2952
      %v3001 = vadd.f32 %v2615, %v2955
      %v3002 = vadd.f32 %v2616, %v2960
      %v3003 = vadd.f32 %v2617, %v2963
      %v3004 = vadd.f32 %v2618, %v2968
      %v3005 = vadd.f32 %v2619, %v2971
      %v3006 = vld [vmem:[%s471] sm:$0xf]
      %v3007 = vld [vmem:[%s471 + $0x4] sm:$0xf]
      %v3008 = vld [vmem:[%s471 + $0x8] sm:$0x1]
      %v3009 = vld [vmem:[%s471 + $0xc] sm:$0xf]
      %v3010 = vld [vmem:[%s471 + $0x10] sm:$0xf]
      %v3011 = vld [vmem:[%s471 + $0x14] sm:$0x1]
      %v3012 = vld [vmem:[%s471 + $0x18] sm:$0xf]
      %v3013 = vld [vmem:[%s471 + $0x1c] sm:$0xf]
      %v3014 = vld [vmem:[%s471 + $0x20] sm:$0x1]
      %v3015 = vld [vmem:[%s471 + $0x24] sm:$0xf]
      %v3016 = vld [vmem:[%s471 + $0x28] sm:$0xf]
      %v3017 = vld [vmem:[%s471 + $0x2c] sm:$0x1]
      %v3018 = vld [vmem:[%s471 + $0x30] sm:$0xf]
      %v3019 = vld [vmem:[%s471 + $0x34] sm:$0xf]
      %v3020 = vld [vmem:[%s471 + $0x38] sm:$0x1]
      %v3021 = vld [vmem:[%s471 + $0x3c] sm:$0xf]
      %v3022 = vld [vmem:[%s471 + $0x40] sm:$0xf]
      %v3023 = vld [vmem:[%s471 + $0x44] sm:$0x1]
      %v3024 = vld [vmem:[%s471 + $0x48] sm:$0xf]
      %v3025 = vld [vmem:[%s471 + $0x4c] sm:$0xf]
      %v3026 = vld [vmem:[%s471 + $0x50] sm:$0x1]
      %v3027 = vld [vmem:[%s471 + $0x54] sm:$0xf]
      %v3028 = vld [vmem:[%s471 + $0x58] sm:$0xf]
      %v3029 = vld [vmem:[%s471 + $0x5c] sm:$0x1]
      %v3030 = vld [vmem:[%s471 + $0x60] sm:$0xf]
      %v3031 = vld [vmem:[%s471 + $0x64] sm:$0xf]
      %v3032 = vld [vmem:[%s471 + $0x68] sm:$0x1]
      %v3033 = vld [vmem:[%s471 + $0x6c] sm:$0xf]
      %v3034 = vld [vmem:[%s471 + $0x70] sm:$0xf]
      %v3035 = vld [vmem:[%s471 + $0x74] sm:$0x1]
      %v3036 = vld [vmem:[%s471 + $0x78] sm:$0xf]
      %v3037 = vld [vmem:[%s471 + $0x7c] sm:$0xf]
      %v3038 = vld [vmem:[%s471 + $0x80] sm:$0x1]
      %v3039 = vld [vmem:[%s471 + $0x84] sm:$0xf]
      %v3040 = vld [vmem:[%s471 + $0x88] sm:$0xf]
      %v3041 = vld [vmem:[%s471 + $0x8c] sm:$0x1]
      %v3042 = vld [vmem:[%s471 + $0x90] sm:$0xf]
      %v3043 = vld [vmem:[%s471 + $0x94] sm:$0xf]
      %v3044 = vld [vmem:[%s471 + $0x98] sm:$0x1]
      %v3045 = vld [vmem:[%s471 + $0x9c] sm:$0xf]
      %v3046 = vld [vmem:[%s471 + $0xa0] sm:$0xf]
      %v3047 = vld [vmem:[%s471 + $0xa4] sm:$0x1]
      %v3048 = vld [vmem:[%s471 + $0xa8] sm:$0xf]
      %v3049 = vld [vmem:[%s471 + $0xac] sm:$0xf]
      %v3050 = vld [vmem:[%s471 + $0xb0] sm:$0x1]
      %v3051 = vld [vmem:[%s471 + $0xb4] sm:$0xf]
      %v3052 = vld [vmem:[%s471 + $0xb8] sm:$0xf]
      %v3053 = vld [vmem:[%s471 + $0xbc] sm:$0x1]
      %v3055 = vshrl.u32 %v3006, 16
      %v3057 = vrot.slane %v3055, 4
      %v3058 = vshll.u32 %v3006, 16
      %v3060 = vrot.slane %v3058, 5
      %v3061 = vor.u32 %v3057, %v3060
      %v3062 = vrot.slane %v3061, 4
      %v3064 = vshll.u32 %v3007, 16
      %v3066 = vrot.slane %v3064, 5
      %v3067 = vsel %vm1155, %v3062, %v3066
      %v3068 = vshrl.u32 %v3007, 16
      %v3070 = vrot.slane %v3068, 4
      %v3071 = vor.u32 %v3070, %v3066
      %v3072 = vrot.slane %v3071, 4
      %v3074 = vshll.u32 %v3008, 16
      %v3076 = vrot.slane %v3074, 5
      %v3077 = vsel %vm1155, %v3072, %v3076
      %v3079 = vshrl.u32 %v3009, 16
      %v3081 = vrot.slane %v3079, 4
      %v3082 = vshll.u32 %v3009, 16
      %v3084 = vrot.slane %v3082, 5
      %v3085 = vor.u32 %v3081, %v3084
      %v3086 = vrot.slane %v3085, 4
      %v3088 = vshll.u32 %v3010, 16
      %v3090 = vrot.slane %v3088, 5
      %v3091 = vsel %vm1155, %v3086, %v3090
      %v3092 = vshrl.u32 %v3010, 16
      %v3094 = vrot.slane %v3092, 4
      %v3095 = vor.u32 %v3094, %v3090
      %v3096 = vrot.slane %v3095, 4
      %v3098 = vshll.u32 %v3011, 16
      %v3100 = vrot.slane %v3098, 5
      %v3101 = vsel %vm1155, %v3096, %v3100
      %v3103 = vshrl.u32 %v3012, 16
      %v3105 = vrot.slane %v3103, 4
      %v3106 = vshll.u32 %v3012, 16
      %v3108 = vrot.slane %v3106, 5
      %v3109 = vor.u32 %v3105, %v3108
      %v3110 = vrot.slane %v3109, 4
      %v3112 = vshll.u32 %v3013, 16
      %v3114 = vrot.slane %v3112, 5
      %v3115 = vsel %vm1155, %v3110, %v3114
      %v3116 = vshrl.u32 %v3013, 16
      %v3118 = vrot.slane %v3116, 4
      %v3119 = vor.u32 %v3118, %v3114
      %v3120 = vrot.slane %v3119, 4
      %v3122 = vshll.u32 %v3014, 16
      %v3124 = vrot.slane %v3122, 5
      %v3125 = vsel %vm1155, %v3120, %v3124
      %v3127 = vshrl.u32 %v3015, 16
      %v3129 = vrot.slane %v3127, 4
      %v3130 = vshll.u32 %v3015, 16
      %v3132 = vrot.slane %v3130, 5
      %v3133 = vor.u32 %v3129, %v3132
      %v3134 = vrot.slane %v3133, 4
      %v3136 = vshll.u32 %v3016, 16
      %v3138 = vrot.slane %v3136, 5
      %v3139 = vsel %vm1155, %v3134, %v3138
      %v3140 = vshrl.u32 %v3016, 16
      %v3142 = vrot.slane %v3140, 4
      %v3143 = vor.u32 %v3142, %v3138
      %v3144 = vrot.slane %v3143, 4
      %v3146 = vshll.u32 %v3017, 16
      %v3148 = vrot.slane %v3146, 5
      %v3149 = vsel %vm1155, %v3144, %v3148
      %v3151 = vshrl.u32 %v3018, 16
      %v3153 = vrot.slane %v3151, 4
      %v3154 = vshll.u32 %v3018, 16
      %v3156 = vrot.slane %v3154, 5
      %v3157 = vor.u32 %v3153, %v3156
      %v3158 = vrot.slane %v3157, 4
      %v3160 = vshll.u32 %v3019, 16
      %v3162 = vrot.slane %v3160, 5
      %v3163 = vsel %vm1155, %v3158, %v3162
      %v3164 = vshrl.u32 %v3019, 16
      %v3166 = vrot.slane %v3164, 4
      %v3167 = vor.u32 %v3166, %v3162
      %v3168 = vrot.slane %v3167, 4
      %v3170 = vshll.u32 %v3020, 16
      %v3172 = vrot.slane %v3170, 5
      %v3173 = vsel %vm1155, %v3168, %v3172
      %v3175 = vshrl.u32 %v3021, 16
      %v3177 = vrot.slane %v3175, 4
      %v3178 = vshll.u32 %v3021, 16
      %v3180 = vrot.slane %v3178, 5
      %v3181 = vor.u32 %v3177, %v3180
      %v3182 = vrot.slane %v3181, 4
      %v3184 = vshll.u32 %v3022, 16
      %v3186 = vrot.slane %v3184, 5
      %v3187 = vsel %vm1155, %v3182, %v3186
      %v3188 = vshrl.u32 %v3022, 16
      %v3190 = vrot.slane %v3188, 4
      %v3191 = vor.u32 %v3190, %v3186
      %v3192 = vrot.slane %v3191, 4
      %v3194 = vshll.u32 %v3023, 16
      %v3196 = vrot.slane %v3194, 5
      %v3197 = vsel %vm1155, %v3192, %v3196
      %v3199 = vshrl.u32 %v3024, 16
      %v3201 = vrot.slane %v3199, 4
      %v3202 = vshll.u32 %v3024, 16
      %v3204 = vrot.slane %v3202, 5
      %v3205 = vor.u32 %v3201, %v3204
      %v3206 = vrot.slane %v3205, 4
      %v3208 = vshll.u32 %v3025, 16
      %v3210 = vrot.slane %v3208, 5
      %v3211 = vsel %vm1155, %v3206, %v3210
      %v3212 = vshrl.u32 %v3025, 16
      %v3214 = vrot.slane %v3212, 4
      %v3215 = vor.u32 %v3214, %v3210
      %v3216 = vrot.slane %v3215, 4
      %v3218 = vshll.u32 %v3026, 16
      %v3220 = vrot.slane %v3218, 5
      %v3221 = vsel %vm1155, %v3216, %v3220
      %v3223 = vshrl.u32 %v3027, 16
      %v3225 = vrot.slane %v3223, 4
      %v3226 = vshll.u32 %v3027, 16
      %v3228 = vrot.slane %v3226, 5
      %v3229 = vor.u32 %v3225, %v3228
      %v3230 = vrot.slane %v3229, 4
      %v3232 = vshll.u32 %v3028, 16
      %v3234 = vrot.slane %v3232, 5
      %v3235 = vsel %vm1155, %v3230, %v3234
      %v3236 = vshrl.u32 %v3028, 16
      %v3238 = vrot.slane %v3236, 4
      %v3239 = vor.u32 %v3238, %v3234
      %v3240 = vrot.slane %v3239, 4
      %v3242 = vshll.u32 %v3029, 16
      %v3244 = vrot.slane %v3242, 5
      %v3245 = vsel %vm1155, %v3240, %v3244
      %v3247 = vshrl.u32 %v3030, 16
      %v3249 = vrot.slane %v3247, 4
      %v3250 = vshll.u32 %v3030, 16
      %v3252 = vrot.slane %v3250, 5
      %v3253 = vor.u32 %v3249, %v3252
      %v3254 = vrot.slane %v3253, 4
      %v3256 = vshll.u32 %v3031, 16
      %v3258 = vrot.slane %v3256, 5
      %v3259 = vsel %vm1155, %v3254, %v3258
      %v3260 = vshrl.u32 %v3031, 16
      %v3262 = vrot.slane %v3260, 4
      %v3263 = vor.u32 %v3262, %v3258
      %v3264 = vrot.slane %v3263, 4
      %v3266 = vshll.u32 %v3032, 16
      %v3268 = vrot.slane %v3266, 5
      %v3269 = vsel %vm1155, %v3264, %v3268
      %v3271 = vshrl.u32 %v3033, 16
      %v3273 = vrot.slane %v3271, 4
      %v3274 = vshll.u32 %v3033, 16
      %v3276 = vrot.slane %v3274, 5
      %v3277 = vor.u32 %v3273, %v3276
      %v3278 = vrot.slane %v3277, 4
      %v3280 = vshll.u32 %v3034, 16
      %v3282 = vrot.slane %v3280, 5
      %v3283 = vsel %vm1155, %v3278, %v3282
      %v3284 = vshrl.u32 %v3034, 16
      %v3286 = vrot.slane %v3284, 4
      %v3287 = vor.u32 %v3286, %v3282
      %v3288 = vrot.slane %v3287, 4
      %v3290 = vshll.u32 %v3035, 16
      %v3292 = vrot.slane %v3290, 5
      %v3293 = vsel %vm1155, %v3288, %v3292
      %v3295 = vshrl.u32 %v3036, 16
      %v3297 = vrot.slane %v3295, 4
      %v3298 = vshll.u32 %v3036, 16
      %v3300 = vrot.slane %v3298, 5
      %v3301 = vor.u32 %v3297, %v3300
      %v3302 = vrot.slane %v3301, 4
      %v3304 = vshll.u32 %v3037, 16
      %v3306 = vrot.slane %v3304, 5
      %v3307 = vsel %vm1155, %v3302, %v3306
      %v3308 = vshrl.u32 %v3037, 16
      %v3310 = vrot.slane %v3308, 4
      %v3311 = vor.u32 %v3310, %v3306
      %v3312 = vrot.slane %v3311, 4
      %v3314 = vshll.u32 %v3038, 16
      %v3316 = vrot.slane %v3314, 5
      %v3317 = vsel %vm1155, %v3312, %v3316
      %v3319 = vshrl.u32 %v3039, 16
      %v3321 = vrot.slane %v3319, 4
      %v3322 = vshll.u32 %v3039, 16
      %v3324 = vrot.slane %v3322, 5
      %v3325 = vor.u32 %v3321, %v3324
      %v3326 = vrot.slane %v3325, 4
      %v3328 = vshll.u32 %v3040, 16
      %v3330 = vrot.slane %v3328, 5
      %v3331 = vsel %vm1155, %v3326, %v3330
      %v3332 = vshrl.u32 %v3040, 16
      %v3334 = vrot.slane %v3332, 4
      %v3335 = vor.u32 %v3334, %v3330
      %v3336 = vrot.slane %v3335, 4
      %v3338 = vshll.u32 %v3041, 16
      %v3340 = vrot.slane %v3338, 5
      %v3341 = vsel %vm1155, %v3336, %v3340
      %v3343 = vshrl.u32 %v3042, 16
      %v3345 = vrot.slane %v3343, 4
      %v3346 = vshll.u32 %v3042, 16
      %v3348 = vrot.slane %v3346, 5
      %v3349 = vor.u32 %v3345, %v3348
      %v3350 = vrot.slane %v3349, 4
      %v3352 = vshll.u32 %v3043, 16
      %v3354 = vrot.slane %v3352, 5
      %v3355 = vsel %vm1155, %v3350, %v3354
      %v3356 = vshrl.u32 %v3043, 16
      %v3358 = vrot.slane %v3356, 4
      %v3359 = vor.u32 %v3358, %v3354
      %v3360 = vrot.slane %v3359, 4
      %v3362 = vshll.u32 %v3044, 16
      %v3364 = vrot.slane %v3362, 5
      %v3365 = vsel %vm1155, %v3360, %v3364
      %v3367 = vshrl.u32 %v3045, 16
      %v3369 = vrot.slane %v3367, 4
      %v3370 = vshll.u32 %v3045, 16
      %v3372 = vrot.slane %v3370, 5
      %v3373 = vor.u32 %v3369, %v3372
      %v3374 = vrot.slane %v3373, 4
      %v3376 = vshll.u32 %v3046, 16
      %v3378 = vrot.slane %v3376, 5
      %v3379 = vsel %vm1155, %v3374, %v3378
      %v3380 = vshrl.u32 %v3046, 16
      %v3382 = vrot.slane %v3380, 4
      %v3383 = vor.u32 %v3382, %v3378
      %v3384 = vrot.slane %v3383, 4
      %v3386 = vshll.u32 %v3047, 16
      %v3388 = vrot.slane %v3386, 5
      %v3389 = vsel %vm1155, %v3384, %v3388
      %v3391 = vshrl.u32 %v3048, 16
      %v3393 = vrot.slane %v3391, 4
      %v3394 = vshll.u32 %v3048, 16
      %v3396 = vrot.slane %v3394, 5
      %v3397 = vor.u32 %v3393, %v3396
      %v3398 = vrot.slane %v3397, 4
      %v3400 = vshll.u32 %v3049, 16
      %v3402 = vrot.slane %v3400, 5
      %v3403 = vsel %vm1155, %v3398, %v3402
      %v3404 = vshrl.u32 %v3049, 16
      %v3406 = vrot.slane %v3404, 4
      %v3407 = vor.u32 %v3406, %v3402
      %v3408 = vrot.slane %v3407, 4
      %v3410 = vshll.u32 %v3050, 16
      %v3412 = vrot.slane %v3410, 5
      %v3413 = vsel %vm1155, %v3408, %v3412
      %v3415 = vshrl.u32 %v3051, 16
      %v3417 = vrot.slane %v3415, 4
      %v3418 = vshll.u32 %v3051, 16
      %v3420 = vrot.slane %v3418, 5
      %v3421 = vor.u32 %v3417, %v3420
      %v3422 = vrot.slane %v3421, 4
      %v3424 = vshll.u32 %v3052, 16
      %v3426 = vrot.slane %v3424, 5
      %v3427 = vsel %vm1155, %v3422, %v3426
      %v3428 = vshrl.u32 %v3052, 16
      %v3430 = vrot.slane %v3428, 4
      %v3431 = vor.u32 %v3430, %v3426
      %v3432 = vrot.slane %v3431, 4
      %v3434 = vshll.u32 %v3053, 16
      %v3436 = vrot.slane %v3434, 5
      %v3437 = vsel %vm1155, %v3432, %v3436
      %s3438 = scalar_lea.vmem %s1, 256
      %v3439 = vld [vmem:[%s3438] sm:$0xf]
      %v3440 = vld [vmem:[%s3438 + $0x4] sm:$0xf]
      %v3441 = vld [vmem:[%s3438 + $0x8] sm:$0xf]
      %v3442 = vld [vmem:[%s3438 + $0xc] sm:$0xf]
      %v3443 = vld [vmem:[%s3438 + $0x10] sm:$0xf]
      %v3444 = vld [vmem:[%s3438 + $0x14] sm:$0xf]
      %v3445 = vld [vmem:[%s3438 + $0x18] sm:$0xf]
      %v3446 = vld [vmem:[%s3438 + $0x1c] sm:$0xf]
      %v3447 = vld [vmem:[%s3438 + $0x20] sm:$0xf]
      %v3448 = vld [vmem:[%s3438 + $0x24] sm:$0xf]
      %v3449 = vld [vmem:[%s3438 + $0x28] sm:$0xf]
      %v3450 = vld [vmem:[%s3438 + $0x2c] sm:$0xf]
      %v3451 = vld [vmem:[%s3438 + $0x30] sm:$0xf]
      %v3452 = vld [vmem:[%s3438 + $0x34] sm:$0xf]
      %v3453 = vld [vmem:[%s3438 + $0x38] sm:$0xf]
      %v3454 = vld [vmem:[%s3438 + $0x3c] sm:$0xf]
      %v3455 = vunpack.c.l.b16 %v3067
      %v3456 = vunpack.c.l.b16 %v3077
      %v3457 = vunpack.c.l.b16 %v3091
      %v3458 = vunpack.c.l.b16 %v3101
      %v3459 = vunpack.c.l.b16 %v3115
      %v3460 = vunpack.c.l.b16 %v3125
      %v3461 = vunpack.c.l.b16 %v3139
      %v3462 = vunpack.c.l.b16 %v3149
      %v3463 = vunpack.c.l.b16 %v3163
      %v3464 = vunpack.c.l.b16 %v3173
      %v3465 = vunpack.c.l.b16 %v3187
      %v3466 = vunpack.c.l.b16 %v3197
      %v3467 = vunpack.c.l.b16 %v3211
      %v3468 = vunpack.c.l.b16 %v3221
      %v3469 = vunpack.c.l.b16 %v3235
      %v3470 = vunpack.c.l.b16 %v3245
      %v3471 = vunpack.c.l.b16 %v3259
      %v3472 = vunpack.c.l.b16 %v3269
      %v3473 = vunpack.c.l.b16 %v3283
      %v3474 = vunpack.c.l.b16 %v3293
      %v3475 = vunpack.c.l.b16 %v3307
      %v3476 = vunpack.c.l.b16 %v3317
      %v3477 = vunpack.c.l.b16 %v3331
      %v3478 = vunpack.c.l.b16 %v3341
      %v3479 = vunpack.c.l.b16 %v3355
      %v3480 = vunpack.c.l.b16 %v3365
      %v3481 = vunpack.c.l.b16 %v3379
      %v3482 = vunpack.c.l.b16 %v3389
      %v3483 = vunpack.c.l.b16 %v3403
      %v3484 = vunpack.c.l.b16 %v3413
      %v3485 = vunpack.c.l.b16 %v3427
      %v3486 = vunpack.c.l.b16 %v3437
      %v3487 = vpack.c.b16 %v3456, %v3455
      %v3488 = vpack.c.b16 %v3458, %v3457
      %v3489 = vpack.c.b16 %v3460, %v3459
      %v3490 = vpack.c.b16 %v3462, %v3461
      %v3491 = vpack.c.b16 %v3464, %v3463
      %v3492 = vpack.c.b16 %v3466, %v3465
      %v3493 = vpack.c.b16 %v3468, %v3467
      %v3494 = vpack.c.b16 %v3470, %v3469
      %v3495 = vpack.c.b16 %v3472, %v3471
      %v3496 = vpack.c.b16 %v3474, %v3473
      %v3497 = vpack.c.b16 %v3476, %v3475
      %v3498 = vpack.c.b16 %v3478, %v3477
      %v3499 = vpack.c.b16 %v3480, %v3479
      %v3500 = vpack.c.b16 %v3482, %v3481
      %v3501 = vpack.c.b16 %v3484, %v3483
      %v3502 = vpack.c.b16 %v3486, %v3485
      %v3535 = vunpack.c.l.b16 %v3439
      %v3536 = vunpack.c.l.b16 %v3440
      %v3537 = vunpack.c.l.b16 %v3441
      %v3538 = vunpack.c.l.b16 %v3442
      %v3539 = vunpack.c.l.b16 %v3443
      %v3540 = vunpack.c.l.b16 %v3444
      %v3541 = vunpack.c.l.b16 %v3445
      %v3542 = vunpack.c.l.b16 %v3446
      %v3543 = vunpack.c.l.b16 %v3447
      %v3544 = vunpack.c.l.b16 %v3448
      %v3545 = vunpack.c.l.b16 %v3449
      %v3546 = vunpack.c.l.b16 %v3450
      %v3547 = vunpack.c.l.b16 %v3451
      %v3548 = vunpack.c.l.b16 %v3452
      %v3549 = vunpack.c.l.b16 %v3453
      %v3550 = vunpack.c.l.b16 %v3454
      %v3551 = vpack.c.b16 %v3536, %v3535
      %v3552 = vpack.c.b16 %v3538, %v3537
      %v3553 = vpack.c.b16 %v3540, %v3539
      %v3554 = vpack.c.b16 %v3542, %v3541
      %v3555 = vpack.c.b16 %v3544, %v3543
      %v3556 = vpack.c.b16 %v3546, %v3545
      %v3557 = vpack.c.b16 %v3548, %v3547
      %v3558 = vpack.c.b16 %v3550, %v3549
      %3567 = vmatprep.subr.bf16.mxu0 0
      %3568 = vmatpush1.bf16.msra.mxu0 %v3558
      %3569 = vmatprep.subr.bf16.mxu0 0
      %3570 = vmatpush1.bf16.msra.mxu0 %v3557
      %3571 = vmatprep.subr.bf16.mxu0 0
      %3572 = vmatpush1.bf16.msra.mxu0 %v3556
      %3573 = vmatprep.subr.bf16.mxu0 0
      %3574 = vmatpush1.bf16.msra.mxu0 %v3555
      %3575 = vmatprep.subr.bf16.mxu0 0
      %3576 = vmatpush1.bf16.msra.mxu0 %v3554
      %3577 = vmatprep.subr.bf16.mxu0 0
      %3578 = vmatpush1.bf16.msra.mxu0 %v3553
      %3579 = vmatprep.subr.bf16.mxu0 0
      %3580 = vmatpush1.bf16.msra.mxu0 %v3552
      %3581 = vmatprep.subr.bf16.mxu0 0
      %3582 = vmatpush1.bf16.msra.mxu0 %v3551
      %3583 = vmatprep.subr.bf16.mxu0 0
      %3584 = vmatpush2.bf16.msra.mxu0 0
      %3585 = vmatprep.subr.bf16.mxu0 0
      %3586 = vmatpush2.bf16.msra.mxu0 0
      %3587 = vmatprep.subr.bf16.mxu0 0
      %3588 = vmatpush2.bf16.msra.mxu0 0
      %3589 = vmatprep.subr.bf16.mxu0 0
      %3590 = vmatpush2.bf16.msra.mxu0 0
      %3591 = vmatprep.subr.bf16.mxu0 0
      %3592 = vmatpush2.bf16.msra.mxu0 0
      %3593 = vmatprep.subr.bf16.mxu0 0
      %3594 = vmatpush2.bf16.msra.mxu0 0
      %3595 = vmatprep.subr.bf16.mxu0 0
      %3596 = vmatpush2.bf16.msra.mxu0 0
      %3597 = vmatprep.subr.bf16.mxu0 0
      %3598 = vmatpush2.bf16.msra.mxu0 0
      %3599 = vmatprep.mubr.bf16.mxu0 0
      %3600 = vmatmul.mubr.bf16.gmra.mxu0 %v3487
      %v3601 = vpop.f32.mrf.mxu0
      %v3602 = vadd.f32 0.0, %v3601
      %v3603 = vpop.f32.mrf.mxu0
      %v3604 = vpop.f32.mrf.mxu0
      %v3605 = vadd.f32 0.0, %v3604
      %v3606 = vpop.f32.mrf.mxu0
      %3607 = vmatprep.mubr.bf16.mxu0 0
      %3608 = vmatmul.mubr.bf16.gmra.mxu0 %v3488
      %v3609 = vpop.f32.mrf.mxu0
      %v3610 = vadd.f32 0.0, %v3609
      %v3611 = vpop.f32.mrf.mxu0
      %v3612 = vpop.f32.mrf.mxu0
      %v3613 = vadd.f32 0.0, %v3612
      %v3614 = vpop.f32.mrf.mxu0
      %3615 = vmatprep.mubr.bf16.mxu0 0
      %3616 = vmatmul.mubr.bf16.gmra.mxu0 %v3489
      %v3617 = vpop.f32.mrf.mxu0
      %v3618 = vadd.f32 0.0, %v3617
      %v3619 = vpop.f32.mrf.mxu0
      %v3620 = vpop.f32.mrf.mxu0
      %v3621 = vadd.f32 0.0, %v3620
      %v3622 = vpop.f32.mrf.mxu0
      %3623 = vmatprep.mubr.bf16.mxu0 0
      %3624 = vmatmul.mubr.bf16.gmra.mxu0 %v3490
      %v3625 = vpop.f32.mrf.mxu0
      %v3626 = vadd.f32 0.0, %v3625
      %v3627 = vpop.f32.mrf.mxu0
      %v3628 = vpop.f32.mrf.mxu0
      %v3629 = vadd.f32 0.0, %v3628
      %v3630 = vpop.f32.mrf.mxu0
      %3631 = vmatprep.mubr.bf16.mxu0 0
      %3632 = vmatmul.mubr.bf16.gmra.mxu0 %v3491
      %v3633 = vpop.f32.mrf.mxu0
      %v3634 = vadd.f32 0.0, %v3633
      %v3635 = vpop.f32.mrf.mxu0
      %v3636 = vpop.f32.mrf.mxu0
      %v3637 = vadd.f32 0.0, %v3636
      %v3638 = vpop.f32.mrf.mxu0
      %3639 = vmatprep.mubr.bf16.mxu0 0
      %3640 = vmatmul.mubr.bf16.gmra.mxu0 %v3492
      %v3641 = vpop.f32.mrf.mxu0
      %v3642 = vadd.f32 0.0, %v3641
      %v3643 = vpop.f32.mrf.mxu0
      %v3644 = vpop.f32.mrf.mxu0
      %v3645 = vadd.f32 0.0, %v3644
      %v3646 = vpop.f32.mrf.mxu0
      %3647 = vmatprep.mubr.bf16.mxu0 0
      %3648 = vmatmul.mubr.bf16.gmra.mxu0 %v3493
      %v3649 = vpop.f32.mrf.mxu0
      %v3650 = vadd.f32 0.0, %v3649
      %v3651 = vpop.f32.mrf.mxu0
      %v3652 = vpop.f32.mrf.mxu0
      %v3653 = vadd.f32 0.0, %v3652
      %v3654 = vpop.f32.mrf.mxu0
      %3655 = vmatprep.mubr.bf16.mxu0 0
      %3656 = vmatmul.mubr.bf16.gmra.mxu0 %v3494
      %v3657 = vpop.f32.mrf.mxu0
      %v3658 = vadd.f32 0.0, %v3657
      %v3659 = vpop.f32.mrf.mxu0
      %v3660 = vpop.f32.mrf.mxu0
      %v3661 = vadd.f32 0.0, %v3660
      %v3662 = vpop.f32.mrf.mxu0
      %3663 = vmatprep.mubr.bf16.mxu0 0
      %3664 = vmatmul.mubr.bf16.gmra.mxu0 %v3495
      %v3665 = vpop.f32.mrf.mxu0
      %v3666 = vadd.f32 0.0, %v3665
      %v3667 = vpop.f32.mrf.mxu0
      %v3668 = vpop.f32.mrf.mxu0
      %v3669 = vadd.f32 0.0, %v3668
      %v3670 = vpop.f32.mrf.mxu0
      %3671 = vmatprep.mubr.bf16.mxu0 0
      %3672 = vmatmul.mubr.bf16.gmra.mxu0 %v3496
      %v3673 = vpop.f32.mrf.mxu0
      %v3674 = vadd.f32 0.0, %v3673
      %v3675 = vpop.f32.mrf.mxu0
      %v3676 = vpop.f32.mrf.mxu0
      %v3677 = vadd.f32 0.0, %v3676
      %v3678 = vpop.f32.mrf.mxu0
      %3679 = vmatprep.mubr.bf16.mxu0 0
      %3680 = vmatmul.mubr.bf16.gmra.mxu0 %v3497
      %v3681 = vpop.f32.mrf.mxu0
      %v3682 = vadd.f32 0.0, %v3681
      %v3683 = vpop.f32.mrf.mxu0
      %v3684 = vpop.f32.mrf.mxu0
      %v3685 = vadd.f32 0.0, %v3684
      %v3686 = vpop.f32.mrf.mxu0
      %3687 = vmatprep.mubr.bf16.mxu0 0
      %3688 = vmatmul.mubr.bf16.gmra.mxu0 %v3498
      %v3689 = vpop.f32.mrf.mxu0
      %v3690 = vadd.f32 0.0, %v3689
      %v3691 = vpop.f32.mrf.mxu0
      %v3692 = vpop.f32.mrf.mxu0
      %v3693 = vadd.f32 0.0, %v3692
      %v3694 = vpop.f32.mrf.mxu0
      %3695 = vmatprep.mubr.bf16.mxu0 0
      %3696 = vmatmul.mubr.bf16.gmra.mxu0 %v3499
      %v3697 = vpop.f32.mrf.mxu0
      %v3698 = vadd.f32 0.0, %v3697
      %v3699 = vpop.f32.mrf.mxu0
      %v3700 = vpop.f32.mrf.mxu0
      %v3701 = vadd.f32 0.0, %v3700
      %v3702 = vpop.f32.mrf.mxu0
      %3703 = vmatprep.mubr.bf16.mxu0 0
      %3704 = vmatmul.mubr.bf16.gmra.mxu0 %v3500
      %v3705 = vpop.f32.mrf.mxu0
      %v3706 = vadd.f32 0.0, %v3705
      %v3707 = vpop.f32.mrf.mxu0
      %v3708 = vpop.f32.mrf.mxu0
      %v3709 = vadd.f32 0.0, %v3708
      %v3710 = vpop.f32.mrf.mxu0
      %3711 = vmatprep.mubr.bf16.mxu0 0
      %3712 = vmatmul.mubr.bf16.gmra.mxu0 %v3501
      %v3713 = vpop.f32.mrf.mxu0
      %v3714 = vadd.f32 0.0, %v3713
      %v3715 = vpop.f32.mrf.mxu0
      %v3716 = vpop.f32.mrf.mxu0
      %v3717 = vadd.f32 0.0, %v3716
      %v3718 = vpop.f32.mrf.mxu0
      %3719 = vmatprep.mubr.bf16.mxu0 0
      %3720 = vmatmul.mubr.bf16.gmra.mxu0 %v3502
      %v3721 = vpop.f32.mrf.mxu0
      %v3722 = vadd.f32 0.0, %v3721
      %v3723 = vpop.f32.mrf.mxu0
      %v3724 = vpop.f32.mrf.mxu0
      %v3725 = vadd.f32 0.0, %v3724
      %v3726 = vpop.f32.mrf.mxu0
      %3727 = vdwg.mxu0
      %v3728 = vadd.f32 %v2974, %v3602
      %v3729 = vadd.f32 %v2975, %v3605
      %v3730 = vadd.f32 %v2976, %v3610
      %v3731 = vadd.f32 %v2977, %v3613
      %v3732 = vadd.f32 %v2978, %v3618
      %v3733 = vadd.f32 %v2979, %v3621
      %v3734 = vadd.f32 %v2980, %v3626
      %v3735 = vadd.f32 %v2981, %v3629
      %v3736 = vadd.f32 %v2982, %v3634
      %v3737 = vadd.f32 %v2983, %v3637
      %v3738 = vadd.f32 %v2984, %v3642
      %v3739 = vadd.f32 %v2985, %v3645
      %v3740 = vadd.f32 %v2986, %v3650
      %v3741 = vadd.f32 %v2987, %v3653
      %v3742 = vadd.f32 %v2988, %v3658
      %v3743 = vadd.f32 %v2989, %v3661
      %v3744 = vadd.f32 %v2990, %v3666
      %v3745 = vadd.f32 %v2991, %v3669
      %v3746 = vadd.f32 %v2992, %v3674
      %v3747 = vadd.f32 %v2993, %v3677
      %v3748 = vadd.f32 %v2994, %v3682
      %v3749 = vadd.f32 %v2995, %v3685
      %v3750 = vadd.f32 %v2996, %v3690
      %v3751 = vadd.f32 %v2997, %v3693
      %v3752 = vadd.f32 %v2998, %v3698
      %v3753 = vadd.f32 %v2999, %v3701
      %v3754 = vadd.f32 %v3000, %v3706
      %v3755 = vadd.f32 %v3001, %v3709
      %v3756 = vadd.f32 %v3002, %v3714
      %v3757 = vadd.f32 %v3003, %v3717
      %v3758 = vadd.f32 %v3004, %v3722
      %v3759 = vadd.f32 %v3005, %v3725
      %v3760 = vld [vmem:[%s471] sm:$0xe]
      %v3761 = vld [vmem:[%s471 + $0xc] sm:$0xe]
      %v3762 = vld [vmem:[%s471 + $0x18] sm:$0xe]
      %v3763 = vld [vmem:[%s471 + $0x24] sm:$0xe]
      %v3764 = vld [vmem:[%s471 + $0x30] sm:$0xe]
      %v3765 = vld [vmem:[%s471 + $0x3c] sm:$0xe]
      %v3766 = vld [vmem:[%s471 + $0x48] sm:$0xe]
      %v3767 = vld [vmem:[%s471 + $0x54] sm:$0xe]
      %v3768 = vld [vmem:[%s471 + $0x60] sm:$0xe]
      %v3769 = vld [vmem:[%s471 + $0x6c] sm:$0xe]
      %v3770 = vld [vmem:[%s471 + $0x78] sm:$0xe]
      %v3771 = vld [vmem:[%s471 + $0x84] sm:$0xe]
      %v3772 = vld [vmem:[%s471 + $0x90] sm:$0xe]
      %v3773 = vld [vmem:[%s471 + $0x9c] sm:$0xe]
      %v3774 = vld [vmem:[%s471 + $0xa8] sm:$0xe]
      %v3775 = vld [vmem:[%s471 + $0xb4] sm:$0xe]
      %v3824 = vrot.slane %v3760, 5
      %v3825 = vrot.slane %v3824, 4
      %v3826 = vrot.slane %v3007, 5
      %v3827 = vsel %vm2185, %v3825, %v3826
      %v3828 = vrot.slane %v3826, 4
      %v3829 = vrot.slane %v3008, 5
      %v3830 = vsel %vm2185, %v3828, %v3829
      %v3831 = vrot.slane %v3761, 5
      %v3832 = vrot.slane %v3831, 4
      %v3833 = vrot.slane %v3010, 5
      %v3834 = vsel %vm2185, %v3832, %v3833
      %v3835 = vrot.slane %v3833, 4
      %v3836 = vrot.slane %v3011, 5
      %v3837 = vsel %vm2185, %v3835, %v3836
      %v3838 = vrot.slane %v3762, 5
      %v3839 = vrot.slane %v3838, 4
      %v3840 = vrot.slane %v3013, 5
      %v3841 = vsel %vm2185, %v3839, %v3840
      %v3842 = vrot.slane %v3840, 4
      %v3843 = vrot.slane %v3014, 5
      %v3844 = vsel %vm2185, %v3842, %v3843
      %v3845 = vrot.slane %v3763, 5
      %v3846 = vrot.slane %v3845, 4
      %v3847 = vrot.slane %v3016, 5
      %v3848 = vsel %vm2185, %v3846, %v3847
      %v3849 = vrot.slane %v3847, 4
      %v3850 = vrot.slane %v3017, 5
      %v3851 = vsel %vm2185, %v3849, %v3850
      %v3852 = vrot.slane %v3764, 5
      %v3853 = vrot.slane %v3852, 4
      %v3854 = vrot.slane %v3019, 5
      %v3855 = vsel %vm2185, %v3853, %v3854
      %v3856 = vrot.slane %v3854, 4
      %v3857 = vrot.slane %v3020, 5
      %v3858 = vsel %vm2185, %v3856, %v3857
      %v3859 = vrot.slane %v3765, 5
      %v3860 = vrot.slane %v3859, 4
      %v3861 = vrot.slane %v3022, 5
      %v3862 = vsel %vm2185, %v3860, %v3861
      %v3863 = vrot.slane %v3861, 4
      %v3864 = vrot.slane %v3023, 5
      %v3865 = vsel %vm2185, %v3863, %v3864
      %v3866 = vrot.slane %v3766, 5
      %v3867 = vrot.slane %v3866, 4
      %v3868 = vrot.slane %v3025, 5
      %v3869 = vsel %vm2185, %v3867, %v3868
      %v3870 = vrot.slane %v3868, 4
      %v3871 = vrot.slane %v3026, 5
      %v3872 = vsel %vm2185, %v3870, %v3871
      %v3873 = vrot.slane %v3767, 5
      %v3874 = vrot.slane %v3873, 4
      %v3875 = vrot.slane %v3028, 5
      %v3876 = vsel %vm2185, %v3874, %v3875
      %v3877 = vrot.slane %v3875, 4
      %v3878 = vrot.slane %v3029, 5
      %v3879 = vsel %vm2185, %v3877, %v3878
      %v3880 = vrot.slane %v3768, 5
      %v3881 = vrot.slane %v3880, 4
      %v3882 = vrot.slane %v3031, 5
      %v3883 = vsel %vm2185, %v3881, %v3882
      %v3884 = vrot.slane %v3882, 4
      %v3885 = vrot.slane %v3032, 5
      %v3886 = vsel %vm2185, %v3884, %v3885
      %v3887 = vrot.slane %v3769, 5
      %v3888 = vrot.slane %v3887, 4
      %v3889 = vrot.slane %v3034, 5
      %v3890 = vsel %vm2185, %v3888, %v3889
      %v3891 = vrot.slane %v3889, 4
      %v3892 = vrot.slane %v3035, 5
      %v3893 = vsel %vm2185, %v3891, %v3892
      %v3894 = vrot.slane %v3770, 5
      %v3895 = vrot.slane %v3894, 4
      %v3896 = vrot.slane %v3037, 5
      %v3897 = vsel %vm2185, %v3895, %v3896
      %v3898 = vrot.slane %v3896, 4
      %v3899 = vrot.slane %v3038, 5
      %v3900 = vsel %vm2185, %v3898, %v3899
      %v3901 = vrot.slane %v3771, 5
      %v3902 = vrot.slane %v3901, 4
      %v3903 = vrot.slane %v3040, 5
      %v3904 = vsel %vm2185, %v3902, %v3903
      %v3905 = vrot.slane %v3903, 4
      %v3906 = vrot.slane %v3041, 5
      %v3907 = vsel %vm2185, %v3905, %v3906
      %v3908 = vrot.slane %v3772, 5
      %v3909 = vrot.slane %v3908, 4
      %v3910 = vrot.slane %v3043, 5
      %v3911 = vsel %vm2185, %v3909, %v3910
      %v3912 = vrot.slane %v3910, 4
      %v3913 = vrot.slane %v3044, 5
      %v3914 = vsel %vm2185, %v3912, %v3913
      %v3915 = vrot.slane %v3773, 5
      %v3916 = vrot.slane %v3915, 4
      %v3917 = vrot.slane %v3046, 5
      %v3918 = vsel %vm2185, %v3916, %v3917
      %v3919 = vrot.slane %v3917, 4
      %v3920 = vrot.slane %v3047, 5
      %v3921 = vsel %vm2185, %v3919, %v3920
      %v3922 = vrot.slane %v3774, 5
      %v3923 = vrot.slane %v3922, 4
      %v3924 = vrot.slane %v3049, 5
      %v3925 = vsel %vm2185, %v3923, %v3924
      %v3926 = vrot.slane %v3924, 4
      %v3927 = vrot.slane %v3050, 5
      %v3928 = vsel %vm2185, %v3926, %v3927
      %v3929 = vrot.slane %v3775, 5
      %v3930 = vrot.slane %v3929, 4
      %v3931 = vrot.slane %v3052, 5
      %v3932 = vsel %vm2185, %v3930, %v3931
      %v3933 = vrot.slane %v3931, 4
      %v3934 = vrot.slane %v3053, 5
      %v3935 = vsel %vm2185, %v3933, %v3934
      %s3936 = scalar_lea.vmem %s1, 320
      %v3937 = vld [vmem:[%s3936] sm:$0xf]
      %v3938 = vld [vmem:[%s3936 + $0x4] sm:$0xf]
      %v3939 = vld [vmem:[%s3936 + $0x8] sm:$0xf]
      %v3940 = vld [vmem:[%s3936 + $0xc] sm:$0xf]
      %v3941 = vld [vmem:[%s3936 + $0x10] sm:$0xf]
      %v3942 = vld [vmem:[%s3936 + $0x14] sm:$0xf]
      %v3943 = vld [vmem:[%s3936 + $0x18] sm:$0xf]
      %v3944 = vld [vmem:[%s3936 + $0x1c] sm:$0xf]
      %v3945 = vld [vmem:[%s3936 + $0x20] sm:$0xf]
      %v3946 = vld [vmem:[%s3936 + $0x24] sm:$0xf]
      %v3947 = vld [vmem:[%s3936 + $0x28] sm:$0xf]
      %v3948 = vld [vmem:[%s3936 + $0x2c] sm:$0xf]
      %v3949 = vld [vmem:[%s3936 + $0x30] sm:$0xf]
      %v3950 = vld [vmem:[%s3936 + $0x34] sm:$0xf]
      %v3951 = vld [vmem:[%s3936 + $0x38] sm:$0xf]
      %v3952 = vld [vmem:[%s3936 + $0x3c] sm:$0xf]
      %v3953 = vunpack.c.l.b16 %v3827
      %v3954 = vunpack.c.l.b16 %v3830
      %v3955 = vunpack.c.l.b16 %v3834
      %v3956 = vunpack.c.l.b16 %v3837
      %v3957 = vunpack.c.l.b16 %v3841
      %v3958 = vunpack.c.l.b16 %v3844
      %v3959 = vunpack.c.l.b16 %v3848
      %v3960 = vunpack.c.l.b16 %v3851
      %v3961 = vunpack.c.l.b16 %v3855
      %v3962 = vunpack.c.l.b16 %v3858
      %v3963 = vunpack.c.l.b16 %v3862
      %v3964 = vunpack.c.l.b16 %v3865
      %v3965 = vunpack.c.l.b16 %v3869
      %v3966 = vunpack.c.l.b16 %v3872
      %v3967 = vunpack.c.l.b16 %v3876
      %v3968 = vunpack.c.l.b16 %v3879
      %v3969 = vunpack.c.l.b16 %v3883
      %v3970 = vunpack.c.l.b16 %v3886
      %v3971 = vunpack.c.l.b16 %v3890
      %v3972 = vunpack.c.l.b16 %v3893
      %v3973 = vunpack.c.l.b16 %v3897
      %v3974 = vunpack.c.l.b16 %v3900
      %v3975 = vunpack.c.l.b16 %v3904
      %v3976 = vunpack.c.l.b16 %v3907
      %v3977 = vunpack.c.l.b16 %v3911
      %v3978 = vunpack.c.l.b16 %v3914
      %v3979 = vunpack.c.l.b16 %v3918
      %v3980 = vunpack.c.l.b16 %v3921
      %v3981 = vunpack.c.l.b16 %v3925
      %v3982 = vunpack.c.l.b16 %v3928
      %v3983 = vunpack.c.l.b16 %v3932
      %v3984 = vunpack.c.l.b16 %v3935
      %v3985 = vpack.c.b16 %v3954, %v3953
      %v3986 = vpack.c.b16 %v3956, %v3955
      %v3987 = vpack.c.b16 %v3958, %v3957
      %v3988 = vpack.c.b16 %v3960, %v3959
      %v3989 = vpack.c.b16 %v3962, %v3961
      %v3990 = vpack.c.b16 %v3964, %v3963
      %v3991 = vpack.c.b16 %v3966, %v3965
      %v3992 = vpack.c.b16 %v3968, %v3967
      %v3993 = vpack.c.b16 %v3970, %v3969
      %v3994 = vpack.c.b16 %v3972, %v3971
      %v3995 = vpack.c.b16 %v3974, %v3973
      %v3996 = vpack.c.b16 %v3976, %v3975
      %v3997 = vpack.c.b16 %v3978, %v3977
      %v3998 = vpack.c.b16 %v3980, %v3979
      %v3999 = vpack.c.b16 %v3982, %v3981
      %v4000 = vpack.c.b16 %v3984, %v3983
      %v4033 = vunpack.c.l.b16 %v3937
      %v4034 = vunpack.c.l.b16 %v3938
      %v4035 = vunpack.c.l.b16 %v3939
      %v4036 = vunpack.c.l.b16 %v3940
      %v4037 = vunpack.c.l.b16 %v3941
      %v4038 = vunpack.c.l.b16 %v3942
      %v4039 = vunpack.c.l.b16 %v3943
      %v4040 = vunpack.c.l.b16 %v3944
      %v4041 = vunpack.c.l.b16 %v3945
      %v4042 = vunpack.c.l.b16 %v3946
      %v4043 = vunpack.c.l.b16 %v3947
      %v4044 = vunpack.c.l.b16 %v3948
      %v4045 = vunpack.c.l.b16 %v3949
      %v4046 = vunpack.c.l.b16 %v3950
      %v4047 = vunpack.c.l.b16 %v3951
      %v4048 = vunpack.c.l.b16 %v3952
      %v4049 = vpack.c.b16 %v4034, %v4033
      %v4050 = vpack.c.b16 %v4036, %v4035
      %v4051 = vpack.c.b16 %v4038, %v4037
      %v4052 = vpack.c.b16 %v4040, %v4039
      %v4053 = vpack.c.b16 %v4042, %v4041
      %v4054 = vpack.c.b16 %v4044, %v4043
      %v4055 = vpack.c.b16 %v4046, %v4045
      %v4056 = vpack.c.b16 %v4048, %v4047
      %4065 = vmatprep.subr.bf16.mxu0 0
      %4066 = vmatpush1.bf16.msra.mxu0 %v4056
      %4067 = vmatprep.subr.bf16.mxu0 0
      %4068 = vmatpush1.bf16.msra.mxu0 %v4055
      %4069 = vmatprep.subr.bf16.mxu0 0
      %4070 = vmatpush1.bf16.msra.mxu0 %v4054
      %4071 = vmatprep.subr.bf16.mxu0 0
      %4072 = vmatpush1.bf16.msra.mxu0 %v4053
      %4073 = vmatprep.subr.bf16.mxu0 0
      %4074 = vmatpush1.bf16.msra.mxu0 %v4052
      %4075 = vmatprep.subr.bf16.mxu0 0
      %4076 = vmatpush1.bf16.msra.mxu0 %v4051
      %4077 = vmatprep.subr.bf16.mxu0 0
      %4078 = vmatpush1.bf16.msra.mxu0 %v4050
      %4079 = vmatprep.subr.bf16.mxu0 0
      %4080 = vmatpush1.bf16.msra.mxu0 %v4049
      %4081 = vmatprep.subr.bf16.mxu0 0
      %4082 = vmatpush2.bf16.msra.mxu0 0
      %4083 = vmatprep.subr.bf16.mxu0 0
      %4084 = vmatpush2.bf16.msra.mxu0 0
      %4085 = vmatprep.subr.bf16.mxu0 0
      %4086 = vmatpush2.bf16.msra.mxu0 0
      %4087 = vmatprep.subr.bf16.mxu0 0
      %4088 = vmatpush2.bf16.msra.mxu0 0
      %4089 = vmatprep.subr.bf16.mxu0 0
      %4090 = vmatpush2.bf16.msra.mxu0 0
      %4091 = vmatprep.subr.bf16.mxu0 0
      %4092 = vmatpush2.bf16.msra.mxu0 0
      %4093 = vmatprep.subr.bf16.mxu0 0
      %4094 = vmatpush2.bf16.msra.mxu0 0
      %4095 = vmatprep.subr.bf16.mxu0 0
      %4096 = vmatpush2.bf16.msra.mxu0 0
      %4097 = vmatprep.mubr.bf16.mxu0 0
      %4098 = vmatmul.mubr.bf16.gmra.mxu0 %v3985
      %v4099 = vpop.f32.mrf.mxu0
      %v4100 = vadd.f32 0.0, %v4099
      %v4101 = vpop.f32.mrf.mxu0
      %v4102 = vpop.f32.mrf.mxu0
      %v4103 = vadd.f32 0.0, %v4102
      %v4104 = vpop.f32.mrf.mxu0
      %4105 = vmatprep.mubr.bf16.mxu0 0
      %4106 = vmatmul.mubr.bf16.gmra.mxu0 %v3986
      %v4107 = vpop.f32.mrf.mxu0
      %v4108 = vadd.f32 0.0, %v4107
      %v4109 = vpop.f32.mrf.mxu0
      %v4110 = vpop.f32.mrf.mxu0
      %v4111 = vadd.f32 0.0, %v4110
      %v4112 = vpop.f32.mrf.mxu0
      %4113 = vmatprep.mubr.bf16.mxu0 0
      %4114 = vmatmul.mubr.bf16.gmra.mxu0 %v3987
      %v4115 = vpop.f32.mrf.mxu0
      %v4116 = vadd.f32 0.0, %v4115
      %v4117 = vpop.f32.mrf.mxu0
      %v4118 = vpop.f32.mrf.mxu0
      %v4119 = vadd.f32 0.0, %v4118
      %v4120 = vpop.f32.mrf.mxu0
      %4121 = vmatprep.mubr.bf16.mxu0 0
      %4122 = vmatmul.mubr.bf16.gmra.mxu0 %v3988
      %v4123 = vpop.f32.mrf.mxu0
      %v4124 = vadd.f32 0.0, %v4123
      %v4125 = vpop.f32.mrf.mxu0
      %v4126 = vpop.f32.mrf.mxu0
      %v4127 = vadd.f32 0.0, %v4126
      %v4128 = vpop.f32.mrf.mxu0
      %4129 = vmatprep.mubr.bf16.mxu0 0
      %4130 = vmatmul.mubr.bf16.gmra.mxu0 %v3989
      %v4131 = vpop.f32.mrf.mxu0
      %v4132 = vadd.f32 0.0, %v4131
      %v4133 = vpop.f32.mrf.mxu0
      %v4134 = vpop.f32.mrf.mxu0
      %v4135 = vadd.f32 0.0, %v4134
      %v4136 = vpop.f32.mrf.mxu0
      %4137 = vmatprep.mubr.bf16.mxu0 0
      %4138 = vmatmul.mubr.bf16.gmra.mxu0 %v3990
      %v4139 = vpop.f32.mrf.mxu0
      %v4140 = vadd.f32 0.0, %v4139
      %v4141 = vpop.f32.mrf.mxu0
      %v4142 = vpop.f32.mrf.mxu0
      %v4143 = vadd.f32 0.0, %v4142
      %v4144 = vpop.f32.mrf.mxu0
      %4145 = vmatprep.mubr.bf16.mxu0 0
      %4146 = vmatmul.mubr.bf16.gmra.mxu0 %v3991
      %v4147 = vpop.f32.mrf.mxu0
      %v4148 = vadd.f32 0.0, %v4147
      %v4149 = vpop.f32.mrf.mxu0
      %v4150 = vpop.f32.mrf.mxu0
      %v4151 = vadd.f32 0.0, %v4150
      %v4152 = vpop.f32.mrf.mxu0
      %4153 = vmatprep.mubr.bf16.mxu0 0
      %4154 = vmatmul.mubr.bf16.gmra.mxu0 %v3992
      %v4155 = vpop.f32.mrf.mxu0
      %v4156 = vadd.f32 0.0, %v4155
      %v4157 = vpop.f32.mrf.mxu0
      %v4158 = vpop.f32.mrf.mxu0
      %v4159 = vadd.f32 0.0, %v4158
      %v4160 = vpop.f32.mrf.mxu0
      %4161 = vmatprep.mubr.bf16.mxu0 0
      %4162 = vmatmul.mubr.bf16.gmra.mxu0 %v3993
      %v4163 = vpop.f32.mrf.mxu0
      %v4164 = vadd.f32 0.0, %v4163
      %v4165 = vpop.f32.mrf.mxu0
      %v4166 = vpop.f32.mrf.mxu0
      %v4167 = vadd.f32 0.0, %v4166
      %v4168 = vpop.f32.mrf.mxu0
      %4169 = vmatprep.mubr.bf16.mxu0 0
      %4170 = vmatmul.mubr.bf16.gmra.mxu0 %v3994
      %v4171 = vpop.f32.mrf.mxu0
      %v4172 = vadd.f32 0.0, %v4171
      %v4173 = vpop.f32.mrf.mxu0
      %v4174 = vpop.f32.mrf.mxu0
      %v4175 = vadd.f32 0.0, %v4174
      %v4176 = vpop.f32.mrf.mxu0
      %4177 = vmatprep.mubr.bf16.mxu0 0
      %4178 = vmatmul.mubr.bf16.gmra.mxu0 %v3995
      %v4179 = vpop.f32.mrf.mxu0
      %v4180 = vadd.f32 0.0, %v4179
      %v4181 = vpop.f32.mrf.mxu0
      %v4182 = vpop.f32.mrf.mxu0
      %v4183 = vadd.f32 0.0, %v4182
      %v4184 = vpop.f32.mrf.mxu0
      %4185 = vmatprep.mubr.bf16.mxu0 0
      %4186 = vmatmul.mubr.bf16.gmra.mxu0 %v3996
      %v4187 = vpop.f32.mrf.mxu0
      %v4188 = vadd.f32 0.0, %v4187
      %v4189 = vpop.f32.mrf.mxu0
      %v4190 = vpop.f32.mrf.mxu0
      %v4191 = vadd.f32 0.0, %v4190
      %v4192 = vpop.f32.mrf.mxu0
      %4193 = vmatprep.mubr.bf16.mxu0 0
      %4194 = vmatmul.mubr.bf16.gmra.mxu0 %v3997
      %v4195 = vpop.f32.mrf.mxu0
      %v4196 = vadd.f32 0.0, %v4195
      %v4197 = vpop.f32.mrf.mxu0
      %v4198 = vpop.f32.mrf.mxu0
      %v4199 = vadd.f32 0.0, %v4198
      %v4200 = vpop.f32.mrf.mxu0
      %4201 = vmatprep.mubr.bf16.mxu0 0
      %4202 = vmatmul.mubr.bf16.gmra.mxu0 %v3998
      %v4203 = vpop.f32.mrf.mxu0
      %v4204 = vadd.f32 0.0, %v4203
      %v4205 = vpop.f32.mrf.mxu0
      %v4206 = vpop.f32.mrf.mxu0
      %v4207 = vadd.f32 0.0, %v4206
      %v4208 = vpop.f32.mrf.mxu0
      %4209 = vmatprep.mubr.bf16.mxu0 0
      %4210 = vmatmul.mubr.bf16.gmra.mxu0 %v3999
      %v4211 = vpop.f32.mrf.mxu0
      %v4212 = vadd.f32 0.0, %v4211
      %v4213 = vpop.f32.mrf.mxu0
      %v4214 = vpop.f32.mrf.mxu0
      %v4215 = vadd.f32 0.0, %v4214
      %v4216 = vpop.f32.mrf.mxu0
      %4217 = vmatprep.mubr.bf16.mxu0 0
      %4218 = vmatmul.mubr.bf16.gmra.mxu0 %v4000
      %v4219 = vpop.f32.mrf.mxu0
      %v4220 = vadd.f32 0.0, %v4219
      %v4221 = vpop.f32.mrf.mxu0
      %v4222 = vpop.f32.mrf.mxu0
      %v4223 = vadd.f32 0.0, %v4222
      %v4224 = vpop.f32.mrf.mxu0
      %4225 = vdwg.mxu0
      %v4226 = vadd.f32 %v3728, %v4100
      %v4227 = vadd.f32 %v3729, %v4103
      %v4228 = vadd.f32 %v3730, %v4108
      %v4229 = vadd.f32 %v3731, %v4111
      %v4230 = vadd.f32 %v3732, %v4116
      %v4231 = vadd.f32 %v3733, %v4119
      %v4232 = vadd.f32 %v3734, %v4124
      %v4233 = vadd.f32 %v3735, %v4127
      %v4234 = vadd.f32 %v3736, %v4132
      %v4235 = vadd.f32 %v3737, %v4135
      %v4236 = vadd.f32 %v3738, %v4140
      %v4237 = vadd.f32 %v3739, %v4143
      %v4238 = vadd.f32 %v3740, %v4148
      %v4239 = vadd.f32 %v3741, %v4151
      %v4240 = vadd.f32 %v3742, %v4156
      %v4241 = vadd.f32 %v3743, %v4159
      %v4242 = vadd.f32 %v3744, %v4164
      %v4243 = vadd.f32 %v3745, %v4167
      %v4244 = vadd.f32 %v3746, %v4172
      %v4245 = vadd.f32 %v3747, %v4175
      %v4246 = vadd.f32 %v3748, %v4180
      %v4247 = vadd.f32 %v3749, %v4183
      %v4248 = vadd.f32 %v3750, %v4188
      %v4249 = vadd.f32 %v3751, %v4191
      %v4250 = vadd.f32 %v3752, %v4196
      %v4251 = vadd.f32 %v3753, %v4199
      %v4252 = vadd.f32 %v3754, %v4204
      %v4253 = vadd.f32 %v3755, %v4207
      %v4254 = vadd.f32 %v3756, %v4212
      %v4255 = vadd.f32 %v3757, %v4215
      %v4256 = vadd.f32 %v3758, %v4220
      %v4257 = vadd.f32 %v3759, %v4223
      %s4258 = scalar_lea.vmem [#allocation2], 24
      %v4259 = vld [vmem:[%s4258] sm:$0xf]
      %v4260 = vld [vmem:[%s4258 + $0x4] sm:$0xf]
      %v4261 = vld [vmem:[%s4258 + $0xc] sm:$0xf]
      %v4262 = vld [vmem:[%s4258 + $0x10] sm:$0xf]
      %v4263 = vld [vmem:[%s4258 + $0x18] sm:$0xf]
      %v4264 = vld [vmem:[%s4258 + $0x1c] sm:$0xf]
      %v4265 = vld [vmem:[%s4258 + $0x24] sm:$0xf]
      %v4266 = vld [vmem:[%s4258 + $0x28] sm:$0xf]
      %v4267 = vld [vmem:[%s4258 + $0x30] sm:$0xf]
      %v4268 = vld [vmem:[%s4258 + $0x34] sm:$0xf]
      %v4269 = vld [vmem:[%s4258 + $0x3c] sm:$0xf]
      %v4270 = vld [vmem:[%s4258 + $0x40] sm:$0xf]
      %v4271 = vld [vmem:[%s4258 + $0x48] sm:$0xf]
      %v4272 = vld [vmem:[%s4258 + $0x4c] sm:$0xf]
      %v4273 = vld [vmem:[%s4258 + $0x54] sm:$0xf]
      %v4274 = vld [vmem:[%s4258 + $0x58] sm:$0xf]
      %v4275 = vld [vmem:[%s4258 + $0x60] sm:$0xf]
      %v4276 = vld [vmem:[%s4258 + $0x64] sm:$0xf]
      %v4277 = vld [vmem:[%s4258 + $0x6c] sm:$0xf]
      %v4278 = vld [vmem:[%s4258 + $0x70] sm:$0xf]
      %v4279 = vld [vmem:[%s4258 + $0x78] sm:$0xf]
      %v4280 = vld [vmem:[%s4258 + $0x7c] sm:$0xf]
      %v4281 = vld [vmem:[%s4258 + $0x84] sm:$0xf]
      %v4282 = vld [vmem:[%s4258 + $0x88] sm:$0xf]
      %v4283 = vld [vmem:[%s4258 + $0x90] sm:$0xf]
      %v4284 = vld [vmem:[%s4258 + $0x94] sm:$0xf]
      %v4285 = vld [vmem:[%s4258 + $0x9c] sm:$0xf]
      %v4286 = vld [vmem:[%s4258 + $0xa0] sm:$0xf]
      %v4287 = vld [vmem:[%s4258 + $0xa8] sm:$0xf]
      %v4288 = vld [vmem:[%s4258 + $0xac] sm:$0xf]
      %v4289 = vld [vmem:[%s4258 + $0xb4] sm:$0xf]
      %v4290 = vld [vmem:[%s4258 + $0xb8] sm:$0xf]
      %s4291 = scalar_lea.vmem %s1, 384
      %v4292 = vld [vmem:[%s4291] sm:$0xf]
      %v4293 = vld [vmem:[%s4291 + $0x4] sm:$0xf]
      %v4294 = vld [vmem:[%s4291 + $0x8] sm:$0xf]
      %v4295 = vld [vmem:[%s4291 + $0xc] sm:$0xf]
      %v4296 = vld [vmem:[%s4291 + $0x10] sm:$0xf]
      %v4297 = vld [vmem:[%s4291 + $0x14] sm:$0xf]
      %v4298 = vld [vmem:[%s4291 + $0x18] sm:$0xf]
      %v4299 = vld [vmem:[%s4291 + $0x1c] sm:$0xf]
      %v4300 = vld [vmem:[%s4291 + $0x20] sm:$0xf]
      %v4301 = vld [vmem:[%s4291 + $0x24] sm:$0xf]
      %v4302 = vld [vmem:[%s4291 + $0x28] sm:$0xf]
      %v4303 = vld [vmem:[%s4291 + $0x2c] sm:$0xf]
      %v4304 = vld [vmem:[%s4291 + $0x30] sm:$0xf]
      %v4305 = vld [vmem:[%s4291 + $0x34] sm:$0xf]
      %v4306 = vld [vmem:[%s4291 + $0x38] sm:$0xf]
      %v4307 = vld [vmem:[%s4291 + $0x3c] sm:$0xf]
      %v4340 = vunpack.c.l.b16 %v4259
      %v4341 = vunpack.c.l.b16 %v4260
      %v4342 = vunpack.c.l.b16 %v4261
      %v4343 = vunpack.c.l.b16 %v4262
      %v4344 = vunpack.c.l.b16 %v4263
      %v4345 = vunpack.c.l.b16 %v4264
      %v4346 = vunpack.c.l.b16 %v4265
      %v4347 = vunpack.c.l.b16 %v4266
      %v4348 = vunpack.c.l.b16 %v4267
      %v4349 = vunpack.c.l.b16 %v4268
      %v4350 = vunpack.c.l.b16 %v4269
      %v4351 = vunpack.c.l.b16 %v4270
      %v4352 = vunpack.c.l.b16 %v4271
      %v4353 = vunpack.c.l.b16 %v4272
      %v4354 = vunpack.c.l.b16 %v4273
      %v4355 = vunpack.c.l.b16 %v4274
      %v4356 = vunpack.c.l.b16 %v4275
      %v4357 = vunpack.c.l.b16 %v4276
      %v4358 = vunpack.c.l.b16 %v4277
      %v4359 = vunpack.c.l.b16 %v4278
      %v4360 = vunpack.c.l.b16 %v4279
      %v4361 = vunpack.c.l.b16 %v4280
      %v4362 = vunpack.c.l.b16 %v4281
      %v4363 = vunpack.c.l.b16 %v4282
      %v4364 = vunpack.c.l.b16 %v4283
      %v4365 = vunpack.c.l.b16 %v4284
      %v4366 = vunpack.c.l.b16 %v4285
      %v4367 = vunpack.c.l.b16 %v4286
      %v4368 = vunpack.c.l.b16 %v4287
      %v4369 = vunpack.c.l.b16 %v4288
      %v4370 = vunpack.c.l.b16 %v4289
      %v4371 = vunpack.c.l.b16 %v4290
      %v4372 = vpack.c.b16 %v4341, %v4340
      %v4373 = vpack.c.b16 %v4343, %v4342
      %v4374 = vpack.c.b16 %v4345, %v4344
      %v4375 = vpack.c.b16 %v4347, %v4346
      %v4376 = vpack.c.b16 %v4349, %v4348
      %v4377 = vpack.c.b16 %v4351, %v4350
      %v4378 = vpack.c.b16 %v4353, %v4352
      %v4379 = vpack.c.b16 %v4355, %v4354
      %v4380 = vpack.c.b16 %v4357, %v4356
      %v4381 = vpack.c.b16 %v4359, %v4358
      %v4382 = vpack.c.b16 %v4361, %v4360
      %v4383 = vpack.c.b16 %v4363, %v4362
      %v4384 = vpack.c.b16 %v4365, %v4364
      %v4385 = vpack.c.b16 %v4367, %v4366
      %v4386 = vpack.c.b16 %v4369, %v4368
      %v4387 = vpack.c.b16 %v4371, %v4370
      %v4420 = vunpack.c.l.b16 %v4292
      %v4421 = vunpack.c.l.b16 %v4293
      %v4422 = vunpack.c.l.b16 %v4294
      %v4423 = vunpack.c.l.b16 %v4295
      %v4424 = vunpack.c.l.b16 %v4296
      %v4425 = vunpack.c.l.b16 %v4297
      %v4426 = vunpack.c.l.b16 %v4298
      %v4427 = vunpack.c.l.b16 %v4299
      %v4428 = vunpack.c.l.b16 %v4300
      %v4429 = vunpack.c.l.b16 %v4301
      %v4430 = vunpack.c.l.b16 %v4302
      %v4431 = vunpack.c.l.b16 %v4303
      %v4432 = vunpack.c.l.b16 %v4304
      %v4433 = vunpack.c.l.b16 %v4305
      %v4434 = vunpack.c.l.b16 %v4306
      %v4435 = vunpack.c.l.b16 %v4307
      %v4436 = vpack.c.b16 %v4421, %v4420
      %v4437 = vpack.c.b16 %v4423, %v4422
      %v4438 = vpack.c.b16 %v4425, %v4424
      %v4439 = vpack.c.b16 %v4427, %v4426
      %v4440 = vpack.c.b16 %v4429, %v4428
      %v4441 = vpack.c.b16 %v4431, %v4430
      %v4442 = vpack.c.b16 %v4433, %v4432
      %v4443 = vpack.c.b16 %v4435, %v4434
      %4452 = vmatprep.subr.bf16.mxu0 0
      %4453 = vmatpush1.bf16.msra.mxu0 %v4443
      %4454 = vmatprep.subr.bf16.mxu0 0
      %4455 = vmatpush1.bf16.msra.mxu0 %v4442
      %4456 = vmatprep.subr.bf16.mxu0 0
      %4457 = vmatpush1.bf16.msra.mxu0 %v4441
      %4458 = vmatprep.subr.bf16.mxu0 0
      %4459 = vmatpush1.bf16.msra.mxu0 %v4440
      %4460 = vmatprep.subr.bf16.mxu0 0
      %4461 = vmatpush1.bf16.msra.mxu0 %v4439
      %4462 = vmatprep.subr.bf16.mxu0 0
      %4463 = vmatpush1.bf16.msra.mxu0 %v4438
      %4464 = vmatprep.subr.bf16.mxu0 0
      %4465 = vmatpush1.bf16.msra.mxu0 %v4437
      %4466 = vmatprep.subr.bf16.mxu0 0
      %4467 = vmatpush1.bf16.msra.mxu0 %v4436
      %4468 = vmatprep.subr.bf16.mxu0 0
      %4469 = vmatpush2.bf16.msra.mxu0 0
      %4470 = vmatprep.subr.bf16.mxu0 0
      %4471 = vmatpush2.bf16.msra.mxu0 0
      %4472 = vmatprep.subr.bf16.mxu0 0
      %4473 = vmatpush2.bf16.msra.mxu0 0
      %4474 = vmatprep.subr.bf16.mxu0 0
      %4475 = vmatpush2.bf16.msra.mxu0 0
      %4476 = vmatprep.subr.bf16.mxu0 0
      %4477 = vmatpush2.bf16.msra.mxu0 0
      %4478 = vmatprep.subr.bf16.mxu0 0
      %4479 = vmatpush2.bf16.msra.mxu0 0
      %4480 = vmatprep.subr.bf16.mxu0 0
      %4481 = vmatpush2.bf16.msra.mxu0 0
      %4482 = vmatprep.subr.bf16.mxu0 0
      %4483 = vmatpush2.bf16.msra.mxu0 0
      %4484 = vmatprep.mubr.bf16.mxu0 0
      %4485 = vmatmul.mubr.bf16.gmra.mxu0 %v4372
      %v4486 = vpop.f32.mrf.mxu0
      %v4487 = vadd.f32 0.0, %v4486
      %v4488 = vpop.f32.mrf.mxu0
      %v4489 = vpop.f32.mrf.mxu0
      %v4490 = vadd.f32 0.0, %v4489
      %v4491 = vpop.f32.mrf.mxu0
      %4492 = vmatprep.mubr.bf16.mxu0 0
      %4493 = vmatmul.mubr.bf16.gmra.mxu0 %v4373
      %v4494 = vpop.f32.mrf.mxu0
      %v4495 = vadd.f32 0.0, %v4494
      %v4496 = vpop.f32.mrf.mxu0
      %v4497 = vpop.f32.mrf.mxu0
      %v4498 = vadd.f32 0.0, %v4497
      %v4499 = vpop.f32.mrf.mxu0
      %4500 = vmatprep.mubr.bf16.mxu0 0
      %4501 = vmatmul.mubr.bf16.gmra.mxu0 %v4374
      %v4502 = vpop.f32.mrf.mxu0
      %v4503 = vadd.f32 0.0, %v4502
      %v4504 = vpop.f32.mrf.mxu0
      %v4505 = vpop.f32.mrf.mxu0
      %v4506 = vadd.f32 0.0, %v4505
      %v4507 = vpop.f32.mrf.mxu0
      %4508 = vmatprep.mubr.bf16.mxu0 0
      %4509 = vmatmul.mubr.bf16.gmra.mxu0 %v4375
      %v4510 = vpop.f32.mrf.mxu0
      %v4511 = vadd.f32 0.0, %v4510
      %v4512 = vpop.f32.mrf.mxu0
      %v4513 = vpop.f32.mrf.mxu0
      %v4514 = vadd.f32 0.0, %v4513
      %v4515 = vpop.f32.mrf.mxu0
      %4516 = vmatprep.mubr.bf16.mxu0 0
      %4517 = vmatmul.mubr.bf16.gmra.mxu0 %v4376
      %v4518 = vpop.f32.mrf.mxu0
      %v4519 = vadd.f32 0.0, %v4518
      %v4520 = vpop.f32.mrf.mxu0
      %v4521 = vpop.f32.mrf.mxu0
      %v4522 = vadd.f32 0.0, %v4521
      %v4523 = vpop.f32.mrf.mxu0
      %4524 = vmatprep.mubr.bf16.mxu0 0
      %4525 = vmatmul.mubr.bf16.gmra.mxu0 %v4377
      %v4526 = vpop.f32.mrf.mxu0
      %v4527 = vadd.f32 0.0, %v4526
      %v4528 = vpop.f32.mrf.mxu0
      %v4529 = vpop.f32.mrf.mxu0
      %v4530 = vadd.f32 0.0, %v4529
      %v4531 = vpop.f32.mrf.mxu0
      %4532 = vmatprep.mubr.bf16.mxu0 0
      %4533 = vmatmul.mubr.bf16.gmra.mxu0 %v4378
      %v4534 = vpop.f32.mrf.mxu0
      %v4535 = vadd.f32 0.0, %v4534
      %v4536 = vpop.f32.mrf.mxu0
      %v4537 = vpop.f32.mrf.mxu0
      %v4538 = vadd.f32 0.0, %v4537
      %v4539 = vpop.f32.mrf.mxu0
      %4540 = vmatprep.mubr.bf16.mxu0 0
      %4541 = vmatmul.mubr.bf16.gmra.mxu0 %v4379
      %v4542 = vpop.f32.mrf.mxu0
      %v4543 = vadd.f32 0.0, %v4542
      %v4544 = vpop.f32.mrf.mxu0
      %v4545 = vpop.f32.mrf.mxu0
      %v4546 = vadd.f32 0.0, %v4545
      %v4547 = vpop.f32.mrf.mxu0
      %4548 = vmatprep.mubr.bf16.mxu0 0
      %4549 = vmatmul.mubr.bf16.gmra.mxu0 %v4380
      %v4550 = vpop.f32.mrf.mxu0
      %v4551 = vadd.f32 0.0, %v4550
      %v4552 = vpop.f32.mrf.mxu0
      %v4553 = vpop.f32.mrf.mxu0
      %v4554 = vadd.f32 0.0, %v4553
      %v4555 = vpop.f32.mrf.mxu0
      %4556 = vmatprep.mubr.bf16.mxu0 0
      %4557 = vmatmul.mubr.bf16.gmra.mxu0 %v4381
      %v4558 = vpop.f32.mrf.mxu0
      %v4559 = vadd.f32 0.0, %v4558
      %v4560 = vpop.f32.mrf.mxu0
      %v4561 = vpop.f32.mrf.mxu0
      %v4562 = vadd.f32 0.0, %v4561
      %v4563 = vpop.f32.mrf.mxu0
      %4564 = vmatprep.mubr.bf16.mxu0 0
      %4565 = vmatmul.mubr.bf16.gmra.mxu0 %v4382
      %v4566 = vpop.f32.mrf.mxu0
      %v4567 = vadd.f32 0.0, %v4566
      %v4568 = vpop.f32.mrf.mxu0
      %v4569 = vpop.f32.mrf.mxu0
      %v4570 = vadd.f32 0.0, %v4569
      %v4571 = vpop.f32.mrf.mxu0
      %4572 = vmatprep.mubr.bf16.mxu0 0
      %4573 = vmatmul.mubr.bf16.gmra.mxu0 %v4383
      %v4574 = vpop.f32.mrf.mxu0
      %v4575 = vadd.f32 0.0, %v4574
      %v4576 = vpop.f32.mrf.mxu0
      %v4577 = vpop.f32.mrf.mxu0
      %v4578 = vadd.f32 0.0, %v4577
      %v4579 = vpop.f32.mrf.mxu0
      %4580 = vmatprep.mubr.bf16.mxu0 0
      %4581 = vmatmul.mubr.bf16.gmra.mxu0 %v4384
      %v4582 = vpop.f32.mrf.mxu0
      %v4583 = vadd.f32 0.0, %v4582
      %v4584 = vpop.f32.mrf.mxu0
      %v4585 = vpop.f32.mrf.mxu0
      %v4586 = vadd.f32 0.0, %v4585
      %v4587 = vpop.f32.mrf.mxu0
      %4588 = vmatprep.mubr.bf16.mxu0 0
      %4589 = vmatmul.mubr.bf16.gmra.mxu0 %v4385
      %v4590 = vpop.f32.mrf.mxu0
      %v4591 = vadd.f32 0.0, %v4590
      %v4592 = vpop.f32.mrf.mxu0
      %v4593 = vpop.f32.mrf.mxu0
      %v4594 = vadd.f32 0.0, %v4593
      %v4595 = vpop.f32.mrf.mxu0
      %4596 = vmatprep.mubr.bf16.mxu0 0
      %4597 = vmatmul.mubr.bf16.gmra.mxu0 %v4386
      %v4598 = vpop.f32.mrf.mxu0
      %v4599 = vadd.f32 0.0, %v4598
      %v4600 = vpop.f32.mrf.mxu0
      %v4601 = vpop.f32.mrf.mxu0
      %v4602 = vadd.f32 0.0, %v4601
      %v4603 = vpop.f32.mrf.mxu0
      %4604 = vmatprep.mubr.bf16.mxu0 0
      %4605 = vmatmul.mubr.bf16.gmra.mxu0 %v4387
      %v4606 = vpop.f32.mrf.mxu0
      %v4607 = vadd.f32 0.0, %v4606
      %v4608 = vpop.f32.mrf.mxu0
      %v4609 = vpop.f32.mrf.mxu0
      %v4610 = vadd.f32 0.0, %v4609
      %v4611 = vpop.f32.mrf.mxu0
      %4612 = vdwg.mxu0
      %v4613 = vadd.f32 %v4226, %v4487
      %v4614 = vadd.f32 %v4227, %v4490
      %v4615 = vadd.f32 %v4228, %v4495
      %v4616 = vadd.f32 %v4229, %v4498
      %v4617 = vadd.f32 %v4230, %v4503
      %v4618 = vadd.f32 %v4231, %v4506
      %v4619 = vadd.f32 %v4232, %v4511
      %v4620 = vadd.f32 %v4233, %v4514
      %v4621 = vadd.f32 %v4234, %v4519
      %v4622 = vadd.f32 %v4235, %v4522
      %v4623 = vadd.f32 %v4236, %v4527
      %v4624 = vadd.f32 %v4237, %v4530
      %v4625 = vadd.f32 %v4238, %v4535
      %v4626 = vadd.f32 %v4239, %v4538
      %v4627 = vadd.f32 %v4240, %v4543
      %v4628 = vadd.f32 %v4241, %v4546
      %v4629 = vadd.f32 %v4242, %v4551
      %v4630 = vadd.f32 %v4243, %v4554
      %v4631 = vadd.f32 %v4244, %v4559
      %v4632 = vadd.f32 %v4245, %v4562
      %v4633 = vadd.f32 %v4246, %v4567
      %v4634 = vadd.f32 %v4247, %v4570
      %v4635 = vadd.f32 %v4248, %v4575
      %v4636 = vadd.f32 %v4249, %v4578
      %v4637 = vadd.f32 %v4250, %v4583
      %v4638 = vadd.f32 %v4251, %v4586
      %v4639 = vadd.f32 %v4252, %v4591
      %v4640 = vadd.f32 %v4253, %v4594
      %v4641 = vadd.f32 %v4254, %v4599
      %v4642 = vadd.f32 %v4255, %v4602
      %v4643 = vadd.f32 %v4256, %v4607
      %v4644 = vadd.f32 %v4257, %v4610
      %v4645 = vld [vmem:[%s4258] sm:$0xf]
      %v4646 = vld [vmem:[%s4258 + $0x4] sm:$0xf]
      %v4647 = vld [vmem:[%s4258 + $0x8] sm:$0x1]
      %v4648 = vld [vmem:[%s4258 + $0xc] sm:$0xf]
      %v4649 = vld [vmem:[%s4258 + $0x10] sm:$0xf]
      %v4650 = vld [vmem:[%s4258 + $0x14] sm:$0x1]
      %v4651 = vld [vmem:[%s4258 + $0x18] sm:$0xf]
      %v4652 = vld [vmem:[%s4258 + $0x1c] sm:$0xf]
      %v4653 = vld [vmem:[%s4258 + $0x20] sm:$0x1]
      %v4654 = vld [vmem:[%s4258 + $0x24] sm:$0xf]
      %v4655 = vld [vmem:[%s4258 + $0x28] sm:$0xf]
      %v4656 = vld [vmem:[%s4258 + $0x2c] sm:$0x1]
      %v4657 = vld [vmem:[%s4258 + $0x30] sm:$0xf]
      %v4658 = vld [vmem:[%s4258 + $0x34] sm:$0xf]
      %v4659 = vld [vmem:[%s4258 + $0x38] sm:$0x1]
      %v4660 = vld [vmem:[%s4258 + $0x3c] sm:$0xf]
      %v4661 = vld [vmem:[%s4258 + $0x40] sm:$0xf]
      %v4662 = vld [vmem:[%s4258 + $0x44] sm:$0x1]
      %v4663 = vld [vmem:[%s4258 + $0x48] sm:$0xf]
      %v4664 = vld [vmem:[%s4258 + $0x4c] sm:$0xf]
      %v4665 = vld [vmem:[%s4258 + $0x50] sm:$0x1]
      %v4666 = vld [vmem:[%s4258 + $0x54] sm:$0xf]
      %v4667 = vld [vmem:[%s4258 + $0x58] sm:$0xf]
      %v4668 = vld [vmem:[%s4258 + $0x5c] sm:$0x1]
      %v4669 = vld [vmem:[%s4258 + $0x60] sm:$0xf]
      %v4670 = vld [vmem:[%s4258 + $0x64] sm:$0xf]
      %v4671 = vld [vmem:[%s4258 + $0x68] sm:$0x1]
      %v4672 = vld [vmem:[%s4258 + $0x6c] sm:$0xf]
      %v4673 = vld [vmem:[%s4258 + $0x70] sm:$0xf]
      %v4674 = vld [vmem:[%s4258 + $0x74] sm:$0x1]
      %v4675 = vld [vmem:[%s4258 + $0x78] sm:$0xf]
      %v4676 = vld [vmem:[%s4258 + $0x7c] sm:$0xf]
      %v4677 = vld [vmem:[%s4258 + $0x80] sm:$0x1]
      %v4678 = vld [vmem:[%s4258 + $0x84] sm:$0xf]
      %v4679 = vld [vmem:[%s4258 + $0x88] sm:$0xf]
      %v4680 = vld [vmem:[%s4258 + $0x8c] sm:$0x1]
      %v4681 = vld [vmem:[%s4258 + $0x90] sm:$0xf]
      %v4682 = vld [vmem:[%s4258 + $0x94] sm:$0xf]
      %v4683 = vld [vmem:[%s4258 + $0x98] sm:$0x1]
      %v4684 = vld [vmem:[%s4258 + $0x9c] sm:$0xf]
      %v4685 = vld [vmem:[%s4258 + $0xa0] sm:$0xf]
      %v4686 = vld [vmem:[%s4258 + $0xa4] sm:$0x1]
      %v4687 = vld [vmem:[%s4258 + $0xa8] sm:$0xf]
      %v4688 = vld [vmem:[%s4258 + $0xac] sm:$0xf]
      %v4689 = vld [vmem:[%s4258 + $0xb0] sm:$0x1]
      %v4690 = vld [vmem:[%s4258 + $0xb4] sm:$0xf]
      %v4691 = vld [vmem:[%s4258 + $0xb8] sm:$0xf]
      %v4692 = vld [vmem:[%s4258 + $0xbc] sm:$0x1]
      %v4694 = vshrl.u32 %v4645, 16
      %v4696 = vrot.slane %v4694, 4
      %v4697 = vshll.u32 %v4645, 16
      %v4699 = vrot.slane %v4697, 5
      %v4700 = vor.u32 %v4696, %v4699
      %v4701 = vrot.slane %v4700, 4
      %v4703 = vshll.u32 %v4646, 16
      %v4705 = vrot.slane %v4703, 5
      %v4706 = vsel %vm1155, %v4701, %v4705
      %v4707 = vshrl.u32 %v4646, 16
      %v4709 = vrot.slane %v4707, 4
      %v4710 = vor.u32 %v4709, %v4705
      %v4711 = vrot.slane %v4710, 4
      %v4713 = vshll.u32 %v4647, 16
      %v4715 = vrot.slane %v4713, 5
      %v4716 = vsel %vm1155, %v4711, %v4715
      %v4718 = vshrl.u32 %v4648, 16
      %v4720 = vrot.slane %v4718, 4
      %v4721 = vshll.u32 %v4648, 16
      %v4723 = vrot.slane %v4721, 5
      %v4724 = vor.u32 %v4720, %v4723
      %v4725 = vrot.slane %v4724, 4
      %v4727 = vshll.u32 %v4649, 16
      %v4729 = vrot.slane %v4727, 5
      %v4730 = vsel %vm1155, %v4725, %v4729
      %v4731 = vshrl.u32 %v4649, 16
      %v4733 = vrot.slane %v4731, 4
      %v4734 = vor.u32 %v4733, %v4729
      %v4735 = vrot.slane %v4734, 4
      %v4737 = vshll.u32 %v4650, 16
      %v4739 = vrot.slane %v4737, 5
      %v4740 = vsel %vm1155, %v4735, %v4739
      %v4742 = vshrl.u32 %v4651, 16
      %v4744 = vrot.slane %v4742, 4
      %v4745 = vshll.u32 %v4651, 16
      %v4747 = vrot.slane %v4745, 5
      %v4748 = vor.u32 %v4744, %v4747
      %v4749 = vrot.slane %v4748, 4
      %v4751 = vshll.u32 %v4652, 16
      %v4753 = vrot.slane %v4751, 5
      %v4754 = vsel %vm1155, %v4749, %v4753
      %v4755 = vshrl.u32 %v4652, 16
      %v4757 = vrot.slane %v4755, 4
      %v4758 = vor.u32 %v4757, %v4753
      %v4759 = vrot.slane %v4758, 4
      %v4761 = vshll.u32 %v4653, 16
      %v4763 = vrot.slane %v4761, 5
      %v4764 = vsel %vm1155, %v4759, %v4763
      %v4766 = vshrl.u32 %v4654, 16
      %v4768 = vrot.slane %v4766, 4
      %v4769 = vshll.u32 %v4654, 16
      %v4771 = vrot.slane %v4769, 5
      %v4772 = vor.u32 %v4768, %v4771
      %v4773 = vrot.slane %v4772, 4
      %v4775 = vshll.u32 %v4655, 16
      %v4777 = vrot.slane %v4775, 5
      %v4778 = vsel %vm1155, %v4773, %v4777
      %v4779 = vshrl.u32 %v4655, 16
      %v4781 = vrot.slane %v4779, 4
      %v4782 = vor.u32 %v4781, %v4777
      %v4783 = vrot.slane %v4782, 4
      %v4785 = vshll.u32 %v4656, 16
      %v4787 = vrot.slane %v4785, 5
      %v4788 = vsel %vm1155, %v4783, %v4787
      %v4790 = vshrl.u32 %v4657, 16
      %v4792 = vrot.slane %v4790, 4
      %v4793 = vshll.u32 %v4657, 16
      %v4795 = vrot.slane %v4793, 5
      %v4796 = vor.u32 %v4792, %v4795
      %v4797 = vrot.slane %v4796, 4
      %v4799 = vshll.u32 %v4658, 16
      %v4801 = vrot.slane %v4799, 5
      %v4802 = vsel %vm1155, %v4797, %v4801
      %v4803 = vshrl.u32 %v4658, 16
      %v4805 = vrot.slane %v4803, 4
      %v4806 = vor.u32 %v4805, %v4801
      %v4807 = vrot.slane %v4806, 4
      %v4809 = vshll.u32 %v4659, 16
      %v4811 = vrot.slane %v4809, 5
      %v4812 = vsel %vm1155, %v4807, %v4811
      %v4814 = vshrl.u32 %v4660, 16
      %v4816 = vrot.slane %v4814, 4
      %v4817 = vshll.u32 %v4660, 16
      %v4819 = vrot.slane %v4817, 5
      %v4820 = vor.u32 %v4816, %v4819
      %v4821 = vrot.slane %v4820, 4
      %v4823 = vshll.u32 %v4661, 16
      %v4825 = vrot.slane %v4823, 5
      %v4826 = vsel %vm1155, %v4821, %v4825
      %v4827 = vshrl.u32 %v4661, 16
      %v4829 = vrot.slane %v4827, 4
      %v4830 = vor.u32 %v4829, %v4825
      %v4831 = vrot.slane %v4830, 4
      %v4833 = vshll.u32 %v4662, 16
      %v4835 = vrot.slane %v4833, 5
      %v4836 = vsel %vm1155, %v4831, %v4835
      %v4838 = vshrl.u32 %v4663, 16
      %v4840 = vrot.slane %v4838, 4
      %v4841 = vshll.u32 %v4663, 16
      %v4843 = vrot.slane %v4841, 5
      %v4844 = vor.u32 %v4840, %v4843
      %v4845 = vrot.slane %v4844, 4
      %v4847 = vshll.u32 %v4664, 16
      %v4849 = vrot.slane %v4847, 5
      %v4850 = vsel %vm1155, %v4845, %v4849
      %v4851 = vshrl.u32 %v4664, 16
      %v4853 = vrot.slane %v4851, 4
      %v4854 = vor.u32 %v4853, %v4849
      %v4855 = vrot.slane %v4854, 4
      %v4857 = vshll.u32 %v4665, 16
      %v4859 = vrot.slane %v4857, 5
      %v4860 = vsel %vm1155, %v4855, %v4859
      %v4862 = vshrl.u32 %v4666, 16
      %v4864 = vrot.slane %v4862, 4
      %v4865 = vshll.u32 %v4666, 16
      %v4867 = vrot.slane %v4865, 5
      %v4868 = vor.u32 %v4864, %v4867
      %v4869 = vrot.slane %v4868, 4
      %v4871 = vshll.u32 %v4667, 16
      %v4873 = vrot.slane %v4871, 5
      %v4874 = vsel %vm1155, %v4869, %v4873
      %v4875 = vshrl.u32 %v4667, 16
      %v4877 = vrot.slane %v4875, 4
      %v4878 = vor.u32 %v4877, %v4873
      %v4879 = vrot.slane %v4878, 4
      %v4881 = vshll.u32 %v4668, 16
      %v4883 = vrot.slane %v4881, 5
      %v4884 = vsel %vm1155, %v4879, %v4883
      %v4886 = vshrl.u32 %v4669, 16
      %v4888 = vrot.slane %v4886, 4
      %v4889 = vshll.u32 %v4669, 16
      %v4891 = vrot.slane %v4889, 5
      %v4892 = vor.u32 %v4888, %v4891
      %v4893 = vrot.slane %v4892, 4
      %v4895 = vshll.u32 %v4670, 16
      %v4897 = vrot.slane %v4895, 5
      %v4898 = vsel %vm1155, %v4893, %v4897
      %v4899 = vshrl.u32 %v4670, 16
      %v4901 = vrot.slane %v4899, 4
      %v4902 = vor.u32 %v4901, %v4897
      %v4903 = vrot.slane %v4902, 4
      %v4905 = vshll.u32 %v4671, 16
      %v4907 = vrot.slane %v4905, 5
      %v4908 = vsel %vm1155, %v4903, %v4907
      %v4910 = vshrl.u32 %v4672, 16
      %v4912 = vrot.slane %v4910, 4
      %v4913 = vshll.u32 %v4672, 16
      %v4915 = vrot.slane %v4913, 5
      %v4916 = vor.u32 %v4912, %v4915
      %v4917 = vrot.slane %v4916, 4
      %v4919 = vshll.u32 %v4673, 16
      %v4921 = vrot.slane %v4919, 5
      %v4922 = vsel %vm1155, %v4917, %v4921
      %v4923 = vshrl.u32 %v4673, 16
      %v4925 = vrot.slane %v4923, 4
      %v4926 = vor.u32 %v4925, %v4921
      %v4927 = vrot.slane %v4926, 4
      %v4929 = vshll.u32 %v4674, 16
      %v4931 = vrot.slane %v4929, 5
      %v4932 = vsel %vm1155, %v4927, %v4931
      %v4934 = vshrl.u32 %v4675, 16
      %v4936 = vrot.slane %v4934, 4
      %v4937 = vshll.u32 %v4675, 16
      %v4939 = vrot.slane %v4937, 5
      %v4940 = vor.u32 %v4936, %v4939
      %v4941 = vrot.slane %v4940, 4
      %v4943 = vshll.u32 %v4676, 16
      %v4945 = vrot.slane %v4943, 5
      %v4946 = vsel %vm1155, %v4941, %v4945
      %v4947 = vshrl.u32 %v4676, 16
      %v4949 = vrot.slane %v4947, 4
      %v4950 = vor.u32 %v4949, %v4945
      %v4951 = vrot.slane %v4950, 4
      %v4953 = vshll.u32 %v4677, 16
      %v4955 = vrot.slane %v4953, 5
      %v4956 = vsel %vm1155, %v4951, %v4955
      %v4958 = vshrl.u32 %v4678, 16
      %v4960 = vrot.slane %v4958, 4
      %v4961 = vshll.u32 %v4678, 16
      %v4963 = vrot.slane %v4961, 5
      %v4964 = vor.u32 %v4960, %v4963
      %v4965 = vrot.slane %v4964, 4
      %v4967 = vshll.u32 %v4679, 16
      %v4969 = vrot.slane %v4967, 5
      %v4970 = vsel %vm1155, %v4965, %v4969
      %v4971 = vshrl.u32 %v4679, 16
      %v4973 = vrot.slane %v4971, 4
      %v4974 = vor.u32 %v4973, %v4969
      %v4975 = vrot.slane %v4974, 4
      %v4977 = vshll.u32 %v4680, 16
      %v4979 = vrot.slane %v4977, 5
      %v4980 = vsel %vm1155, %v4975, %v4979
      %v4982 = vshrl.u32 %v4681, 16
      %v4984 = vrot.slane %v4982, 4
      %v4985 = vshll.u32 %v4681, 16
      %v4987 = vrot.slane %v4985, 5
      %v4988 = vor.u32 %v4984, %v4987
      %v4989 = vrot.slane %v4988, 4
      %v4991 = vshll.u32 %v4682, 16
      %v4993 = vrot.slane %v4991, 5
      %v4994 = vsel %vm1155, %v4989, %v4993
      %v4995 = vshrl.u32 %v4682, 16
      %v4997 = vrot.slane %v4995, 4
      %v4998 = vor.u32 %v4997, %v4993
      %v4999 = vrot.slane %v4998, 4
      %v5001 = vshll.u32 %v4683, 16
      %v5003 = vrot.slane %v5001, 5
      %v5004 = vsel %vm1155, %v4999, %v5003
      %v5006 = vshrl.u32 %v4684, 16
      %v5008 = vrot.slane %v5006, 4
      %v5009 = vshll.u32 %v4684, 16
      %v5011 = vrot.slane %v5009, 5
      %v5012 = vor.u32 %v5008, %v5011
      %v5013 = vrot.slane %v5012, 4
      %v5015 = vshll.u32 %v4685, 16
      %v5017 = vrot.slane %v5015, 5
      %v5018 = vsel %vm1155, %v5013, %v5017
      %v5019 = vshrl.u32 %v4685, 16
      %v5021 = vrot.slane %v5019, 4
      %v5022 = vor.u32 %v5021, %v5017
      %v5023 = vrot.slane %v5022, 4
      %v5025 = vshll.u32 %v4686, 16
      %v5027 = vrot.slane %v5025, 5
      %v5028 = vsel %vm1155, %v5023, %v5027
      %v5030 = vshrl.u32 %v4687, 16
      %v5032 = vrot.slane %v5030, 4
      %v5033 = vshll.u32 %v4687, 16
      %v5035 = vrot.slane %v5033, 5
      %v5036 = vor.u32 %v5032, %v5035
      %v5037 = vrot.slane %v5036, 4
      %v5039 = vshll.u32 %v4688, 16
      %v5041 = vrot.slane %v5039, 5
      %v5042 = vsel %vm1155, %v5037, %v5041
      %v5043 = vshrl.u32 %v4688, 16
      %v5045 = vrot.slane %v5043, 4
      %v5046 = vor.u32 %v5045, %v5041
      %v5047 = vrot.slane %v5046, 4
      %v5049 = vshll.u32 %v4689, 16
      %v5051 = vrot.slane %v5049, 5
      %v5052 = vsel %vm1155, %v5047, %v5051
      %v5054 = vshrl.u32 %v4690, 16
      %v5056 = vrot.slane %v5054, 4
      %v5057 = vshll.u32 %v4690, 16
      %v5059 = vrot.slane %v5057, 5
      %v5060 = vor.u32 %v5056, %v5059
      %v5061 = vrot.slane %v5060, 4
      %v5063 = vshll.u32 %v4691, 16
      %v5065 = vrot.slane %v5063, 5
      %v5066 = vsel %vm1155, %v5061, %v5065
      %v5067 = vshrl.u32 %v4691, 16
      %v5069 = vrot.slane %v5067, 4
      %v5070 = vor.u32 %v5069, %v5065
      %v5071 = vrot.slane %v5070, 4
      %v5073 = vshll.u32 %v4692, 16
      %v5075 = vrot.slane %v5073, 5
      %v5076 = vsel %vm1155, %v5071, %v5075
      %s5077 = scalar_lea.vmem %s1, 448
      %v5078 = vld [vmem:[%s5077] sm:$0xf]
      %v5079 = vld [vmem:[%s5077 + $0x4] sm:$0xf]
      %v5080 = vld [vmem:[%s5077 + $0x8] sm:$0xf]
      %v5081 = vld [vmem:[%s5077 + $0xc] sm:$0xf]
      %v5082 = vld [vmem:[%s5077 + $0x10] sm:$0xf]
      %v5083 = vld [vmem:[%s5077 + $0x14] sm:$0xf]
      %v5084 = vld [vmem:[%s5077 + $0x18] sm:$0xf]
      %v5085 = vld [vmem:[%s5077 + $0x1c] sm:$0xf]
      %v5086 = vld [vmem:[%s5077 + $0x20] sm:$0xf]
      %v5087 = vld [vmem:[%s5077 + $0x24] sm:$0xf]
      %v5088 = vld [vmem:[%s5077 + $0x28] sm:$0xf]
      %v5089 = vld [vmem:[%s5077 + $0x2c] sm:$0xf]
      %v5090 = vld [vmem:[%s5077 + $0x30] sm:$0xf]
      %v5091 = vld [vmem:[%s5077 + $0x34] sm:$0xf]
      %v5092 = vld [vmem:[%s5077 + $0x38] sm:$0xf]
      %v5093 = vld [vmem:[%s5077 + $0x3c] sm:$0xf]
      %v5094 = vunpack.c.l.b16 %v4706
      %v5095 = vunpack.c.l.b16 %v4716
      %v5096 = vunpack.c.l.b16 %v4730
      %v5097 = vunpack.c.l.b16 %v4740
      %v5098 = vunpack.c.l.b16 %v4754
      %v5099 = vunpack.c.l.b16 %v4764
      %v5100 = vunpack.c.l.b16 %v4778
      %v5101 = vunpack.c.l.b16 %v4788
      %v5102 = vunpack.c.l.b16 %v4802
      %v5103 = vunpack.c.l.b16 %v4812
      %v5104 = vunpack.c.l.b16 %v4826
      %v5105 = vunpack.c.l.b16 %v4836
      %v5106 = vunpack.c.l.b16 %v4850
      %v5107 = vunpack.c.l.b16 %v4860
      %v5108 = vunpack.c.l.b16 %v4874
      %v5109 = vunpack.c.l.b16 %v4884
      %v5110 = vunpack.c.l.b16 %v4898
      %v5111 = vunpack.c.l.b16 %v4908
      %v5112 = vunpack.c.l.b16 %v4922
      %v5113 = vunpack.c.l.b16 %v4932
      %v5114 = vunpack.c.l.b16 %v4946
      %v5115 = vunpack.c.l.b16 %v4956
      %v5116 = vunpack.c.l.b16 %v4970
      %v5117 = vunpack.c.l.b16 %v4980
      %v5118 = vunpack.c.l.b16 %v4994
      %v5119 = vunpack.c.l.b16 %v5004
      %v5120 = vunpack.c.l.b16 %v5018
      %v5121 = vunpack.c.l.b16 %v5028
      %v5122 = vunpack.c.l.b16 %v5042
      %v5123 = vunpack.c.l.b16 %v5052
      %v5124 = vunpack.c.l.b16 %v5066
      %v5125 = vunpack.c.l.b16 %v5076
      %v5126 = vpack.c.b16 %v5095, %v5094
      %v5127 = vpack.c.b16 %v5097, %v5096
      %v5128 = vpack.c.b16 %v5099, %v5098
      %v5129 = vpack.c.b16 %v5101, %v5100
      %v5130 = vpack.c.b16 %v5103, %v5102
      %v5131 = vpack.c.b16 %v5105, %v5104
      %v5132 = vpack.c.b16 %v5107, %v5106
      %v5133 = vpack.c.b16 %v5109, %v5108
      %v5134 = vpack.c.b16 %v5111, %v5110
      %v5135 = vpack.c.b16 %v5113, %v5112
      %v5136 = vpack.c.b16 %v5115, %v5114
      %v5137 = vpack.c.b16 %v5117, %v5116
      %v5138 = vpack.c.b16 %v5119, %v5118
      %v5139 = vpack.c.b16 %v5121, %v5120
      %v5140 = vpack.c.b16 %v5123, %v5122
      %v5141 = vpack.c.b16 %v5125, %v5124
      %v5174 = vunpack.c.l.b16 %v5078
      %v5175 = vunpack.c.l.b16 %v5079
      %v5176 = vunpack.c.l.b16 %v5080
      %v5177 = vunpack.c.l.b16 %v5081
      %v5178 = vunpack.c.l.b16 %v5082
      %v5179 = vunpack.c.l.b16 %v5083
      %v5180 = vunpack.c.l.b16 %v5084
      %v5181 = vunpack.c.l.b16 %v5085
      %v5182 = vunpack.c.l.b16 %v5086
      %v5183 = vunpack.c.l.b16 %v5087
      %v5184 = vunpack.c.l.b16 %v5088
      %v5185 = vunpack.c.l.b16 %v5089
      %v5186 = vunpack.c.l.b16 %v5090
      %v5187 = vunpack.c.l.b16 %v5091
      %v5188 = vunpack.c.l.b16 %v5092
      %v5189 = vunpack.c.l.b16 %v5093
      %v5190 = vpack.c.b16 %v5175, %v5174
      %v5191 = vpack.c.b16 %v5177, %v5176
      %v5192 = vpack.c.b16 %v5179, %v5178
      %v5193 = vpack.c.b16 %v5181, %v5180
      %v5194 = vpack.c.b16 %v5183, %v5182
      %v5195 = vpack.c.b16 %v5185, %v5184
      %v5196 = vpack.c.b16 %v5187, %v5186
      %v5197 = vpack.c.b16 %v5189, %v5188
      %5206 = vmatprep.subr.bf16.mxu0 0
      %5207 = vmatpush1.bf16.msra.mxu0 %v5197
      %5208 = vmatprep.subr.bf16.mxu0 0
      %5209 = vmatpush1.bf16.msra.mxu0 %v5196
      %5210 = vmatprep.subr.bf16.mxu0 0
      %5211 = vmatpush1.bf16.msra.mxu0 %v5195
      %5212 = vmatprep.subr.bf16.mxu0 0
      %5213 = vmatpush1.bf16.msra.mxu0 %v5194
      %5214 = vmatprep.subr.bf16.mxu0 0
      %5215 = vmatpush1.bf16.msra.mxu0 %v5193
      %5216 = vmatprep.subr.bf16.mxu0 0
      %5217 = vmatpush1.bf16.msra.mxu0 %v5192
      %5218 = vmatprep.subr.bf16.mxu0 0
      %5219 = vmatpush1.bf16.msra.mxu0 %v5191
      %5220 = vmatprep.subr.bf16.mxu0 0
      %5221 = vmatpush1.bf16.msra.mxu0 %v5190
      %5222 = vmatprep.subr.bf16.mxu0 0
      %5223 = vmatpush2.bf16.msra.mxu0 0
      %5224 = vmatprep.subr.bf16.mxu0 0
      %5225 = vmatpush2.bf16.msra.mxu0 0
      %5226 = vmatprep.subr.bf16.mxu0 0
      %5227 = vmatpush2.bf16.msra.mxu0 0
      %5228 = vmatprep.subr.bf16.mxu0 0
      %5229 = vmatpush2.bf16.msra.mxu0 0
      %5230 = vmatprep.subr.bf16.mxu0 0
      %5231 = vmatpush2.bf16.msra.mxu0 0
      %5232 = vmatprep.subr.bf16.mxu0 0
      %5233 = vmatpush2.bf16.msra.mxu0 0
      %5234 = vmatprep.subr.bf16.mxu0 0
      %5235 = vmatpush2.bf16.msra.mxu0 0
      %5236 = vmatprep.subr.bf16.mxu0 0
      %5237 = vmatpush2.bf16.msra.mxu0 0
      %5238 = vmatprep.mubr.bf16.mxu0 0
      %5239 = vmatmul.mubr.bf16.gmra.mxu0 %v5126
      %v5240 = vpop.f32.mrf.mxu0
      %v5241 = vadd.f32 0.0, %v5240
      %v5242 = vpop.f32.mrf.mxu0
      %v5243 = vpop.f32.mrf.mxu0
      %v5244 = vadd.f32 0.0, %v5243
      %v5245 = vpop.f32.mrf.mxu0
      %5246 = vmatprep.mubr.bf16.mxu0 0
      %5247 = vmatmul.mubr.bf16.gmra.mxu0 %v5127
      %v5248 = vpop.f32.mrf.mxu0
      %v5249 = vadd.f32 0.0, %v5248
      %v5250 = vpop.f32.mrf.mxu0
      %v5251 = vpop.f32.mrf.mxu0
      %v5252 = vadd.f32 0.0, %v5251
      %v5253 = vpop.f32.mrf.mxu0
      %5254 = vmatprep.mubr.bf16.mxu0 0
      %5255 = vmatmul.mubr.bf16.gmra.mxu0 %v5128
      %v5256 = vpop.f32.mrf.mxu0
      %v5257 = vadd.f32 0.0, %v5256
      %v5258 = vpop.f32.mrf.mxu0
      %v5259 = vpop.f32.mrf.mxu0
      %v5260 = vadd.f32 0.0, %v5259
      %v5261 = vpop.f32.mrf.mxu0
      %5262 = vmatprep.mubr.bf16.mxu0 0
      %5263 = vmatmul.mubr.bf16.gmra.mxu0 %v5129
      %v5264 = vpop.f32.mrf.mxu0
      %v5265 = vadd.f32 0.0, %v5264
      %v5266 = vpop.f32.mrf.mxu0
      %v5267 = vpop.f32.mrf.mxu0
      %v5268 = vadd.f32 0.0, %v5267
      %v5269 = vpop.f32.mrf.mxu0
      %5270 = vmatprep.mubr.bf16.mxu0 0
      %5271 = vmatmul.mubr.bf16.gmra.mxu0 %v5130
      %v5272 = vpop.f32.mrf.mxu0
      %v5273 = vadd.f32 0.0, %v5272
      %v5274 = vpop.f32.mrf.mxu0
      %v5275 = vpop.f32.mrf.mxu0
      %v5276 = vadd.f32 0.0, %v5275
      %v5277 = vpop.f32.mrf.mxu0
      %5278 = vmatprep.mubr.bf16.mxu0 0
      %5279 = vmatmul.mubr.bf16.gmra.mxu0 %v5131
      %v5280 = vpop.f32.mrf.mxu0
      %v5281 = vadd.f32 0.0, %v5280
      %v5282 = vpop.f32.mrf.mxu0
      %v5283 = vpop.f32.mrf.mxu0
      %v5284 = vadd.f32 0.0, %v5283
      %v5285 = vpop.f32.mrf.mxu0
      %5286 = vmatprep.mubr.bf16.mxu0 0
      %5287 = vmatmul.mubr.bf16.gmra.mxu0 %v5132
      %v5288 = vpop.f32.mrf.mxu0
      %v5289 = vadd.f32 0.0, %v5288
      %v5290 = vpop.f32.mrf.mxu0
      %v5291 = vpop.f32.mrf.mxu0
      %v5292 = vadd.f32 0.0, %v5291
      %v5293 = vpop.f32.mrf.mxu0
      %5294 = vmatprep.mubr.bf16.mxu0 0
      %5295 = vmatmul.mubr.bf16.gmra.mxu0 %v5133
      %v5296 = vpop.f32.mrf.mxu0
      %v5297 = vadd.f32 0.0, %v5296
      %v5298 = vpop.f32.mrf.mxu0
      %v5299 = vpop.f32.mrf.mxu0
      %v5300 = vadd.f32 0.0, %v5299
      %v5301 = vpop.f32.mrf.mxu0
      %5302 = vmatprep.mubr.bf16.mxu0 0
      %5303 = vmatmul.mubr.bf16.gmra.mxu0 %v5134
      %v5304 = vpop.f32.mrf.mxu0
      %v5305 = vadd.f32 0.0, %v5304
      %v5306 = vpop.f32.mrf.mxu0
      %v5307 = vpop.f32.mrf.mxu0
      %v5308 = vadd.f32 0.0, %v5307
      %v5309 = vpop.f32.mrf.mxu0
      %5310 = vmatprep.mubr.bf16.mxu0 0
      %5311 = vmatmul.mubr.bf16.gmra.mxu0 %v5135
      %v5312 = vpop.f32.mrf.mxu0
      %v5313 = vadd.f32 0.0, %v5312
      %v5314 = vpop.f32.mrf.mxu0
      %v5315 = vpop.f32.mrf.mxu0
      %v5316 = vadd.f32 0.0, %v5315
      %v5317 = vpop.f32.mrf.mxu0
      %5318 = vmatprep.mubr.bf16.mxu0 0
      %5319 = vmatmul.mubr.bf16.gmra.mxu0 %v5136
      %v5320 = vpop.f32.mrf.mxu0
      %v5321 = vadd.f32 0.0, %v5320
      %v5322 = vpop.f32.mrf.mxu0
      %v5323 = vpop.f32.mrf.mxu0
      %v5324 = vadd.f32 0.0, %v5323
      %v5325 = vpop.f32.mrf.mxu0
      %5326 = vmatprep.mubr.bf16.mxu0 0
      %5327 = vmatmul.mubr.bf16.gmra.mxu0 %v5137
      %v5328 = vpop.f32.mrf.mxu0
      %v5329 = vadd.f32 0.0, %v5328
      %v5330 = vpop.f32.mrf.mxu0
      %v5331 = vpop.f32.mrf.mxu0
      %v5332 = vadd.f32 0.0, %v5331
      %v5333 = vpop.f32.mrf.mxu0
      %5334 = vmatprep.mubr.bf16.mxu0 0
      %5335 = vmatmul.mubr.bf16.gmra.mxu0 %v5138
      %v5336 = vpop.f32.mrf.mxu0
      %v5337 = vadd.f32 0.0, %v5336
      %v5338 = vpop.f32.mrf.mxu0
      %v5339 = vpop.f32.mrf.mxu0
      %v5340 = vadd.f32 0.0, %v5339
      %v5341 = vpop.f32.mrf.mxu0
      %5342 = vmatprep.mubr.bf16.mxu0 0
      %5343 = vmatmul.mubr.bf16.gmra.mxu0 %v5139
      %v5344 = vpop.f32.mrf.mxu0
      %v5345 = vadd.f32 0.0, %v5344
      %v5346 = vpop.f32.mrf.mxu0
      %v5347 = vpop.f32.mrf.mxu0
      %v5348 = vadd.f32 0.0, %v5347
      %v5349 = vpop.f32.mrf.mxu0
      %5350 = vmatprep.mubr.bf16.mxu0 0
      %5351 = vmatmul.mubr.bf16.gmra.mxu0 %v5140
      %v5352 = vpop.f32.mrf.mxu0
      %v5353 = vadd.f32 0.0, %v5352
      %v5354 = vpop.f32.mrf.mxu0
      %v5355 = vpop.f32.mrf.mxu0
      %v5356 = vadd.f32 0.0, %v5355
      %v5357 = vpop.f32.mrf.mxu0
      %5358 = vmatprep.mubr.bf16.mxu0 0
      %5359 = vmatmul.mubr.bf16.gmra.mxu0 %v5141
      %v5360 = vpop.f32.mrf.mxu0
      %v5361 = vadd.f32 0.0, %v5360
      %v5362 = vpop.f32.mrf.mxu0
      %v5363 = vpop.f32.mrf.mxu0
      %v5364 = vadd.f32 0.0, %v5363
      %v5365 = vpop.f32.mrf.mxu0
      %5366 = vdwg.mxu0
      %v5367 = vadd.f32 %v4613, %v5241
      %v5368 = vadd.f32 %v4614, %v5244
      %v5369 = vadd.f32 %v4615, %v5249
      %v5370 = vadd.f32 %v4616, %v5252
      %v5371 = vadd.f32 %v4617, %v5257
      %v5372 = vadd.f32 %v4618, %v5260
      %v5373 = vadd.f32 %v4619, %v5265
      %v5374 = vadd.f32 %v4620, %v5268
      %v5375 = vadd.f32 %v4621, %v5273
      %v5376 = vadd.f32 %v4622, %v5276
      %v5377 = vadd.f32 %v4623, %v5281
      %v5378 = vadd.f32 %v4624, %v5284
      %v5379 = vadd.f32 %v4625, %v5289
      %v5380 = vadd.f32 %v4626, %v5292
      %v5381 = vadd.f32 %v4627, %v5297
      %v5382 = vadd.f32 %v4628, %v5300
      %v5383 = vadd.f32 %v4629, %v5305
      %v5384 = vadd.f32 %v4630, %v5308
      %v5385 = vadd.f32 %v4631, %v5313
      %v5386 = vadd.f32 %v4632, %v5316
      %v5387 = vadd.f32 %v4633, %v5321
      %v5388 = vadd.f32 %v4634, %v5324
      %v5389 = vadd.f32 %v4635, %v5329
      %v5390 = vadd.f32 %v4636, %v5332
      %v5391 = vadd.f32 %v4637, %v5337
      %v5392 = vadd.f32 %v4638, %v5340
      %v5393 = vadd.f32 %v4639, %v5345
      %v5394 = vadd.f32 %v4640, %v5348
      %v5395 = vadd.f32 %v4641, %v5353
      %v5396 = vadd.f32 %v4642, %v5356
      %v5397 = vadd.f32 %v4643, %v5361
      %v5398 = vadd.f32 %v4644, %v5364
      %v5399 = vld [vmem:[%s4258] sm:$0xe]
      %v5400 = vld [vmem:[%s4258 + $0xc] sm:$0xe]
      %v5401 = vld [vmem:[%s4258 + $0x18] sm:$0xe]
      %v5402 = vld [vmem:[%s4258 + $0x24] sm:$0xe]
      %v5403 = vld [vmem:[%s4258 + $0x30] sm:$0xe]
      %v5404 = vld [vmem:[%s4258 + $0x3c] sm:$0xe]
      %v5405 = vld [vmem:[%s4258 + $0x48] sm:$0xe]
      %v5406 = vld [vmem:[%s4258 + $0x54] sm:$0xe]
      %v5407 = vld [vmem:[%s4258 + $0x60] sm:$0xe]
      %v5408 = vld [vmem:[%s4258 + $0x6c] sm:$0xe]
      %v5409 = vld [vmem:[%s4258 + $0x78] sm:$0xe]
      %v5410 = vld [vmem:[%s4258 + $0x84] sm:$0xe]
      %v5411 = vld [vmem:[%s4258 + $0x90] sm:$0xe]
      %v5412 = vld [vmem:[%s4258 + $0x9c] sm:$0xe]
      %v5413 = vld [vmem:[%s4258 + $0xa8] sm:$0xe]
      %v5414 = vld [vmem:[%s4258 + $0xb4] sm:$0xe]
      %v5463 = vrot.slane %v5399, 5
      %v5464 = vrot.slane %v5463, 4
      %v5465 = vrot.slane %v4646, 5
      %v5466 = vsel %vm2185, %v5464, %v5465
      %v5467 = vrot.slane %v5465, 4
      %v5468 = vrot.slane %v4647, 5
      %v5469 = vsel %vm2185, %v5467, %v5468
      %v5470 = vrot.slane %v5400, 5
      %v5471 = vrot.slane %v5470, 4
      %v5472 = vrot.slane %v4649, 5
      %v5473 = vsel %vm2185, %v5471, %v5472
      %v5474 = vrot.slane %v5472, 4
      %v5475 = vrot.slane %v4650, 5
      %v5476 = vsel %vm2185, %v5474, %v5475
      %v5477 = vrot.slane %v5401, 5
      %v5478 = vrot.slane %v5477, 4
      %v5479 = vrot.slane %v4652, 5
      %v5480 = vsel %vm2185, %v5478, %v5479
      %v5481 = vrot.slane %v5479, 4
      %v5482 = vrot.slane %v4653, 5
      %v5483 = vsel %vm2185, %v5481, %v5482
      %v5484 = vrot.slane %v5402, 5
      %v5485 = vrot.slane %v5484, 4
      %v5486 = vrot.slane %v4655, 5
      %v5487 = vsel %vm2185, %v5485, %v5486
      %v5488 = vrot.slane %v5486, 4
      %v5489 = vrot.slane %v4656, 5
      %v5490 = vsel %vm2185, %v5488, %v5489
      %v5491 = vrot.slane %v5403, 5
      %v5492 = vrot.slane %v5491, 4
      %v5493 = vrot.slane %v4658, 5
      %v5494 = vsel %vm2185, %v5492, %v5493
      %v5495 = vrot.slane %v5493, 4
      %v5496 = vrot.slane %v4659, 5
      %v5497 = vsel %vm2185, %v5495, %v5496
      %v5498 = vrot.slane %v5404, 5
      %v5499 = vrot.slane %v5498, 4
      %v5500 = vrot.slane %v4661, 5
      %v5501 = vsel %vm2185, %v5499, %v5500
      %v5502 = vrot.slane %v5500, 4
      %v5503 = vrot.slane %v4662, 5
      %v5504 = vsel %vm2185, %v5502, %v5503
      %v5505 = vrot.slane %v5405, 5
      %v5506 = vrot.slane %v5505, 4
      %v5507 = vrot.slane %v4664, 5
      %v5508 = vsel %vm2185, %v5506, %v5507
      %v5509 = vrot.slane %v5507, 4
      %v5510 = vrot.slane %v4665, 5
      %v5511 = vsel %vm2185, %v5509, %v5510
      %v5512 = vrot.slane %v5406, 5
      %v5513 = vrot.slane %v5512, 4
      %v5514 = vrot.slane %v4667, 5
      %v5515 = vsel %vm2185, %v5513, %v5514
      %v5516 = vrot.slane %v5514, 4
      %v5517 = vrot.slane %v4668, 5
      %v5518 = vsel %vm2185, %v5516, %v5517
      %v5519 = vrot.slane %v5407, 5
      %v5520 = vrot.slane %v5519, 4
      %v5521 = vrot.slane %v4670, 5
      %v5522 = vsel %vm2185, %v5520, %v5521
      %v5523 = vrot.slane %v5521, 4
      %v5524 = vrot.slane %v4671, 5
      %v5525 = vsel %vm2185, %v5523, %v5524
      %v5526 = vrot.slane %v5408, 5
      %v5527 = vrot.slane %v5526, 4
      %v5528 = vrot.slane %v4673, 5
      %v5529 = vsel %vm2185, %v5527, %v5528
      %v5530 = vrot.slane %v5528, 4
      %v5531 = vrot.slane %v4674, 5
      %v5532 = vsel %vm2185, %v5530, %v5531
      %v5533 = vrot.slane %v5409, 5
      %v5534 = vrot.slane %v5533, 4
      %v5535 = vrot.slane %v4676, 5
      %v5536 = vsel %vm2185, %v5534, %v5535
      %v5537 = vrot.slane %v5535, 4
      %v5538 = vrot.slane %v4677, 5
      %v5539 = vsel %vm2185, %v5537, %v5538
      %v5540 = vrot.slane %v5410, 5
      %v5541 = vrot.slane %v5540, 4
      %v5542 = vrot.slane %v4679, 5
      %v5543 = vsel %vm2185, %v5541, %v5542
      %v5544 = vrot.slane %v5542, 4
      %v5545 = vrot.slane %v4680, 5
      %v5546 = vsel %vm2185, %v5544, %v5545
      %v5547 = vrot.slane %v5411, 5
      %v5548 = vrot.slane %v5547, 4
      %v5549 = vrot.slane %v4682, 5
      %v5550 = vsel %vm2185, %v5548, %v5549
      %v5551 = vrot.slane %v5549, 4
      %v5552 = vrot.slane %v4683, 5
      %v5553 = vsel %vm2185, %v5551, %v5552
      %v5554 = vrot.slane %v5412, 5
      %v5555 = vrot.slane %v5554, 4
      %v5556 = vrot.slane %v4685, 5
      %v5557 = vsel %vm2185, %v5555, %v5556
      %v5558 = vrot.slane %v5556, 4
      %v5559 = vrot.slane %v4686, 5
      %v5560 = vsel %vm2185, %v5558, %v5559
      %v5561 = vrot.slane %v5413, 5
      %v5562 = vrot.slane %v5561, 4
      %v5563 = vrot.slane %v4688, 5
      %v5564 = vsel %vm2185, %v5562, %v5563
      %v5565 = vrot.slane %v5563, 4
      %v5566 = vrot.slane %v4689, 5
      %v5567 = vsel %vm2185, %v5565, %v5566
      %v5568 = vrot.slane %v5414, 5
      %v5569 = vrot.slane %v5568, 4
      %v5570 = vrot.slane %v4691, 5
      %v5571 = vsel %vm2185, %v5569, %v5570
      %v5572 = vrot.slane %v5570, 4
      %v5573 = vrot.slane %v4692, 5
      %v5574 = vsel %vm2185, %v5572, %v5573
      %s5575 = scalar_lea.vmem %s1, 512
      %v5576 = vld [vmem:[%s5575] sm:$0xf]
      %v5577 = vld [vmem:[%s5575 + $0x4] sm:$0xf]
      %v5578 = vld [vmem:[%s5575 + $0x8] sm:$0xf]
      %v5579 = vld [vmem:[%s5575 + $0xc] sm:$0xf]
      %v5580 = vld [vmem:[%s5575 + $0x10] sm:$0xf]
      %v5581 = vld [vmem:[%s5575 + $0x14] sm:$0xf]
      %v5582 = vld [vmem:[%s5575 + $0x18] sm:$0xf]
      %v5583 = vld [vmem:[%s5575 + $0x1c] sm:$0xf]
      %v5584 = vld [vmem:[%s5575 + $0x20] sm:$0xf]
      %v5585 = vld [vmem:[%s5575 + $0x24] sm:$0xf]
      %v5586 = vld [vmem:[%s5575 + $0x28] sm:$0xf]
      %v5587 = vld [vmem:[%s5575 + $0x2c] sm:$0xf]
      %v5588 = vld [vmem:[%s5575 + $0x30] sm:$0xf]
      %v5589 = vld [vmem:[%s5575 + $0x34] sm:$0xf]
      %v5590 = vld [vmem:[%s5575 + $0x38] sm:$0xf]
      %v5591 = vld [vmem:[%s5575 + $0x3c] sm:$0xf]
      %v5592 = vunpack.c.l.b16 %v5466
      %v5593 = vunpack.c.l.b16 %v5469
      %v5594 = vunpack.c.l.b16 %v5473
      %v5595 = vunpack.c.l.b16 %v5476
      %v5596 = vunpack.c.l.b16 %v5480
      %v5597 = vunpack.c.l.b16 %v5483
      %v5598 = vunpack.c.l.b16 %v5487
      %v5599 = vunpack.c.l.b16 %v5490
      %v5600 = vunpack.c.l.b16 %v5494
      %v5601 = vunpack.c.l.b16 %v5497
      %v5602 = vunpack.c.l.b16 %v5501
      %v5603 = vunpack.c.l.b16 %v5504
      %v5604 = vunpack.c.l.b16 %v5508
      %v5605 = vunpack.c.l.b16 %v5511
      %v5606 = vunpack.c.l.b16 %v5515
      %v5607 = vunpack.c.l.b16 %v5518
      %v5608 = vunpack.c.l.b16 %v5522
      %v5609 = vunpack.c.l.b16 %v5525
      %v5610 = vunpack.c.l.b16 %v5529
      %v5611 = vunpack.c.l.b16 %v5532
      %v5612 = vunpack.c.l.b16 %v5536
      %v5613 = vunpack.c.l.b16 %v5539
      %v5614 = vunpack.c.l.b16 %v5543
      %v5615 = vunpack.c.l.b16 %v5546
      %v5616 = vunpack.c.l.b16 %v5550
      %v5617 = vunpack.c.l.b16 %v5553
      %v5618 = vunpack.c.l.b16 %v5557
      %v5619 = vunpack.c.l.b16 %v5560
      %v5620 = vunpack.c.l.b16 %v5564
      %v5621 = vunpack.c.l.b16 %v5567
      %v5622 = vunpack.c.l.b16 %v5571
      %v5623 = vunpack.c.l.b16 %v5574
      %v5624 = vpack.c.b16 %v5593, %v5592
      %v5625 = vpack.c.b16 %v5595, %v5594
      %v5626 = vpack.c.b16 %v5597, %v5596
      %v5627 = vpack.c.b16 %v5599, %v5598
      %v5628 = vpack.c.b16 %v5601, %v5600
      %v5629 = vpack.c.b16 %v5603, %v5602
      %v5630 = vpack.c.b16 %v5605, %v5604
      %v5631 = vpack.c.b16 %v5607, %v5606
      %v5632 = vpack.c.b16 %v5609, %v5608
      %v5633 = vpack.c.b16 %v5611, %v5610
      %v5634 = vpack.c.b16 %v5613, %v5612
      %v5635 = vpack.c.b16 %v5615, %v5614
      %v5636 = vpack.c.b16 %v5617, %v5616
      %v5637 = vpack.c.b16 %v5619, %v5618
      %v5638 = vpack.c.b16 %v5621, %v5620
      %v5639 = vpack.c.b16 %v5623, %v5622
      %v5672 = vunpack.c.l.b16 %v5576
      %v5673 = vunpack.c.l.b16 %v5577
      %v5674 = vunpack.c.l.b16 %v5578
      %v5675 = vunpack.c.l.b16 %v5579
      %v5676 = vunpack.c.l.b16 %v5580
      %v5677 = vunpack.c.l.b16 %v5581
      %v5678 = vunpack.c.l.b16 %v5582
      %v5679 = vunpack.c.l.b16 %v5583
      %v5680 = vunpack.c.l.b16 %v5584
      %v5681 = vunpack.c.l.b16 %v5585
      %v5682 = vunpack.c.l.b16 %v5586
      %v5683 = vunpack.c.l.b16 %v5587
      %v5684 = vunpack.c.l.b16 %v5588
      %v5685 = vunpack.c.l.b16 %v5589
      %v5686 = vunpack.c.l.b16 %v5590
      %v5687 = vunpack.c.l.b16 %v5591
      %v5688 = vpack.c.b16 %v5673, %v5672
      %v5689 = vpack.c.b16 %v5675, %v5674
      %v5690 = vpack.c.b16 %v5677, %v5676
      %v5691 = vpack.c.b16 %v5679, %v5678
      %v5692 = vpack.c.b16 %v5681, %v5680
      %v5693 = vpack.c.b16 %v5683, %v5682
      %v5694 = vpack.c.b16 %v5685, %v5684
      %v5695 = vpack.c.b16 %v5687, %v5686
      %5704 = vmatprep.subr.bf16.mxu0 0
      %5705 = vmatpush1.bf16.msra.mxu0 %v5695
      %5706 = vmatprep.subr.bf16.mxu0 0
      %5707 = vmatpush1.bf16.msra.mxu0 %v5694
      %5708 = vmatprep.subr.bf16.mxu0 0
      %5709 = vmatpush1.bf16.msra.mxu0 %v5693
      %5710 = vmatprep.subr.bf16.mxu0 0
      %5711 = vmatpush1.bf16.msra.mxu0 %v5692
      %5712 = vmatprep.subr.bf16.mxu0 0
      %5713 = vmatpush1.bf16.msra.mxu0 %v5691
      %5714 = vmatprep.subr.bf16.mxu0 0
      %5715 = vmatpush1.bf16.msra.mxu0 %v5690
      %5716 = vmatprep.subr.bf16.mxu0 0
      %5717 = vmatpush1.bf16.msra.mxu0 %v5689
      %5718 = vmatprep.subr.bf16.mxu0 0
      %5719 = vmatpush1.bf16.msra.mxu0 %v5688
      %5720 = vmatprep.subr.bf16.mxu0 0
      %5721 = vmatpush2.bf16.msra.mxu0 0
      %5722 = vmatprep.subr.bf16.mxu0 0
      %5723 = vmatpush2.bf16.msra.mxu0 0
      %5724 = vmatprep.subr.bf16.mxu0 0
      %5725 = vmatpush2.bf16.msra.mxu0 0
      %5726 = vmatprep.subr.bf16.mxu0 0
      %5727 = vmatpush2.bf16.msra.mxu0 0
      %5728 = vmatprep.subr.bf16.mxu0 0
      %5729 = vmatpush2.bf16.msra.mxu0 0
      %5730 = vmatprep.subr.bf16.mxu0 0
      %5731 = vmatpush2.bf16.msra.mxu0 0
      %5732 = vmatprep.subr.bf16.mxu0 0
      %5733 = vmatpush2.bf16.msra.mxu0 0
      %5734 = vmatprep.subr.bf16.mxu0 0
      %5735 = vmatpush2.bf16.msra.mxu0 0
      %5736 = vmatprep.mubr.bf16.mxu0 0
      %5737 = vmatmul.mubr.bf16.gmra.mxu0 %v5624
      %v5738 = vpop.f32.mrf.mxu0
      %v5739 = vadd.f32 0.0, %v5738
      %v5740 = vpop.f32.mrf.mxu0
      %v5741 = vpop.f32.mrf.mxu0
      %v5742 = vadd.f32 0.0, %v5741
      %v5743 = vpop.f32.mrf.mxu0
      %5744 = vmatprep.mubr.bf16.mxu0 0
      %5745 = vmatmul.mubr.bf16.gmra.mxu0 %v5625
      %v5746 = vpop.f32.mrf.mxu0
      %v5747 = vadd.f32 0.0, %v5746
      %v5748 = vpop.f32.mrf.mxu0
      %v5749 = vpop.f32.mrf.mxu0
      %v5750 = vadd.f32 0.0, %v5749
      %v5751 = vpop.f32.mrf.mxu0
      %5752 = vmatprep.mubr.bf16.mxu0 0
      %5753 = vmatmul.mubr.bf16.gmra.mxu0 %v5626
      %v5754 = vpop.f32.mrf.mxu0
      %v5755 = vadd.f32 0.0, %v5754
      %v5756 = vpop.f32.mrf.mxu0
      %v5757 = vpop.f32.mrf.mxu0
      %v5758 = vadd.f32 0.0, %v5757
      %v5759 = vpop.f32.mrf.mxu0
      %5760 = vmatprep.mubr.bf16.mxu0 0
      %5761 = vmatmul.mubr.bf16.gmra.mxu0 %v5627
      %v5762 = vpop.f32.mrf.mxu0
      %v5763 = vadd.f32 0.0, %v5762
      %v5764 = vpop.f32.mrf.mxu0
      %v5765 = vpop.f32.mrf.mxu0
      %v5766 = vadd.f32 0.0, %v5765
      %v5767 = vpop.f32.mrf.mxu0
      %5768 = vmatprep.mubr.bf16.mxu0 0
      %5769 = vmatmul.mubr.bf16.gmra.mxu0 %v5628
      %v5770 = vpop.f32.mrf.mxu0
      %v5771 = vadd.f32 0.0, %v5770
      %v5772 = vpop.f32.mrf.mxu0
      %v5773 = vpop.f32.mrf.mxu0
      %v5774 = vadd.f32 0.0, %v5773
      %v5775 = vpop.f32.mrf.mxu0
      %5776 = vmatprep.mubr.bf16.mxu0 0
      %5777 = vmatmul.mubr.bf16.gmra.mxu0 %v5629
      %v5778 = vpop.f32.mrf.mxu0
      %v5779 = vadd.f32 0.0, %v5778
      %v5780 = vpop.f32.mrf.mxu0
      %v5781 = vpop.f32.mrf.mxu0
      %v5782 = vadd.f32 0.0, %v5781
      %v5783 = vpop.f32.mrf.mxu0
      %5784 = vmatprep.mubr.bf16.mxu0 0
      %5785 = vmatmul.mubr.bf16.gmra.mxu0 %v5630
      %v5786 = vpop.f32.mrf.mxu0
      %v5787 = vadd.f32 0.0, %v5786
      %v5788 = vpop.f32.mrf.mxu0
      %v5789 = vpop.f32.mrf.mxu0
      %v5790 = vadd.f32 0.0, %v5789
      %v5791 = vpop.f32.mrf.mxu0
      %5792 = vmatprep.mubr.bf16.mxu0 0
      %5793 = vmatmul.mubr.bf16.gmra.mxu0 %v5631
      %v5794 = vpop.f32.mrf.mxu0
      %v5795 = vadd.f32 0.0, %v5794
      %v5796 = vpop.f32.mrf.mxu0
      %v5797 = vpop.f32.mrf.mxu0
      %v5798 = vadd.f32 0.0, %v5797
      %v5799 = vpop.f32.mrf.mxu0
      %5800 = vmatprep.mubr.bf16.mxu0 0
      %5801 = vmatmul.mubr.bf16.gmra.mxu0 %v5632
      %v5802 = vpop.f32.mrf.mxu0
      %v5803 = vadd.f32 0.0, %v5802
      %v5804 = vpop.f32.mrf.mxu0
      %v5805 = vpop.f32.mrf.mxu0
      %v5806 = vadd.f32 0.0, %v5805
      %v5807 = vpop.f32.mrf.mxu0
      %5808 = vmatprep.mubr.bf16.mxu0 0
      %5809 = vmatmul.mubr.bf16.gmra.mxu0 %v5633
      %v5810 = vpop.f32.mrf.mxu0
      %v5811 = vadd.f32 0.0, %v5810
      %v5812 = vpop.f32.mrf.mxu0
      %v5813 = vpop.f32.mrf.mxu0
      %v5814 = vadd.f32 0.0, %v5813
      %v5815 = vpop.f32.mrf.mxu0
      %5816 = vmatprep.mubr.bf16.mxu0 0
      %5817 = vmatmul.mubr.bf16.gmra.mxu0 %v5634
      %v5818 = vpop.f32.mrf.mxu0
      %v5819 = vadd.f32 0.0, %v5818
      %v5820 = vpop.f32.mrf.mxu0
      %v5821 = vpop.f32.mrf.mxu0
      %v5822 = vadd.f32 0.0, %v5821
      %v5823 = vpop.f32.mrf.mxu0
      %5824 = vmatprep.mubr.bf16.mxu0 0
      %5825 = vmatmul.mubr.bf16.gmra.mxu0 %v5635
      %v5826 = vpop.f32.mrf.mxu0
      %v5827 = vadd.f32 0.0, %v5826
      %v5828 = vpop.f32.mrf.mxu0
      %v5829 = vpop.f32.mrf.mxu0
      %v5830 = vadd.f32 0.0, %v5829
      %v5831 = vpop.f32.mrf.mxu0
      %5832 = vmatprep.mubr.bf16.mxu0 0
      %5833 = vmatmul.mubr.bf16.gmra.mxu0 %v5636
      %v5834 = vpop.f32.mrf.mxu0
      %v5835 = vadd.f32 0.0, %v5834
      %v5836 = vpop.f32.mrf.mxu0
      %v5837 = vpop.f32.mrf.mxu0
      %v5838 = vadd.f32 0.0, %v5837
      %v5839 = vpop.f32.mrf.mxu0
      %5840 = vmatprep.mubr.bf16.mxu0 0
      %5841 = vmatmul.mubr.bf16.gmra.mxu0 %v5637
      %v5842 = vpop.f32.mrf.mxu0
      %v5843 = vadd.f32 0.0, %v5842
      %v5844 = vpop.f32.mrf.mxu0
      %v5845 = vpop.f32.mrf.mxu0
      %v5846 = vadd.f32 0.0, %v5845
      %v5847 = vpop.f32.mrf.mxu0
      %5848 = vmatprep.mubr.bf16.mxu0 0
      %5849 = vmatmul.mubr.bf16.gmra.mxu0 %v5638
      %v5850 = vpop.f32.mrf.mxu0
      %v5851 = vadd.f32 0.0, %v5850
      %v5852 = vpop.f32.mrf.mxu0
      %v5853 = vpop.f32.mrf.mxu0
      %v5854 = vadd.f32 0.0, %v5853
      %v5855 = vpop.f32.mrf.mxu0
      %5856 = vmatprep.mubr.bf16.mxu0 0
      %5857 = vmatmul.mubr.bf16.gmra.mxu0 %v5639
      %v5858 = vpop.f32.mrf.mxu0
      %v5859 = vadd.f32 0.0, %v5858
      %v5860 = vpop.f32.mrf.mxu0
      %v5861 = vpop.f32.mrf.mxu0
      %v5862 = vadd.f32 0.0, %v5861
      %v5863 = vpop.f32.mrf.mxu0
      %5864 = vdwg.mxu0
      %v5865 = vadd.f32 %v5367, %v5739
      %v5866 = vadd.f32 %v5368, %v5742
      %v5867 = vadd.f32 %v5369, %v5747
      %v5868 = vadd.f32 %v5370, %v5750
      %v5869 = vadd.f32 %v5371, %v5755
      %v5870 = vadd.f32 %v5372, %v5758
      %v5871 = vadd.f32 %v5373, %v5763
      %v5872 = vadd.f32 %v5374, %v5766
      %v5873 = vadd.f32 %v5375, %v5771
      %v5874 = vadd.f32 %v5376, %v5774
      %v5875 = vadd.f32 %v5377, %v5779
      %v5876 = vadd.f32 %v5378, %v5782
      %v5877 = vadd.f32 %v5379, %v5787
      %v5878 = vadd.f32 %v5380, %v5790
      %v5879 = vadd.f32 %v5381, %v5795
      %v5880 = vadd.f32 %v5382, %v5798
      %v5881 = vadd.f32 %v5383, %v5803
      %v5882 = vadd.f32 %v5384, %v5806
      %v5883 = vadd.f32 %v5385, %v5811
      %v5884 = vadd.f32 %v5386, %v5814
      %v5885 = vadd.f32 %v5387, %v5819
      %v5886 = vadd.f32 %v5388, %v5822
      %v5887 = vadd.f32 %v5389, %v5827
      %v5888 = vadd.f32 %v5390, %v5830
      %v5889 = vadd.f32 %v5391, %v5835
      %v5890 = vadd.f32 %v5392, %v5838
      %v5891 = vadd.f32 %v5393, %v5843
      %v5892 = vadd.f32 %v5394, %v5846
      %v5893 = vadd.f32 %v5395, %v5851
      %v5894 = vadd.f32 %v5396, %v5854
      %v5895 = vadd.f32 %v5397, %v5859
      %v5896 = vadd.f32 %v5398, %v5862
      %v5897 = vpack.c.bf16 %v5866, %v5865
      %v5898 = vpack.c.bf16 %v5868, %v5867
      %v5899 = vpack.c.bf16 %v5870, %v5869
      %v5900 = vpack.c.bf16 %v5872, %v5871
      %v5901 = vpack.c.bf16 %v5874, %v5873
      %v5902 = vpack.c.bf16 %v5876, %v5875
      %v5903 = vpack.c.bf16 %v5878, %v5877
      %v5904 = vpack.c.bf16 %v5880, %v5879
      %v5905 = vpack.c.bf16 %v5882, %v5881
      %v5906 = vpack.c.bf16 %v5884, %v5883
      %v5907 = vpack.c.bf16 %v5886, %v5885
      %v5908 = vpack.c.bf16 %v5888, %v5887
      %v5909 = vpack.c.bf16 %v5890, %v5889
      %v5910 = vpack.c.bf16 %v5892, %v5891
      %v5911 = vpack.c.bf16 %v5894, %v5893
      %v5912 = vpack.c.bf16 %v5896, %v5895
      %v5929 = vunpack.c.l.b16 %v5897
      %v5930 = vunpack.c.h.b16 %v5897
      %v5931 = vunpack.c.l.b16 %v5898
      %v5932 = vunpack.c.h.b16 %v5898
      %v5933 = vunpack.c.l.b16 %v5899
      %v5934 = vunpack.c.h.b16 %v5899
      %v5935 = vunpack.c.l.b16 %v5900
      %v5936 = vunpack.c.h.b16 %v5900
      %v5937 = vunpack.c.l.b16 %v5901
      %v5938 = vunpack.c.h.b16 %v5901
      %v5939 = vunpack.c.l.b16 %v5902
      %v5940 = vunpack.c.h.b16 %v5902
      %v5941 = vunpack.c.l.b16 %v5903
      %v5942 = vunpack.c.h.b16 %v5903
      %v5943 = vunpack.c.l.b16 %v5904
      %v5944 = vunpack.c.h.b16 %v5904
      %v5945 = vunpack.c.l.b16 %v5905
      %v5946 = vunpack.c.h.b16 %v5905
      %v5947 = vunpack.c.l.b16 %v5906
      %v5948 = vunpack.c.h.b16 %v5906
      %v5949 = vunpack.c.l.b16 %v5907
      %v5950 = vunpack.c.h.b16 %v5907
      %v5951 = vunpack.c.l.b16 %v5908
      %v5952 = vunpack.c.h.b16 %v5908
      %v5953 = vunpack.c.l.b16 %v5909
      %v5954 = vunpack.c.h.b16 %v5909
      %v5955 = vunpack.c.l.b16 %v5910
      %v5956 = vunpack.c.h.b16 %v5910
      %v5957 = vunpack.c.l.b16 %v5911
      %v5958 = vunpack.c.h.b16 %v5911
      %v5959 = vunpack.c.l.b16 %v5912
      %v5960 = vunpack.c.h.b16 %v5912
      %v5961 = vpack.c.b16 %v5929, %v5929
      %v5962 = vpack.c.b16 %v5930, %v5930
      %v5963 = vpack.c.b16 %v5931, %v5931
      %v5964 = vpack.c.b16 %v5932, %v5932
      %v5965 = vpack.c.b16 %v5933, %v5933
      %v5966 = vpack.c.b16 %v5934, %v5934
      %v5967 = vpack.c.b16 %v5935, %v5935
      %v5968 = vpack.c.b16 %v5936, %v5936
      %v5969 = vpack.c.b16 %v5937, %v5937
      %v5970 = vpack.c.b16 %v5938, %v5938
      %v5971 = vpack.c.b16 %v5939, %v5939
      %v5972 = vpack.c.b16 %v5940, %v5940
      %v5973 = vpack.c.b16 %v5941, %v5941
      %v5974 = vpack.c.b16 %v5942, %v5942
      %v5975 = vpack.c.b16 %v5943, %v5943
      %v5976 = vpack.c.b16 %v5944, %v5944
      %v5977 = vpack.c.b16 %v5945, %v5945
      %v5978 = vpack.c.b16 %v5946, %v5946
      %v5979 = vpack.c.b16 %v5947, %v5947
      %v5980 = vpack.c.b16 %v5948, %v5948
      %v5981 = vpack.c.b16 %v5949, %v5949
      %v5982 = vpack.c.b16 %v5950, %v5950
      %v5983 = vpack.c.b16 %v5951, %v5951
      %v5984 = vpack.c.b16 %v5952, %v5952
      %v5985 = vpack.c.b16 %v5953, %v5953
      %v5986 = vpack.c.b16 %v5954, %v5954
      %v5987 = vpack.c.b16 %v5955, %v5955
      %v5988 = vpack.c.b16 %v5956, %v5956
      %v5989 = vpack.c.b16 %v5957, %v5957
      %v5990 = vpack.c.b16 %v5958, %v5958
      %v5991 = vpack.c.b16 %v5959, %v5959
      %v5992 = vpack.c.b16 %v5960, %v5960
      %6025 = vst [vmem:[%s264] sm:$0xf] %v5961
      %6026 = vst [vmem:[%s264 + $0x4] sm:$0xf] %v5962
      %6027 = vst [vmem:[%s264 + $0x8] sm:$0xf] %v5963
      %6028 = vst [vmem:[%s264 + $0xc] sm:$0xf] %v5964
      %6029 = vst [vmem:[%s264 + $0x10] sm:$0xf] %v5965
      %6030 = vst [vmem:[%s264 + $0x14] sm:$0xf] %v5966
      %6031 = vst [vmem:[%s264 + $0x18] sm:$0xf] %v5967
      %6032 = vst [vmem:[%s264 + $0x1c] sm:$0xf] %v5968
      %6033 = vst [vmem:[%s264 + $0x20] sm:$0xf] %v5969
      %6034 = vst [vmem:[%s264 + $0x24] sm:$0xf] %v5970
      %6035 = vst [vmem:[%s264 + $0x28] sm:$0xf] %v5971
      %6036 = vst [vmem:[%s264 + $0x2c] sm:$0xf] %v5972
      %6037 = vst [vmem:[%s264 + $0x30] sm:$0xf] %v5973
      %6038 = vst [vmem:[%s264 + $0x34] sm:$0xf] %v5974
      %6039 = vst [vmem:[%s264 + $0x38] sm:$0xf] %v5975
      %6040 = vst [vmem:[%s264 + $0x3c] sm:$0xf] %v5976
      %6041 = vst [vmem:[%s264 + $0x40] sm:$0xf] %v5977
      %6042 = vst [vmem:[%s264 + $0x44] sm:$0xf] %v5978
      %6043 = vst [vmem:[%s264 + $0x48] sm:$0xf] %v5979
      %6044 = vst [vmem:[%s264 + $0x4c] sm:$0xf] %v5980
      %6045 = vst [vmem:[%s264 + $0x50] sm:$0xf] %v5981
      %6046 = vst [vmem:[%s264 + $0x54] sm:$0xf] %v5982
      %6047 = vst [vmem:[%s264 + $0x58] sm:$0xf] %v5983
      %6048 = vst [vmem:[%s264 + $0x5c] sm:$0xf] %v5984
      %6049 = vst [vmem:[%s264 + $0x60] sm:$0xf] %v5985
      %6050 = vst [vmem:[%s264 + $0x64] sm:$0xf] %v5986
      %6051 = vst [vmem:[%s264 + $0x68] sm:$0xf] %v5987
      %6052 = vst [vmem:[%s264 + $0x6c] sm:$0xf] %v5988
      %6053 = vst [vmem:[%s264 + $0x70] sm:$0xf] %v5989
      %6054 = vst [vmem:[%s264 + $0x74] sm:$0xf] %v5990
      %6055 = vst [vmem:[%s264 + $0x78] sm:$0xf] %v5991
      %6056 = vst [vmem:[%s264 + $0x7c] sm:$0xf] %v5992
      %v6057 = vadd.f32 %v5865, %v5866
      %v6058 = vadd.f32 %v6057, %v5867
      %v6059 = vadd.f32 %v6058, %v5868
      %v6060 = vadd.f32 %v6059, %v5869
      %v6061 = vadd.f32 %v6060, %v5870
      %v6062 = vadd.f32 %v6061, %v5871
      %v6063 = vadd.f32 %v6062, %v5872
      %v6064 = vadd.f32 %v6063, %v5873
      %v6065 = vadd.f32 %v6064, %v5874
      %v6066 = vadd.f32 %v6065, %v5875
      %v6067 = vadd.f32 %v6066, %v5876
      %v6068 = vadd.f32 %v6067, %v5877
      %v6069 = vadd.f32 %v6068, %v5878
      %v6070 = vadd.f32 %v6069, %v5879
      %v6071 = vadd.f32 %v6070, %v5880
      %v6072 = vadd.f32 %v6071, %v5881
      %v6073 = vadd.f32 %v6072, %v5882
      %v6074 = vadd.f32 %v6073, %v5883
      %v6075 = vadd.f32 %v6074, %v5884
      %v6076 = vadd.f32 %v6075, %v5885
      %v6077 = vadd.f32 %v6076, %v5886
      %v6078 = vadd.f32 %v6077, %v5887
      %v6079 = vadd.f32 %v6078, %v5888
      %v6080 = vadd.f32 %v6079, %v5889
      %v6081 = vadd.f32 %v6080, %v5890
      %v6082 = vadd.f32 %v6081, %v5891
      %v6083 = vadd.f32 %v6082, %v5892
      %v6084 = vadd.f32 %v6083, %v5893
      %v6085 = vadd.f32 %v6084, %v5894
      %v6086 = vadd.f32 %v6085, %v5895
      %v6087 = vadd.f32 %v6086, %v5896
      %6088 = vst [vmem:[%s268] sm:$0xff] %v6087
      %v6089 = vmul.f32 %v5865, %v5865
      %v6090 = vmul.f32 %v5866, %v5866
      %v6091 = vmul.f32 %v5867, %v5867
      %v6092 = vmul.f32 %v5868, %v5868
      %v6093 = vmul.f32 %v5869, %v5869
      %v6094 = vmul.f32 %v5870, %v5870
      %v6095 = vmul.f32 %v5871, %v5871
      %v6096 = vmul.f32 %v5872, %v5872
      %v6097 = vmul.f32 %v5873, %v5873
      %v6098 = vmul.f32 %v5874, %v5874
      %v6099 = vmul.f32 %v5875, %v5875
      %v6100 = vmul.f32 %v5876, %v5876
      %v6101 = vmul.f32 %v5877, %v5877
      %v6102 = vmul.f32 %v5878, %v5878
      %v6103 = vmul.f32 %v5879, %v5879
      %v6104 = vmul.f32 %v5880, %v5880
      %v6105 = vmul.f32 %v5881, %v5881
      %v6106 = vmul.f32 %v5882, %v5882
      %v6107 = vmul.f32 %v5883, %v5883
      %v6108 = vmul.f32 %v5884, %v5884
      %v6109 = vmul.f32 %v5885, %v5885
      %v6110 = vmul.f32 %v5886, %v5886
      %v6111 = vmul.f32 %v5887, %v5887
      %v6112 = vmul.f32 %v5888, %v5888
      %v6113 = vmul.f32 %v5889, %v5889
      %v6114 = vmul.f32 %v5890, %v5890
      %v6115 = vmul.f32 %v5891, %v5891
      %v6116 = vmul.f32 %v5892, %v5892
      %v6117 = vmul.f32 %v5893, %v5893
      %v6118 = vmul.f32 %v5894, %v5894
      %v6119 = vmul.f32 %v5895, %v5895
      %v6120 = vmul.f32 %v5896, %v5896
      %v6121 = vadd.f32 %v6089, %v6090
      %v6122 = vadd.f32 %v6121, %v6091
      %v6123 = vadd.f32 %v6122, %v6092
      %v6124 = vadd.f32 %v6123, %v6093
      %v6125 = vadd.f32 %v6124, %v6094
      %v6126 = vadd.f32 %v6125, %v6095
      %v6127 = vadd.f32 %v6126, %v6096
      %v6128 = vadd.f32 %v6127, %v6097
      %v6129 = vadd.f32 %v6128, %v6098
      %v6130 = vadd.f32 %v6129, %v6099
      %v6131 = vadd.f32 %v6130, %v6100
      %v6132 = vadd.f32 %v6131, %v6101
      %v6133 = vadd.f32 %v6132, %v6102
      %v6134 = vadd.f32 %v6133, %v6103
      %v6135 = vadd.f32 %v6134, %v6104
      %v6136 = vadd.f32 %v6135, %v6105
      %v6137 = vadd.f32 %v6136, %v6106
      %v6138 = vadd.f32 %v6137, %v6107
      %v6139 = vadd.f32 %v6138, %v6108
      %v6140 = vadd.f32 %v6139, %v6109
      %v6141 = vadd.f32 %v6140, %v6110
      %v6142 = vadd.f32 %v6141, %v6111
      %v6143 = vadd.f32 %v6142, %v6112
      %v6144 = vadd.f32 %v6143, %v6113
      %v6145 = vadd.f32 %v6144, %v6114
      %v6146 = vadd.f32 %v6145, %v6115
      %v6147 = vadd.f32 %v6146, %v6116
      %v6148 = vadd.f32 %v6147, %v6117
      %v6149 = vadd.f32 %v6148, %v6118
      %v6150 = vadd.f32 %v6149, %v6119
      %v6151 = vadd.f32 %v6150, %v6120
      %6152 = vst [vmem:[%s272] sm:$0xff] %v6151
      %p6153 = scmp.lt.s32.totalorder %s18, 1
      %s6154 = scalar_select %p6153, %s18, 1
      %s6155 = smul.addr %s6154, 32
      %s6156 = smul.addr %s6155, 4
      %s6157 = scalar_lea.vmem %s4, %s6156
      %p6158 = scmp.lt.s32.totalorder %s18, 1
      %s6159 = scalar_select %p6158, %s18, 1
      %s6160 = smul.addr %s6159, 8
      %s6161 = scalar_lea.vmem %s5, %s6160
      %p6162 = scmp.lt.s32.totalorder %s18, 1
      %s6163 = scalar_select %p6162, %s18, 1
      %s6164 = smul.addr %s6163, 8
      %s6165 = scalar_lea.vmem %s6, %s6164
      // Predicated region
      $region37: #{conv_block_forward.4} parent=35 // pred_check
        %p6166 = pneg %p125
      $region38: #{conv_block_forward.4} parent=35 // pred_check_branch
        %6168 = sbr.rel (%p6166) target = $region40
      $region39: #{conv_block_forward.4} parent=35 // pred_region
        _
      $region40: #{conv_block_forward.4} parent=35 // pred_fallthru
        _
      // Predicated region
      $region41: #{conv_block_forward.4} parent=35 // pred_check
        %p6169 = pneg %p151
      $region42: #{conv_block_forward.4} parent=35 // pred_check_branch
        %6171 = sbr.rel (%p6169) target = $region44
      $region43: #{conv_block_forward.4} parent=35 // pred_region
        _
      $region44: #{conv_block_forward.4} parent=35 // pred_fallthru
        _
      // Predicated region
      $region45: #{conv_block_forward.4} parent=35 // pred_check
        %p6172 = pneg %p177
      $region46: #{conv_block_forward.4} parent=35 // pred_check_branch
        %6174 = sbr.rel (%p6172) target = $region48
      $region47: #{conv_block_forward.4} parent=35 // pred_region
        _
      $region48: #{conv_block_forward.4} parent=35 // pred_fallthru
        _
    $region36: #{conv_block_forward.4} parent=5 // pred_fallthru
      _
    %p6175 = scmp.le.s32.totalorder 2, %s13
    // Predicated region
    $region49: #{conv_block_forward.4} parent=5 // pred_check
      %p6176 = pneg %p6175
    $region50: #{conv_block_forward.4} parent=5 // pred_check_branch
      %6178 = sbr.rel (%p6176) target = $region52
    $region51: #{conv_block_forward.4} parent=5 // pred_region
      %s6179 = ssub.s32 %s13, 2
      // Predicated region
      $region53: #{conv_block_forward.4} parent=51 // pred_check
        %p6180 = pneg %p131
      $region54: #{conv_block_forward.4} parent=51 // pred_check_branch
        %6182 = sbr.rel (%p6180) target = $region56
      $region55: #{conv_block_forward.4} parent=51 // pred_region
        %p6183 = scmp.lt.s32.totalorder %s19, 1
        %s6184 = scalar_select %p6183, %s19, 1
        %s6185 = smul.addr %s6184, 32
        %s6186 = smul.addr %s6185, 4
        %s6187 = scalar_lea.vmem %s4, %s6186
      $region56: #{conv_block_forward.4} parent=51 // pred_fallthru
        _
      // Predicated region
      $region57: #{conv_block_forward.4} parent=51 // pred_check
        %p6188 = pneg %p157
      $region58: #{conv_block_forward.4} parent=51 // pred_check_branch
        %6190 = sbr.rel (%p6188) target = $region60
      $region59: #{conv_block_forward.4} parent=51 // pred_region
        %p6191 = scmp.lt.s32.totalorder %s19, 1
        %s6192 = scalar_select %p6191, %s19, 1
        %s6193 = smul.addr %s6192, 8
        %s6194 = scalar_lea.vmem %s5, %s6193
      $region60: #{conv_block_forward.4} parent=51 // pred_fallthru
        _
      // Predicated region
      $region61: #{conv_block_forward.4} parent=51 // pred_check
        %p6195 = pneg %p183
      $region62: #{conv_block_forward.4} parent=51 // pred_check_branch
        %6197 = sbr.rel (%p6195) target = $region64
      $region63: #{conv_block_forward.4} parent=51 // pred_region
        %p6198 = scmp.lt.s32.totalorder %s19, 1
        %s6199 = scalar_select %p6198, %s19, 1
        %s6200 = smul.addr %s6199, 8
        %s6201 = scalar_lea.vmem %s6, %s6200
      $region64: #{conv_block_forward.4} parent=51 // pred_fallthru
        _
    $region52: #{conv_block_forward.4} parent=5 // pred_fallthru
      _
  $region6: #{conv_block_forward.4} parent=0 // loop_footer
    %s17 = sadd.s32 1, %s13
  $region7: #{conv_block_forward.4} parent=0 // loop_footer_branch
    %12 = sbr.rel target = $region3
  $region8: #{conv_block_forward.4} parent=0 // loop_exit
    _

</llo_original>
